<compile_context>
chip_gen: v6e
topology: v6e:2x2x1
jax: 0.10.0
libtpu: 0.0.40
codegen_flags: <defaults>
</compile_context>

<pallas_src>
import functools
import numpy as np

import jax
import jax.numpy as jnp
from jax import lax
from jax.experimental import pallas as pl
from jax.experimental.pallas import tpu as pltpu


# ---------------------------------------------------------------------------
# In-kernel math helpers (f32)
# ---------------------------------------------------------------------------

def _layernorm(x, g, b, eps):
    # PyTorch nn.LayerNorm: biased variance over the last dim.
    mean = jnp.mean(x, axis=-1, keepdims=True)
    var = jnp.mean(jnp.square(x - mean), axis=-1, keepdims=True)
    return (x - mean) * lax.rsqrt(var + eps) * g + b


def _erf_approx(x):
    # Abramowitz & Stegun 7.1.26, |abs err| < 1.5e-7 (matches exact-erf GELU).
    a1, a2, a3, a4, a5 = 0.254829592, -0.284496736, 1.421413741, -1.453152027, 1.061405429
    p = 0.3275911
    ax = jnp.abs(x)
    t = 1.0 / (1.0 + p * ax)
    poly = ((((a5 * t + a4) * t + a3) * t + a2) * t + a1) * t
    y = 1.0 - poly * jnp.exp(-ax * ax)
    return jnp.where(x >= 0, y, -y)


def _gelu_erf(x):
    return 0.5 * x * (1.0 + _erf_approx(x * 0.7071067811865476))


# ---------------------------------------------------------------------------
# Fused encoder-layer kernel
# ---------------------------------------------------------------------------

def _layer_kernel(x_ref, ln1g, ln1b, wq, bq, wkv, bkv, wo, bo,
                  ln2g, ln2b, w1, b1, w2, b2, o_ref,
                  *, num_heads, head_dim, eps, scale, q_tile):
    # x_ref: (1, S, D) f32 (full sequence, resident across the query-tile axis)
    # o_ref: (1, TQ, D) f32 (query tile)
    bf16 = jnp.bfloat16
    D = num_heads * head_dim

    qi = pl.program_id(1)
    q0 = pl.multiple_of(qi * q_tile, q_tile)

    x_full = x_ref[0]                               # (S, D)  f32
    x_tile = x_ref[0, pl.ds(q0, q_tile), :]         # (TQ, D) f32  (residual base)

    # ---- self-attention block (pre-LN) ----
    h_kv = _layernorm(x_full, ln1g[...], ln1b[...], eps)     # (S, D)
    h_q = _layernorm(x_tile, ln1g[...], ln1b[...], eps)      # (TQ, D)

    # Lane-dense projections: fused K/V in one (D, 2D) matmul; Q for this tile.
    q = jnp.dot(h_q.astype(bf16), wq[...],
                preferred_element_type=jnp.float32) + bq[...]        # (TQ, D)
    kv = jnp.dot(h_kv.astype(bf16), wkv[...],
                 preferred_element_type=jnp.float32) + bkv[...]      # (S, 2D)
    k = kv[:, :D]
    v = kv[:, D:]

    # Per-head attention with static, lane-aligned head slices (head_dim = 128
    # in the toy config -> full lane tiles, no relayout).  f32 softmax, exact divide.
    ctx_heads = []
    for h in range(num_heads):
        sl = slice(h * head_dim, (h + 1) * head_dim)
        qh = q[:, sl].astype(bf16)                                    # (TQ, Dh)
        kh = k[:, sl].astype(bf16)                                    # (S, Dh)
        vh = v[:, sl].astype(bf16)                                    # (S, Dh)
        s = lax.dot_general(qh, kh, (((1,), (1,)), ((), ())),
                            preferred_element_type=jnp.float32) * scale  # (TQ, S)
        s = s - jnp.max(s, axis=-1, keepdims=True)
        p = jnp.exp(s)
        p = p / jnp.sum(p, axis=-1, keepdims=True)
        # attention_dropout = 0.0 -> identity
        ctx_heads.append(jnp.dot(p.astype(bf16), vh,
                                 preferred_element_type=jnp.float32))  # (TQ, Dh)

    # Lane-aligned concat -> single output projection contracting the full D.
    ctx = jnp.concatenate(ctx_heads, axis=-1)                          # (TQ, D)
    attn = jnp.dot(ctx.astype(bf16), wo[...],
                   preferred_element_type=jnp.float32) + bo[...]       # (TQ, D)
    x1 = x_tile + attn

    # ---- MLP block (pre-LN) ----
    h2 = _layernorm(x1, ln2g[...], ln2b[...], eps)
    f = jnp.dot(h2.astype(bf16), w1[...],
                preferred_element_type=jnp.float32) + b1[...]          # (TQ, I)
    f = _gelu_erf(f)
    f = jnp.dot(f.astype(bf16), w2[...],
                preferred_element_type=jnp.float32) + b2[...]          # (TQ, D)
    o_ref[0] = (x1 + f).astype(o_ref.dtype)


# ---------------------------------------------------------------------------
# pallas_call wrapper
# ---------------------------------------------------------------------------

_PARAM_ORDER = ['ln1g', 'ln1b', 'wq', 'bq', 'wkv', 'bkv', 'wo', 'bo',
                'ln2g', 'ln2b', 'w1', 'b1', 'w2', 'b2']


def siglip_encoder_layer(x, kparams, cfg, *, q_tile=None):
    B, S, D = x.shape
    H = cfg['num_attention_heads']
    assert D % H == 0
    Dh = D // H
    if q_tile is None:
        q_tile = min(S, 128)
    assert S % q_tile == 0 and q_tile % 8 == 0

    kernel = functools.partial(
        _layer_kernel, num_heads=H, head_dim=Dh,
        eps=cfg['layer_norm_eps'], scale=Dh ** -0.5, q_tile=q_tile)

    pvals = [kparams[n] for n in _PARAM_ORDER]

    def const_spec(shape):
        n = len(shape)
        return pl.BlockSpec(shape, lambda b, q, _n=n: (0,) * _n)

    in_specs = [pl.BlockSpec((1, S, D), lambda b, q: (b, 0, 0))]
    in_specs += [const_spec(tuple(p.shape)) for p in pvals]

    return pl.pallas_call(
        kernel,
        out_shape=jax.ShapeDtypeStruct((B, S, D), x.dtype),
        grid=(B, S // q_tile),
        in_specs=in_specs,
        out_specs=pl.BlockSpec((1, q_tile, D), lambda b, q: (b, q, 0)),
        compiler_params=pltpu.CompilerParams(
            dimension_semantics=("parallel", "parallel"),
            vmem_limit_bytes=32 * 1024 * 1024),
    )(x, *pvals)


def prep_kernel_params(p):
    # Host-side re-layout + bf16 cast of the weights (x @ W + b convention).
    bf16 = jnp.bfloat16
    return dict(
        ln1g=p['ln1g'], ln1b=p['ln1b'],
        wq=p['wq'].astype(bf16), bq=p['bq'],
        wkv=jnp.concatenate([p['wk'], p['wv']], axis=1).astype(bf16),
        bkv=jnp.concatenate([p['bk'], p['bv']], axis=1),
        wo=p['wo'].astype(bf16), bo=p['bo'],
        ln2g=p['ln2g'], ln2b=p['ln2b'],
        w1=p['w1'].astype(bf16), b1=p['b1'],
        w2=p['w2'].astype(bf16), b2=p['b2'])


# ---------------------------------------------------------------------------
# Deterministic parameter init + pure-JAX fp32 reference
# ---------------------------------------------------------------------------

def init_params(key, cfg):
    D = cfg['hidden_size']
    I = cfg['intermediate_size']
    ks = iter(jax.random.split(key, 32))

    def nrm(shape, s=0.05):
        return s * jax.random.normal(next(ks), shape, jnp.float32)

    return dict(
        ln1g=jnp.ones((1, D), jnp.float32), ln1b=jnp.zeros((1, D), jnp.float32),
        wq=nrm((D, D)), bq=nrm((1, D)),
        wk=nrm((D, D)), bk=nrm((1, D)),
        wv=nrm((D, D)), bv=nrm((1, D)),
        wo=nrm((D, D)), bo=nrm((1, D)),
        ln2g=jnp.ones((1, D), jnp.float32), ln2b=jnp.zeros((1, D), jnp.float32),
        w1=nrm((D, I)), b1=nrm((1, I)),
        w2=nrm((I, D)), b2=nrm((1, D)))


def reference_layer(x, p, cfg):
    eps = cfg['layer_norm_eps']
    H = cfg['num_attention_heads']
    B, S, D = x.shape
    Dh = D // H
    scale = Dh ** -0.5

    def ln(t, g, b):
        m = jnp.mean(t, -1, keepdims=True)
        v = jnp.mean(jnp.square(t - m), -1, keepdims=True)
        return (t - m) * lax.rsqrt(v + eps) * g + b

    h = ln(x, p['ln1g'], p['ln1b'])
    q = (h @ p['wq'] + p['bq']).reshape(B, S, H, Dh).transpose(0, 2, 1, 3)
    k = (h @ p['wk'] + p['bk']).reshape(B, S, H, Dh).transpose(0, 2, 1, 3)
    v = (h @ p['wv'] + p['bv']).reshape(B, S, H, Dh).transpose(0, 2, 1, 3)
    s = jnp.einsum('bhqd,bhkd->bhqk', q, k) * scale
    a = jax.nn.softmax(s.astype(jnp.float32), axis=-1)
    ctx = jnp.einsum('bhqk,bhkd->bhqd', a, v).transpose(0, 2, 1, 3).reshape(B, S, D)
    x = x + ctx @ p['wo'] + p['bo']
    h2 = ln(x, p['ln2g'], p['ln2b'])
    f = jax.nn.gelu(h2 @ p['w1'] + p['b1'], approximate=False)
    return x + f @ p['w2'] + p['b2']


# ---------------------------------------------------------------------------
# Main
# ---------------------------------------------------------------------------

if __name__ == "__main__":
    cfg = dict(
        hidden_size=256,           # lane-dense (multiple of 128)
        intermediate_size=512,
        num_attention_heads=2,     # head_dim = 128 -> lane-aligned head slices
        layer_norm_eps=1e-12,
        attention_dropout=0.0,
    )
    B, S = 2, 256
    key = jax.random.PRNGKey(0)
    params = init_params(key, cfg)
    hidden_states = jax.random.normal(
        jax.random.fold_in(key, 7), (B, S, cfg['hidden_size']), jnp.float32)

    kparams = prep_kernel_params(params)
    out = siglip_encoder_layer(hidden_states, kparams, cfg, q_tile=128)
    out = jax.block_until_ready(out)

    ref = reference_layer(hidden_states, params, cfg)
    np.testing.assert_allclose(np.asarray(out), np.asarray(ref),
                               rtol=2e-2, atol=2e-2)
    print("KERNEL_OK")
</pallas_src>

<mosaic_0001>
module attributes {stable_mosaic.version = 11 : i64} {
  func.func @_layer_kernel(%arg0: i32, %arg1: i32, %arg2: memref<1x256x256xf32, #tpu.memory_space<vmem>>, %arg3: memref<1x256xf32, #tpu.memory_space<vmem>>, %arg4: memref<1x256xf32, #tpu.memory_space<vmem>>, %arg5: memref<256x256xbf16, #tpu.memory_space<vmem>>, %arg6: memref<1x256xf32, #tpu.memory_space<vmem>>, %arg7: memref<256x512xbf16, #tpu.memory_space<vmem>>, %arg8: memref<1x512xf32, #tpu.memory_space<vmem>>, %arg9: memref<256x256xbf16, #tpu.memory_space<vmem>>, %arg10: memref<1x256xf32, #tpu.memory_space<vmem>>, %arg11: memref<1x256xf32, #tpu.memory_space<vmem>>, %arg12: memref<1x256xf32, #tpu.memory_space<vmem>>, %arg13: memref<256x512xbf16, #tpu.memory_space<vmem>>, %arg14: memref<1x512xf32, #tpu.memory_space<vmem>>, %arg15: memref<512x256xbf16, #tpu.memory_space<vmem>>, %arg16: memref<1x256xf32, #tpu.memory_space<vmem>>, %arg17: memref<1x128x256xf32, #tpu.memory_space<vmem>>) attributes {dimension_semantics = [#tpu.dimension_semantics<parallel>, #tpu.dimension_semantics<parallel>], iteration_bounds = array<i64: 2, 2>, scalar_prefetch = 0 : i64, scratch_operands = 0 : i64, tpu.core_type = #tpu.core_type<tc>, window_params = [{transform_indices = @transform_0, window_bounds = array<i64: 1, 256, 256>}, {pipeline_mode = #tpu.pipeline_mode<synchronous>, transform_indices = @transform_1, window_bounds = array<i64: 1, 256>}, {pipeline_mode = #tpu.pipeline_mode<synchronous>, transform_indices = @transform_2, window_bounds = array<i64: 1, 256>}, {pipeline_mode = #tpu.pipeline_mode<synchronous>, transform_indices = @transform_3, window_bounds = array<i64: 256, 256>}, {pipeline_mode = #tpu.pipeline_mode<synchronous>, transform_indices = @transform_4, window_bounds = array<i64: 1, 256>}, {pipeline_mode = #tpu.pipeline_mode<synchronous>, transform_indices = @transform_5, window_bounds = array<i64: 256, 512>}, {pipeline_mode = #tpu.pipeline_mode<synchronous>, transform_indices = @transform_6, window_bounds = array<i64: 1, 512>}, {pipeline_mode = #tpu.pipeline_mode<synchronous>, transform_indices = @transform_7, window_bounds = array<i64: 256, 256>}, {pipeline_mode = #tpu.pipeline_mode<synchronous>, transform_indices = @transform_8, window_bounds = array<i64: 1, 256>}, {pipeline_mode = #tpu.pipeline_mode<synchronous>, transform_indices = @transform_9, window_bounds = array<i64: 1, 256>}, {pipeline_mode = #tpu.pipeline_mode<synchronous>, transform_indices = @transform_10, window_bounds = array<i64: 1, 256>}, {pipeline_mode = #tpu.pipeline_mode<synchronous>, transform_indices = @transform_11, window_bounds = array<i64: 256, 512>}, {pipeline_mode = #tpu.pipeline_mode<synchronous>, transform_indices = @transform_12, window_bounds = array<i64: 1, 512>}, {pipeline_mode = #tpu.pipeline_mode<synchronous>, transform_indices = @transform_13, window_bounds = array<i64: 512, 256>}, {pipeline_mode = #tpu.pipeline_mode<synchronous>, transform_indices = @transform_14, window_bounds = array<i64: 1, 256>}, {transform_indices = @transform_15, window_bounds = array<i64: 1, 128, 256>}]} {
    %c128_i32 = arith.constant 128 : i32
    %0 = arith.muli %arg1, %c128_i32 : i32
    %1 = tpu.assume_multiple %0, 128 : i32
    %c0 = arith.constant 0 : index
    %c0_0 = arith.constant 0 : index
    %c0_1 = arith.constant 0 : index
    %2 = vector.load %arg2[%c0, %c0_0, %c0_1] : memref<1x256x256xf32, #tpu.memory_space<vmem>>, vector<1x256x256xf32>
    %3 = vector.shape_cast %2 : vector<1x256x256xf32> to vector<256x256xf32>
    %c0_2 = arith.constant 0 : index
    %4 = arith.index_cast %1 : i32 to index
    %c0_3 = arith.constant 0 : index
    %5 = vector.load %arg2[%c0_2, %4, %c0_3] : memref<1x256x256xf32, #tpu.memory_space<vmem>>, vector<1x128x256xf32>
    %6 = vector.shape_cast %5 : vector<1x128x256xf32> to vector<128x256xf32>
    %c0_4 = arith.constant 0 : index
    %c0_5 = arith.constant 0 : index
    %7 = vector.load %arg3[%c0_4, %c0_5] : memref<1x256xf32, #tpu.memory_space<vmem>>, vector<1x256xf32>
    %c0_6 = arith.constant 0 : index
    %c0_7 = arith.constant 0 : index
    %8 = vector.load %arg4[%c0_6, %c0_7] : memref<1x256xf32, #tpu.memory_space<vmem>>, vector<1x256xf32>
    %cst = arith.constant dense<0.000000e+00> : vector<256xf32>
    %9 = vector.multi_reduction <add>, %3, %cst [1] : vector<256x256xf32> to vector<256xf32>
    %10 = vector.shape_cast %9 : vector<256xf32> to vector<256x1xf32>
    %cst_8 = arith.constant 2.560000e+02 : f32
    %11 = vector.broadcast %cst_8 : f32 to vector<256x1xf32>
    %12 = arith.divf %10, %11 : vector<256x1xf32>
    %13 = vector.broadcast %12 : vector<256x1xf32> to vector<256x256xf32>
    %14 = arith.subf %3, %13 : vector<256x256xf32>
    %15 = arith.mulf %14, %14 : vector<256x256xf32>
    %cst_9 = arith.constant dense<0.000000e+00> : vector<256xf32>
    %16 = vector.multi_reduction <add>, %15, %cst_9 [1] : vector<256x256xf32> to vector<256xf32>
    %17 = vector.shape_cast %16 : vector<256xf32> to vector<256x1xf32>
    %cst_10 = arith.constant 2.560000e+02 : f32
    %18 = vector.broadcast %cst_10 : f32 to vector<256x1xf32>
    %19 = arith.divf %17, %18 : vector<256x1xf32>
    %20 = vector.broadcast %12 : vector<256x1xf32> to vector<256x256xf32>
    %21 = arith.subf %3, %20 : vector<256x256xf32>
    %cst_11 = arith.constant 9.99999996E-13 : f32
    %22 = vector.broadcast %cst_11 : f32 to vector<256x1xf32>
    %23 = arith.addf %19, %22 : vector<256x1xf32>
    %24 = math.rsqrt %23 : vector<256x1xf32>
    %25 = vector.broadcast %24 : vector<256x1xf32> to vector<256x256xf32>
    %26 = arith.mulf %21, %25 : vector<256x256xf32>
    %27 = vector.broadcast %7 : vector<1x256xf32> to vector<256x256xf32>
    %28 = arith.mulf %26, %27 : vector<256x256xf32>
    %29 = vector.broadcast %8 : vector<1x256xf32> to vector<256x256xf32>
    %30 = arith.addf %28, %29 : vector<256x256xf32>
    %c0_12 = arith.constant 0 : index
    %c0_13 = arith.constant 0 : index
    %31 = vector.load %arg3[%c0_12, %c0_13] : memref<1x256xf32, #tpu.memory_space<vmem>>, vector<1x256xf32>
    %c0_14 = arith.constant 0 : index
    %c0_15 = arith.constant 0 : index
    %32 = vector.load %arg4[%c0_14, %c0_15] : memref<1x256xf32, #tpu.memory_space<vmem>>, vector<1x256xf32>
    %cst_16 = arith.constant dense<0.000000e+00> : vector<128xf32>
    %33 = vector.multi_reduction <add>, %6, %cst_16 [1] : vector<128x256xf32> to vector<128xf32>
    %34 = vector.shape_cast %33 : vector<128xf32> to vector<128x1xf32>
    %cst_17 = arith.constant 2.560000e+02 : f32
    %35 = vector.broadcast %cst_17 : f32 to vector<128x1xf32>
    %36 = arith.divf %34, %35 : vector<128x1xf32>
    %37 = vector.broadcast %36 : vector<128x1xf32> to vector<128x256xf32>
    %38 = arith.subf %6, %37 : vector<128x256xf32>
    %39 = arith.mulf %38, %38 : vector<128x256xf32>
    %cst_18 = arith.constant dense<0.000000e+00> : vector<128xf32>
    %40 = vector.multi_reduction <add>, %39, %cst_18 [1] : vector<128x256xf32> to vector<128xf32>
    %41 = vector.shape_cast %40 : vector<128xf32> to vector<128x1xf32>
    %cst_19 = arith.constant 2.560000e+02 : f32
    %42 = vector.broadcast %cst_19 : f32 to vector<128x1xf32>
    %43 = arith.divf %41, %42 : vector<128x1xf32>
    %44 = vector.broadcast %36 : vector<128x1xf32> to vector<128x256xf32>
    %45 = arith.subf %6, %44 : vector<128x256xf32>
    %cst_20 = arith.constant 9.99999996E-13 : f32
    %46 = vector.broadcast %cst_20 : f32 to vector<128x1xf32>
    %47 = arith.addf %43, %46 : vector<128x1xf32>
    %48 = math.rsqrt %47 : vector<128x1xf32>
    %49 = vector.broadcast %48 : vector<128x1xf32> to vector<128x256xf32>
    %50 = arith.mulf %45, %49 : vector<128x256xf32>
    %51 = vector.broadcast %31 : vector<1x256xf32> to vector<128x256xf32>
    %52 = arith.mulf %50, %51 : vector<128x256xf32>
    %53 = vector.broadcast %32 : vector<1x256xf32> to vector<128x256xf32>
    %54 = arith.addf %52, %53 : vector<128x256xf32>
    %55 = arith.truncf %54 : vector<128x256xf32> to vector<128x256xbf16>
    %c0_21 = arith.constant 0 : index
    %c0_22 = arith.constant 0 : index
    %56 = vector.load %arg5[%c0_21, %c0_22] : memref<256x256xbf16, #tpu.memory_space<vmem>>, vector<256x256xbf16>
    %cst_23 = arith.constant dense<0.000000e+00> : vector<128x256xf32>
    %57 = tpu.matmul %55, %56, %cst_23 {dimension_numbers = #tpu.dot_dimension_numbers<[1], [0], [0], [1], [0, 0, 1, 1], [], []>} : vector<128x256xbf16>, vector<256x256xbf16>, vector<128x256xf32> -> vector<128x256xf32>
    %c0_24 = arith.constant 0 : index
    %c0_25 = arith.constant 0 : index
    %58 = vector.load %arg6[%c0_24, %c0_25] : memref<1x256xf32, #tpu.memory_space<vmem>>, vector<1x256xf32>
    %59 = vector.broadcast %58 : vector<1x256xf32> to vector<128x256xf32>
    %60 = arith.addf %57, %59 : vector<128x256xf32>
    %61 = arith.truncf %30 : vector<256x256xf32> to vector<256x256xbf16>
    %c0_26 = arith.constant 0 : index
    %c0_27 = arith.constant 0 : index
    %62 = vector.load %arg7[%c0_26, %c0_27] : memref<256x512xbf16, #tpu.memory_space<vmem>>, vector<256x512xbf16>
    %cst_28 = arith.constant dense<0.000000e+00> : vector<256x512xf32>
    %63 = tpu.matmul %61, %62, %cst_28 {dimension_numbers = #tpu.dot_dimension_numbers<[1], [0], [0], [1], [0, 0, 1, 1], [], []>} : vector<256x256xbf16>, vector<256x512xbf16>, vector<256x512xf32> -> vector<256x512xf32>
    %c0_29 = arith.constant 0 : index
    %c0_30 = arith.constant 0 : index
    %64 = vector.load %arg8[%c0_29, %c0_30] : memref<1x512xf32, #tpu.memory_space<vmem>>, vector<1x512xf32>
    %65 = vector.broadcast %64 : vector<1x512xf32> to vector<256x512xf32>
    %66 = arith.addf %63, %65 : vector<256x512xf32>
    %67 = vector.extract_strided_slice %66 {offsets = [0, 0], sizes = [256, 256], strides = [1, 1]} : vector<256x512xf32> to vector<256x256xf32>
    %68 = vector.extract_strided_slice %66 {offsets = [0, 256], sizes = [256, 256], strides = [1, 1]} : vector<256x512xf32> to vector<256x256xf32>
    %69 = vector.extract_strided_slice %60 {offsets = [0, 0], sizes = [128, 128], strides = [1, 1]} : vector<128x256xf32> to vector<128x128xf32>
    %70 = arith.truncf %69 : vector<128x128xf32> to vector<128x128xbf16>
    %71 = vector.extract_strided_slice %67 {offsets = [0, 0], sizes = [256, 128], strides = [1, 1]} : vector<256x256xf32> to vector<256x128xf32>
    %72 = arith.truncf %71 : vector<256x128xf32> to vector<256x128xbf16>
    %73 = vector.extract_strided_slice %68 {offsets = [0, 0], sizes = [256, 128], strides = [1, 1]} : vector<256x256xf32> to vector<256x128xf32>
    %74 = arith.truncf %73 : vector<256x128xf32> to vector<256x128xbf16>
    %cst_31 = arith.constant dense<0.000000e+00> : vector<128x256xf32>
    %75 = tpu.matmul %70, %72, %cst_31 {dimension_numbers = #tpu.dot_dimension_numbers<[1], [1], [0], [0], [0, 0, 1, 0], [], []>} : vector<128x128xbf16>, vector<256x128xbf16>, vector<128x256xf32> -> vector<128x256xf32>
    %cst_32 = arith.constant 0.0883883461 : f32
    %76 = vector.broadcast %cst_32 : f32 to vector<128x256xf32>
    %77 = arith.mulf %75, %76 : vector<128x256xf32>
    %cst_33 = arith.constant dense<0xFF800000> : vector<128xf32>
    %78 = vector.multi_reduction <maximumf>, %77, %cst_33 [1] : vector<128x256xf32> to vector<128xf32>
    %79 = vector.shape_cast %78 : vector<128xf32> to vector<128x1xf32>
    %80 = vector.broadcast %79 : vector<128x1xf32> to vector<128x256xf32>
    %81 = arith.subf %77, %80 : vector<128x256xf32>
    %82 = math.exp %81 : vector<128x256xf32>
    %cst_34 = arith.constant dense<0.000000e+00> : vector<128xf32>
    %83 = vector.multi_reduction <add>, %82, %cst_34 [1] : vector<128x256xf32> to vector<128xf32>
    %84 = vector.shape_cast %83 : vector<128xf32> to vector<128x1xf32>
    %85 = vector.broadcast %84 : vector<128x1xf32> to vector<128x256xf32>
    %86 = arith.divf %82, %85 : vector<128x256xf32>
    %87 = arith.truncf %86 : vector<128x256xf32> to vector<128x256xbf16>
    %cst_35 = arith.constant dense<0.000000e+00> : vector<128x128xf32>
    %88 = tpu.matmul %87, %74, %cst_35 {dimension_numbers = #tpu.dot_dimension_numbers<[1], [0], [0], [1], [0, 0, 1, 1], [], []>} : vector<128x256xbf16>, vector<256x128xbf16>, vector<128x128xf32> -> vector<128x128xf32>
    %89 = vector.extract_strided_slice %60 {offsets = [0, 128], sizes = [128, 128], strides = [1, 1]} : vector<128x256xf32> to vector<128x128xf32>
    %90 = arith.truncf %89 : vector<128x128xf32> to vector<128x128xbf16>
    %91 = vector.extract_strided_slice %67 {offsets = [0, 128], sizes = [256, 128], strides = [1, 1]} : vector<256x256xf32> to vector<256x128xf32>
    %92 = arith.truncf %91 : vector<256x128xf32> to vector<256x128xbf16>
    %93 = vector.extract_strided_slice %68 {offsets = [0, 128], sizes = [256, 128], strides = [1, 1]} : vector<256x256xf32> to vector<256x128xf32>
    %94 = arith.truncf %93 : vector<256x128xf32> to vector<256x128xbf16>
    %cst_36 = arith.constant dense<0.000000e+00> : vector<128x256xf32>
    %95 = tpu.matmul %90, %92, %cst_36 {dimension_numbers = #tpu.dot_dimension_numbers<[1], [1], [0], [0], [0, 0, 1, 0], [], []>} : vector<128x128xbf16>, vector<256x128xbf16>, vector<128x256xf32> -> vector<128x256xf32>
    %cst_37 = arith.constant 0.0883883461 : f32
    %96 = vector.broadcast %cst_37 : f32 to vector<128x256xf32>
    %97 = arith.mulf %95, %96 : vector<128x256xf32>
    %cst_38 = arith.constant dense<0xFF800000> : vector<128xf32>
    %98 = vector.multi_reduction <maximumf>, %97, %cst_38 [1] : vector<128x256xf32> to vector<128xf32>
    %99 = vector.shape_cast %98 : vector<128xf32> to vector<128x1xf32>
    %100 = vector.broadcast %99 : vector<128x1xf32> to vector<128x256xf32>
    %101 = arith.subf %97, %100 : vector<128x256xf32>
    %102 = math.exp %101 : vector<128x256xf32>
    %cst_39 = arith.constant dense<0.000000e+00> : vector<128xf32>
    %103 = vector.multi_reduction <add>, %102, %cst_39 [1] : vector<128x256xf32> to vector<128xf32>
    %104 = vector.shape_cast %103 : vector<128xf32> to vector<128x1xf32>
    %105 = vector.broadcast %104 : vector<128x1xf32> to vector<128x256xf32>
    %106 = arith.divf %102, %105 : vector<128x256xf32>
    %107 = arith.truncf %106 : vector<128x256xf32> to vector<128x256xbf16>
    %cst_40 = arith.constant dense<0.000000e+00> : vector<128x128xf32>
    %108 = tpu.matmul %107, %94, %cst_40 {dimension_numbers = #tpu.dot_dimension_numbers<[1], [0], [0], [1], [0, 0, 1, 1], [], []>} : vector<128x256xbf16>, vector<256x128xbf16>, vector<128x128xf32> -> vector<128x128xf32>
    %109 = tpu.concatenate %88, %108 in 1 : vector<128x128xf32>, vector<128x128xf32> -> vector<128x256xf32>
    %110 = arith.truncf %109 : vector<128x256xf32> to vector<128x256xbf16>
    %c0_41 = arith.constant 0 : index
    %c0_42 = arith.constant 0 : index
    %111 = vector.load %arg9[%c0_41, %c0_42] : memref<256x256xbf16, #tpu.memory_space<vmem>>, vector<256x256xbf16>
    %cst_43 = arith.constant dense<0.000000e+00> : vector<128x256xf32>
    %112 = tpu.matmul %110, %111, %cst_43 {dimension_numbers = #tpu.dot_dimension_numbers<[1], [0], [0], [1], [0, 0, 1, 1], [], []>} : vector<128x256xbf16>, vector<256x256xbf16>, vector<128x256xf32> -> vector<128x256xf32>
    %c0_44 = arith.constant 0 : index
    %c0_45 = arith.constant 0 : index
    %113 = vector.load %arg10[%c0_44, %c0_45] : memref<1x256xf32, #tpu.memory_space<vmem>>, vector<1x256xf32>
    %114 = vector.broadcast %113 : vector<1x256xf32> to vector<128x256xf32>
    %115 = arith.addf %112, %114 : vector<128x256xf32>
    %116 = arith.addf %6, %115 : vector<128x256xf32>
    %c0_46 = arith.constant 0 : index
    %c0_47 = arith.constant 0 : index
    %117 = vector.load %arg11[%c0_46, %c0_47] : memref<1x256xf32, #tpu.memory_space<vmem>>, vector<1x256xf32>
    %c0_48 = arith.constant 0 : index
    %c0_49 = arith.constant 0 : index
    %118 = vector.load %arg12[%c0_48, %c0_49] : memref<1x256xf32, #tpu.memory_space<vmem>>, vector<1x256xf32>
    %cst_50 = arith.constant dense<0.000000e+00> : vector<128xf32>
    %119 = vector.multi_reduction <add>, %116, %cst_50 [1] : vector<128x256xf32> to vector<128xf32>
    %120 = vector.shape_cast %119 : vector<128xf32> to vector<128x1xf32>
    %cst_51 = arith.constant 2.560000e+02 : f32
    %121 = vector.broadcast %cst_51 : f32 to vector<128x1xf32>
    %122 = arith.divf %120, %121 : vector<128x1xf32>
    %123 = vector.broadcast %122 : vector<128x1xf32> to vector<128x256xf32>
    %124 = arith.subf %116, %123 : vector<128x256xf32>
    %125 = arith.mulf %124, %124 : vector<128x256xf32>
    %cst_52 = arith.constant dense<0.000000e+00> : vector<128xf32>
    %126 = vector.multi_reduction <add>, %125, %cst_52 [1] : vector<128x256xf32> to vector<128xf32>
    %127 = vector.shape_cast %126 : vector<128xf32> to vector<128x1xf32>
    %cst_53 = arith.constant 2.560000e+02 : f32
    %128 = vector.broadcast %cst_53 : f32 to vector<128x1xf32>
    %129 = arith.divf %127, %128 : vector<128x1xf32>
    %130 = vector.broadcast %122 : vector<128x1xf32> to vector<128x256xf32>
    %131 = arith.subf %116, %130 : vector<128x256xf32>
    %cst_54 = arith.constant 9.99999996E-13 : f32
    %132 = vector.broadcast %cst_54 : f32 to vector<128x1xf32>
    %133 = arith.addf %129, %132 : vector<128x1xf32>
    %134 = math.rsqrt %133 : vector<128x1xf32>
    %135 = vector.broadcast %134 : vector<128x1xf32> to vector<128x256xf32>
    %136 = arith.mulf %131, %135 : vector<128x256xf32>
    %137 = vector.broadcast %117 : vector<1x256xf32> to vector<128x256xf32>
    %138 = arith.mulf %136, %137 : vector<128x256xf32>
    %139 = vector.broadcast %118 : vector<1x256xf32> to vector<128x256xf32>
    %140 = arith.addf %138, %139 : vector<128x256xf32>
    %141 = arith.truncf %140 : vector<128x256xf32> to vector<128x256xbf16>
    %c0_55 = arith.constant 0 : index
    %c0_56 = arith.constant 0 : index
    %142 = vector.load %arg13[%c0_55, %c0_56] : memref<256x512xbf16, #tpu.memory_space<vmem>>, vector<256x512xbf16>
    %cst_57 = arith.constant dense<0.000000e+00> : vector<128x512xf32>
    %143 = tpu.matmul %141, %142, %cst_57 {dimension_numbers = #tpu.dot_dimension_numbers<[1], [0], [0], [1], [0, 0, 1, 1], [], []>} : vector<128x256xbf16>, vector<256x512xbf16>, vector<128x512xf32> -> vector<128x512xf32>
    %c0_58 = arith.constant 0 : index
    %c0_59 = arith.constant 0 : index
    %144 = vector.load %arg14[%c0_58, %c0_59] : memref<1x512xf32, #tpu.memory_space<vmem>>, vector<1x512xf32>
    %145 = vector.broadcast %144 : vector<1x512xf32> to vector<128x512xf32>
    %146 = arith.addf %143, %145 : vector<128x512xf32>
    %cst_60 = arith.constant 5.000000e-01 : f32
    %147 = vector.broadcast %cst_60 : f32 to vector<128x512xf32>
    %148 = arith.mulf %147, %146 : vector<128x512xf32>
    %cst_61 = arith.constant 0.707106769 : f32
    %149 = vector.broadcast %cst_61 : f32 to vector<128x512xf32>
    %150 = arith.mulf %146, %149 : vector<128x512xf32>
    %151 = math.absf %150 : vector<128x512xf32>
    %cst_62 = arith.constant 0.327591091 : f32
    %152 = vector.broadcast %cst_62 : f32 to vector<128x512xf32>
    %153 = arith.mulf %152, %151 : vector<128x512xf32>
    %cst_63 = arith.constant 1.000000e+00 : f32
    %154 = vector.broadcast %cst_63 : f32 to vector<128x512xf32>
    %155 = arith.addf %154, %153 : vector<128x512xf32>
    %cst_64 = arith.constant 1.000000e+00 : f32
    %156 = vector.broadcast %cst_64 : f32 to vector<128x512xf32>
    %157 = arith.divf %156, %155 : vector<128x512xf32>
    %cst_65 = arith.constant 1.06140542 : f32
    %158 = vector.broadcast %cst_65 : f32 to vector<128x512xf32>
    %159 = arith.mulf %158, %157 : vector<128x512xf32>
    %cst_66 = arith.constant -1.45315206 : f32
    %160 = vector.broadcast %cst_66 : f32 to vector<128x512xf32>
    %161 = arith.addf %159, %160 : vector<128x512xf32>
    %162 = arith.mulf %161, %157 : vector<128x512xf32>
    %cst_67 = arith.constant 1.42141378 : f32
    %163 = vector.broadcast %cst_67 : f32 to vector<128x512xf32>
    %164 = arith.addf %162, %163 : vector<128x512xf32>
    %165 = arith.mulf %164, %157 : vector<128x512xf32>
    %cst_68 = arith.constant -0.284496725 : f32
    %166 = vector.broadcast %cst_68 : f32 to vector<128x512xf32>
    %167 = arith.addf %165, %166 : vector<128x512xf32>
    %168 = arith.mulf %167, %157 : vector<128x512xf32>
    %cst_69 = arith.constant 0.254829586 : f32
    %169 = vector.broadcast %cst_69 : f32 to vector<128x512xf32>
    %170 = arith.addf %168, %169 : vector<128x512xf32>
    %171 = arith.mulf %170, %157 : vector<128x512xf32>
    %cst_70 = arith.constant 0.000000e+00 : f32
    %172 = vector.broadcast %cst_70 : f32 to vector<128x512xf32>
    %173 = arith.subf %172, %151 : vector<128x512xf32>
    %174 = arith.mulf %173, %151 : vector<128x512xf32>
    %175 = math.exp %174 : vector<128x512xf32>
    %176 = arith.mulf %171, %175 : vector<128x512xf32>
    %cst_71 = arith.constant 1.000000e+00 : f32
    %177 = vector.broadcast %cst_71 : f32 to vector<128x512xf32>
    %178 = arith.subf %177, %176 : vector<128x512xf32>
    %cst_72 = arith.constant 0.000000e+00 : f32
    %179 = vector.broadcast %cst_72 : f32 to vector<128x512xf32>
    %180 = arith.cmpf oge, %150, %179 : vector<128x512xf32>
    %cst_73 = arith.constant 0.000000e+00 : f32
    %181 = vector.broadcast %cst_73 : f32 to vector<128x512xf32>
    %182 = arith.subf %181, %178 : vector<128x512xf32>
    %183 = arith.select %180, %178, %182 : vector<128x512xi1>, vector<128x512xf32>
    %cst_74 = arith.constant 1.000000e+00 : f32
    %184 = vector.broadcast %cst_74 : f32 to vector<128x512xf32>
    %185 = arith.addf %184, %183 : vector<128x512xf32>
    %186 = arith.mulf %148, %185 : vector<128x512xf32>
    %187 = arith.truncf %186 : vector<128x512xf32> to vector<128x512xbf16>
    %c0_75 = arith.constant 0 : index
    %c0_76 = arith.constant 0 : index
    %188 = vector.load %arg15[%c0_75, %c0_76] : memref<512x256xbf16, #tpu.memory_space<vmem>>, vector<512x256xbf16>
    %cst_77 = arith.constant dense<0.000000e+00> : vector<128x256xf32>
    %189 = tpu.matmul %187, %188, %cst_77 {dimension_numbers = #tpu.dot_dimension_numbers<[1], [0], [0], [1], [0, 0, 1, 1], [], []>} : vector<128x512xbf16>, vector<512x256xbf16>, vector<128x256xf32> -> vector<128x256xf32>
    %c0_78 = arith.constant 0 : index
    %c0_79 = arith.constant 0 : index
    %190 = vector.load %arg16[%c0_78, %c0_79] : memref<1x256xf32, #tpu.memory_space<vmem>>, vector<1x256xf32>
    %191 = vector.broadcast %190 : vector<1x256xf32> to vector<128x256xf32>
    %192 = arith.addf %189, %191 : vector<128x256xf32>
    %193 = arith.addf %116, %192 : vector<128x256xf32>
    %c0_80 = arith.constant 0 : index
    %c0_81 = arith.constant 0 : index
    %c0_82 = arith.constant 0 : index
    %194 = vector.load %arg17[%c0_80, %c0_81, %c0_82] : memref<1x128x256xf32, #tpu.memory_space<vmem>>, vector<1x128x256xf32>
    %195 = vector.shape_cast %194 : vector<1x128x256xf32> to vector<128x256xf32>
    %196 = vector.shape_cast %193 : vector<128x256xf32> to vector<1x128x256xf32>
    tpu.vector_store %arg17[%c0_80, %c0_81, %c0_82], %196 {strides = array<i32>} : memref<1x128x256xf32, #tpu.memory_space<vmem>>, vector<1x128x256xf32>,
    return
  }
  func.func @transform_0(%arg0: i32, %arg1: i32) -> (i32, i32, i32) {
    %c0_i32 = arith.constant 0 : i32
    %c0_i32_0 = arith.constant 0 : i32
    %c0_i32_1 = arith.constant 0 : i32
    return %arg0, %c0_i32, %c0_i32_0 : i32, i32, i32
  }
  func.func @transform_1(%arg0: i32, %arg1: i32) -> (i32, i32) {
    %c0_i32 = arith.constant 0 : i32
    %c0_i32_0 = arith.constant 0 : i32
    %c0_i32_1 = arith.constant 0 : i32
    return %c0_i32, %c0_i32_0 : i32, i32
  }
  func.func @transform_2(%arg0: i32, %arg1: i32) -> (i32, i32) {
    %c0_i32 = arith.constant 0 : i32
    %c0_i32_0 = arith.constant 0 : i32
    %c0_i32_1 = arith.constant 0 : i32
    return %c0_i32, %c0_i32_0 : i32, i32
  }
  func.func @transform_3(%arg0: i32, %arg1: i32) -> (i32, i32) {
    %c0_i32 = arith.constant 0 : i32
    %c0_i32_0 = arith.constant 0 : i32
    %c0_i32_1 = arith.constant 0 : i32
    return %c0_i32, %c0_i32_0 : i32, i32
  }
  func.func @transform_4(%arg0: i32, %arg1: i32) -> (i32, i32) {
    %c0_i32 = arith.constant 0 : i32
    %c0_i32_0 = arith.constant 0 : i32
    %c0_i32_1 = arith.constant 0 : i32
    return %c0_i32, %c0_i32_0 : i32, i32
  }
  func.func @transform_5(%arg0: i32, %arg1: i32) -> (i32, i32) {
    %c0_i32 = arith.constant 0 : i32
    %c0_i32_0 = arith.constant 0 : i32
    %c0_i32_1 = arith.constant 0 : i32
    return %c0_i32, %c0_i32_0 : i32, i32
  }
  func.func @transform_6(%arg0: i32, %arg1: i32) -> (i32, i32) {
    %c0_i32 = arith.constant 0 : i32
    %c0_i32_0 = arith.constant 0 : i32
    %c0_i32_1 = arith.constant 0 : i32
    return %c0_i32, %c0_i32_0 : i32, i32
  }
  func.func @transform_7(%arg0: i32, %arg1: i32) -> (i32, i32) {
    %c0_i32 = arith.constant 0 : i32
    %c0_i32_0 = arith.constant 0 : i32
    %c0_i32_1 = arith.constant 0 : i32
    return %c0_i32, %c0_i32_0 : i32, i32
  }
  func.func @transform_8(%arg0: i32, %arg1: i32) -> (i32, i32) {
    %c0_i32 = arith.constant 0 : i32
    %c0_i32_0 = arith.constant 0 : i32
    %c0_i32_1 = arith.constant 0 : i32
    return %c0_i32, %c0_i32_0 : i32, i32
  }
  func.func @transform_9(%arg0: i32, %arg1: i32) -> (i32, i32) {
    %c0_i32 = arith.constant 0 : i32
    %c0_i32_0 = arith.constant 0 : i32
    %c0_i32_1 = arith.constant 0 : i32
    return %c0_i32, %c0_i32_0 : i32, i32
  }
  func.func @transform_10(%arg0: i32, %arg1: i32) -> (i32, i32) {
    %c0_i32 = arith.constant 0 : i32
    %c0_i32_0 = arith.constant 0 : i32
    %c0_i32_1 = arith.constant 0 : i32
    return %c0_i32, %c0_i32_0 : i32, i32
  }
  func.func @transform_11(%arg0: i32, %arg1: i32) -> (i32, i32) {
    %c0_i32 = arith.constant 0 : i32
    %c0_i32_0 = arith.constant 0 : i32
    %c0_i32_1 = arith.constant 0 : i32
    return %c0_i32, %c0_i32_0 : i32, i32
  }
  func.func @transform_12(%arg0: i32, %arg1: i32) -> (i32, i32) {
    %c0_i32 = arith.constant 0 : i32
    %c0_i32_0 = arith.constant 0 : i32
    %c0_i32_1 = arith.constant 0 : i32
    return %c0_i32, %c0_i32_0 : i32, i32
  }
  func.func @transform_13(%arg0: i32, %arg1: i32) -> (i32, i32) {
    %c0_i32 = arith.constant 0 : i32
    %c0_i32_0 = arith.constant 0 : i32
    %c0_i32_1 = arith.constant 0 : i32
    return %c0_i32, %c0_i32_0 : i32, i32
  }
  func.func @transform_14(%arg0: i32, %arg1: i32) -> (i32, i32) {
    %c0_i32 = arith.constant 0 : i32
    %c0_i32_0 = arith.constant 0 : i32
    %c0_i32_1 = arith.constant 0 : i32
    return %c0_i32, %c0_i32_0 : i32, i32
  }
  func.func @transform_15(%arg0: i32, %arg1: i32) -> (i32, i32, i32) {
    %c0_i32 = arith.constant 0 : i32
    %c0_i32_0 = arith.constant 0 : i32
    return %arg0, %arg1, %c0_i32 : i32, i32, i32
  }
}

</mosaic_0001>

<llo_original>
// kernel: tpu_custom_call.1
$region0: #{tpu_custom_call.1}
  #allocation0 [shape = 'u32[]', space=smem, size = 0x4, offset = 0x4, fixed_abs, tag = 'smem constant byte address 0x4 - core index']
  #allocation1 [shape = 'u32[144,128]{1,0:T(1,128)}', space=vmem, size = 0x12000, scoped, tag = 'internal scratch']
  %s0 = inlined_call_operand.hbm [shape: f32[2,256,256], index: 0, kind: input, shape index: {}]
  %s1 = inlined_call_operand.hbm [shape: f32[1,256], index: 1, kind: input, shape index: {}]
  %s2 = inlined_call_operand.hbm [shape: f32[1,256], index: 2, kind: input, shape index: {}]
  %s3 = inlined_call_operand.hbm [shape: bf16[256,256], index: 3, kind: input, shape index: {}]
  %s4 = inlined_call_operand.hbm [shape: f32[1,256], index: 4, kind: input, shape index: {}]
  %s5 = inlined_call_operand.hbm [shape: bf16[256,512], index: 5, kind: input, shape index: {}]
  %s6 = inlined_call_operand.vmem [shape: f32[1,512], index: 6, kind: input, shape index: {}]
  %s7 = inlined_call_operand.hbm [shape: bf16[256,256], index: 7, kind: input, shape index: {}]
  %s8 = inlined_call_operand.vmem [shape: f32[1,256], index: 8, kind: input, shape index: {}]
  %s9 = inlined_call_operand.vmem [shape: f32[1,256], index: 9, kind: input, shape index: {}]
  %s10 = inlined_call_operand.vmem [shape: f32[1,256], index: 10, kind: input, shape index: {}]
  %s11 = inlined_call_operand.hbm [shape: bf16[256,512], index: 11, kind: input, shape index: {}]
  %s12 = inlined_call_operand.vmem [shape: f32[1,512], index: 12, kind: input, shape index: {}]
  %s13 = inlined_call_operand.hbm [shape: bf16[512,256], index: 13, kind: input, shape index: {}]
  %s14 = inlined_call_operand.vmem [shape: f32[1,256], index: 14, kind: input, shape index: {}]
  %s15 = inlined_call_operand.hbm [shape: f32[2,256,256], index: 15, kind: output, shape index: {}]
  %s16 = sld [smem:[#allocation0]]
  $region129: #{tpu_custom_call.1} parent=0
    _
  %s18 = ssub.s32 1, %s16
  %s19 = scalar_select 0, %s18, %s16
  $region1: #{tpu_custom_call.1} parent=0
    #allocation2 [shape = 'u8[524288]{0}', space=vmem, size = 0x80000, scoped, tag = 'input window, operand 0']
    #allocation3 [shape = 's32[2]{0}', space=sflag, size = 0x8, scoped, tag = 'scoped memory for tpu_custom_call.1']
    #allocation4 [shape = 's32[2]{0}', space=sflag, size = 0x8, scoped, tag = 'scoped memory for tpu_custom_call.1']
    #allocation5 [shape = 'u8[1024]{0}', space=vmem, size = 0x400, scoped, tag = 'input window, operand 1, single buffered']
    #allocation6 [shape = 's32[1]{0}', space=sflag, size = 0x4, scoped, tag = 'scoped memory for tpu_custom_call.1']
    #allocation7 [shape = 'u8[1024]{0}', space=vmem, size = 0x400, scoped, tag = 'input window, operand 2, single buffered']
    #allocation8 [shape = 'u8[131072]{0}', space=vmem, size = 0x20000, scoped, tag = 'input window, operand 3, single buffered']
    #allocation9 [shape = 's32[1]{0}', space=sflag, size = 0x4, scoped, tag = 'scoped memory for tpu_custom_call.1']
    #allocation10 [shape = 'u8[1024]{0}', space=vmem, size = 0x400, scoped, tag = 'input window, operand 4, single buffered']
    #allocation11 [shape = 'u8[262144]{0}', space=vmem, size = 0x40000, scoped, tag = 'input window, operand 5, single buffered']
    #allocation12 [shape = 's32[1]{0}', space=sflag, size = 0x4, scoped, tag = 'scoped memory for tpu_custom_call.1']
    #allocation13 [shape = 'u8[131072]{0}', space=vmem, size = 0x20000, scoped, tag = 'input window, operand 7, single buffered']
    #allocation14 [shape = 'u8[262144]{0}', space=vmem, size = 0x40000, scoped, tag = 'input window, operand 11, single buffered']
    #allocation15 [shape = 's32[1]{0}', space=sflag, size = 0x4, scoped, tag = 'scoped memory for tpu_custom_call.1']
    #allocation16 [shape = 'u8[262144]{0}', space=vmem, size = 0x40000, scoped, tag = 'input window, operand 13, single buffered']
    #allocation17 [shape = 'u8[262144]{0}', space=vmem, size = 0x40000, scoped, tag = 'output window, operand 0']
    %20 = vsyncpa [#allocation3], 0
    %s21 = scalar_lea.sflag [#allocation3], 1
    %22 = vsyncpa %s21, 0
    %23 = vsyncpa [#allocation6], 0
    %24 = vsyncpa [#allocation9], 0
    %25 = vsyncpa [#allocation12], 0
    %26 = vsyncpa [#allocation15], 0
    %27 = vsyncpa [#allocation4], 0
    %s28 = scalar_lea.sflag [#allocation4], 1
    %29 = vsyncpa %s28, 0
    loop: start=0, step=1, limit=6
    $region2: #{tpu_custom_call.1} parent=1 // loop_pre_header
      _
    $region3: #{tpu_custom_call.1} parent=1 // loop_header
      %s31 = sphi 0, %s35
      %p32 = scmp.ge.s32.totalorder %s31, 6
      %s38 = sphi 0, %s50
      %s39 = sphi 0, %s46
      %s40 = sphi 0, %s38
      %s41 = sphi 0, %s39
      %s42 = sphi 0, %s40
      %s43 = sphi 0, %s41
      %s53 = sphi 0, %s55
      %s56 = sphi 0, %s53
      %s57 = sphi 0, %s56
      %s73 = sphi 0, %s57
      %s77 = sphi 0, %s77
      %s79 = sphi 0, %s77
      %s80 = sphi 0, %s79
      %s94 = sphi 0, %s80
      %s98 = sphi 0, %s98
      %s100 = sphi 0, %s98
      %s101 = sphi 0, %s100
      %s115 = sphi 0, %s101
      %s119 = sphi 0, %s119
      %s121 = sphi 0, %s119
      %s122 = sphi 0, %s121
      %s136 = sphi 0, %s122
      %s140 = sphi 0, %s140
      %s142 = sphi 0, %s140
      %s143 = sphi 0, %s142
      %s157 = sphi 0, %s143
      %s161 = sphi 0, %s161
      %s163 = sphi 0, %s161
      %s164 = sphi 0, %s163
      %s178 = sphi 0, %s164
      %s182 = sphi 0, %s182
      %s184 = sphi 0, %s182
      %s185 = sphi 0, %s184
      %s199 = sphi 0, %s185
      %s203 = sphi 0, %s203
      %s205 = sphi 0, %s203
      %s206 = sphi 0, %s205
      %s220 = sphi 0, %s206
      %s224 = sphi 0, %s224
      %s226 = sphi 0, %s224
      %s227 = sphi 0, %s226
      %s241 = sphi 0, %s227
      %s245 = sphi 0, %s245
      %s247 = sphi 0, %s245
      %s248 = sphi 0, %s247
      %s262 = sphi 0, %s248
      %s266 = sphi 0, %s266
      %s268 = sphi 0, %s266
      %s269 = sphi 0, %s268
      %s283 = sphi 0, %s269
      %s287 = sphi 0, %s287
      %s289 = sphi 0, %s287
      %s290 = sphi 0, %s289
      %s304 = sphi 0, %s290
      %s308 = sphi 0, %s308
      %s310 = sphi 0, %s308
      %s311 = sphi 0, %s310
      %s325 = sphi 0, %s311
      %s329 = sphi 0, %s329
      %s331 = sphi 0, %s329
      %s332 = sphi 0, %s331
      %s346 = sphi 0, %s332
      %s350 = sphi 0, %s350
      %s352 = sphi 0, %s350
      %s353 = sphi 0, %s352
      %s367 = sphi 0, %s353
      %s375 = sphi 0, %s377
      %s378 = sphi 0, %s375
      %s379 = sphi 0, %s378
      %s395 = sphi 0, %s379
    $region4: #{tpu_custom_call.1} parent=1 // loop_header_branch
      %34 = sbr.rel (%p32) target = $region8
    $region5: #{tpu_custom_call.1} parent=1 // loop_body
      %s36 = ssub.s32 %s31, 1
      %s37 = ssub.s32 %s31, 2
      %s44 = sadd.s32 1, %s39
      %p45 = scmp.ge.s32.totalorder %s44, 2
      %s46 = scalar_select %p45, 0, %s44
      %s47 = sadd.s32 1, %s38
      %s48 = scalar_select %p45, %s47, %s38
      %p49 = scmp.ge.s32.totalorder %s48, 2
      %s50 = scalar_select %p49, 0, %s48
      %s51 = ssub.s32 %s38, %s50
      %p52 = scmp.eq.s32.totalorder %s51, 0
      %s54 = sadd.s32 %s53, 1
      %s55 = scalar_select %p52, %s53, %s54
      %p58 = pneg %p52
      %p59 = scmp.eq.s32.totalorder %s31, 3
      %p60 = por %p58, %p59
      %p61 = scmp.ne.s32.totalorder %s53, %s56
      %p62 = scmp.eq.s32.totalorder %s31, 0
      %p63 = por %p61, %p62
      %p64 = scmp.ne.s32.totalorder %s53, %s56
      %p65 = scmp.eq.s32.totalorder %s36, 3
      %p66 = por %p64, %p65
      %p67 = scmp.ne.s32.totalorder %s56, %s57
      %p68 = scmp.eq.s32.totalorder %s36, 0
      %p69 = por %p67, %p68
      %p70 = scmp.ne.s32.totalorder %s56, %s57
      %p71 = scmp.eq.s32.totalorder %s37, 3
      %p72 = por %p70, %p71
      %p74 = scmp.ne.s32.totalorder %s57, %s73
      %p75 = scmp.eq.s32.totalorder %s37, 0
      %p76 = por %p74, %p75
      %s78 = sadd.s32 %s77, 1
      %p81 = scmp.eq.s32.totalorder %s31, 3
      %p82 = scmp.ne.s32.totalorder %s77, %s79
      %p83 = scmp.eq.s32.totalorder %s31, 0
      %p84 = por %p82, %p83
      %p85 = scmp.ne.s32.totalorder %s77, %s79
      %p86 = scmp.eq.s32.totalorder %s36, 3
      %p87 = por %p85, %p86
      %p88 = scmp.ne.s32.totalorder %s79, %s80
      %p89 = scmp.eq.s32.totalorder %s36, 0
      %p90 = por %p88, %p89
      %p91 = scmp.ne.s32.totalorder %s79, %s80
      %p92 = scmp.eq.s32.totalorder %s37, 3
      %p93 = por %p91, %p92
      %p95 = scmp.ne.s32.totalorder %s80, %s94
      %p96 = scmp.eq.s32.totalorder %s37, 0
      %p97 = por %p95, %p96
      %s99 = sadd.s32 %s98, 1
      %p102 = scmp.eq.s32.totalorder %s31, 3
      %p103 = scmp.ne.s32.totalorder %s98, %s100
      %p104 = scmp.eq.s32.totalorder %s31, 0
      %p105 = por %p103, %p104
      %p106 = scmp.ne.s32.totalorder %s98, %s100
      %p107 = scmp.eq.s32.totalorder %s36, 3
      %p108 = por %p106, %p107
      %p109 = scmp.ne.s32.totalorder %s100, %s101
      %p110 = scmp.eq.s32.totalorder %s36, 0
      %p111 = por %p109, %p110
      %p112 = scmp.ne.s32.totalorder %s100, %s101
      %p113 = scmp.eq.s32.totalorder %s37, 3
      %p114 = por %p112, %p113
      %p116 = scmp.ne.s32.totalorder %s101, %s115
      %p117 = scmp.eq.s32.totalorder %s37, 0
      %p118 = por %p116, %p117
      %s120 = sadd.s32 %s119, 1
      %p123 = scmp.eq.s32.totalorder %s31, 3
      %p124 = scmp.ne.s32.totalorder %s119, %s121
      %p125 = scmp.eq.s32.totalorder %s31, 0
      %p126 = por %p124, %p125
      %p127 = scmp.ne.s32.totalorder %s119, %s121
      %p128 = scmp.eq.s32.totalorder %s36, 3
      %p129 = por %p127, %p128
      %p130 = scmp.ne.s32.totalorder %s121, %s122
      %p131 = scmp.eq.s32.totalorder %s36, 0
      %p132 = por %p130, %p131
      %p133 = scmp.ne.s32.totalorder %s121, %s122
      %p134 = scmp.eq.s32.totalorder %s37, 3
      %p135 = por %p133, %p134
      %p137 = scmp.ne.s32.totalorder %s122, %s136
      %p138 = scmp.eq.s32.totalorder %s37, 0
      %p139 = por %p137, %p138
      %s141 = sadd.s32 %s140, 1
      %p144 = scmp.eq.s32.totalorder %s31, 3
      %p145 = scmp.ne.s32.totalorder %s140, %s142
      %p146 = scmp.eq.s32.totalorder %s31, 0
      %p147 = por %p145, %p146
      %p148 = scmp.ne.s32.totalorder %s140, %s142
      %p149 = scmp.eq.s32.totalorder %s36, 3
      %p150 = por %p148, %p149
      %p151 = scmp.ne.s32.totalorder %s142, %s143
      %p152 = scmp.eq.s32.totalorder %s36, 0
      %p153 = por %p151, %p152
      %p154 = scmp.ne.s32.totalorder %s142, %s143
      %p155 = scmp.eq.s32.totalorder %s37, 3
      %p156 = por %p154, %p155
      %p158 = scmp.ne.s32.totalorder %s143, %s157
      %p159 = scmp.eq.s32.totalorder %s37, 0
      %p160 = por %p158, %p159
      %s162 = sadd.s32 %s161, 1
      %p165 = scmp.eq.s32.totalorder %s31, 3
      %p166 = scmp.ne.s32.totalorder %s161, %s163
      %p167 = scmp.eq.s32.totalorder %s31, 0
      %p168 = por %p166, %p167
      %p169 = scmp.ne.s32.totalorder %s161, %s163
      %p170 = scmp.eq.s32.totalorder %s36, 3
      %p171 = por %p169, %p170
      %p172 = scmp.ne.s32.totalorder %s163, %s164
      %p173 = scmp.eq.s32.totalorder %s36, 0
      %p174 = por %p172, %p173
      %p175 = scmp.ne.s32.totalorder %s163, %s164
      %p176 = scmp.eq.s32.totalorder %s37, 3
      %p177 = por %p175, %p176
      %p179 = scmp.ne.s32.totalorder %s164, %s178
      %p180 = scmp.eq.s32.totalorder %s37, 0
      %p181 = por %p179, %p180
      %s183 = sadd.s32 %s182, 1
      %p186 = scmp.eq.s32.totalorder %s31, 3
      %p187 = scmp.ne.s32.totalorder %s182, %s184
      %p188 = scmp.eq.s32.totalorder %s31, 0
      %p189 = por %p187, %p188
      %p190 = scmp.ne.s32.totalorder %s182, %s184
      %p191 = scmp.eq.s32.totalorder %s36, 3
      %p192 = por %p190, %p191
      %p193 = scmp.ne.s32.totalorder %s184, %s185
      %p194 = scmp.eq.s32.totalorder %s36, 0
      %p195 = por %p193, %p194
      %p196 = scmp.ne.s32.totalorder %s184, %s185
      %p197 = scmp.eq.s32.totalorder %s37, 3
      %p198 = por %p196, %p197
      %p200 = scmp.ne.s32.totalorder %s185, %s199
      %p201 = scmp.eq.s32.totalorder %s37, 0
      %p202 = por %p200, %p201
      %s204 = sadd.s32 %s203, 1
      %p207 = scmp.eq.s32.totalorder %s31, 3
      %p208 = scmp.ne.s32.totalorder %s203, %s205
      %p209 = scmp.eq.s32.totalorder %s31, 0
      %p210 = por %p208, %p209
      %p211 = scmp.ne.s32.totalorder %s203, %s205
      %p212 = scmp.eq.s32.totalorder %s36, 3
      %p213 = por %p211, %p212
      %p214 = scmp.ne.s32.totalorder %s205, %s206
      %p215 = scmp.eq.s32.totalorder %s36, 0
      %p216 = por %p214, %p215
      %p217 = scmp.ne.s32.totalorder %s205, %s206
      %p218 = scmp.eq.s32.totalorder %s37, 3
      %p219 = por %p217, %p218
      %p221 = scmp.ne.s32.totalorder %s206, %s220
      %p222 = scmp.eq.s32.totalorder %s37, 0
      %p223 = por %p221, %p222
      %s225 = sadd.s32 %s224, 1
      %p228 = scmp.eq.s32.totalorder %s31, 3
      %p229 = scmp.ne.s32.totalorder %s224, %s226
      %p230 = scmp.eq.s32.totalorder %s31, 0
      %p231 = por %p229, %p230
      %p232 = scmp.ne.s32.totalorder %s224, %s226
      %p233 = scmp.eq.s32.totalorder %s36, 3
      %p234 = por %p232, %p233
      %p235 = scmp.ne.s32.totalorder %s226, %s227
      %p236 = scmp.eq.s32.totalorder %s36, 0
      %p237 = por %p235, %p236
      %p238 = scmp.ne.s32.totalorder %s226, %s227
      %p239 = scmp.eq.s32.totalorder %s37, 3
      %p240 = por %p238, %p239
      %p242 = scmp.ne.s32.totalorder %s227, %s241
      %p243 = scmp.eq.s32.totalorder %s37, 0
      %p244 = por %p242, %p243
      %s246 = sadd.s32 %s245, 1
      %p249 = scmp.eq.s32.totalorder %s31, 3
      %p250 = scmp.ne.s32.totalorder %s245, %s247
      %p251 = scmp.eq.s32.totalorder %s31, 0
      %p252 = por %p250, %p251
      %p253 = scmp.ne.s32.totalorder %s245, %s247
      %p254 = scmp.eq.s32.totalorder %s36, 3
      %p255 = por %p253, %p254
      %p256 = scmp.ne.s32.totalorder %s247, %s248
      %p257 = scmp.eq.s32.totalorder %s36, 0
      %p258 = por %p256, %p257
      %p259 = scmp.ne.s32.totalorder %s247, %s248
      %p260 = scmp.eq.s32.totalorder %s37, 3
      %p261 = por %p259, %p260
      %p263 = scmp.ne.s32.totalorder %s248, %s262
      %p264 = scmp.eq.s32.totalorder %s37, 0
      %p265 = por %p263, %p264
      %s267 = sadd.s32 %s266, 1
      %p270 = scmp.eq.s32.totalorder %s31, 3
      %p271 = scmp.ne.s32.totalorder %s266, %s268
      %p272 = scmp.eq.s32.totalorder %s31, 0
      %p273 = por %p271, %p272
      %p274 = scmp.ne.s32.totalorder %s266, %s268
      %p275 = scmp.eq.s32.totalorder %s36, 3
      %p276 = por %p274, %p275
      %p277 = scmp.ne.s32.totalorder %s268, %s269
      %p278 = scmp.eq.s32.totalorder %s36, 0
      %p279 = por %p277, %p278
      %p280 = scmp.ne.s32.totalorder %s268, %s269
      %p281 = scmp.eq.s32.totalorder %s37, 3
      %p282 = por %p280, %p281
      %p284 = scmp.ne.s32.totalorder %s269, %s283
      %p285 = scmp.eq.s32.totalorder %s37, 0
      %p286 = por %p284, %p285
      %s288 = sadd.s32 %s287, 1
      %p291 = scmp.eq.s32.totalorder %s31, 3
      %p292 = scmp.ne.s32.totalorder %s287, %s289
      %p293 = scmp.eq.s32.totalorder %s31, 0
      %p294 = por %p292, %p293
      %p295 = scmp.ne.s32.totalorder %s287, %s289
      %p296 = scmp.eq.s32.totalorder %s36, 3
      %p297 = por %p295, %p296
      %p298 = scmp.ne.s32.totalorder %s289, %s290
      %p299 = scmp.eq.s32.totalorder %s36, 0
      %p300 = por %p298, %p299
      %p301 = scmp.ne.s32.totalorder %s289, %s290
      %p302 = scmp.eq.s32.totalorder %s37, 3
      %p303 = por %p301, %p302
      %p305 = scmp.ne.s32.totalorder %s290, %s304
      %p306 = scmp.eq.s32.totalorder %s37, 0
      %p307 = por %p305, %p306
      %s309 = sadd.s32 %s308, 1
      %p312 = scmp.eq.s32.totalorder %s31, 3
      %p313 = scmp.ne.s32.totalorder %s308, %s310
      %p314 = scmp.eq.s32.totalorder %s31, 0
      %p315 = por %p313, %p314
      %p316 = scmp.ne.s32.totalorder %s308, %s310
      %p317 = scmp.eq.s32.totalorder %s36, 3
      %p318 = por %p316, %p317
      %p319 = scmp.ne.s32.totalorder %s310, %s311
      %p320 = scmp.eq.s32.totalorder %s36, 0
      %p321 = por %p319, %p320
      %p322 = scmp.ne.s32.totalorder %s310, %s311
      %p323 = scmp.eq.s32.totalorder %s37, 3
      %p324 = por %p322, %p323
      %p326 = scmp.ne.s32.totalorder %s311, %s325
      %p327 = scmp.eq.s32.totalorder %s37, 0
      %p328 = por %p326, %p327
      %s330 = sadd.s32 %s329, 1
      %p333 = scmp.eq.s32.totalorder %s31, 3
      %p334 = scmp.ne.s32.totalorder %s329, %s331
      %p335 = scmp.eq.s32.totalorder %s31, 0
      %p336 = por %p334, %p335
      %p337 = scmp.ne.s32.totalorder %s329, %s331
      %p338 = scmp.eq.s32.totalorder %s36, 3
      %p339 = por %p337, %p338
      %p340 = scmp.ne.s32.totalorder %s331, %s332
      %p341 = scmp.eq.s32.totalorder %s36, 0
      %p342 = por %p340, %p341
      %p343 = scmp.ne.s32.totalorder %s331, %s332
      %p344 = scmp.eq.s32.totalorder %s37, 3
      %p345 = por %p343, %p344
      %p347 = scmp.ne.s32.totalorder %s332, %s346
      %p348 = scmp.eq.s32.totalorder %s37, 0
      %p349 = por %p347, %p348
      %s351 = sadd.s32 %s350, 1
      %p354 = scmp.eq.s32.totalorder %s31, 3
      %p355 = scmp.ne.s32.totalorder %s350, %s352
      %p356 = scmp.eq.s32.totalorder %s31, 0
      %p357 = por %p355, %p356
      %p358 = scmp.ne.s32.totalorder %s350, %s352
      %p359 = scmp.eq.s32.totalorder %s36, 3
      %p360 = por %p358, %p359
      %p361 = scmp.ne.s32.totalorder %s352, %s353
      %p362 = scmp.eq.s32.totalorder %s36, 0
      %p363 = por %p361, %p362
      %p364 = scmp.ne.s32.totalorder %s352, %s353
      %p365 = scmp.eq.s32.totalorder %s37, 3
      %p366 = por %p364, %p365
      %p368 = scmp.ne.s32.totalorder %s353, %s367
      %p369 = scmp.eq.s32.totalorder %s37, 0
      %p370 = por %p368, %p369
      %s371 = ssub.s32 %s38, %s50
      %s372 = ssub.s32 %s39, %s46
      %s373 = sor.u32 %s371, %s372
      %p374 = scmp.eq.s32.totalorder %s373, 0
      %s376 = sadd.s32 %s375, 1
      %s377 = scalar_select %p374, %s375, %s376
      %p380 = pneg %p374
      %p381 = scmp.eq.s32.totalorder %s31, 3
      %p382 = por %p380, %p381
      %p383 = scmp.ne.s32.totalorder %s375, %s378
      %p384 = scmp.eq.s32.totalorder %s31, 0
      %p385 = por %p383, %p384
      %p386 = scmp.ne.s32.totalorder %s375, %s378
      %p387 = scmp.eq.s32.totalorder %s36, 3
      %p388 = por %p386, %p387
      %p389 = scmp.ne.s32.totalorder %s378, %s379
      %p390 = scmp.eq.s32.totalorder %s36, 0
      %p391 = por %p389, %p390
      %p392 = scmp.ne.s32.totalorder %s378, %s379
      %p393 = scmp.eq.s32.totalorder %s37, 3
      %p394 = por %p392, %p393
      %p396 = scmp.ne.s32.totalorder %s379, %s395
      %p397 = scmp.eq.s32.totalorder %s37, 0
      %p398 = por %p396, %p397
      %p399 = scmp.le.s32.totalorder 1, %s31
      %p400 = scmp.lt.s32.totalorder %s31, 5
      %p401 = pnand %p399, %p400
      %p402 = pneg %p401
      // Predicated region
      $region9: #{tpu_custom_call.1} parent=5 // pred_check
        _
      $region10: #{tpu_custom_call.1} parent=5 // pred_check_branch
        %404 = sbr.rel (%p401) target = $region12
      $region11: #{tpu_custom_call.1} parent=5 // pred_region
        %s405 = ssub.s32 %s31, 1
        // Predicated region
        $region13: #{tpu_custom_call.1} parent=11 // pred_check
          %p406 = pneg %p90
        $region14: #{tpu_custom_call.1} parent=11 // pred_check_branch
          %408 = sbr.rel (%p406) target = $region16
        $region15: #{tpu_custom_call.1} parent=11 // pred_region
          %s410 = ssub.s32 32, 32
          %411 = vsyncadd [#allocation6], %s410
          %s413 = sshll.u32 [#allocation5], 4
          %s414 = int_to_ptr.vmem [resolvable:$true] %s413
          %416 = dma.hbm_to_vmem [thread:$0]  %s1, 32, %s414, [#allocation6]
        $region16: #{tpu_custom_call.1} parent=11 // pred_fallthru
          _
        // Predicated region
        $region17: #{tpu_custom_call.1} parent=11 // pred_check
          %p417 = pneg %p111
        $region18: #{tpu_custom_call.1} parent=11 // pred_check_branch
          %419 = sbr.rel (%p417) target = $region20
        $region19: #{tpu_custom_call.1} parent=11 // pred_region
          %s421 = ssub.s32 32, 32
          %422 = vsyncadd [#allocation6], %s421
          %s424 = sshll.u32 [#allocation7], 4
          %s425 = int_to_ptr.vmem [resolvable:$true] %s424
          %427 = dma.hbm_to_vmem [thread:$0]  %s2, 32, %s425, [#allocation6]
        $region20: #{tpu_custom_call.1} parent=11 // pred_fallthru
          _
        // Predicated region
        $region21: #{tpu_custom_call.1} parent=11 // pred_check
          %p428 = pneg %p132
        $region22: #{tpu_custom_call.1} parent=11 // pred_check_branch
          %430 = sbr.rel (%p428) target = $region24
        $region23: #{tpu_custom_call.1} parent=11 // pred_region
          %s432 = ssub.s32 4096, 4096
          %433 = vsyncadd [#allocation9], %s432
          %s434 = sshll.u32 [#allocation8], 4
          %s435 = int_to_ptr.vmem [resolvable:$true] %s434
          %440 = dma.hbm_to_vmem [thread:$0]  %s3, 4096, %s435, [#allocation9], 128, 128, 8
        $region24: #{tpu_custom_call.1} parent=11 // pred_fallthru
          _
        // Predicated region
        $region25: #{tpu_custom_call.1} parent=11 // pred_check
          %p441 = pneg %p153
        $region26: #{tpu_custom_call.1} parent=11 // pred_check_branch
          %443 = sbr.rel (%p441) target = $region28
        $region27: #{tpu_custom_call.1} parent=11 // pred_region
          %s445 = ssub.s32 32, 32
          %446 = vsyncadd [#allocation9], %s445
          %s448 = sshll.u32 [#allocation10], 4
          %s449 = int_to_ptr.vmem [resolvable:$true] %s448
          %451 = dma.hbm_to_vmem [thread:$0]  %s4, 32, %s449, [#allocation9]
        $region28: #{tpu_custom_call.1} parent=11 // pred_fallthru
          _
        // Predicated region
        $region29: #{tpu_custom_call.1} parent=11 // pred_check
          %p452 = pneg %p174
        $region30: #{tpu_custom_call.1} parent=11 // pred_check_branch
          %454 = sbr.rel (%p452) target = $region32
        $region31: #{tpu_custom_call.1} parent=11 // pred_region
          %s456 = ssub.s32 8192, 8192
          %457 = vsyncadd [#allocation12], %s456
          %s458 = sshll.u32 [#allocation11], 4
          %s459 = int_to_ptr.vmem [resolvable:$true] %s458
          %464 = dma.hbm_to_vmem [thread:$0]  %s5, 8192, %s459, [#allocation12], 256, 256, 16
        $region32: #{tpu_custom_call.1} parent=11 // pred_fallthru
          _
        // Predicated region
        $region33: #{tpu_custom_call.1} parent=11 // pred_check
          %p465 = pneg %p195
        $region34: #{tpu_custom_call.1} parent=11 // pred_check_branch
          %467 = sbr.rel (%p465) target = $region36
        $region35: #{tpu_custom_call.1} parent=11 // pred_region
          _
        $region36: #{tpu_custom_call.1} parent=11 // pred_fallthru
          _
        // Predicated region
        $region37: #{tpu_custom_call.1} parent=11 // pred_check
          %p468 = pneg %p216
        $region38: #{tpu_custom_call.1} parent=11 // pred_check_branch
          %470 = sbr.rel (%p468) target = $region40
        $region39: #{tpu_custom_call.1} parent=11 // pred_region
          %s472 = ssub.s32 4096, 4096
          %473 = vsyncadd [#allocation12], %s472
          %s474 = sshll.u32 [#allocation13], 4
          %s475 = int_to_ptr.vmem [resolvable:$true] %s474
          %480 = dma.hbm_to_vmem [thread:$0]  %s7, 4096, %s475, [#allocation12], 128, 128, 8
        $region40: #{tpu_custom_call.1} parent=11 // pred_fallthru
          _
        // Predicated region
        $region41: #{tpu_custom_call.1} parent=11 // pred_check
          %p481 = pneg %p237
        $region42: #{tpu_custom_call.1} parent=11 // pred_check_branch
          %483 = sbr.rel (%p481) target = $region44
        $region43: #{tpu_custom_call.1} parent=11 // pred_region
          _
        $region44: #{tpu_custom_call.1} parent=11 // pred_fallthru
          _
        // Predicated region
        $region45: #{tpu_custom_call.1} parent=11 // pred_check
          %p484 = pneg %p258
        $region46: #{tpu_custom_call.1} parent=11 // pred_check_branch
          %486 = sbr.rel (%p484) target = $region48
        $region47: #{tpu_custom_call.1} parent=11 // pred_region
          _
        $region48: #{tpu_custom_call.1} parent=11 // pred_fallthru
          _
        // Predicated region
        $region49: #{tpu_custom_call.1} parent=11 // pred_check
          %p487 = pneg %p279
        $region50: #{tpu_custom_call.1} parent=11 // pred_check_branch
          %489 = sbr.rel (%p487) target = $region52
        $region51: #{tpu_custom_call.1} parent=11 // pred_region
          _
        $region52: #{tpu_custom_call.1} parent=11 // pred_fallthru
          _
        // Predicated region
        $region53: #{tpu_custom_call.1} parent=11 // pred_check
          %p490 = pneg %p300
        $region54: #{tpu_custom_call.1} parent=11 // pred_check_branch
          %492 = sbr.rel (%p490) target = $region56
        $region55: #{tpu_custom_call.1} parent=11 // pred_region
          %s494 = ssub.s32 8192, 8192
          %495 = vsyncadd [#allocation15], %s494
          %s496 = sshll.u32 [#allocation14], 4
          %s497 = int_to_ptr.vmem [resolvable:$true] %s496
          %502 = dma.hbm_to_vmem [thread:$0]  %s11, 8192, %s497, [#allocation15], 256, 256, 16
        $region56: #{tpu_custom_call.1} parent=11 // pred_fallthru
          _
        // Predicated region
        $region57: #{tpu_custom_call.1} parent=11 // pred_check
          %p503 = pneg %p321
        $region58: #{tpu_custom_call.1} parent=11 // pred_check_branch
          %505 = sbr.rel (%p503) target = $region60
        $region59: #{tpu_custom_call.1} parent=11 // pred_region
          _
        $region60: #{tpu_custom_call.1} parent=11 // pred_fallthru
          _
        // Predicated region
        $region61: #{tpu_custom_call.1} parent=11 // pred_check
          %p506 = pneg %p342
        $region62: #{tpu_custom_call.1} parent=11 // pred_check_branch
          %508 = sbr.rel (%p506) target = $region64
        $region63: #{tpu_custom_call.1} parent=11 // pred_region
          %s510 = ssub.s32 8192, 8192
          %511 = vsyncadd [#allocation15], %s510
          %s512 = sshll.u32 [#allocation16], 4
          %s513 = int_to_ptr.vmem [resolvable:$true] %s512
          %518 = dma.hbm_to_vmem [thread:$0]  %s13, 8192, %s513, [#allocation15], 128, 128, 8
        $region64: #{tpu_custom_call.1} parent=11 // pred_fallthru
          _
        // Predicated region
        $region65: #{tpu_custom_call.1} parent=11 // pred_check
          %p519 = pneg %p363
        $region66: #{tpu_custom_call.1} parent=11 // pred_check_branch
          %521 = sbr.rel (%p519) target = $region68
        $region67: #{tpu_custom_call.1} parent=11 // pred_region
          _
        $region68: #{tpu_custom_call.1} parent=11 // pred_fallthru
          _
      $region12: #{tpu_custom_call.1} parent=5 // pred_fallthru
        _
      %p522 = scmp.lt.s32.totalorder %s31, 4
      // Predicated region
      $region69: #{tpu_custom_call.1} parent=5 // pred_check
        %p523 = pneg %p522
      $region70: #{tpu_custom_call.1} parent=5 // pred_check_branch
        %525 = sbr.rel (%p523) target = $region72
      $region71: #{tpu_custom_call.1} parent=5 // pred_region
        // Predicated region
        $region73: #{tpu_custom_call.1} parent=71 // pred_check
          %p526 = pneg %p63
        $region74: #{tpu_custom_call.1} parent=71 // pred_check_branch
          %528 = sbr.rel (%p526) target = $region76
        $region75: #{tpu_custom_call.1} parent=71 // pred_region
          %s529 = sand.u32 %s53, 1
          %s530 = scalar_lea.sflag [#allocation3], %s529
          %s531 = sand.u32 %s53, 1
          %s532 = smul.addr %s531, 512
          %s533 = scalar_lea.vmem [#allocation2], %s532
          %s535 = ssub.s32 8192, 8192
          %536 = vsyncadd %s530, %s535
          %s537 = smul.addr %s38, 64
          %s538 = smul.addr %s537, 128
          %s539 = scalar_lea.hbm %s0, %s538
          %s540 = sshll.u32 %s533, 4
          %s541 = int_to_ptr.vmem [resolvable:$true] %s540
          %546 = dma.hbm_to_vmem [thread:$0]  %s539, 8192, %s541, %s530, 256, 256, 16
        $region76: #{tpu_custom_call.1} parent=71 // pred_fallthru
          _
      $region72: #{tpu_custom_call.1} parent=5 // pred_fallthru
        _
      %p547 = scmp.le.s32.totalorder 1, %s31
      %p548 = scmp.lt.s32.totalorder %s31, 5
      %p549 = pnand %p547, %p548
      %p550 = pneg %p549
      // Predicated region
      $region77: #{tpu_custom_call.1} parent=5 // pred_check
        _
      $region78: #{tpu_custom_call.1} parent=5 // pred_check_branch
        %552 = sbr.rel (%p549) target = $region80
      $region79: #{tpu_custom_call.1} parent=5 // pred_region
        %s553 = ssub.s32 %s31, 1
        %s554 = sand.u32 %s56, 1
        %s555 = scalar_lea.sflag [#allocation3], %s554
        %s556 = sand.u32 %s56, 1
        %s557 = smul.addr %s556, 512
        %s558 = scalar_lea.vmem [#allocation2], %s557
        // Predicated region
        $region81: #{tpu_custom_call.1} parent=79 // pred_check
          %p559 = pneg %p69
        $region82: #{tpu_custom_call.1} parent=79 // pred_check_branch
          %561 = sbr.rel (%p559) target = $region84
        $region83: #{tpu_custom_call.1} parent=79 // pred_region
          %562 = dma.done %s555, 8192
        $region84: #{tpu_custom_call.1} parent=79 // pred_fallthru
          _
        // Predicated region
        $region85: #{tpu_custom_call.1} parent=79 // pred_check
          %p563 = pneg %p90
        $region86: #{tpu_custom_call.1} parent=79 // pred_check_branch
          %565 = sbr.rel (%p563) target = $region88
        $region87: #{tpu_custom_call.1} parent=79 // pred_region
          %566 = dma.done [#allocation6], 32
        $region88: #{tpu_custom_call.1} parent=79 // pred_fallthru
          _
        // Predicated region
        $region89: #{tpu_custom_call.1} parent=79 // pred_check
          %p567 = pneg %p111
        $region90: #{tpu_custom_call.1} parent=79 // pred_check_branch
          %569 = sbr.rel (%p567) target = $region92
        $region91: #{tpu_custom_call.1} parent=79 // pred_region
          %570 = dma.done [#allocation6], 32
        $region92: #{tpu_custom_call.1} parent=79 // pred_fallthru
          _
        // Predicated region
        $region93: #{tpu_custom_call.1} parent=79 // pred_check
          %p571 = pneg %p132
        $region94: #{tpu_custom_call.1} parent=79 // pred_check_branch
          %573 = sbr.rel (%p571) target = $region96
        $region95: #{tpu_custom_call.1} parent=79 // pred_region
          %574 = dma.done [#allocation9], 4096
        $region96: #{tpu_custom_call.1} parent=79 // pred_fallthru
          _
        // Predicated region
        $region97: #{tpu_custom_call.1} parent=79 // pred_check
          %p575 = pneg %p153
        $region98: #{tpu_custom_call.1} parent=79 // pred_check_branch
          %577 = sbr.rel (%p575) target = $region100
        $region99: #{tpu_custom_call.1} parent=79 // pred_region
          %578 = dma.done [#allocation9], 32
        $region100: #{tpu_custom_call.1} parent=79 // pred_fallthru
          _
        // Predicated region
        $region101: #{tpu_custom_call.1} parent=79 // pred_check
          %p579 = pneg %p174
        $region102: #{tpu_custom_call.1} parent=79 // pred_check_branch
          %581 = sbr.rel (%p579) target = $region104
        $region103: #{tpu_custom_call.1} parent=79 // pred_region
          %582 = dma.done [#allocation12], 8192
        $region104: #{tpu_custom_call.1} parent=79 // pred_fallthru
          _
        // Predicated region
        $region105: #{tpu_custom_call.1} parent=79 // pred_check
          %p583 = pneg %p216
        $region106: #{tpu_custom_call.1} parent=79 // pred_check_branch
          %585 = sbr.rel (%p583) target = $region108
        $region107: #{tpu_custom_call.1} parent=79 // pred_region
          %586 = dma.done [#allocation12], 4096
        $region108: #{tpu_custom_call.1} parent=79 // pred_fallthru
          _
        // Predicated region
        $region109: #{tpu_custom_call.1} parent=79 // pred_check
          %p587 = pneg %p300
        $region110: #{tpu_custom_call.1} parent=79 // pred_check_branch
          %589 = sbr.rel (%p587) target = $region112
        $region111: #{tpu_custom_call.1} parent=79 // pred_region
          %590 = dma.done [#allocation15], 8192
        $region112: #{tpu_custom_call.1} parent=79 // pred_fallthru
          _
        // Predicated region
        $region113: #{tpu_custom_call.1} parent=79 // pred_check
          %p591 = pneg %p342
        $region114: #{tpu_custom_call.1} parent=79 // pred_check_branch
          %593 = sbr.rel (%p591) target = $region116
        $region115: #{tpu_custom_call.1} parent=79 // pred_region
          %594 = dma.done [#allocation15], 8192
        $region116: #{tpu_custom_call.1} parent=79 // pred_fallthru
          _
        %s595 = sand.u32 %s56, 1
        %s596 = scalar_lea.sflag [#allocation3], %s595
        %s597 = sand.u32 %s56, 1
        %s598 = smul.addr %s597, 512
        %s599 = scalar_lea.vmem [#allocation2], %s598
        %p600 = pneg %p69
        %p601 = pneg %p66
        %p602 = pneg %p90
        %p603 = pneg %p87
        %p604 = pneg %p111
        %p605 = pneg %p108
        %p606 = pneg %p132
        %p607 = pneg %p129
        %p608 = pneg %p153
        %p609 = pneg %p150
        %p610 = pneg %p174
        %p611 = pneg %p171
        %p612 = pneg %p195
        %p613 = pneg %p192
        %p614 = pneg %p216
        %p615 = pneg %p213
        %p616 = pneg %p237
        %p617 = pneg %p234
        %p618 = pneg %p258
        %p619 = pneg %p255
        %p620 = pneg %p279
        %p621 = pneg %p276
        %p622 = pneg %p300
        %p623 = pneg %p297
        %p624 = pneg %p321
        %p625 = pneg %p318
        %p626 = pneg %p342
        %p627 = pneg %p339
        %p628 = pneg %p363
        %p629 = pneg %p360
        %p630 = pneg %p391
        %p631 = pneg %p388
        %s632 = sand.u32 %s378, 1
        %s633 = scalar_lea.sflag [#allocation4], %s632
        %s634 = sand.u32 %s378, 1
        %s635 = smul.addr %s634, 256
        %s636 = scalar_lea.vmem [#allocation17], %s635
        %s637 = smul.u32 16, %s41
        %s639 = smul.u32 %s41, 128
        %v640 = vld [vmem:[%s558] sm:$0xff]
        %v641 = vld [vmem:[%s558 + $0x8] sm:$0xff]
        %v642 = vld [vmem:[%s558 + $0x10] sm:$0xff]
        %v643 = vld [vmem:[%s558 + $0x18] sm:$0xff]
        %v644 = vld [vmem:[%s558 + $0x20] sm:$0xff]
        %v645 = vld [vmem:[%s558 + $0x28] sm:$0xff]
        %v646 = vld [vmem:[%s558 + $0x30] sm:$0xff]
        %v647 = vld [vmem:[%s558 + $0x38] sm:$0xff]
        %v648 = vld [vmem:[%s558 + $0x40] sm:$0xff]
        %v649 = vld [vmem:[%s558 + $0x48] sm:$0xff]
        %v650 = vld [vmem:[%s558 + $0x50] sm:$0xff]
        %v651 = vld [vmem:[%s558 + $0x58] sm:$0xff]
        %v652 = vld [vmem:[%s558 + $0x60] sm:$0xff]
        %v653 = vld [vmem:[%s558 + $0x68] sm:$0xff]
        %v654 = vld [vmem:[%s558 + $0x70] sm:$0xff]
        %v655 = vld [vmem:[%s558 + $0x78] sm:$0xff]
        %v656 = vld [vmem:[%s558 + $0x80] sm:$0xff]
        %v657 = vld [vmem:[%s558 + $0x88] sm:$0xff]
        %v658 = vld [vmem:[%s558 + $0x90] sm:$0xff]
        %v659 = vld [vmem:[%s558 + $0x98] sm:$0xff]
        %v660 = vld [vmem:[%s558 + $0xa0] sm:$0xff]
        %v661 = vld [vmem:[%s558 + $0xa8] sm:$0xff]
        %v662 = vld [vmem:[%s558 + $0xb0] sm:$0xff]
        %v663 = vld [vmem:[%s558 + $0xb8] sm:$0xff]
        %v664 = vld [vmem:[%s558 + $0xc0] sm:$0xff]
        %v665 = vld [vmem:[%s558 + $0xc8] sm:$0xff]
        %v666 = vld [vmem:[%s558 + $0xd0] sm:$0xff]
        %v667 = vld [vmem:[%s558 + $0xd8] sm:$0xff]
        %v668 = vld [vmem:[%s558 + $0xe0] sm:$0xff]
        %v669 = vld [vmem:[%s558 + $0xe8] sm:$0xff]
        %v670 = vld [vmem:[%s558 + $0xf0] sm:$0xff]
        %v671 = vld [vmem:[%s558 + $0xf8] sm:$0xff]
        %v672 = vld [vmem:[%s558 + $0x100] sm:$0xff]
        %v673 = vld [vmem:[%s558 + $0x108] sm:$0xff]
        %v674 = vld [vmem:[%s558 + $0x110] sm:$0xff]
        %v675 = vld [vmem:[%s558 + $0x118] sm:$0xff]
        %v676 = vld [vmem:[%s558 + $0x120] sm:$0xff]
        %v677 = vld [vmem:[%s558 + $0x128] sm:$0xff]
        %v678 = vld [vmem:[%s558 + $0x130] sm:$0xff]
        %v679 = vld [vmem:[%s558 + $0x138] sm:$0xff]
        %v680 = vld [vmem:[%s558 + $0x140] sm:$0xff]
        %v681 = vld [vmem:[%s558 + $0x148] sm:$0xff]
        %v682 = vld [vmem:[%s558 + $0x150] sm:$0xff]
        %v683 = vld [vmem:[%s558 + $0x158] sm:$0xff]
        %v684 = vld [vmem:[%s558 + $0x160] sm:$0xff]
        %v685 = vld [vmem:[%s558 + $0x168] sm:$0xff]
        %v686 = vld [vmem:[%s558 + $0x170] sm:$0xff]
        %v687 = vld [vmem:[%s558 + $0x178] sm:$0xff]
        %v688 = vld [vmem:[%s558 + $0x180] sm:$0xff]
        %v689 = vld [vmem:[%s558 + $0x188] sm:$0xff]
        %v690 = vld [vmem:[%s558 + $0x190] sm:$0xff]
        %v691 = vld [vmem:[%s558 + $0x198] sm:$0xff]
        %v692 = vld [vmem:[%s558 + $0x1a0] sm:$0xff]
        %v693 = vld [vmem:[%s558 + $0x1a8] sm:$0xff]
        %v694 = vld [vmem:[%s558 + $0x1b0] sm:$0xff]
        %v695 = vld [vmem:[%s558 + $0x1b8] sm:$0xff]
        %v696 = vld [vmem:[%s558 + $0x1c0] sm:$0xff]
        %v697 = vld [vmem:[%s558 + $0x1c8] sm:$0xff]
        %v698 = vld [vmem:[%s558 + $0x1d0] sm:$0xff]
        %v699 = vld [vmem:[%s558 + $0x1d8] sm:$0xff]
        %v700 = vld [vmem:[%s558 + $0x1e0] sm:$0xff]
        %v701 = vld [vmem:[%s558 + $0x1e8] sm:$0xff]
        %v702 = vld [vmem:[%s558 + $0x1f0] sm:$0xff]
        %v703 = vld [vmem:[%s558 + $0x1f8] sm:$0xff]
        %s704 = sshra.s32 %s639, 3
        %s705 = sand.u32 %s639, 7
        %s706 = smul.u32 %s704, 2
        %s707 = smul.addr %s706, 8
        %s708 = scalar_lea.vmem %s558, %s707 [#allocation2]
        %v709 = vld [vmem:[%s708] sm:$0xff]
        %v710 = vld [vmem:[%s708 + $0x8] sm:$0xff]
        %v711 = vld [vmem:[%s708 + $0x10] sm:$0xff]
        %v712 = vld [vmem:[%s708 + $0x18] sm:$0xff]
        %v713 = vld [vmem:[%s708 + $0x20] sm:$0xff]
        %v714 = vld [vmem:[%s708 + $0x28] sm:$0xff]
        %v715 = vld [vmem:[%s708 + $0x30] sm:$0xff]
        %v716 = vld [vmem:[%s708 + $0x38] sm:$0xff]
        %v717 = vld [vmem:[%s708 + $0x40] sm:$0xff]
        %v718 = vld [vmem:[%s708 + $0x48] sm:$0xff]
        %v719 = vld [vmem:[%s708 + $0x50] sm:$0xff]
        %v720 = vld [vmem:[%s708 + $0x58] sm:$0xff]
        %v721 = vld [vmem:[%s708 + $0x60] sm:$0xff]
        %v722 = vld [vmem:[%s708 + $0x68] sm:$0xff]
        %v723 = vld [vmem:[%s708 + $0x70] sm:$0xff]
        %v724 = vld [vmem:[%s708 + $0x78] sm:$0xff]
        %v725 = vld [vmem:[%s708 + $0x80] sm:$0xff]
        %v726 = vld [vmem:[%s708 + $0x88] sm:$0xff]
        %v727 = vld [vmem:[%s708 + $0x90] sm:$0xff]
        %v728 = vld [vmem:[%s708 + $0x98] sm:$0xff]
        %v729 = vld [vmem:[%s708 + $0xa0] sm:$0xff]
        %v730 = vld [vmem:[%s708 + $0xa8] sm:$0xff]
        %v731 = vld [vmem:[%s708 + $0xb0] sm:$0xff]
        %v732 = vld [vmem:[%s708 + $0xb8] sm:$0xff]
        %v733 = vld [vmem:[%s708 + $0xc0] sm:$0xff]
        %v734 = vld [vmem:[%s708 + $0xc8] sm:$0xff]
        %v735 = vld [vmem:[%s708 + $0xd0] sm:$0xff]
        %v736 = vld [vmem:[%s708 + $0xd8] sm:$0xff]
        %v737 = vld [vmem:[%s708 + $0xe0] sm:$0xff]
        %v738 = vld [vmem:[%s708 + $0xe8] sm:$0xff]
        %v739 = vld [vmem:[%s708 + $0xf0] sm:$0xff]
        %v740 = vld [vmem:[%s708 + $0xf8] sm:$0xff]
        %v741 = vld [vmem:[#allocation5] sm:$0x3]
        %v742 = vld [vmem:[#allocation7] sm:$0x3]
        %v743 = vadd.f32 %v640, %v641
        %744 = vadd.xlane.f32.xlu0 %v743
        %v745 = vpop.xlane.xlu0 %744
        %v746 = vadd.f32 %v642, %v643
        %747 = vadd.xlane.f32.xlu0 %v746
        %v748 = vpop.xlane.xlu0 %747
        %v749 = vadd.f32 %v644, %v645
        %750 = vadd.xlane.f32.xlu0 %v749
        %v751 = vpop.xlane.xlu0 %750
        %v752 = vadd.f32 %v646, %v647
        %753 = vadd.xlane.f32.xlu0 %v752
        %v754 = vpop.xlane.xlu0 %753
        %v755 = vadd.f32 %v648, %v649
        %756 = vadd.xlane.f32.xlu0 %v755
        %v757 = vpop.xlane.xlu0 %756
        %v758 = vadd.f32 %v650, %v651
        %759 = vadd.xlane.f32.xlu0 %v758
        %v760 = vpop.xlane.xlu0 %759
        %v761 = vadd.f32 %v652, %v653
        %762 = vadd.xlane.f32.xlu0 %v761
        %v763 = vpop.xlane.xlu0 %762
        %v764 = vadd.f32 %v654, %v655
        %765 = vadd.xlane.f32.xlu0 %v764
        %v766 = vpop.xlane.xlu0 %765
        %v767 = vadd.f32 %v656, %v657
        %768 = vadd.xlane.f32.xlu0 %v767
        %v769 = vpop.xlane.xlu0 %768
        %v770 = vadd.f32 %v658, %v659
        %771 = vadd.xlane.f32.xlu0 %v770
        %v772 = vpop.xlane.xlu0 %771
        %v773 = vadd.f32 %v660, %v661
        %774 = vadd.xlane.f32.xlu0 %v773
        %v775 = vpop.xlane.xlu0 %774
        %v776 = vadd.f32 %v662, %v663
        %777 = vadd.xlane.f32.xlu0 %v776
        %v778 = vpop.xlane.xlu0 %777
        %v779 = vadd.f32 %v664, %v665
        %780 = vadd.xlane.f32.xlu0 %v779
        %v781 = vpop.xlane.xlu0 %780
        %v782 = vadd.f32 %v666, %v667
        %783 = vadd.xlane.f32.xlu0 %v782
        %v784 = vpop.xlane.xlu0 %783
        %v785 = vadd.f32 %v668, %v669
        %786 = vadd.xlane.f32.xlu0 %v785
        %v787 = vpop.xlane.xlu0 %786
        %v788 = vadd.f32 %v670, %v671
        %789 = vadd.xlane.f32.xlu0 %v788
        %v790 = vpop.xlane.xlu0 %789
        %v791 = vadd.f32 %v672, %v673
        %792 = vadd.xlane.f32.xlu0 %v791
        %v793 = vpop.xlane.xlu0 %792
        %v794 = vadd.f32 %v674, %v675
        %795 = vadd.xlane.f32.xlu0 %v794
        %v796 = vpop.xlane.xlu0 %795
        %v797 = vadd.f32 %v676, %v677
        %798 = vadd.xlane.f32.xlu0 %v797
        %v799 = vpop.xlane.xlu0 %798
        %v800 = vadd.f32 %v678, %v679
        %801 = vadd.xlane.f32.xlu0 %v800
        %v802 = vpop.xlane.xlu0 %801
        %v803 = vadd.f32 %v680, %v681
        %804 = vadd.xlane.f32.xlu0 %v803
        %v805 = vpop.xlane.xlu0 %804
        %v806 = vadd.f32 %v682, %v683
        %807 = vadd.xlane.f32.xlu0 %v806
        %v808 = vpop.xlane.xlu0 %807
        %v809 = vadd.f32 %v684, %v685
        %810 = vadd.xlane.f32.xlu0 %v809
        %v811 = vpop.xlane.xlu0 %810
        %v812 = vadd.f32 %v686, %v687
        %813 = vadd.xlane.f32.xlu0 %v812
        %v814 = vpop.xlane.xlu0 %813
        %v815 = vadd.f32 %v688, %v689
        %816 = vadd.xlane.f32.xlu0 %v815
        %v817 = vpop.xlane.xlu0 %816
        %v818 = vadd.f32 %v690, %v691
        %819 = vadd.xlane.f32.xlu0 %v818
        %v820 = vpop.xlane.xlu0 %819
        %v821 = vadd.f32 %v692, %v693
        %822 = vadd.xlane.f32.xlu0 %v821
        %v823 = vpop.xlane.xlu0 %822
        %v824 = vadd.f32 %v694, %v695
        %825 = vadd.xlane.f32.xlu0 %v824
        %v826 = vpop.xlane.xlu0 %825
        %v827 = vadd.f32 %v696, %v697
        %828 = vadd.xlane.f32.xlu0 %v827
        %v829 = vpop.xlane.xlu0 %828
        %v830 = vadd.f32 %v698, %v699
        %831 = vadd.xlane.f32.xlu0 %v830
        %v832 = vpop.xlane.xlu0 %831
        %v833 = vadd.f32 %v700, %v701
        %834 = vadd.xlane.f32.xlu0 %v833
        %v835 = vpop.xlane.xlu0 %834
        %v836 = vadd.f32 %v702, %v703
        %837 = vadd.xlane.f32.xlu0 %v836
        %v838 = vpop.xlane.xlu0 %837
        %v839 = vrcp.pop 256.0
        %v840 = vmul.f32 %v745, %v839
        %v841 = vmul.f32 %v748, %v839
        %v842 = vmul.f32 %v751, %v839
        %v843 = vmul.f32 %v754, %v839
        %v844 = vmul.f32 %v757, %v839
        %v845 = vmul.f32 %v760, %v839
        %v846 = vmul.f32 %v763, %v839
        %v847 = vmul.f32 %v766, %v839
        %v848 = vmul.f32 %v769, %v839
        %v849 = vmul.f32 %v772, %v839
        %v850 = vmul.f32 %v775, %v839
        %v851 = vmul.f32 %v778, %v839
        %v852 = vmul.f32 %v781, %v839
        %v853 = vmul.f32 %v784, %v839
        %v854 = vmul.f32 %v787, %v839
        %v855 = vmul.f32 %v790, %v839
        %v856 = vmul.f32 %v793, %v839
        %v857 = vmul.f32 %v796, %v839
        %v858 = vmul.f32 %v799, %v839
        %v859 = vmul.f32 %v802, %v839
        %v860 = vmul.f32 %v805, %v839
        %v861 = vmul.f32 %v808, %v839
        %v862 = vmul.f32 %v811, %v839
        %v863 = vmul.f32 %v814, %v839
        %v864 = vmul.f32 %v817, %v839
        %v865 = vmul.f32 %v820, %v839
        %v866 = vmul.f32 %v823, %v839
        %v867 = vmul.f32 %v826, %v839
        %v868 = vmul.f32 %v829, %v839
        %v869 = vmul.f32 %v832, %v839
        %v870 = vmul.f32 %v835, %v839
        %v871 = vmul.f32 %v838, %v839
        %v872 = vsub.f32 %v640, %v840
        %v873 = vsub.f32 %v641, %v840
        %v874 = vsub.f32 %v642, %v841
        %v875 = vsub.f32 %v643, %v841
        %v876 = vsub.f32 %v644, %v842
        %v877 = vsub.f32 %v645, %v842
        %v878 = vsub.f32 %v646, %v843
        %v879 = vsub.f32 %v647, %v843
        %v880 = vsub.f32 %v648, %v844
        %v881 = vsub.f32 %v649, %v844
        %v882 = vsub.f32 %v650, %v845
        %v883 = vsub.f32 %v651, %v845
        %v884 = vsub.f32 %v652, %v846
        %v885 = vsub.f32 %v653, %v846
        %v886 = vsub.f32 %v654, %v847
        %v887 = vsub.f32 %v655, %v847
        %v888 = vsub.f32 %v656, %v848
        %v889 = vsub.f32 %v657, %v848
        %v890 = vsub.f32 %v658, %v849
        %v891 = vsub.f32 %v659, %v849
        %v892 = vsub.f32 %v660, %v850
        %v893 = vsub.f32 %v661, %v850
        %v894 = vsub.f32 %v662, %v851
        %v895 = vsub.f32 %v663, %v851
        %v896 = vsub.f32 %v664, %v852
        %v897 = vsub.f32 %v665, %v852
        %v898 = vsub.f32 %v666, %v853
        %v899 = vsub.f32 %v667, %v853
        %v900 = vsub.f32 %v668, %v854
        %v901 = vsub.f32 %v669, %v854
        %v902 = vsub.f32 %v670, %v855
        %v903 = vsub.f32 %v671, %v855
        %v904 = vsub.f32 %v672, %v856
        %v905 = vsub.f32 %v673, %v856
        %v906 = vsub.f32 %v674, %v857
        %v907 = vsub.f32 %v675, %v857
        %v908 = vsub.f32 %v676, %v858
        %v909 = vsub.f32 %v677, %v858
        %v910 = vsub.f32 %v678, %v859
        %v911 = vsub.f32 %v679, %v859
        %v912 = vsub.f32 %v680, %v860
        %v913 = vsub.f32 %v681, %v860
        %v914 = vsub.f32 %v682, %v861
        %v915 = vsub.f32 %v683, %v861
        %v916 = vsub.f32 %v684, %v862
        %v917 = vsub.f32 %v685, %v862
        %v918 = vsub.f32 %v686, %v863
        %v919 = vsub.f32 %v687, %v863
        %v920 = vsub.f32 %v688, %v864
        %v921 = vsub.f32 %v689, %v864
        %v922 = vsub.f32 %v690, %v865
        %v923 = vsub.f32 %v691, %v865
        %v924 = vsub.f32 %v692, %v866
        %v925 = vsub.f32 %v693, %v866
        %v926 = vsub.f32 %v694, %v867
        %v927 = vsub.f32 %v695, %v867
        %v928 = vsub.f32 %v696, %v868
        %v929 = vsub.f32 %v697, %v868
        %v930 = vsub.f32 %v698, %v869
        %v931 = vsub.f32 %v699, %v869
        %v932 = vsub.f32 %v700, %v870
        %v933 = vsub.f32 %v701, %v870
        %v934 = vsub.f32 %v702, %v871
        %v935 = vsub.f32 %v703, %v871
        %v936 = vmul.f32 %v872, %v872
        %v937 = vmul.f32 %v873, %v873
        %v938 = vmul.f32 %v874, %v874
        %v939 = vmul.f32 %v875, %v875
        %v940 = vmul.f32 %v876, %v876
        %v941 = vmul.f32 %v877, %v877
        %v942 = vmul.f32 %v878, %v878
        %v943 = vmul.f32 %v879, %v879
        %v944 = vmul.f32 %v880, %v880
        %v945 = vmul.f32 %v881, %v881
        %v946 = vmul.f32 %v882, %v882
        %v947 = vmul.f32 %v883, %v883
        %v948 = vmul.f32 %v884, %v884
        %v949 = vmul.f32 %v885, %v885
        %v950 = vmul.f32 %v886, %v886
        %v951 = vmul.f32 %v887, %v887
        %v952 = vmul.f32 %v888, %v888
        %v953 = vmul.f32 %v889, %v889
        %v954 = vmul.f32 %v890, %v890
        %v955 = vmul.f32 %v891, %v891
        %v956 = vmul.f32 %v892, %v892
        %v957 = vmul.f32 %v893, %v893
        %v958 = vmul.f32 %v894, %v894
        %v959 = vmul.f32 %v895, %v895
        %v960 = vmul.f32 %v896, %v896
        %v961 = vmul.f32 %v897, %v897
        %v962 = vmul.f32 %v898, %v898
        %v963 = vmul.f32 %v899, %v899
        %v964 = vmul.f32 %v900, %v900
        %v965 = vmul.f32 %v901, %v901
        %v966 = vmul.f32 %v902, %v902
        %v967 = vmul.f32 %v903, %v903
        %v968 = vmul.f32 %v904, %v904
        %v969 = vmul.f32 %v905, %v905
        %v970 = vmul.f32 %v906, %v906
        %v971 = vmul.f32 %v907, %v907
        %v972 = vmul.f32 %v908, %v908
        %v973 = vmul.f32 %v909, %v909
        %v974 = vmul.f32 %v910, %v910
        %v975 = vmul.f32 %v911, %v911
        %v976 = vmul.f32 %v912, %v912
        %v977 = vmul.f32 %v913, %v913
        %v978 = vmul.f32 %v914, %v914
        %v979 = vmul.f32 %v915, %v915
        %v980 = vmul.f32 %v916, %v916
        %v981 = vmul.f32 %v917, %v917
        %v982 = vmul.f32 %v918, %v918
        %v983 = vmul.f32 %v919, %v919
        %v984 = vmul.f32 %v920, %v920
        %v985 = vmul.f32 %v921, %v921
        %v986 = vmul.f32 %v922, %v922
        %v987 = vmul.f32 %v923, %v923
        %v988 = vmul.f32 %v924, %v924
        %v989 = vmul.f32 %v925, %v925
        %v990 = vmul.f32 %v926, %v926
        %v991 = vmul.f32 %v927, %v927
        %v992 = vmul.f32 %v928, %v928
        %v993 = vmul.f32 %v929, %v929
        %v994 = vmul.f32 %v930, %v930
        %v995 = vmul.f32 %v931, %v931
        %v996 = vmul.f32 %v932, %v932
        %v997 = vmul.f32 %v933, %v933
        %v998 = vmul.f32 %v934, %v934
        %v999 = vmul.f32 %v935, %v935
        %v1000 = vadd.f32 %v936, %v937
        %1001 = vadd.xlane.f32.xlu0 %v1000
        %v1002 = vpop.xlane.xlu0 %1001
        %v1003 = vadd.f32 %v938, %v939
        %1004 = vadd.xlane.f32.xlu0 %v1003
        %v1005 = vpop.xlane.xlu0 %1004
        %v1006 = vadd.f32 %v940, %v941
        %1007 = vadd.xlane.f32.xlu0 %v1006
        %v1008 = vpop.xlane.xlu0 %1007
        %v1009 = vadd.f32 %v942, %v943
        %1010 = vadd.xlane.f32.xlu0 %v1009
        %v1011 = vpop.xlane.xlu0 %1010
        %v1012 = vadd.f32 %v944, %v945
        %1013 = vadd.xlane.f32.xlu0 %v1012
        %v1014 = vpop.xlane.xlu0 %1013
        %v1015 = vadd.f32 %v946, %v947
        %1016 = vadd.xlane.f32.xlu0 %v1015
        %v1017 = vpop.xlane.xlu0 %1016
        %v1018 = vadd.f32 %v948, %v949
        %1019 = vadd.xlane.f32.xlu0 %v1018
        %v1020 = vpop.xlane.xlu0 %1019
        %v1021 = vadd.f32 %v950, %v951
        %1022 = vadd.xlane.f32.xlu0 %v1021
        %v1023 = vpop.xlane.xlu0 %1022
        %v1024 = vadd.f32 %v952, %v953
        %1025 = vadd.xlane.f32.xlu0 %v1024
        %v1026 = vpop.xlane.xlu0 %1025
        %v1027 = vadd.f32 %v954, %v955
        %1028 = vadd.xlane.f32.xlu0 %v1027
        %v1029 = vpop.xlane.xlu0 %1028
        %v1030 = vadd.f32 %v956, %v957
        %1031 = vadd.xlane.f32.xlu0 %v1030
        %v1032 = vpop.xlane.xlu0 %1031
        %v1033 = vadd.f32 %v958, %v959
        %1034 = vadd.xlane.f32.xlu0 %v1033
        %v1035 = vpop.xlane.xlu0 %1034
        %v1036 = vadd.f32 %v960, %v961
        %1037 = vadd.xlane.f32.xlu0 %v1036
        %v1038 = vpop.xlane.xlu0 %1037
        %v1039 = vadd.f32 %v962, %v963
        %1040 = vadd.xlane.f32.xlu0 %v1039
        %v1041 = vpop.xlane.xlu0 %1040
        %v1042 = vadd.f32 %v964, %v965
        %1043 = vadd.xlane.f32.xlu0 %v1042
        %v1044 = vpop.xlane.xlu0 %1043
        %v1045 = vadd.f32 %v966, %v967
        %1046 = vadd.xlane.f32.xlu0 %v1045
        %v1047 = vpop.xlane.xlu0 %1046
        %v1048 = vadd.f32 %v968, %v969
        %1049 = vadd.xlane.f32.xlu0 %v1048
        %v1050 = vpop.xlane.xlu0 %1049
        %v1051 = vadd.f32 %v970, %v971
        %1052 = vadd.xlane.f32.xlu0 %v1051
        %v1053 = vpop.xlane.xlu0 %1052
        %v1054 = vadd.f32 %v972, %v973
        %1055 = vadd.xlane.f32.xlu0 %v1054
        %v1056 = vpop.xlane.xlu0 %1055
        %v1057 = vadd.f32 %v974, %v975
        %1058 = vadd.xlane.f32.xlu0 %v1057
        %v1059 = vpop.xlane.xlu0 %1058
        %v1060 = vadd.f32 %v976, %v977
        %1061 = vadd.xlane.f32.xlu0 %v1060
        %v1062 = vpop.xlane.xlu0 %1061
        %v1063 = vadd.f32 %v978, %v979
        %1064 = vadd.xlane.f32.xlu0 %v1063
        %v1065 = vpop.xlane.xlu0 %1064
        %v1066 = vadd.f32 %v980, %v981
        %1067 = vadd.xlane.f32.xlu0 %v1066
        %v1068 = vpop.xlane.xlu0 %1067
        %v1069 = vadd.f32 %v982, %v983
        %1070 = vadd.xlane.f32.xlu0 %v1069
        %v1071 = vpop.xlane.xlu0 %1070
        %v1072 = vadd.f32 %v984, %v985
        %1073 = vadd.xlane.f32.xlu0 %v1072
        %v1074 = vpop.xlane.xlu0 %1073
        %v1075 = vadd.f32 %v986, %v987
        %1076 = vadd.xlane.f32.xlu0 %v1075
        %v1077 = vpop.xlane.xlu0 %1076
        %v1078 = vadd.f32 %v988, %v989
        %1079 = vadd.xlane.f32.xlu0 %v1078
        %v1080 = vpop.xlane.xlu0 %1079
        %v1081 = vadd.f32 %v990, %v991
        %1082 = vadd.xlane.f32.xlu0 %v1081
        %v1083 = vpop.xlane.xlu0 %1082
        %v1084 = vadd.f32 %v992, %v993
        %1085 = vadd.xlane.f32.xlu0 %v1084
        %v1086 = vpop.xlane.xlu0 %1085
        %v1087 = vadd.f32 %v994, %v995
        %1088 = vadd.xlane.f32.xlu0 %v1087
        %v1089 = vpop.xlane.xlu0 %1088
        %v1090 = vadd.f32 %v996, %v997
        %1091 = vadd.xlane.f32.xlu0 %v1090
        %v1092 = vpop.xlane.xlu0 %1091
        %v1093 = vadd.f32 %v998, %v999
        %1094 = vadd.xlane.f32.xlu0 %v1093
        %v1095 = vpop.xlane.xlu0 %1094
        %v1096 = vmul.f32 %v1002, %v839
        %v1097 = vmul.f32 %v1005, %v839
        %v1098 = vmul.f32 %v1008, %v839
        %v1099 = vmul.f32 %v1011, %v839
        %v1100 = vmul.f32 %v1014, %v839
        %v1101 = vmul.f32 %v1017, %v839
        %v1102 = vmul.f32 %v1020, %v839
        %v1103 = vmul.f32 %v1023, %v839
        %v1104 = vmul.f32 %v1026, %v839
        %v1105 = vmul.f32 %v1029, %v839
        %v1106 = vmul.f32 %v1032, %v839
        %v1107 = vmul.f32 %v1035, %v839
        %v1108 = vmul.f32 %v1038, %v839
        %v1109 = vmul.f32 %v1041, %v839
        %v1110 = vmul.f32 %v1044, %v839
        %v1111 = vmul.f32 %v1047, %v839
        %v1112 = vmul.f32 %v1050, %v839
        %v1113 = vmul.f32 %v1053, %v839
        %v1114 = vmul.f32 %v1056, %v839
        %v1115 = vmul.f32 %v1059, %v839
        %v1116 = vmul.f32 %v1062, %v839
        %v1117 = vmul.f32 %v1065, %v839
        %v1118 = vmul.f32 %v1068, %v839
        %v1119 = vmul.f32 %v1071, %v839
        %v1120 = vmul.f32 %v1074, %v839
        %v1121 = vmul.f32 %v1077, %v839
        %v1122 = vmul.f32 %v1080, %v839
        %v1123 = vmul.f32 %v1083, %v839
        %v1124 = vmul.f32 %v1086, %v839
        %v1125 = vmul.f32 %v1089, %v839
        %v1126 = vmul.f32 %v1092, %v839
        %v1127 = vmul.f32 %v1095, %v839
        %v1128 = vadd.f32 %v1096, 1e-12
        %v1129 = vadd.f32 %v1097, 1e-12
        %v1130 = vadd.f32 %v1098, 1e-12
        %v1131 = vadd.f32 %v1099, 1e-12
        %v1132 = vadd.f32 %v1100, 1e-12
        %v1133 = vadd.f32 %v1101, 1e-12
        %v1134 = vadd.f32 %v1102, 1e-12
        %v1135 = vadd.f32 %v1103, 1e-12
        %v1136 = vadd.f32 %v1104, 1e-12
        %v1137 = vadd.f32 %v1105, 1e-12
        %v1138 = vadd.f32 %v1106, 1e-12
        %v1139 = vadd.f32 %v1107, 1e-12
        %v1140 = vadd.f32 %v1108, 1e-12
        %v1141 = vadd.f32 %v1109, 1e-12
        %v1142 = vadd.f32 %v1110, 1e-12
        %v1143 = vadd.f32 %v1111, 1e-12
        %v1144 = vadd.f32 %v1112, 1e-12
        %v1145 = vadd.f32 %v1113, 1e-12
        %v1146 = vadd.f32 %v1114, 1e-12
        %v1147 = vadd.f32 %v1115, 1e-12
        %v1148 = vadd.f32 %v1116, 1e-12
        %v1149 = vadd.f32 %v1117, 1e-12
        %v1150 = vadd.f32 %v1118, 1e-12
        %v1151 = vadd.f32 %v1119, 1e-12
        %v1152 = vadd.f32 %v1120, 1e-12
        %v1153 = vadd.f32 %v1121, 1e-12
        %v1154 = vadd.f32 %v1122, 1e-12
        %v1155 = vadd.f32 %v1123, 1e-12
        %v1156 = vadd.f32 %v1124, 1e-12
        %v1157 = vadd.f32 %v1125, 1e-12
        %v1158 = vadd.f32 %v1126, 1e-12
        %v1159 = vadd.f32 %v1127, 1e-12
        %v1160 = vrsqrt.pop %v1128
        %v1161 = vrsqrt.pop %v1129
        %v1162 = vrsqrt.pop %v1130
        %v1163 = vrsqrt.pop %v1131
        %v1164 = vrsqrt.pop %v1132
        %v1165 = vrsqrt.pop %v1133
        %v1166 = vrsqrt.pop %v1134
        %v1167 = vrsqrt.pop %v1135
        %v1168 = vrsqrt.pop %v1136
        %v1169 = vrsqrt.pop %v1137
        %v1170 = vrsqrt.pop %v1138
        %v1171 = vrsqrt.pop %v1139
        %v1172 = vrsqrt.pop %v1140
        %v1173 = vrsqrt.pop %v1141
        %v1174 = vrsqrt.pop %v1142
        %v1175 = vrsqrt.pop %v1143
        %v1176 = vrsqrt.pop %v1144
        %v1177 = vrsqrt.pop %v1145
        %v1178 = vrsqrt.pop %v1146
        %v1179 = vrsqrt.pop %v1147
        %v1180 = vrsqrt.pop %v1148
        %v1181 = vrsqrt.pop %v1149
        %v1182 = vrsqrt.pop %v1150
        %v1183 = vrsqrt.pop %v1151
        %v1184 = vrsqrt.pop %v1152
        %v1185 = vrsqrt.pop %v1153
        %v1186 = vrsqrt.pop %v1154
        %v1187 = vrsqrt.pop %v1155
        %v1188 = vrsqrt.pop %v1156
        %v1189 = vrsqrt.pop %v1157
        %v1190 = vrsqrt.pop %v1158
        %v1191 = vrsqrt.pop %v1159
        %v1192 = vmul.f32 %v872, %v1160
        %v1193 = vmul.f32 %v873, %v1160
        %v1194 = vmul.f32 %v874, %v1161
        %v1195 = vmul.f32 %v875, %v1161
        %v1196 = vmul.f32 %v876, %v1162
        %v1197 = vmul.f32 %v877, %v1162
        %v1198 = vmul.f32 %v878, %v1163
        %v1199 = vmul.f32 %v879, %v1163
        %v1200 = vmul.f32 %v880, %v1164
        %v1201 = vmul.f32 %v881, %v1164
        %v1202 = vmul.f32 %v882, %v1165
        %v1203 = vmul.f32 %v883, %v1165
        %v1204 = vmul.f32 %v884, %v1166
        %v1205 = vmul.f32 %v885, %v1166
        %v1206 = vmul.f32 %v886, %v1167
        %v1207 = vmul.f32 %v887, %v1167
        %v1208 = vmul.f32 %v888, %v1168
        %v1209 = vmul.f32 %v889, %v1168
        %v1210 = vmul.f32 %v890, %v1169
        %v1211 = vmul.f32 %v891, %v1169
        %v1212 = vmul.f32 %v892, %v1170
        %v1213 = vmul.f32 %v893, %v1170
        %v1214 = vmul.f32 %v894, %v1171
        %v1215 = vmul.f32 %v895, %v1171
        %v1216 = vmul.f32 %v896, %v1172
        %v1217 = vmul.f32 %v897, %v1172
        %v1218 = vmul.f32 %v898, %v1173
        %v1219 = vmul.f32 %v899, %v1173
        %v1220 = vmul.f32 %v900, %v1174
        %v1221 = vmul.f32 %v901, %v1174
        %v1222 = vmul.f32 %v902, %v1175
        %v1223 = vmul.f32 %v903, %v1175
        %v1224 = vmul.f32 %v904, %v1176
        %v1225 = vmul.f32 %v905, %v1176
        %v1226 = vmul.f32 %v906, %v1177
        %v1227 = vmul.f32 %v907, %v1177
        %v1228 = vmul.f32 %v908, %v1178
        %v1229 = vmul.f32 %v909, %v1178
        %v1230 = vmul.f32 %v910, %v1179
        %v1231 = vmul.f32 %v911, %v1179
        %v1232 = vmul.f32 %v912, %v1180
        %v1233 = vmul.f32 %v913, %v1180
        %v1234 = vmul.f32 %v914, %v1181
        %v1235 = vmul.f32 %v915, %v1181
        %v1236 = vmul.f32 %v916, %v1182
        %v1237 = vmul.f32 %v917, %v1182
        %v1238 = vmul.f32 %v918, %v1183
        %v1239 = vmul.f32 %v919, %v1183
        %v1240 = vmul.f32 %v920, %v1184
        %v1241 = vmul.f32 %v921, %v1184
        %v1242 = vmul.f32 %v922, %v1185
        %v1243 = vmul.f32 %v923, %v1185
        %v1244 = vmul.f32 %v924, %v1186
        %v1245 = vmul.f32 %v925, %v1186
        %v1246 = vmul.f32 %v926, %v1187
        %v1247 = vmul.f32 %v927, %v1187
        %v1248 = vmul.f32 %v928, %v1188
        %v1249 = vmul.f32 %v929, %v1188
        %v1250 = vmul.f32 %v930, %v1189
        %v1251 = vmul.f32 %v931, %v1189
        %v1252 = vmul.f32 %v932, %v1190
        %v1253 = vmul.f32 %v933, %v1190
        %v1254 = vmul.f32 %v934, %v1191
        %v1255 = vmul.f32 %v935, %v1191
        %v1257 = vlaneseq
        %v1258 = vshrl.u32 %v1257, 7
        %v1259 = vsub.s32 0, %v1258
        %v1260 = vrot.slane %v741, %v1259
        %v1261 = vlaneseq
        %v1262 = vshrl.u32 %v1261, 7
        %v1263 = vsub.s32 1, %v1262
        %v1264 = vrot.slane %v741, %v1263
        %v1267 = vmul.f32 %v1192, %v1260
        %v1268 = vmul.f32 %v1193, %v1264
        %v1269 = vmul.f32 %v1194, %v1260
        %v1270 = vmul.f32 %v1195, %v1264
        %v1271 = vmul.f32 %v1196, %v1260
        %v1272 = vmul.f32 %v1197, %v1264
        %v1273 = vmul.f32 %v1198, %v1260
        %v1274 = vmul.f32 %v1199, %v1264
        %v1275 = vmul.f32 %v1200, %v1260
        %v1276 = vmul.f32 %v1201, %v1264
        %v1277 = vmul.f32 %v1202, %v1260
        %v1278 = vmul.f32 %v1203, %v1264
        %v1279 = vmul.f32 %v1204, %v1260
        %v1280 = vmul.f32 %v1205, %v1264
        %v1281 = vmul.f32 %v1206, %v1260
        %v1282 = vmul.f32 %v1207, %v1264
        %v1283 = vmul.f32 %v1208, %v1260
        %v1284 = vmul.f32 %v1209, %v1264
        %v1285 = vmul.f32 %v1210, %v1260
        %v1286 = vmul.f32 %v1211, %v1264
        %v1287 = vmul.f32 %v1212, %v1260
        %v1288 = vmul.f32 %v1213, %v1264
        %v1289 = vmul.f32 %v1214, %v1260
        %v1290 = vmul.f32 %v1215, %v1264
        %v1291 = vmul.f32 %v1216, %v1260
        %v1292 = vmul.f32 %v1217, %v1264
        %v1293 = vmul.f32 %v1218, %v1260
        %v1294 = vmul.f32 %v1219, %v1264
        %v1295 = vmul.f32 %v1220, %v1260
        %v1296 = vmul.f32 %v1221, %v1264
        %v1297 = vmul.f32 %v1222, %v1260
        %v1298 = vmul.f32 %v1223, %v1264
        %v1299 = vmul.f32 %v1224, %v1260
        %v1300 = vmul.f32 %v1225, %v1264
        %v1301 = vmul.f32 %v1226, %v1260
        %v1302 = vmul.f32 %v1227, %v1264
        %v1303 = vmul.f32 %v1228, %v1260
        %v1304 = vmul.f32 %v1229, %v1264
        %v1305 = vmul.f32 %v1230, %v1260
        %v1306 = vmul.f32 %v1231, %v1264
        %v1307 = vmul.f32 %v1232, %v1260
        %v1308 = vmul.f32 %v1233, %v1264
        %v1309 = vmul.f32 %v1234, %v1260
        %v1310 = vmul.f32 %v1235, %v1264
        %v1311 = vmul.f32 %v1236, %v1260
        %v1312 = vmul.f32 %v1237, %v1264
        %v1313 = vmul.f32 %v1238, %v1260
        %v1314 = vmul.f32 %v1239, %v1264
        %v1315 = vmul.f32 %v1240, %v1260
        %v1316 = vmul.f32 %v1241, %v1264
        %v1317 = vmul.f32 %v1242, %v1260
        %v1318 = vmul.f32 %v1243, %v1264
        %v1319 = vmul.f32 %v1244, %v1260
        %v1320 = vmul.f32 %v1245, %v1264
        %v1321 = vmul.f32 %v1246, %v1260
        %v1322 = vmul.f32 %v1247, %v1264
        %v1323 = vmul.f32 %v1248, %v1260
        %v1324 = vmul.f32 %v1249, %v1264
        %v1325 = vmul.f32 %v1250, %v1260
        %v1326 = vmul.f32 %v1251, %v1264
        %v1327 = vmul.f32 %v1252, %v1260
        %v1328 = vmul.f32 %v1253, %v1264
        %v1329 = vmul.f32 %v1254, %v1260
        %v1330 = vmul.f32 %v1255, %v1264
        %v1332 = vlaneseq
        %v1333 = vshrl.u32 %v1332, 7
        %v1334 = vsub.s32 0, %v1333
        %v1335 = vrot.slane %v742, %v1334
        %v1336 = vlaneseq
        %v1337 = vshrl.u32 %v1336, 7
        %v1338 = vsub.s32 1, %v1337
        %v1339 = vrot.slane %v742, %v1338
        %v1342 = vadd.f32 %v1267, %v1335
        %v1343 = vadd.f32 %v1268, %v1339
        %v1344 = vadd.f32 %v1269, %v1335
        %v1345 = vadd.f32 %v1270, %v1339
        %v1346 = vadd.f32 %v1271, %v1335
        %v1347 = vadd.f32 %v1272, %v1339
        %v1348 = vadd.f32 %v1273, %v1335
        %v1349 = vadd.f32 %v1274, %v1339
        %v1350 = vadd.f32 %v1275, %v1335
        %v1351 = vadd.f32 %v1276, %v1339
        %v1352 = vadd.f32 %v1277, %v1335
        %v1353 = vadd.f32 %v1278, %v1339
        %v1354 = vadd.f32 %v1279, %v1335
        %v1355 = vadd.f32 %v1280, %v1339
        %v1356 = vadd.f32 %v1281, %v1335
        %v1357 = vadd.f32 %v1282, %v1339
        %v1358 = vadd.f32 %v1283, %v1335
        %v1359 = vadd.f32 %v1284, %v1339
        %v1360 = vadd.f32 %v1285, %v1335
        %v1361 = vadd.f32 %v1286, %v1339
        %v1362 = vadd.f32 %v1287, %v1335
        %v1363 = vadd.f32 %v1288, %v1339
        %v1364 = vadd.f32 %v1289, %v1335
        %v1365 = vadd.f32 %v1290, %v1339
        %v1366 = vadd.f32 %v1291, %v1335
        %v1367 = vadd.f32 %v1292, %v1339
        %v1368 = vadd.f32 %v1293, %v1335
        %v1369 = vadd.f32 %v1294, %v1339
        %v1370 = vadd.f32 %v1295, %v1335
        %v1371 = vadd.f32 %v1296, %v1339
        %v1372 = vadd.f32 %v1297, %v1335
        %v1373 = vadd.f32 %v1298, %v1339
        %v1374 = vadd.f32 %v1299, %v1335
        %v1375 = vadd.f32 %v1300, %v1339
        %v1376 = vadd.f32 %v1301, %v1335
        %v1377 = vadd.f32 %v1302, %v1339
        %v1378 = vadd.f32 %v1303, %v1335
        %v1379 = vadd.f32 %v1304, %v1339
        %v1380 = vadd.f32 %v1305, %v1335
        %v1381 = vadd.f32 %v1306, %v1339
        %v1382 = vadd.f32 %v1307, %v1335
        %v1383 = vadd.f32 %v1308, %v1339
        %v1384 = vadd.f32 %v1309, %v1335
        %v1385 = vadd.f32 %v1310, %v1339
        %v1386 = vadd.f32 %v1311, %v1335
        %v1387 = vadd.f32 %v1312, %v1339
        %v1388 = vadd.f32 %v1313, %v1335
        %v1389 = vadd.f32 %v1314, %v1339
        %v1390 = vadd.f32 %v1315, %v1335
        %v1391 = vadd.f32 %v1316, %v1339
        %v1392 = vadd.f32 %v1317, %v1335
        %v1393 = vadd.f32 %v1318, %v1339
        %v1394 = vadd.f32 %v1319, %v1335
        %v1395 = vadd.f32 %v1320, %v1339
        %v1396 = vadd.f32 %v1321, %v1335
        %v1397 = vadd.f32 %v1322, %v1339
        %v1398 = vadd.f32 %v1323, %v1335
        %v1399 = vadd.f32 %v1324, %v1339
        %v1400 = vadd.f32 %v1325, %v1335
        %v1401 = vadd.f32 %v1326, %v1339
        %v1402 = vadd.f32 %v1327, %v1335
        %v1403 = vadd.f32 %v1328, %v1339
        %v1404 = vadd.f32 %v1329, %v1335
        %v1405 = vadd.f32 %v1330, %v1339
        %v1406 = vadd.f32 %v709, %v710
        %1407 = vadd.xlane.f32.xlu0 %v1406
        %v1408 = vpop.xlane.xlu0 %1407
        %v1409 = vadd.f32 %v711, %v712
        %1410 = vadd.xlane.f32.xlu0 %v1409
        %v1411 = vpop.xlane.xlu0 %1410
        %v1412 = vadd.f32 %v713, %v714
        %1413 = vadd.xlane.f32.xlu0 %v1412
        %v1414 = vpop.xlane.xlu0 %1413
        %v1415 = vadd.f32 %v715, %v716
        %1416 = vadd.xlane.f32.xlu0 %v1415
        %v1417 = vpop.xlane.xlu0 %1416
        %v1418 = vadd.f32 %v717, %v718
        %1419 = vadd.xlane.f32.xlu0 %v1418
        %v1420 = vpop.xlane.xlu0 %1419
        %v1421 = vadd.f32 %v719, %v720
        %1422 = vadd.xlane.f32.xlu0 %v1421
        %v1423 = vpop.xlane.xlu0 %1422
        %v1424 = vadd.f32 %v721, %v722
        %1425 = vadd.xlane.f32.xlu0 %v1424
        %v1426 = vpop.xlane.xlu0 %1425
        %v1427 = vadd.f32 %v723, %v724
        %1428 = vadd.xlane.f32.xlu0 %v1427
        %v1429 = vpop.xlane.xlu0 %1428
        %v1430 = vadd.f32 %v725, %v726
        %1431 = vadd.xlane.f32.xlu0 %v1430
        %v1432 = vpop.xlane.xlu0 %1431
        %v1433 = vadd.f32 %v727, %v728
        %1434 = vadd.xlane.f32.xlu0 %v1433
        %v1435 = vpop.xlane.xlu0 %1434
        %v1436 = vadd.f32 %v729, %v730
        %1437 = vadd.xlane.f32.xlu0 %v1436
        %v1438 = vpop.xlane.xlu0 %1437
        %v1439 = vadd.f32 %v731, %v732
        %1440 = vadd.xlane.f32.xlu0 %v1439
        %v1441 = vpop.xlane.xlu0 %1440
        %v1442 = vadd.f32 %v733, %v734
        %1443 = vadd.xlane.f32.xlu0 %v1442
        %v1444 = vpop.xlane.xlu0 %1443
        %v1445 = vadd.f32 %v735, %v736
        %1446 = vadd.xlane.f32.xlu0 %v1445
        %v1447 = vpop.xlane.xlu0 %1446
        %v1448 = vadd.f32 %v737, %v738
        %1449 = vadd.xlane.f32.xlu0 %v1448
        %v1450 = vpop.xlane.xlu0 %1449
        %v1451 = vadd.f32 %v739, %v740
        %1452 = vadd.xlane.f32.xlu0 %v1451
        %v1453 = vpop.xlane.xlu0 %1452
        %v1454 = vmul.f32 %v1408, %v839
        %v1455 = vmul.f32 %v1411, %v839
        %v1456 = vmul.f32 %v1414, %v839
        %v1457 = vmul.f32 %v1417, %v839
        %v1458 = vmul.f32 %v1420, %v839
        %v1459 = vmul.f32 %v1423, %v839
        %v1460 = vmul.f32 %v1426, %v839
        %v1461 = vmul.f32 %v1429, %v839
        %v1462 = vmul.f32 %v1432, %v839
        %v1463 = vmul.f32 %v1435, %v839
        %v1464 = vmul.f32 %v1438, %v839
        %v1465 = vmul.f32 %v1441, %v839
        %v1466 = vmul.f32 %v1444, %v839
        %v1467 = vmul.f32 %v1447, %v839
        %v1468 = vmul.f32 %v1450, %v839
        %v1469 = vmul.f32 %v1453, %v839
        %v1470 = vsub.f32 %v709, %v1454
        %v1471 = vsub.f32 %v710, %v1454
        %v1472 = vsub.f32 %v711, %v1455
        %v1473 = vsub.f32 %v712, %v1455
        %v1474 = vsub.f32 %v713, %v1456
        %v1475 = vsub.f32 %v714, %v1456
        %v1476 = vsub.f32 %v715, %v1457
        %v1477 = vsub.f32 %v716, %v1457
        %v1478 = vsub.f32 %v717, %v1458
        %v1479 = vsub.f32 %v718, %v1458
        %v1480 = vsub.f32 %v719, %v1459
        %v1481 = vsub.f32 %v720, %v1459
        %v1482 = vsub.f32 %v721, %v1460
        %v1483 = vsub.f32 %v722, %v1460
        %v1484 = vsub.f32 %v723, %v1461
        %v1485 = vsub.f32 %v724, %v1461
        %v1486 = vsub.f32 %v725, %v1462
        %v1487 = vsub.f32 %v726, %v1462
        %v1488 = vsub.f32 %v727, %v1463
        %v1489 = vsub.f32 %v728, %v1463
        %v1490 = vsub.f32 %v729, %v1464
        %v1491 = vsub.f32 %v730, %v1464
        %v1492 = vsub.f32 %v731, %v1465
        %v1493 = vsub.f32 %v732, %v1465
        %v1494 = vsub.f32 %v733, %v1466
        %v1495 = vsub.f32 %v734, %v1466
        %v1496 = vsub.f32 %v735, %v1467
        %v1497 = vsub.f32 %v736, %v1467
        %v1498 = vsub.f32 %v737, %v1468
        %v1499 = vsub.f32 %v738, %v1468
        %v1500 = vsub.f32 %v739, %v1469
        %v1501 = vsub.f32 %v740, %v1469
        %v1502 = vmul.f32 %v1470, %v1470
        %v1503 = vmul.f32 %v1471, %v1471
        %v1504 = vmul.f32 %v1472, %v1472
        %v1505 = vmul.f32 %v1473, %v1473
        %v1506 = vmul.f32 %v1474, %v1474
        %v1507 = vmul.f32 %v1475, %v1475
        %v1508 = vmul.f32 %v1476, %v1476
        %v1509 = vmul.f32 %v1477, %v1477
        %v1510 = vmul.f32 %v1478, %v1478
        %v1511 = vmul.f32 %v1479, %v1479
        %v1512 = vmul.f32 %v1480, %v1480
        %v1513 = vmul.f32 %v1481, %v1481
        %v1514 = vmul.f32 %v1482, %v1482
        %v1515 = vmul.f32 %v1483, %v1483
        %v1516 = vmul.f32 %v1484, %v1484
        %v1517 = vmul.f32 %v1485, %v1485
        %v1518 = vmul.f32 %v1486, %v1486
        %v1519 = vmul.f32 %v1487, %v1487
        %v1520 = vmul.f32 %v1488, %v1488
        %v1521 = vmul.f32 %v1489, %v1489
        %v1522 = vmul.f32 %v1490, %v1490
        %v1523 = vmul.f32 %v1491, %v1491
        %v1524 = vmul.f32 %v1492, %v1492
        %v1525 = vmul.f32 %v1493, %v1493
        %v1526 = vmul.f32 %v1494, %v1494
        %v1527 = vmul.f32 %v1495, %v1495
        %v1528 = vmul.f32 %v1496, %v1496
        %v1529 = vmul.f32 %v1497, %v1497
        %v1530 = vmul.f32 %v1498, %v1498
        %v1531 = vmul.f32 %v1499, %v1499
        %v1532 = vmul.f32 %v1500, %v1500
        %v1533 = vmul.f32 %v1501, %v1501
        %v1534 = vadd.f32 %v1502, %v1503
        %1535 = vadd.xlane.f32.xlu0 %v1534
        %v1536 = vpop.xlane.xlu0 %1535
        %v1537 = vadd.f32 %v1504, %v1505
        %1538 = vadd.xlane.f32.xlu0 %v1537
        %v1539 = vpop.xlane.xlu0 %1538
        %v1540 = vadd.f32 %v1506, %v1507
        %1541 = vadd.xlane.f32.xlu0 %v1540
        %v1542 = vpop.xlane.xlu0 %1541
        %v1543 = vadd.f32 %v1508, %v1509
        %1544 = vadd.xlane.f32.xlu0 %v1543
        %v1545 = vpop.xlane.xlu0 %1544
        %v1546 = vadd.f32 %v1510, %v1511
        %1547 = vadd.xlane.f32.xlu0 %v1546
        %v1548 = vpop.xlane.xlu0 %1547
        %v1549 = vadd.f32 %v1512, %v1513
        %1550 = vadd.xlane.f32.xlu0 %v1549
        %v1551 = vpop.xlane.xlu0 %1550
        %v1552 = vadd.f32 %v1514, %v1515
        %1553 = vadd.xlane.f32.xlu0 %v1552
        %v1554 = vpop.xlane.xlu0 %1553
        %v1555 = vadd.f32 %v1516, %v1517
        %1556 = vadd.xlane.f32.xlu0 %v1555
        %v1557 = vpop.xlane.xlu0 %1556
        %v1558 = vadd.f32 %v1518, %v1519
        %1559 = vadd.xlane.f32.xlu0 %v1558
        %v1560 = vpop.xlane.xlu0 %1559
        %v1561 = vadd.f32 %v1520, %v1521
        %1562 = vadd.xlane.f32.xlu0 %v1561
        %v1563 = vpop.xlane.xlu0 %1562
        %v1564 = vadd.f32 %v1522, %v1523
        %1565 = vadd.xlane.f32.xlu0 %v1564
        %v1566 = vpop.xlane.xlu0 %1565
        %v1567 = vadd.f32 %v1524, %v1525
        %1568 = vadd.xlane.f32.xlu0 %v1567
        %v1569 = vpop.xlane.xlu0 %1568
        %v1570 = vadd.f32 %v1526, %v1527
        %1571 = vadd.xlane.f32.xlu0 %v1570
        %v1572 = vpop.xlane.xlu0 %1571
        %v1573 = vadd.f32 %v1528, %v1529
        %1574 = vadd.xlane.f32.xlu0 %v1573
        %v1575 = vpop.xlane.xlu0 %1574
        %v1576 = vadd.f32 %v1530, %v1531
        %1577 = vadd.xlane.f32.xlu0 %v1576
        %v1578 = vpop.xlane.xlu0 %1577
        %v1579 = vadd.f32 %v1532, %v1533
        %1580 = vadd.xlane.f32.xlu0 %v1579
        %v1581 = vpop.xlane.xlu0 %1580
        %v1582 = vmul.f32 %v1536, %v839
        %v1583 = vmul.f32 %v1539, %v839
        %v1584 = vmul.f32 %v1542, %v839
        %v1585 = vmul.f32 %v1545, %v839
        %v1586 = vmul.f32 %v1548, %v839
        %v1587 = vmul.f32 %v1551, %v839
        %v1588 = vmul.f32 %v1554, %v839
        %v1589 = vmul.f32 %v1557, %v839
        %v1590 = vmul.f32 %v1560, %v839
        %v1591 = vmul.f32 %v1563, %v839
        %v1592 = vmul.f32 %v1566, %v839
        %v1593 = vmul.f32 %v1569, %v839
        %v1594 = vmul.f32 %v1572, %v839
        %v1595 = vmul.f32 %v1575, %v839
        %v1596 = vmul.f32 %v1578, %v839
        %v1597 = vmul.f32 %v1581, %v839
        %v1598 = vadd.f32 %v1582, 1e-12
        %v1599 = vadd.f32 %v1583, 1e-12
        %v1600 = vadd.f32 %v1584, 1e-12
        %v1601 = vadd.f32 %v1585, 1e-12
        %v1602 = vadd.f32 %v1586, 1e-12
        %v1603 = vadd.f32 %v1587, 1e-12
        %v1604 = vadd.f32 %v1588, 1e-12
        %v1605 = vadd.f32 %v1589, 1e-12
        %v1606 = vadd.f32 %v1590, 1e-12
        %v1607 = vadd.f32 %v1591, 1e-12
        %v1608 = vadd.f32 %v1592, 1e-12
        %v1609 = vadd.f32 %v1593, 1e-12
        %v1610 = vadd.f32 %v1594, 1e-12
        %v1611 = vadd.f32 %v1595, 1e-12
        %v1612 = vadd.f32 %v1596, 1e-12
        %v1613 = vadd.f32 %v1597, 1e-12
        %v1614 = vrsqrt.pop %v1598
        %v1615 = vrsqrt.pop %v1599
        %v1616 = vrsqrt.pop %v1600
        %v1617 = vrsqrt.pop %v1601
        %v1618 = vrsqrt.pop %v1602
        %v1619 = vrsqrt.pop %v1603
        %v1620 = vrsqrt.pop %v1604
        %v1621 = vrsqrt.pop %v1605
        %v1622 = vrsqrt.pop %v1606
        %v1623 = vrsqrt.pop %v1607
        %v1624 = vrsqrt.pop %v1608
        %v1625 = vrsqrt.pop %v1609
        %v1626 = vrsqrt.pop %v1610
        %v1627 = vrsqrt.pop %v1611
        %v1628 = vrsqrt.pop %v1612
        %v1629 = vrsqrt.pop %v1613
        %v1630 = vmul.f32 %v1470, %v1614
        %v1631 = vmul.f32 %v1471, %v1614
        %v1632 = vmul.f32 %v1472, %v1615
        %v1633 = vmul.f32 %v1473, %v1615
        %v1634 = vmul.f32 %v1474, %v1616
        %v1635 = vmul.f32 %v1475, %v1616
        %v1636 = vmul.f32 %v1476, %v1617
        %v1637 = vmul.f32 %v1477, %v1617
        %v1638 = vmul.f32 %v1478, %v1618
        %v1639 = vmul.f32 %v1479, %v1618
        %v1640 = vmul.f32 %v1480, %v1619
        %v1641 = vmul.f32 %v1481, %v1619
        %v1642 = vmul.f32 %v1482, %v1620
        %v1643 = vmul.f32 %v1483, %v1620
        %v1644 = vmul.f32 %v1484, %v1621
        %v1645 = vmul.f32 %v1485, %v1621
        %v1646 = vmul.f32 %v1486, %v1622
        %v1647 = vmul.f32 %v1487, %v1622
        %v1648 = vmul.f32 %v1488, %v1623
        %v1649 = vmul.f32 %v1489, %v1623
        %v1650 = vmul.f32 %v1490, %v1624
        %v1651 = vmul.f32 %v1491, %v1624
        %v1652 = vmul.f32 %v1492, %v1625
        %v1653 = vmul.f32 %v1493, %v1625
        %v1654 = vmul.f32 %v1494, %v1626
        %v1655 = vmul.f32 %v1495, %v1626
        %v1656 = vmul.f32 %v1496, %v1627
        %v1657 = vmul.f32 %v1497, %v1627
        %v1658 = vmul.f32 %v1498, %v1628
        %v1659 = vmul.f32 %v1499, %v1628
        %v1660 = vmul.f32 %v1500, %v1629
        %v1661 = vmul.f32 %v1501, %v1629
        %v1662 = vmul.f32 %v1630, %v1260
        %v1663 = vmul.f32 %v1631, %v1264
        %v1664 = vmul.f32 %v1632, %v1260
        %v1665 = vmul.f32 %v1633, %v1264
        %v1666 = vmul.f32 %v1634, %v1260
        %v1667 = vmul.f32 %v1635, %v1264
        %v1668 = vmul.f32 %v1636, %v1260
        %v1669 = vmul.f32 %v1637, %v1264
        %v1670 = vmul.f32 %v1638, %v1260
        %v1671 = vmul.f32 %v1639, %v1264
        %v1672 = vmul.f32 %v1640, %v1260
        %v1673 = vmul.f32 %v1641, %v1264
        %v1674 = vmul.f32 %v1642, %v1260
        %v1675 = vmul.f32 %v1643, %v1264
        %v1676 = vmul.f32 %v1644, %v1260
        %v1677 = vmul.f32 %v1645, %v1264
        %v1678 = vmul.f32 %v1646, %v1260
        %v1679 = vmul.f32 %v1647, %v1264
        %v1680 = vmul.f32 %v1648, %v1260
        %v1681 = vmul.f32 %v1649, %v1264
        %v1682 = vmul.f32 %v1650, %v1260
        %v1683 = vmul.f32 %v1651, %v1264
        %v1684 = vmul.f32 %v1652, %v1260
        %v1685 = vmul.f32 %v1653, %v1264
        %v1686 = vmul.f32 %v1654, %v1260
        %v1687 = vmul.f32 %v1655, %v1264
        %v1688 = vmul.f32 %v1656, %v1260
        %v1689 = vmul.f32 %v1657, %v1264
        %v1690 = vmul.f32 %v1658, %v1260
        %v1691 = vmul.f32 %v1659, %v1264
        %v1692 = vmul.f32 %v1660, %v1260
        %v1693 = vmul.f32 %v1661, %v1264
        %v1694 = vadd.f32 %v1662, %v1335
        %v1695 = vadd.f32 %v1663, %v1339
        %v1696 = vadd.f32 %v1664, %v1335
        %v1697 = vadd.f32 %v1665, %v1339
        %v1698 = vadd.f32 %v1666, %v1335
        %v1699 = vadd.f32 %v1667, %v1339
        %v1700 = vadd.f32 %v1668, %v1335
        %v1701 = vadd.f32 %v1669, %v1339
        %v1702 = vadd.f32 %v1670, %v1335
        %v1703 = vadd.f32 %v1671, %v1339
        %v1704 = vadd.f32 %v1672, %v1335
        %v1705 = vadd.f32 %v1673, %v1339
        %v1706 = vadd.f32 %v1674, %v1335
        %v1707 = vadd.f32 %v1675, %v1339
        %v1708 = vadd.f32 %v1676, %v1335
        %v1709 = vadd.f32 %v1677, %v1339
        %v1710 = vadd.f32 %v1678, %v1335
        %v1711 = vadd.f32 %v1679, %v1339
        %v1712 = vadd.f32 %v1680, %v1335
        %v1713 = vadd.f32 %v1681, %v1339
        %v1714 = vadd.f32 %v1682, %v1335
        %v1715 = vadd.f32 %v1683, %v1339
        %v1716 = vadd.f32 %v1684, %v1335
        %v1717 = vadd.f32 %v1685, %v1339
        %v1718 = vadd.f32 %v1686, %v1335
        %v1719 = vadd.f32 %v1687, %v1339
        %v1720 = vadd.f32 %v1688, %v1335
        %v1721 = vadd.f32 %v1689, %v1339
        %v1722 = vadd.f32 %v1690, %v1335
        %v1723 = vadd.f32 %v1691, %v1339
        %v1724 = vadd.f32 %v1692, %v1335
        %v1725 = vadd.f32 %v1693, %v1339
        %v1726 = vpack.c.bf16 %v1696, %v1694
        %v1727 = vpack.c.bf16 %v1697, %v1695
        %v1728 = vpack.c.bf16 %v1700, %v1698
        %v1729 = vpack.c.bf16 %v1701, %v1699
        %v1730 = vpack.c.bf16 %v1704, %v1702
        %v1731 = vpack.c.bf16 %v1705, %v1703
        %v1732 = vpack.c.bf16 %v1708, %v1706
        %v1733 = vpack.c.bf16 %v1709, %v1707
        %v1734 = vpack.c.bf16 %v1712, %v1710
        %v1735 = vpack.c.bf16 %v1713, %v1711
        %v1736 = vpack.c.bf16 %v1716, %v1714
        %v1737 = vpack.c.bf16 %v1717, %v1715
        %v1738 = vpack.c.bf16 %v1720, %v1718
        %v1739 = vpack.c.bf16 %v1721, %v1719
        %v1740 = vpack.c.bf16 %v1724, %v1722
        %v1741 = vpack.c.bf16 %v1725, %v1723
        %v1742 = vld [vmem:[#allocation8] sm:$0xff]
        %v1743 = vld [vmem:[#allocation8 + $0x8] sm:$0xff]
        %v1744 = vld [vmem:[#allocation8 + $0x10] sm:$0xff]
        %v1745 = vld [vmem:[#allocation8 + $0x18] sm:$0xff]
        %v1746 = vld [vmem:[#allocation8 + $0x20] sm:$0xff]
        %v1747 = vld [vmem:[#allocation8 + $0x28] sm:$0xff]
        %v1748 = vld [vmem:[#allocation8 + $0x30] sm:$0xff]
        %v1749 = vld [vmem:[#allocation8 + $0x38] sm:$0xff]
        %v1750 = vld [vmem:[#allocation8 + $0x40] sm:$0xff]
        %v1751 = vld [vmem:[#allocation8 + $0x48] sm:$0xff]
        %v1752 = vld [vmem:[#allocation8 + $0x50] sm:$0xff]
        %v1753 = vld [vmem:[#allocation8 + $0x58] sm:$0xff]
        %v1754 = vld [vmem:[#allocation8 + $0x60] sm:$0xff]
        %v1755 = vld [vmem:[#allocation8 + $0x68] sm:$0xff]
        %v1756 = vld [vmem:[#allocation8 + $0x70] sm:$0xff]
        %v1757 = vld [vmem:[#allocation8 + $0x78] sm:$0xff]
        %v1758 = vld [vmem:[#allocation8 + $0x80] sm:$0xff]
        %v1759 = vld [vmem:[#allocation8 + $0x88] sm:$0xff]
        %v1760 = vld [vmem:[#allocation8 + $0x90] sm:$0xff]
        %v1761 = vld [vmem:[#allocation8 + $0x98] sm:$0xff]
        %v1762 = vld [vmem:[#allocation8 + $0xa0] sm:$0xff]
        %v1763 = vld [vmem:[#allocation8 + $0xa8] sm:$0xff]
        %v1764 = vld [vmem:[#allocation8 + $0xb0] sm:$0xff]
        %v1765 = vld [vmem:[#allocation8 + $0xb8] sm:$0xff]
        %v1766 = vld [vmem:[#allocation8 + $0xc0] sm:$0xff]
        %v1767 = vld [vmem:[#allocation8 + $0xc8] sm:$0xff]
        %v1768 = vld [vmem:[#allocation8 + $0xd0] sm:$0xff]
        %v1769 = vld [vmem:[#allocation8 + $0xd8] sm:$0xff]
        %v1770 = vld [vmem:[#allocation8 + $0xe0] sm:$0xff]
        %v1771 = vld [vmem:[#allocation8 + $0xe8] sm:$0xff]
        %v1772 = vld [vmem:[#allocation8 + $0xf0] sm:$0xff]
        %v1773 = vld [vmem:[#allocation8 + $0xf8] sm:$0xff]
        %v1774 = vld [vmem:[#allocation10] sm:$0x3]
        %v1776 = vlaneseq
        %v1777 = vshrl.u32 %v1776, 7
        %v1778 = vsub.s32 0, %v1777
        %v1779 = vrot.slane %v1774, %v1778
        %v1780 = vlaneseq
        %v1781 = vshrl.u32 %v1780, 7
        %v1782 = vsub.s32 1, %v1781
        %v1783 = vrot.slane %v1774, %v1782
        %v1818 = vunpack.c.l.b16 %v1742
        %v1819 = vunpack.c.h.b16 %v1742
        %v1820 = vunpack.c.l.b16 %v1743
        %v1821 = vunpack.c.h.b16 %v1743
        %v1822 = vunpack.c.l.b16 %v1744
        %v1823 = vunpack.c.h.b16 %v1744
        %v1824 = vunpack.c.l.b16 %v1745
        %v1825 = vunpack.c.h.b16 %v1745
        %v1826 = vunpack.c.l.b16 %v1746
        %v1827 = vunpack.c.h.b16 %v1746
        %v1828 = vunpack.c.l.b16 %v1747
        %v1829 = vunpack.c.h.b16 %v1747
        %v1830 = vunpack.c.l.b16 %v1748
        %v1831 = vunpack.c.h.b16 %v1748
        %v1832 = vunpack.c.l.b16 %v1749
        %v1833 = vunpack.c.h.b16 %v1749
        %v1834 = vunpack.c.l.b16 %v1750
        %v1835 = vunpack.c.h.b16 %v1750
        %v1836 = vunpack.c.l.b16 %v1751
        %v1837 = vunpack.c.h.b16 %v1751
        %v1838 = vunpack.c.l.b16 %v1752
        %v1839 = vunpack.c.h.b16 %v1752
        %v1840 = vunpack.c.l.b16 %v1753
        %v1841 = vunpack.c.h.b16 %v1753
        %v1842 = vunpack.c.l.b16 %v1754
        %v1843 = vunpack.c.h.b16 %v1754
        %v1844 = vunpack.c.l.b16 %v1755
        %v1845 = vunpack.c.h.b16 %v1755
        %v1846 = vunpack.c.l.b16 %v1756
        %v1847 = vunpack.c.h.b16 %v1756
        %v1848 = vunpack.c.l.b16 %v1757
        %v1849 = vunpack.c.h.b16 %v1757
        %v1850 = vunpack.c.l.b16 %v1758
        %v1851 = vunpack.c.h.b16 %v1758
        %v1852 = vunpack.c.l.b16 %v1759
        %v1853 = vunpack.c.h.b16 %v1759
        %v1854 = vunpack.c.l.b16 %v1760
        %v1855 = vunpack.c.h.b16 %v1760
        %v1856 = vunpack.c.l.b16 %v1761
        %v1857 = vunpack.c.h.b16 %v1761
        %v1858 = vunpack.c.l.b16 %v1762
        %v1859 = vunpack.c.h.b16 %v1762
        %v1860 = vunpack.c.l.b16 %v1763
        %v1861 = vunpack.c.h.b16 %v1763
        %v1862 = vunpack.c.l.b16 %v1764
        %v1863 = vunpack.c.h.b16 %v1764
        %v1864 = vunpack.c.l.b16 %v1765
        %v1865 = vunpack.c.h.b16 %v1765
        %v1866 = vunpack.c.l.b16 %v1766
        %v1867 = vunpack.c.h.b16 %v1766
        %v1868 = vunpack.c.l.b16 %v1767
        %v1869 = vunpack.c.h.b16 %v1767
        %v1870 = vunpack.c.l.b16 %v1768
        %v1871 = vunpack.c.h.b16 %v1768
        %v1872 = vunpack.c.l.b16 %v1769
        %v1873 = vunpack.c.h.b16 %v1769
        %v1874 = vunpack.c.l.b16 %v1770
        %v1875 = vunpack.c.h.b16 %v1770
        %v1876 = vunpack.c.l.b16 %v1771
        %v1877 = vunpack.c.h.b16 %v1771
        %v1878 = vunpack.c.l.b16 %v1772
        %v1879 = vunpack.c.h.b16 %v1772
        %v1880 = vunpack.c.l.b16 %v1773
        %v1881 = vunpack.c.h.b16 %v1773
        %v1882 = vpack.c.b16 %v1820, %v1818
        %v1883 = vpack.c.b16 %v1821, %v1819
        %v1884 = vpack.c.b16 %v1824, %v1822
        %v1885 = vpack.c.b16 %v1825, %v1823
        %v1886 = vpack.c.b16 %v1828, %v1826
        %v1887 = vpack.c.b16 %v1829, %v1827
        %v1888 = vpack.c.b16 %v1832, %v1830
        %v1889 = vpack.c.b16 %v1833, %v1831
        %v1890 = vpack.c.b16 %v1836, %v1834
        %v1891 = vpack.c.b16 %v1837, %v1835
        %v1892 = vpack.c.b16 %v1840, %v1838
        %v1893 = vpack.c.b16 %v1841, %v1839
        %v1894 = vpack.c.b16 %v1844, %v1842
        %v1895 = vpack.c.b16 %v1845, %v1843
        %v1896 = vpack.c.b16 %v1848, %v1846
        %v1897 = vpack.c.b16 %v1849, %v1847
        %v1898 = vpack.c.b16 %v1852, %v1850
        %v1899 = vpack.c.b16 %v1853, %v1851
        %v1900 = vpack.c.b16 %v1856, %v1854
        %v1901 = vpack.c.b16 %v1857, %v1855
        %v1902 = vpack.c.b16 %v1860, %v1858
        %v1903 = vpack.c.b16 %v1861, %v1859
        %v1904 = vpack.c.b16 %v1864, %v1862
        %v1905 = vpack.c.b16 %v1865, %v1863
        %v1906 = vpack.c.b16 %v1868, %v1866
        %v1907 = vpack.c.b16 %v1869, %v1867
        %v1908 = vpack.c.b16 %v1872, %v1870
        %v1909 = vpack.c.b16 %v1873, %v1871
        %v1910 = vpack.c.b16 %v1876, %v1874
        %v1911 = vpack.c.b16 %v1877, %v1875
        %v1912 = vpack.c.b16 %v1880, %v1878
        %v1913 = vpack.c.b16 %v1881, %v1879
        %1946 = vmatprep.subr.bf16.mxu0 %v1897
        %1947 = vmatpush1.bf16.msra.mxu0 %v1896
        %1948 = vmatprep.subr.bf16.mxu0 %v1895
        %1949 = vmatpush1.bf16.msra.mxu0 %v1894
        %1950 = vmatprep.subr.bf16.mxu0 %v1893
        %1951 = vmatpush1.bf16.msra.mxu0 %v1892
        %1952 = vmatprep.subr.bf16.mxu0 %v1891
        %1953 = vmatpush1.bf16.msra.mxu0 %v1890
        %1954 = vmatprep.subr.bf16.mxu0 %v1889
        %1955 = vmatpush1.bf16.msra.mxu0 %v1888
        %1956 = vmatprep.subr.bf16.mxu0 %v1887
        %1957 = vmatpush1.bf16.msra.mxu0 %v1886
        %1958 = vmatprep.subr.bf16.mxu0 %v1885
        %1959 = vmatpush1.bf16.msra.mxu0 %v1884
        %1960 = vmatprep.subr.bf16.mxu0 %v1883
        %1961 = vmatpush1.bf16.msra.mxu0 %v1882
        %1962 = vmatprep.subr.bf16.mxu0 %v1913
        %1963 = vmatpush2.bf16.msra.mxu0 %v1912
        %1964 = vmatprep.subr.bf16.mxu0 %v1911
        %1965 = vmatpush2.bf16.msra.mxu0 %v1910
        %1966 = vmatprep.subr.bf16.mxu0 %v1909
        %1967 = vmatpush2.bf16.msra.mxu0 %v1908
        %1968 = vmatprep.subr.bf16.mxu0 %v1907
        %1969 = vmatpush2.bf16.msra.mxu0 %v1906
        %1970 = vmatprep.subr.bf16.mxu0 %v1905
        %1971 = vmatpush2.bf16.msra.mxu0 %v1904
        %1972 = vmatprep.subr.bf16.mxu0 %v1903
        %1973 = vmatpush2.bf16.msra.mxu0 %v1902
        %1974 = vmatprep.subr.bf16.mxu0 %v1901
        %1975 = vmatpush2.bf16.msra.mxu0 %v1900
        %1976 = vmatprep.subr.bf16.mxu0 %v1899
        %1977 = vmatpush2.bf16.msra.mxu0 %v1898
        %1978 = vmatprep.mubr.bf16.mxu0 %v1727
        %1979 = vmatmul.mubr.bf16.gmra.mxu0 %v1726
        %v1980 = vpop.f32.mrf.mxu0
        %v1981 = vadd.f32 %v1779, %v1980
        %v1982 = vpop.f32.mrf.mxu0
        %v1983 = vadd.f32 %v1783, %v1982
        %v1984 = vpop.f32.mrf.mxu0
        %v1985 = vadd.f32 %v1779, %v1984
        %v1986 = vpop.f32.mrf.mxu0
        %v1987 = vadd.f32 %v1783, %v1986
        %1988 = vmatprep.mubr.bf16.mxu0 %v1729
        %1989 = vmatmul.mubr.bf16.gmra.mxu0 %v1728
        %v1990 = vpop.f32.mrf.mxu0
        %v1991 = vadd.f32 %v1779, %v1990
        %v1992 = vpop.f32.mrf.mxu0
        %v1993 = vadd.f32 %v1783, %v1992
        %v1994 = vpop.f32.mrf.mxu0
        %v1995 = vadd.f32 %v1779, %v1994
        %v1996 = vpop.f32.mrf.mxu0
        %v1997 = vadd.f32 %v1783, %v1996
        %1998 = vmatprep.mubr.bf16.mxu0 %v1731
        %1999 = vmatmul.mubr.bf16.gmra.mxu0 %v1730
        %v2000 = vpop.f32.mrf.mxu0
        %v2001 = vadd.f32 %v1779, %v2000
        %v2002 = vpop.f32.mrf.mxu0
        %v2003 = vadd.f32 %v1783, %v2002
        %v2004 = vpop.f32.mrf.mxu0
        %v2005 = vadd.f32 %v1779, %v2004
        %v2006 = vpop.f32.mrf.mxu0
        %v2007 = vadd.f32 %v1783, %v2006
        %2008 = vmatprep.mubr.bf16.mxu0 %v1733
        %2009 = vmatmul.mubr.bf16.gmra.mxu0 %v1732
        %v2010 = vpop.f32.mrf.mxu0
        %v2011 = vadd.f32 %v1779, %v2010
        %v2012 = vpop.f32.mrf.mxu0
        %v2013 = vadd.f32 %v1783, %v2012
        %v2014 = vpop.f32.mrf.mxu0
        %v2015 = vadd.f32 %v1779, %v2014
        %v2016 = vpop.f32.mrf.mxu0
        %v2017 = vadd.f32 %v1783, %v2016
        %2018 = vmatprep.mubr.bf16.mxu0 %v1735
        %2019 = vmatmul.mubr.bf16.gmra.mxu0 %v1734
        %v2020 = vpop.f32.mrf.mxu0
        %v2021 = vadd.f32 %v1779, %v2020
        %v2022 = vpop.f32.mrf.mxu0
        %v2023 = vadd.f32 %v1783, %v2022
        %v2024 = vpop.f32.mrf.mxu0
        %v2025 = vadd.f32 %v1779, %v2024
        %v2026 = vpop.f32.mrf.mxu0
        %v2027 = vadd.f32 %v1783, %v2026
        %2028 = vmatprep.mubr.bf16.mxu0 %v1737
        %2029 = vmatmul.mubr.bf16.gmra.mxu0 %v1736
        %v2030 = vpop.f32.mrf.mxu0
        %v2031 = vadd.f32 %v1779, %v2030
        %v2032 = vpop.f32.mrf.mxu0
        %v2033 = vadd.f32 %v1783, %v2032
        %v2034 = vpop.f32.mrf.mxu0
        %v2035 = vadd.f32 %v1779, %v2034
        %v2036 = vpop.f32.mrf.mxu0
        %v2037 = vadd.f32 %v1783, %v2036
        %2038 = vmatprep.mubr.bf16.mxu0 %v1739
        %2039 = vmatmul.mubr.bf16.gmra.mxu0 %v1738
        %v2040 = vpop.f32.mrf.mxu0
        %v2041 = vadd.f32 %v1779, %v2040
        %v2042 = vpop.f32.mrf.mxu0
        %v2043 = vadd.f32 %v1783, %v2042
        %v2044 = vpop.f32.mrf.mxu0
        %v2045 = vadd.f32 %v1779, %v2044
        %v2046 = vpop.f32.mrf.mxu0
        %v2047 = vadd.f32 %v1783, %v2046
        %2048 = vmatprep.mubr.bf16.mxu0 %v1741
        %2049 = vmatmul.mubr.bf16.gmra.mxu0 %v1740
        %v2050 = vpop.f32.mrf.mxu0
        %v2051 = vadd.f32 %v1779, %v2050
        %v2052 = vpop.f32.mrf.mxu0
        %v2053 = vadd.f32 %v1783, %v2052
        %v2054 = vpop.f32.mrf.mxu0
        %v2055 = vadd.f32 %v1779, %v2054
        %v2056 = vpop.f32.mrf.mxu0
        %v2057 = vadd.f32 %v1783, %v2056
        %2058 = vdwg.mxu0
        %v2059 = vpack.c.bf16 %v1344, %v1342
        %v2060 = vpack.c.bf16 %v1345, %v1343
        %v2061 = vpack.c.bf16 %v1348, %v1346
        %v2062 = vpack.c.bf16 %v1349, %v1347
        %v2063 = vpack.c.bf16 %v1352, %v1350
        %v2064 = vpack.c.bf16 %v1353, %v1351
        %v2065 = vpack.c.bf16 %v1356, %v1354
        %v2066 = vpack.c.bf16 %v1357, %v1355
        %v2067 = vpack.c.bf16 %v1360, %v1358
        %v2068 = vpack.c.bf16 %v1361, %v1359
        %v2069 = vpack.c.bf16 %v1364, %v1362
        %v2070 = vpack.c.bf16 %v1365, %v1363
        %v2071 = vpack.c.bf16 %v1368, %v1366
        %v2072 = vpack.c.bf16 %v1369, %v1367
        %v2073 = vpack.c.bf16 %v1372, %v1370
        %v2074 = vpack.c.bf16 %v1373, %v1371
        %v2075 = vpack.c.bf16 %v1376, %v1374
        %v2076 = vpack.c.bf16 %v1377, %v1375
        %v2077 = vpack.c.bf16 %v1380, %v1378
        %v2078 = vpack.c.bf16 %v1381, %v1379
        %v2079 = vpack.c.bf16 %v1384, %v1382
        %v2080 = vpack.c.bf16 %v1385, %v1383
        %v2081 = vpack.c.bf16 %v1388, %v1386
        %v2082 = vpack.c.bf16 %v1389, %v1387
        %v2083 = vpack.c.bf16 %v1392, %v1390
        %v2084 = vpack.c.bf16 %v1393, %v1391
        %v2085 = vpack.c.bf16 %v1396, %v1394
        %v2086 = vpack.c.bf16 %v1397, %v1395
        %v2087 = vpack.c.bf16 %v1400, %v1398
        %v2088 = vpack.c.bf16 %v1401, %v1399
        %v2089 = vpack.c.bf16 %v1404, %v1402
        %v2090 = vpack.c.bf16 %v1405, %v1403
        %v2091 = vld [vmem:[#allocation11] sm:$0xff]
        %v2092 = vld [vmem:[#allocation11 + $0x8] sm:$0xff]
        %v2093 = vld [vmem:[#allocation11 + $0x10] sm:$0xff]
        %v2094 = vld [vmem:[#allocation11 + $0x18] sm:$0xff]
        %v2095 = vld [vmem:[#allocation11 + $0x20] sm:$0xff]
        %v2096 = vld [vmem:[#allocation11 + $0x28] sm:$0xff]
        %v2097 = vld [vmem:[#allocation11 + $0x30] sm:$0xff]
        %v2098 = vld [vmem:[#allocation11 + $0x38] sm:$0xff]
        %v2099 = vld [vmem:[#allocation11 + $0x40] sm:$0xff]
        %v2100 = vld [vmem:[#allocation11 + $0x48] sm:$0xff]
        %v2101 = vld [vmem:[#allocation11 + $0x50] sm:$0xff]
        %v2102 = vld [vmem:[#allocation11 + $0x58] sm:$0xff]
        %v2103 = vld [vmem:[#allocation11 + $0x60] sm:$0xff]
        %v2104 = vld [vmem:[#allocation11 + $0x68] sm:$0xff]
        %v2105 = vld [vmem:[#allocation11 + $0x70] sm:$0xff]
        %v2106 = vld [vmem:[#allocation11 + $0x78] sm:$0xff]
        %v2107 = vld [vmem:[#allocation11 + $0x80] sm:$0xff]
        %v2108 = vld [vmem:[#allocation11 + $0x88] sm:$0xff]
        %v2109 = vld [vmem:[#allocation11 + $0x90] sm:$0xff]
        %v2110 = vld [vmem:[#allocation11 + $0x98] sm:$0xff]
        %v2111 = vld [vmem:[#allocation11 + $0xa0] sm:$0xff]
        %v2112 = vld [vmem:[#allocation11 + $0xa8] sm:$0xff]
        %v2113 = vld [vmem:[#allocation11 + $0xb0] sm:$0xff]
        %v2114 = vld [vmem:[#allocation11 + $0xb8] sm:$0xff]
        %v2115 = vld [vmem:[#allocation11 + $0xc0] sm:$0xff]
        %v2116 = vld [vmem:[#allocation11 + $0xc8] sm:$0xff]
        %v2117 = vld [vmem:[#allocation11 + $0xd0] sm:$0xff]
        %v2118 = vld [vmem:[#allocation11 + $0xd8] sm:$0xff]
        %v2119 = vld [vmem:[#allocation11 + $0xe0] sm:$0xff]
        %v2120 = vld [vmem:[#allocation11 + $0xe8] sm:$0xff]
        %v2121 = vld [vmem:[#allocation11 + $0xf0] sm:$0xff]
        %v2122 = vld [vmem:[#allocation11 + $0xf8] sm:$0xff]
        %v2123 = vld [vmem:[#allocation11 + $0x100] sm:$0xff]
        %v2124 = vld [vmem:[#allocation11 + $0x108] sm:$0xff]
        %v2125 = vld [vmem:[#allocation11 + $0x110] sm:$0xff]
        %v2126 = vld [vmem:[#allocation11 + $0x118] sm:$0xff]
        %v2127 = vld [vmem:[#allocation11 + $0x120] sm:$0xff]
        %v2128 = vld [vmem:[#allocation11 + $0x128] sm:$0xff]
        %v2129 = vld [vmem:[#allocation11 + $0x130] sm:$0xff]
        %v2130 = vld [vmem:[#allocation11 + $0x138] sm:$0xff]
        %v2131 = vld [vmem:[#allocation11 + $0x140] sm:$0xff]
        %v2132 = vld [vmem:[#allocation11 + $0x148] sm:$0xff]
        %v2133 = vld [vmem:[#allocation11 + $0x150] sm:$0xff]
        %v2134 = vld [vmem:[#allocation11 + $0x158] sm:$0xff]
        %v2135 = vld [vmem:[#allocation11 + $0x160] sm:$0xff]
        %v2136 = vld [vmem:[#allocation11 + $0x168] sm:$0xff]
        %v2137 = vld [vmem:[#allocation11 + $0x170] sm:$0xff]
        %v2138 = vld [vmem:[#allocation11 + $0x178] sm:$0xff]
        %v2139 = vld [vmem:[#allocation11 + $0x180] sm:$0xff]
        %v2140 = vld [vmem:[#allocation11 + $0x188] sm:$0xff]
        %v2141 = vld [vmem:[#allocation11 + $0x190] sm:$0xff]
        %v2142 = vld [vmem:[#allocation11 + $0x198] sm:$0xff]
        %v2143 = vld [vmem:[#allocation11 + $0x1a0] sm:$0xff]
        %v2144 = vld [vmem:[#allocation11 + $0x1a8] sm:$0xff]
        %v2145 = vld [vmem:[#allocation11 + $0x1b0] sm:$0xff]
        %v2146 = vld [vmem:[#allocation11 + $0x1b8] sm:$0xff]
        %v2147 = vld [vmem:[#allocation11 + $0x1c0] sm:$0xff]
        %v2148 = vld [vmem:[#allocation11 + $0x1c8] sm:$0xff]
        %v2149 = vld [vmem:[#allocation11 + $0x1d0] sm:$0xff]
        %v2150 = vld [vmem:[#allocation11 + $0x1d8] sm:$0xff]
        %v2151 = vld [vmem:[#allocation11 + $0x1e0] sm:$0xff]
        %v2152 = vld [vmem:[#allocation11 + $0x1e8] sm:$0xff]
        %v2153 = vld [vmem:[#allocation11 + $0x1f0] sm:$0xff]
        %v2154 = vld [vmem:[#allocation11 + $0x1f8] sm:$0xff]
        %v2155 = vld [vmem:[%s6] sm:$0xf]
        %v2157 = vlaneseq
        %v2158 = vshrl.u32 %v2157, 7
        %v2159 = vsub.s32 0, %v2158
        %v2160 = vrot.slane %v2155, %v2159
        %v2161 = vlaneseq
        %v2162 = vshrl.u32 %v2161, 7
        %v2163 = vsub.s32 1, %v2162
        %v2164 = vrot.slane %v2155, %v2163
        %v2165 = vlaneseq
        %v2166 = vshrl.u32 %v2165, 7
        %v2167 = vsub.s32 2, %v2166
        %v2168 = vrot.slane %v2155, %v2167
        %v2169 = vlaneseq
        %v2170 = vshrl.u32 %v2169, 7
        %v2171 = vsub.s32 3, %v2170
        %v2172 = vrot.slane %v2155, %v2171
        %v2241 = vunpack.c.l.b16 %v2091
        %v2242 = vunpack.c.h.b16 %v2091
        %v2243 = vunpack.c.l.b16 %v2092
        %v2244 = vunpack.c.h.b16 %v2092
        %v2245 = vunpack.c.l.b16 %v2093
        %v2246 = vunpack.c.h.b16 %v2093
        %v2247 = vunpack.c.l.b16 %v2094
        %v2248 = vunpack.c.h.b16 %v2094
        %v2249 = vunpack.c.l.b16 %v2095
        %v2250 = vunpack.c.h.b16 %v2095
        %v2251 = vunpack.c.l.b16 %v2096
        %v2252 = vunpack.c.h.b16 %v2096
        %v2253 = vunpack.c.l.b16 %v2097
        %v2254 = vunpack.c.h.b16 %v2097
        %v2255 = vunpack.c.l.b16 %v2098
        %v2256 = vunpack.c.h.b16 %v2098
        %v2257 = vunpack.c.l.b16 %v2099
        %v2258 = vunpack.c.h.b16 %v2099
        %v2259 = vunpack.c.l.b16 %v2100
        %v2260 = vunpack.c.h.b16 %v2100
        %v2261 = vunpack.c.l.b16 %v2101
        %v2262 = vunpack.c.h.b16 %v2101
        %v2263 = vunpack.c.l.b16 %v2102
        %v2264 = vunpack.c.h.b16 %v2102
        %v2265 = vunpack.c.l.b16 %v2103
        %v2266 = vunpack.c.h.b16 %v2103
        %v2267 = vunpack.c.l.b16 %v2104
        %v2268 = vunpack.c.h.b16 %v2104
        %v2269 = vunpack.c.l.b16 %v2105
        %v2270 = vunpack.c.h.b16 %v2105
        %v2271 = vunpack.c.l.b16 %v2106
        %v2272 = vunpack.c.h.b16 %v2106
        %v2273 = vunpack.c.l.b16 %v2107
        %v2274 = vunpack.c.h.b16 %v2107
        %v2275 = vunpack.c.l.b16 %v2108
        %v2276 = vunpack.c.h.b16 %v2108
        %v2277 = vunpack.c.l.b16 %v2109
        %v2278 = vunpack.c.h.b16 %v2109
        %v2279 = vunpack.c.l.b16 %v2110
        %v2280 = vunpack.c.h.b16 %v2110
        %v2281 = vunpack.c.l.b16 %v2111
        %v2282 = vunpack.c.h.b16 %v2111
        %v2283 = vunpack.c.l.b16 %v2112
        %v2284 = vunpack.c.h.b16 %v2112
        %v2285 = vunpack.c.l.b16 %v2113
        %v2286 = vunpack.c.h.b16 %v2113
        %v2287 = vunpack.c.l.b16 %v2114
        %v2288 = vunpack.c.h.b16 %v2114
        %v2289 = vunpack.c.l.b16 %v2115
        %v2290 = vunpack.c.h.b16 %v2115
        %v2291 = vunpack.c.l.b16 %v2116
        %v2292 = vunpack.c.h.b16 %v2116
        %v2293 = vunpack.c.l.b16 %v2117
        %v2294 = vunpack.c.h.b16 %v2117
        %v2295 = vunpack.c.l.b16 %v2118
        %v2296 = vunpack.c.h.b16 %v2118
        %v2297 = vunpack.c.l.b16 %v2119
        %v2298 = vunpack.c.h.b16 %v2119
        %v2299 = vunpack.c.l.b16 %v2120
        %v2300 = vunpack.c.h.b16 %v2120
        %v2301 = vunpack.c.l.b16 %v2121
        %v2302 = vunpack.c.h.b16 %v2121
        %v2303 = vunpack.c.l.b16 %v2122
        %v2304 = vunpack.c.h.b16 %v2122
        %v2305 = vunpack.c.l.b16 %v2123
        %v2306 = vunpack.c.h.b16 %v2123
        %v2307 = vunpack.c.l.b16 %v2124
        %v2308 = vunpack.c.h.b16 %v2124
        %v2309 = vunpack.c.l.b16 %v2125
        %v2310 = vunpack.c.h.b16 %v2125
        %v2311 = vunpack.c.l.b16 %v2126
        %v2312 = vunpack.c.h.b16 %v2126
        %v2313 = vunpack.c.l.b16 %v2127
        %v2314 = vunpack.c.h.b16 %v2127
        %v2315 = vunpack.c.l.b16 %v2128
        %v2316 = vunpack.c.h.b16 %v2128
        %v2317 = vunpack.c.l.b16 %v2129
        %v2318 = vunpack.c.h.b16 %v2129
        %v2319 = vunpack.c.l.b16 %v2130
        %v2320 = vunpack.c.h.b16 %v2130
        %v2321 = vunpack.c.l.b16 %v2131
        %v2322 = vunpack.c.h.b16 %v2131
        %v2323 = vunpack.c.l.b16 %v2132
        %v2324 = vunpack.c.h.b16 %v2132
        %v2325 = vunpack.c.l.b16 %v2133
        %v2326 = vunpack.c.h.b16 %v2133
        %v2327 = vunpack.c.l.b16 %v2134
        %v2328 = vunpack.c.h.b16 %v2134
        %v2329 = vunpack.c.l.b16 %v2135
        %v2330 = vunpack.c.h.b16 %v2135
        %v2331 = vunpack.c.l.b16 %v2136
        %v2332 = vunpack.c.h.b16 %v2136
        %v2333 = vunpack.c.l.b16 %v2137
        %v2334 = vunpack.c.h.b16 %v2137
        %v2335 = vunpack.c.l.b16 %v2138
        %v2336 = vunpack.c.h.b16 %v2138
        %v2337 = vunpack.c.l.b16 %v2139
        %v2338 = vunpack.c.h.b16 %v2139
        %v2339 = vunpack.c.l.b16 %v2140
        %v2340 = vunpack.c.h.b16 %v2140
        %v2341 = vunpack.c.l.b16 %v2141
        %v2342 = vunpack.c.h.b16 %v2141
        %v2343 = vunpack.c.l.b16 %v2142
        %v2344 = vunpack.c.h.b16 %v2142
        %v2345 = vunpack.c.l.b16 %v2143
        %v2346 = vunpack.c.h.b16 %v2143
        %v2347 = vunpack.c.l.b16 %v2144
        %v2348 = vunpack.c.h.b16 %v2144
        %v2349 = vunpack.c.l.b16 %v2145
        %v2350 = vunpack.c.h.b16 %v2145
        %v2351 = vunpack.c.l.b16 %v2146
        %v2352 = vunpack.c.h.b16 %v2146
        %v2353 = vunpack.c.l.b16 %v2147
        %v2354 = vunpack.c.h.b16 %v2147
        %v2355 = vunpack.c.l.b16 %v2148
        %v2356 = vunpack.c.h.b16 %v2148
        %v2357 = vunpack.c.l.b16 %v2149
        %v2358 = vunpack.c.h.b16 %v2149
        %v2359 = vunpack.c.l.b16 %v2150
        %v2360 = vunpack.c.h.b16 %v2150
        %v2361 = vunpack.c.l.b16 %v2151
        %v2362 = vunpack.c.h.b16 %v2151
        %v2363 = vunpack.c.l.b16 %v2152
        %v2364 = vunpack.c.h.b16 %v2152
        %v2365 = vunpack.c.l.b16 %v2153
        %v2366 = vunpack.c.h.b16 %v2153
        %v2367 = vunpack.c.l.b16 %v2154
        %v2368 = vunpack.c.h.b16 %v2154
        %v2369 = vpack.c.b16 %v2245, %v2241
        %v2370 = vpack.c.b16 %v2246, %v2242
        %v2371 = vpack.c.b16 %v2247, %v2243
        %v2372 = vpack.c.b16 %v2248, %v2244
        %v2373 = vpack.c.b16 %v2253, %v2249
        %v2374 = vpack.c.b16 %v2254, %v2250
        %v2375 = vpack.c.b16 %v2255, %v2251
        %v2376 = vpack.c.b16 %v2256, %v2252
        %v2377 = vpack.c.b16 %v2261, %v2257
        %v2378 = vpack.c.b16 %v2262, %v2258
        %v2379 = vpack.c.b16 %v2263, %v2259
        %v2380 = vpack.c.b16 %v2264, %v2260
        %v2381 = vpack.c.b16 %v2269, %v2265
        %v2382 = vpack.c.b16 %v2270, %v2266
        %v2383 = vpack.c.b16 %v2271, %v2267
        %v2384 = vpack.c.b16 %v2272, %v2268
        %v2385 = vpack.c.b16 %v2277, %v2273
        %v2386 = vpack.c.b16 %v2278, %v2274
        %v2387 = vpack.c.b16 %v2279, %v2275
        %v2388 = vpack.c.b16 %v2280, %v2276
        %v2389 = vpack.c.b16 %v2285, %v2281
        %v2390 = vpack.c.b16 %v2286, %v2282
        %v2391 = vpack.c.b16 %v2287, %v2283
        %v2392 = vpack.c.b16 %v2288, %v2284
        %v2393 = vpack.c.b16 %v2293, %v2289
        %v2394 = vpack.c.b16 %v2294, %v2290
        %v2395 = vpack.c.b16 %v2295, %v2291
        %v2396 = vpack.c.b16 %v2296, %v2292
        %v2397 = vpack.c.b16 %v2301, %v2297
        %v2398 = vpack.c.b16 %v2302, %v2298
        %v2399 = vpack.c.b16 %v2303, %v2299
        %v2400 = vpack.c.b16 %v2304, %v2300
        %v2401 = vpack.c.b16 %v2309, %v2305
        %v2402 = vpack.c.b16 %v2310, %v2306
        %v2403 = vpack.c.b16 %v2311, %v2307
        %v2404 = vpack.c.b16 %v2312, %v2308
        %v2405 = vpack.c.b16 %v2317, %v2313
        %v2406 = vpack.c.b16 %v2318, %v2314
        %v2407 = vpack.c.b16 %v2319, %v2315
        %v2408 = vpack.c.b16 %v2320, %v2316
        %v2409 = vpack.c.b16 %v2325, %v2321
        %v2410 = vpack.c.b16 %v2326, %v2322
        %v2411 = vpack.c.b16 %v2327, %v2323
        %v2412 = vpack.c.b16 %v2328, %v2324
        %v2413 = vpack.c.b16 %v2333, %v2329
        %v2414 = vpack.c.b16 %v2334, %v2330
        %v2415 = vpack.c.b16 %v2335, %v2331
        %v2416 = vpack.c.b16 %v2336, %v2332
        %v2417 = vpack.c.b16 %v2341, %v2337
        %v2418 = vpack.c.b16 %v2342, %v2338
        %v2419 = vpack.c.b16 %v2343, %v2339
        %v2420 = vpack.c.b16 %v2344, %v2340
        %v2421 = vpack.c.b16 %v2349, %v2345
        %v2422 = vpack.c.b16 %v2350, %v2346
        %v2423 = vpack.c.b16 %v2351, %v2347
        %v2424 = vpack.c.b16 %v2352, %v2348
        %v2425 = vpack.c.b16 %v2357, %v2353
        %v2426 = vpack.c.b16 %v2358, %v2354
        %v2427 = vpack.c.b16 %v2359, %v2355
        %v2428 = vpack.c.b16 %v2360, %v2356
        %v2429 = vpack.c.b16 %v2365, %v2361
        %v2430 = vpack.c.b16 %v2366, %v2362
        %v2431 = vpack.c.b16 %v2367, %v2363
        %v2432 = vpack.c.b16 %v2368, %v2364
        %2497 = vmatprep.subr.bf16.mxu0 %v2398
        %2498 = vmatpush1.bf16.msra.mxu0 %v2397
        %2499 = vmatprep.subr.bf16.mxu0 %v2394
        %2500 = vmatpush1.bf16.msra.mxu0 %v2393
        %2501 = vmatprep.subr.bf16.mxu0 %v2390
        %2502 = vmatpush1.bf16.msra.mxu0 %v2389
        %2503 = vmatprep.subr.bf16.mxu0 %v2386
        %2504 = vmatpush1.bf16.msra.mxu0 %v2385
        %2505 = vmatprep.subr.bf16.mxu0 %v2382
        %2506 = vmatpush1.bf16.msra.mxu0 %v2381
        %2507 = vmatprep.subr.bf16.mxu0 %v2378
        %2508 = vmatpush1.bf16.msra.mxu0 %v2377
        %2509 = vmatprep.subr.bf16.mxu0 %v2374
        %2510 = vmatpush1.bf16.msra.mxu0 %v2373
        %2511 = vmatprep.subr.bf16.mxu0 %v2370
        %2512 = vmatpush1.bf16.msra.mxu0 %v2369
        %2513 = vmatprep.subr.bf16.mxu0 %v2430
        %2514 = vmatpush2.bf16.msra.mxu0 %v2429
        %2515 = vmatprep.subr.bf16.mxu0 %v2426
        %2516 = vmatpush2.bf16.msra.mxu0 %v2425
        %2517 = vmatprep.subr.bf16.mxu0 %v2422
        %2518 = vmatpush2.bf16.msra.mxu0 %v2421
        %2519 = vmatprep.subr.bf16.mxu0 %v2418
        %2520 = vmatpush2.bf16.msra.mxu0 %v2417
        %2521 = vmatprep.subr.bf16.mxu0 %v2414
        %2522 = vmatpush2.bf16.msra.mxu0 %v2413
        %2523 = vmatprep.subr.bf16.mxu0 %v2410
        %2524 = vmatpush2.bf16.msra.mxu0 %v2409
        %2525 = vmatprep.subr.bf16.mxu0 %v2406
        %2526 = vmatpush2.bf16.msra.mxu0 %v2405
        %2527 = vmatprep.subr.bf16.mxu0 %v2402
        %2528 = vmatpush2.bf16.msra.mxu0 %v2401
        %2529 = vmatprep.mubr.bf16.mxu0 %v2060
        %2530 = vmatmul.mubr.bf16.gmra.mxu0 %v2059
        %v2531 = vpop.f32.mrf.mxu0
        %v2532 = vadd.f32 %v2160, %v2531
        %v2533 = vpop.f32.mrf.mxu0
        %v2534 = vadd.f32 %v2164, %v2533
        %v2535 = vpop.f32.mrf.mxu0
        %v2536 = vadd.f32 %v2160, %v2535
        %v2537 = vpop.f32.mrf.mxu0
        %v2538 = vadd.f32 %v2164, %v2537
        %2539 = vmatprep.mubr.bf16.mxu0 %v2062
        %2540 = vmatmul.mubr.bf16.gmra.mxu0 %v2061
        %v2541 = vpop.f32.mrf.mxu0
        %v2542 = vadd.f32 %v2160, %v2541
        %v2543 = vpop.f32.mrf.mxu0
        %v2544 = vadd.f32 %v2164, %v2543
        %v2545 = vpop.f32.mrf.mxu0
        %v2546 = vadd.f32 %v2160, %v2545
        %v2547 = vpop.f32.mrf.mxu0
        %v2548 = vadd.f32 %v2164, %v2547
        %2549 = vmatprep.mubr.bf16.mxu0 %v2064
        %2550 = vmatmul.mubr.bf16.gmra.mxu0 %v2063
        %v2551 = vpop.f32.mrf.mxu0
        %v2552 = vadd.f32 %v2160, %v2551
        %v2553 = vpop.f32.mrf.mxu0
        %v2554 = vadd.f32 %v2164, %v2553
        %v2555 = vpop.f32.mrf.mxu0
        %v2556 = vadd.f32 %v2160, %v2555
        %v2557 = vpop.f32.mrf.mxu0
        %v2558 = vadd.f32 %v2164, %v2557
        %2559 = vmatprep.mubr.bf16.mxu0 %v2066
        %2560 = vmatmul.mubr.bf16.gmra.mxu0 %v2065
        %v2561 = vpop.f32.mrf.mxu0
        %v2562 = vadd.f32 %v2160, %v2561
        %v2563 = vpop.f32.mrf.mxu0
        %v2564 = vadd.f32 %v2164, %v2563
        %v2565 = vpop.f32.mrf.mxu0
        %v2566 = vadd.f32 %v2160, %v2565
        %v2567 = vpop.f32.mrf.mxu0
        %v2568 = vadd.f32 %v2164, %v2567
        %2569 = vmatprep.mubr.bf16.mxu0 %v2068
        %2570 = vmatmul.mubr.bf16.gmra.mxu0 %v2067
        %v2571 = vpop.f32.mrf.mxu0
        %v2572 = vadd.f32 %v2160, %v2571
        %v2573 = vpop.f32.mrf.mxu0
        %v2574 = vadd.f32 %v2164, %v2573
        %v2575 = vpop.f32.mrf.mxu0
        %v2576 = vadd.f32 %v2160, %v2575
        %v2577 = vpop.f32.mrf.mxu0
        %v2578 = vadd.f32 %v2164, %v2577
        %2579 = vmatprep.mubr.bf16.mxu0 %v2070
        %2580 = vmatmul.mubr.bf16.gmra.mxu0 %v2069
        %v2581 = vpop.f32.mrf.mxu0
        %v2582 = vadd.f32 %v2160, %v2581
        %v2583 = vpop.f32.mrf.mxu0
        %v2584 = vadd.f32 %v2164, %v2583
        %v2585 = vpop.f32.mrf.mxu0
        %v2586 = vadd.f32 %v2160, %v2585
        %v2587 = vpop.f32.mrf.mxu0
        %v2588 = vadd.f32 %v2164, %v2587
        %2589 = vmatprep.mubr.bf16.mxu0 %v2072
        %2590 = vmatmul.mubr.bf16.gmra.mxu0 %v2071
        %v2591 = vpop.f32.mrf.mxu0
        %v2592 = vadd.f32 %v2160, %v2591
        %v2593 = vpop.f32.mrf.mxu0
        %v2594 = vadd.f32 %v2164, %v2593
        %v2595 = vpop.f32.mrf.mxu0
        %v2596 = vadd.f32 %v2160, %v2595
        %v2597 = vpop.f32.mrf.mxu0
        %v2598 = vadd.f32 %v2164, %v2597
        %2599 = vmatprep.mubr.bf16.mxu0 %v2074
        %2600 = vmatmul.mubr.bf16.gmra.mxu0 %v2073
        %v2601 = vpop.f32.mrf.mxu0
        %v2602 = vadd.f32 %v2160, %v2601
        %v2603 = vpop.f32.mrf.mxu0
        %v2604 = vadd.f32 %v2164, %v2603
        %v2605 = vpop.f32.mrf.mxu0
        %v2606 = vadd.f32 %v2160, %v2605
        %v2607 = vpop.f32.mrf.mxu0
        %v2608 = vadd.f32 %v2164, %v2607
        %2609 = vmatprep.mubr.bf16.mxu0 %v2076
        %2610 = vmatmul.mubr.bf16.gmra.mxu0 %v2075
        %v2611 = vpop.f32.mrf.mxu0
        %v2612 = vadd.f32 %v2160, %v2611
        %v2613 = vpop.f32.mrf.mxu0
        %v2614 = vadd.f32 %v2164, %v2613
        %v2615 = vpop.f32.mrf.mxu0
        %v2616 = vadd.f32 %v2160, %v2615
        %v2617 = vpop.f32.mrf.mxu0
        %v2618 = vadd.f32 %v2164, %v2617
        %2619 = vmatprep.mubr.bf16.mxu0 %v2078
        %2620 = vmatmul.mubr.bf16.gmra.mxu0 %v2077
        %v2621 = vpop.f32.mrf.mxu0
        %v2622 = vadd.f32 %v2160, %v2621
        %v2623 = vpop.f32.mrf.mxu0
        %v2624 = vadd.f32 %v2164, %v2623
        %v2625 = vpop.f32.mrf.mxu0
        %v2626 = vadd.f32 %v2160, %v2625
        %v2627 = vpop.f32.mrf.mxu0
        %v2628 = vadd.f32 %v2164, %v2627
        %2629 = vmatprep.mubr.bf16.mxu0 %v2080
        %2630 = vmatmul.mubr.bf16.gmra.mxu0 %v2079
        %v2631 = vpop.f32.mrf.mxu0
        %v2632 = vadd.f32 %v2160, %v2631
        %v2633 = vpop.f32.mrf.mxu0
        %v2634 = vadd.f32 %v2164, %v2633
        %v2635 = vpop.f32.mrf.mxu0
        %v2636 = vadd.f32 %v2160, %v2635
        %v2637 = vpop.f32.mrf.mxu0
        %v2638 = vadd.f32 %v2164, %v2637
        %2639 = vmatprep.mubr.bf16.mxu0 %v2082
        %2640 = vmatmul.mubr.bf16.gmra.mxu0 %v2081
        %v2641 = vpop.f32.mrf.mxu0
        %v2642 = vadd.f32 %v2160, %v2641
        %v2643 = vpop.f32.mrf.mxu0
        %v2644 = vadd.f32 %v2164, %v2643
        %v2645 = vpop.f32.mrf.mxu0
        %v2646 = vadd.f32 %v2160, %v2645
        %v2647 = vpop.f32.mrf.mxu0
        %v2648 = vadd.f32 %v2164, %v2647
        %2649 = vmatprep.mubr.bf16.mxu0 %v2084
        %2650 = vmatmul.mubr.bf16.gmra.mxu0 %v2083
        %v2651 = vpop.f32.mrf.mxu0
        %v2652 = vadd.f32 %v2160, %v2651
        %v2653 = vpop.f32.mrf.mxu0
        %v2654 = vadd.f32 %v2164, %v2653
        %v2655 = vpop.f32.mrf.mxu0
        %v2656 = vadd.f32 %v2160, %v2655
        %v2657 = vpop.f32.mrf.mxu0
        %v2658 = vadd.f32 %v2164, %v2657
        %2659 = vmatprep.mubr.bf16.mxu0 %v2086
        %2660 = vmatmul.mubr.bf16.gmra.mxu0 %v2085
        %v2661 = vpop.f32.mrf.mxu0
        %v2662 = vadd.f32 %v2160, %v2661
        %v2663 = vpop.f32.mrf.mxu0
        %v2664 = vadd.f32 %v2164, %v2663
        %v2665 = vpop.f32.mrf.mxu0
        %v2666 = vadd.f32 %v2160, %v2665
        %v2667 = vpop.f32.mrf.mxu0
        %v2668 = vadd.f32 %v2164, %v2667
        %2669 = vmatprep.mubr.bf16.mxu0 %v2088
        %2670 = vmatmul.mubr.bf16.gmra.mxu0 %v2087
        %v2671 = vpop.f32.mrf.mxu0
        %v2672 = vadd.f32 %v2160, %v2671
        %v2673 = vpop.f32.mrf.mxu0
        %v2674 = vadd.f32 %v2164, %v2673
        %v2675 = vpop.f32.mrf.mxu0
        %v2676 = vadd.f32 %v2160, %v2675
        %v2677 = vpop.f32.mrf.mxu0
        %v2678 = vadd.f32 %v2164, %v2677
        %2679 = vmatprep.mubr.bf16.mxu0 %v2090
        %2680 = vmatmul.mubr.bf16.gmra.mxu0 %v2089
        %v2681 = vpop.f32.mrf.mxu0
        %v2682 = vadd.f32 %v2160, %v2681
        %v2683 = vpop.f32.mrf.mxu0
        %v2684 = vadd.f32 %v2164, %v2683
        %v2685 = vpop.f32.mrf.mxu0
        %v2686 = vadd.f32 %v2160, %v2685
        %v2687 = vpop.f32.mrf.mxu0
        %v2688 = vadd.f32 %v2164, %v2687
        %2689 = vdwg.mxu0
        %2690 = vmatprep.subr.bf16.mxu0 %v2400
        %2691 = vmatpush1.bf16.msra.mxu0 %v2399
        %2692 = vmatprep.subr.bf16.mxu0 %v2396
        %2693 = vmatpush1.bf16.msra.mxu0 %v2395
        %2694 = vmatprep.subr.bf16.mxu0 %v2392
        %2695 = vmatpush1.bf16.msra.mxu0 %v2391
        %2696 = vmatprep.subr.bf16.mxu0 %v2388
        %2697 = vmatpush1.bf16.msra.mxu0 %v2387
        %2698 = vmatprep.subr.bf16.mxu0 %v2384
        %2699 = vmatpush1.bf16.msra.mxu0 %v2383
        %2700 = vmatprep.subr.bf16.mxu0 %v2380
        %2701 = vmatpush1.bf16.msra.mxu0 %v2379
        %2702 = vmatprep.subr.bf16.mxu0 %v2376
        %2703 = vmatpush1.bf16.msra.mxu0 %v2375
        %2704 = vmatprep.subr.bf16.mxu0 %v2372
        %2705 = vmatpush1.bf16.msra.mxu0 %v2371
        %2706 = vmatprep.subr.bf16.mxu0 %v2432
        %2707 = vmatpush2.bf16.msra.mxu0 %v2431
        %2708 = vmatprep.subr.bf16.mxu0 %v2428
        %2709 = vmatpush2.bf16.msra.mxu0 %v2427
        %2710 = vmatprep.subr.bf16.mxu0 %v2424
        %2711 = vmatpush2.bf16.msra.mxu0 %v2423
        %2712 = vmatprep.subr.bf16.mxu0 %v2420
        %2713 = vmatpush2.bf16.msra.mxu0 %v2419
        %2714 = vmatprep.subr.bf16.mxu0 %v2416
        %2715 = vmatpush2.bf16.msra.mxu0 %v2415
        %2716 = vmatprep.subr.bf16.mxu0 %v2412
        %2717 = vmatpush2.bf16.msra.mxu0 %v2411
        %2718 = vmatprep.subr.bf16.mxu0 %v2408
        %2719 = vmatpush2.bf16.msra.mxu0 %v2407
        %2720 = vmatprep.subr.bf16.mxu0 %v2404
        %2721 = vmatpush2.bf16.msra.mxu0 %v2403
        %2722 = vmatprep.mubr.bf16.mxu0 %v2060
        %2723 = vmatmul.mubr.bf16.gmra.mxu0 %v2059
        %v2724 = vpop.f32.mrf.mxu0
        %v2725 = vadd.f32 %v2168, %v2724
        %v2726 = vpop.f32.mrf.mxu0
        %v2727 = vadd.f32 %v2172, %v2726
        %v2728 = vpop.f32.mrf.mxu0
        %v2729 = vadd.f32 %v2168, %v2728
        %v2730 = vpop.f32.mrf.mxu0
        %v2731 = vadd.f32 %v2172, %v2730
        %2732 = vmatprep.mubr.bf16.mxu0 %v2062
        %2733 = vmatmul.mubr.bf16.gmra.mxu0 %v2061
        %v2734 = vpop.f32.mrf.mxu0
        %v2735 = vadd.f32 %v2168, %v2734
        %v2736 = vpop.f32.mrf.mxu0
        %v2737 = vadd.f32 %v2172, %v2736
        %v2738 = vpop.f32.mrf.mxu0
        %v2739 = vadd.f32 %v2168, %v2738
        %v2740 = vpop.f32.mrf.mxu0
        %v2741 = vadd.f32 %v2172, %v2740
        %2742 = vmatprep.mubr.bf16.mxu0 %v2064
        %2743 = vmatmul.mubr.bf16.gmra.mxu0 %v2063
        %v2744 = vpop.f32.mrf.mxu0
        %v2745 = vadd.f32 %v2168, %v2744
        %v2746 = vpop.f32.mrf.mxu0
        %v2747 = vadd.f32 %v2172, %v2746
        %v2748 = vpop.f32.mrf.mxu0
        %v2749 = vadd.f32 %v2168, %v2748
        %v2750 = vpop.f32.mrf.mxu0
        %v2751 = vadd.f32 %v2172, %v2750
        %2752 = vmatprep.mubr.bf16.mxu0 %v2066
        %2753 = vmatmul.mubr.bf16.gmra.mxu0 %v2065
        %v2754 = vpop.f32.mrf.mxu0
        %v2755 = vadd.f32 %v2168, %v2754
        %v2756 = vpop.f32.mrf.mxu0
        %v2757 = vadd.f32 %v2172, %v2756
        %v2758 = vpop.f32.mrf.mxu0
        %v2759 = vadd.f32 %v2168, %v2758
        %v2760 = vpop.f32.mrf.mxu0
        %v2761 = vadd.f32 %v2172, %v2760
        %2762 = vmatprep.mubr.bf16.mxu0 %v2068
        %2763 = vmatmul.mubr.bf16.gmra.mxu0 %v2067
        %v2764 = vpop.f32.mrf.mxu0
        %v2765 = vadd.f32 %v2168, %v2764
        %v2766 = vpop.f32.mrf.mxu0
        %v2767 = vadd.f32 %v2172, %v2766
        %v2768 = vpop.f32.mrf.mxu0
        %v2769 = vadd.f32 %v2168, %v2768
        %v2770 = vpop.f32.mrf.mxu0
        %v2771 = vadd.f32 %v2172, %v2770
        %2772 = vmatprep.mubr.bf16.mxu0 %v2070
        %2773 = vmatmul.mubr.bf16.gmra.mxu0 %v2069
        %v2774 = vpop.f32.mrf.mxu0
        %v2775 = vadd.f32 %v2168, %v2774
        %v2776 = vpop.f32.mrf.mxu0
        %v2777 = vadd.f32 %v2172, %v2776
        %v2778 = vpop.f32.mrf.mxu0
        %v2779 = vadd.f32 %v2168, %v2778
        %v2780 = vpop.f32.mrf.mxu0
        %v2781 = vadd.f32 %v2172, %v2780
        %2782 = vmatprep.mubr.bf16.mxu0 %v2072
        %2783 = vmatmul.mubr.bf16.gmra.mxu0 %v2071
        %v2784 = vpop.f32.mrf.mxu0
        %v2785 = vadd.f32 %v2168, %v2784
        %v2786 = vpop.f32.mrf.mxu0
        %v2787 = vadd.f32 %v2172, %v2786
        %v2788 = vpop.f32.mrf.mxu0
        %v2789 = vadd.f32 %v2168, %v2788
        %v2790 = vpop.f32.mrf.mxu0
        %v2791 = vadd.f32 %v2172, %v2790
        %2792 = vmatprep.mubr.bf16.mxu0 %v2074
        %2793 = vmatmul.mubr.bf16.gmra.mxu0 %v2073
        %v2794 = vpop.f32.mrf.mxu0
        %v2795 = vadd.f32 %v2168, %v2794
        %v2796 = vpop.f32.mrf.mxu0
        %v2797 = vadd.f32 %v2172, %v2796
        %v2798 = vpop.f32.mrf.mxu0
        %v2799 = vadd.f32 %v2168, %v2798
        %v2800 = vpop.f32.mrf.mxu0
        %v2801 = vadd.f32 %v2172, %v2800
        %2802 = vmatprep.mubr.bf16.mxu0 %v2076
        %2803 = vmatmul.mubr.bf16.gmra.mxu0 %v2075
        %v2804 = vpop.f32.mrf.mxu0
        %v2805 = vadd.f32 %v2168, %v2804
        %v2806 = vpop.f32.mrf.mxu0
        %v2807 = vadd.f32 %v2172, %v2806
        %v2808 = vpop.f32.mrf.mxu0
        %v2809 = vadd.f32 %v2168, %v2808
        %v2810 = vpop.f32.mrf.mxu0
        %v2811 = vadd.f32 %v2172, %v2810
        %2812 = vmatprep.mubr.bf16.mxu0 %v2078
        %2813 = vmatmul.mubr.bf16.gmra.mxu0 %v2077
        %v2814 = vpop.f32.mrf.mxu0
        %v2815 = vadd.f32 %v2168, %v2814
        %v2816 = vpop.f32.mrf.mxu0
        %v2817 = vadd.f32 %v2172, %v2816
        %v2818 = vpop.f32.mrf.mxu0
        %v2819 = vadd.f32 %v2168, %v2818
        %v2820 = vpop.f32.mrf.mxu0
        %v2821 = vadd.f32 %v2172, %v2820
        %2822 = vmatprep.mubr.bf16.mxu0 %v2080
        %2823 = vmatmul.mubr.bf16.gmra.mxu0 %v2079
        %v2824 = vpop.f32.mrf.mxu0
        %v2825 = vadd.f32 %v2168, %v2824
        %v2826 = vpop.f32.mrf.mxu0
        %v2827 = vadd.f32 %v2172, %v2826
        %v2828 = vpop.f32.mrf.mxu0
        %v2829 = vadd.f32 %v2168, %v2828
        %v2830 = vpop.f32.mrf.mxu0
        %v2831 = vadd.f32 %v2172, %v2830
        %2832 = vmatprep.mubr.bf16.mxu0 %v2082
        %2833 = vmatmul.mubr.bf16.gmra.mxu0 %v2081
        %v2834 = vpop.f32.mrf.mxu0
        %v2835 = vadd.f32 %v2168, %v2834
        %v2836 = vpop.f32.mrf.mxu0
        %v2837 = vadd.f32 %v2172, %v2836
        %v2838 = vpop.f32.mrf.mxu0
        %v2839 = vadd.f32 %v2168, %v2838
        %v2840 = vpop.f32.mrf.mxu0
        %v2841 = vadd.f32 %v2172, %v2840
        %2842 = vmatprep.mubr.bf16.mxu0 %v2084
        %2843 = vmatmul.mubr.bf16.gmra.mxu0 %v2083
        %v2844 = vpop.f32.mrf.mxu0
        %v2845 = vadd.f32 %v2168, %v2844
        %v2846 = vpop.f32.mrf.mxu0
        %v2847 = vadd.f32 %v2172, %v2846
        %v2848 = vpop.f32.mrf.mxu0
        %v2849 = vadd.f32 %v2168, %v2848
        %v2850 = vpop.f32.mrf.mxu0
        %v2851 = vadd.f32 %v2172, %v2850
        %2852 = vmatprep.mubr.bf16.mxu0 %v2086
        %2853 = vmatmul.mubr.bf16.gmra.mxu0 %v2085
        %v2854 = vpop.f32.mrf.mxu0
        %v2855 = vadd.f32 %v2168, %v2854
        %v2856 = vpop.f32.mrf.mxu0
        %v2857 = vadd.f32 %v2172, %v2856
        %v2858 = vpop.f32.mrf.mxu0
        %v2859 = vadd.f32 %v2168, %v2858
        %v2860 = vpop.f32.mrf.mxu0
        %v2861 = vadd.f32 %v2172, %v2860
        %2862 = vmatprep.mubr.bf16.mxu0 %v2088
        %2863 = vmatmul.mubr.bf16.gmra.mxu0 %v2087
        %v2864 = vpop.f32.mrf.mxu0
        %v2865 = vadd.f32 %v2168, %v2864
        %v2866 = vpop.f32.mrf.mxu0
        %v2867 = vadd.f32 %v2172, %v2866
        %v2868 = vpop.f32.mrf.mxu0
        %v2869 = vadd.f32 %v2168, %v2868
        %v2870 = vpop.f32.mrf.mxu0
        %v2871 = vadd.f32 %v2172, %v2870
        %2872 = vmatprep.mubr.bf16.mxu0 %v2090
        %2873 = vmatmul.mubr.bf16.gmra.mxu0 %v2089
        %v2874 = vpop.f32.mrf.mxu0
        %v2875 = vadd.f32 %v2168, %v2874
        %v2876 = vpop.f32.mrf.mxu0
        %v2877 = vadd.f32 %v2172, %v2876
        %v2878 = vpop.f32.mrf.mxu0
        %v2879 = vadd.f32 %v2168, %v2878
        %v2880 = vpop.f32.mrf.mxu0
        %v2881 = vadd.f32 %v2172, %v2880
        %2882 = vdwg.mxu0
        %v2883 = vpack.c.bf16 %v1985, %v1981
        %v2884 = vpack.c.bf16 %v1995, %v1991
        %v2885 = vpack.c.bf16 %v2005, %v2001
        %v2886 = vpack.c.bf16 %v2015, %v2011
        %v2887 = vpack.c.bf16 %v2025, %v2021
        %v2888 = vpack.c.bf16 %v2035, %v2031
        %v2889 = vpack.c.bf16 %v2045, %v2041
        %v2890 = vpack.c.bf16 %v2055, %v2051
        %v2891 = vpack.c.bf16 %v2536, %v2532
        %v2892 = vpack.c.bf16 %v2546, %v2542
        %v2893 = vpack.c.bf16 %v2556, %v2552
        %v2894 = vpack.c.bf16 %v2566, %v2562
        %v2895 = vpack.c.bf16 %v2576, %v2572
        %v2896 = vpack.c.bf16 %v2586, %v2582
        %v2897 = vpack.c.bf16 %v2596, %v2592
        %v2898 = vpack.c.bf16 %v2606, %v2602
        %v2899 = vpack.c.bf16 %v2616, %v2612
        %v2900 = vpack.c.bf16 %v2626, %v2622
        %v2901 = vpack.c.bf16 %v2636, %v2632
        %v2902 = vpack.c.bf16 %v2646, %v2642
        %v2903 = vpack.c.bf16 %v2656, %v2652
        %v2904 = vpack.c.bf16 %v2666, %v2662
        %v2905 = vpack.c.bf16 %v2676, %v2672
        %v2906 = vpack.c.bf16 %v2686, %v2682
        %v2907 = vpack.c.bf16 %v2729, %v2725
        %v2908 = vpack.c.bf16 %v2739, %v2735
        %v2909 = vpack.c.bf16 %v2749, %v2745
        %v2910 = vpack.c.bf16 %v2759, %v2755
        %v2911 = vpack.c.bf16 %v2769, %v2765
        %v2912 = vpack.c.bf16 %v2779, %v2775
        %v2913 = vpack.c.bf16 %v2789, %v2785
        %v2914 = vpack.c.bf16 %v2799, %v2795
        %v2915 = vpack.c.bf16 %v2809, %v2805
        %v2916 = vpack.c.bf16 %v2819, %v2815
        %v2917 = vpack.c.bf16 %v2829, %v2825
        %v2918 = vpack.c.bf16 %v2839, %v2835
        %v2919 = vpack.c.bf16 %v2849, %v2845
        %v2920 = vpack.c.bf16 %v2859, %v2855
        %v2921 = vpack.c.bf16 %v2869, %v2865
        %v2922 = vpack.c.bf16 %v2879, %v2875
        %2923 = vmatprep.subr.bf16.mxu0 0
        %2924 = vmatpush1.bf16.xpose.msra.mxu0 %v2898
        %2925 = vmatprep.subr.bf16.mxu0 0
        %2926 = vmatpush1.bf16.xpose.msra.mxu0 %v2897
        %2927 = vmatprep.subr.bf16.mxu0 0
        %2928 = vmatpush1.bf16.xpose.msra.mxu0 %v2896
        %2929 = vmatprep.subr.bf16.mxu0 0
        %2930 = vmatpush1.bf16.xpose.msra.mxu0 %v2895
        %2931 = vmatprep.subr.bf16.mxu0 0
        %2932 = vmatpush1.bf16.xpose.msra.mxu0 %v2894
        %2933 = vmatprep.subr.bf16.mxu0 0
        %2934 = vmatpush1.bf16.xpose.msra.mxu0 %v2893
        %2935 = vmatprep.subr.bf16.mxu0 0
        %2936 = vmatpush1.bf16.xpose.msra.mxu0 %v2892
        %2937 = vmatprep.subr.bf16.mxu0 0
        %2938 = vmatpush1.bf16.xpose.msra.mxu0 %v2891
        %2939 = vmatprep.subr.bf16.mxu0 0
        %2940 = vmatpush2.bf16.xpose.msra.mxu0 %v2906
        %2941 = vmatprep.subr.bf16.mxu0 0
        %2942 = vmatpush2.bf16.xpose.msra.mxu0 %v2905
        %2943 = vmatprep.subr.bf16.mxu0 0
        %2944 = vmatpush2.bf16.xpose.msra.mxu0 %v2904
        %2945 = vmatprep.subr.bf16.mxu0 0
        %2946 = vmatpush2.bf16.xpose.msra.mxu0 %v2903
        %2947 = vmatprep.subr.bf16.mxu0 0
        %2948 = vmatpush2.bf16.xpose.msra.mxu0 %v2902
        %2949 = vmatprep.subr.bf16.mxu0 0
        %2950 = vmatpush2.bf16.xpose.msra.mxu0 %v2901
        %2951 = vmatprep.subr.bf16.mxu0 0
        %2952 = vmatpush2.bf16.xpose.msra.mxu0 %v2900
        %2953 = vmatprep.subr.bf16.mxu0 0
        %2954 = vmatpush2.bf16.xpose.msra.mxu0 %v2899
        %2955 = vmatprep.mubr.bf16.mxu0 0
        %2956 = vmatmul.mubr.bf16.gmra.mxu0 %v2883
        %v2957 = vpop.f32.mrf.mxu0
        %v2958 = vadd.f32 0.0, %v2957
        %v2959 = vpop.f32.mrf.mxu0
        %v2960 = vadd.f32 0.0, %v2959
        %v2961 = vpop.f32.mrf.mxu0
        %v2962 = vadd.f32 0.0, %v2961
        %v2963 = vpop.f32.mrf.mxu0
        %v2964 = vadd.f32 0.0, %v2963
        %2965 = vmatprep.mubr.bf16.mxu0 0
        %2966 = vmatmul.mubr.bf16.gmra.mxu0 %v2884
        %v2967 = vpop.f32.mrf.mxu0
        %v2968 = vadd.f32 0.0, %v2967
        %v2969 = vpop.f32.mrf.mxu0
        %v2970 = vadd.f32 0.0, %v2969
        %v2971 = vpop.f32.mrf.mxu0
        %v2972 = vadd.f32 0.0, %v2971
        %v2973 = vpop.f32.mrf.mxu0
        %v2974 = vadd.f32 0.0, %v2973
        %2975 = vmatprep.mubr.bf16.mxu0 0
        %2976 = vmatmul.mubr.bf16.gmra.mxu0 %v2885
        %v2977 = vpop.f32.mrf.mxu0
        %v2978 = vadd.f32 0.0, %v2977
        %v2979 = vpop.f32.mrf.mxu0
        %v2980 = vadd.f32 0.0, %v2979
        %v2981 = vpop.f32.mrf.mxu0
        %v2982 = vadd.f32 0.0, %v2981
        %v2983 = vpop.f32.mrf.mxu0
        %v2984 = vadd.f32 0.0, %v2983
        %2985 = vmatprep.mubr.bf16.mxu0 0
        %2986 = vmatmul.mubr.bf16.gmra.mxu0 %v2886
        %v2987 = vpop.f32.mrf.mxu0
        %v2988 = vadd.f32 0.0, %v2987
        %v2989 = vpop.f32.mrf.mxu0
        %v2990 = vadd.f32 0.0, %v2989
        %v2991 = vpop.f32.mrf.mxu0
        %v2992 = vadd.f32 0.0, %v2991
        %v2993 = vpop.f32.mrf.mxu0
        %v2994 = vadd.f32 0.0, %v2993
        %2995 = vmatprep.mubr.bf16.mxu0 0
        %2996 = vmatmul.mubr.bf16.gmra.mxu0 %v2887
        %v2997 = vpop.f32.mrf.mxu0
        %v2998 = vadd.f32 0.0, %v2997
        %v2999 = vpop.f32.mrf.mxu0
        %v3000 = vadd.f32 0.0, %v2999
        %v3001 = vpop.f32.mrf.mxu0
        %v3002 = vadd.f32 0.0, %v3001
        %v3003 = vpop.f32.mrf.mxu0
        %v3004 = vadd.f32 0.0, %v3003
        %3005 = vmatprep.mubr.bf16.mxu0 0
        %3006 = vmatmul.mubr.bf16.gmra.mxu0 %v2888
        %v3007 = vpop.f32.mrf.mxu0
        %v3008 = vadd.f32 0.0, %v3007
        %v3009 = vpop.f32.mrf.mxu0
        %v3010 = vadd.f32 0.0, %v3009
        %v3011 = vpop.f32.mrf.mxu0
        %v3012 = vadd.f32 0.0, %v3011
        %v3013 = vpop.f32.mrf.mxu0
        %v3014 = vadd.f32 0.0, %v3013
        %3015 = vmatprep.mubr.bf16.mxu0 0
        %3016 = vmatmul.mubr.bf16.gmra.mxu0 %v2889
        %v3017 = vpop.f32.mrf.mxu0
        %v3018 = vadd.f32 0.0, %v3017
        %v3019 = vpop.f32.mrf.mxu0
        %v3020 = vadd.f32 0.0, %v3019
        %v3021 = vpop.f32.mrf.mxu0
        %v3022 = vadd.f32 0.0, %v3021
        %v3023 = vpop.f32.mrf.mxu0
        %v3024 = vadd.f32 0.0, %v3023
        %3025 = vmatprep.mubr.bf16.mxu0 0
        %3026 = vmatmul.mubr.bf16.gmra.mxu0 %v2890
        %v3027 = vpop.f32.mrf.mxu0
        %v3028 = vadd.f32 0.0, %v3027
        %v3029 = vpop.f32.mrf.mxu0
        %v3030 = vadd.f32 0.0, %v3029
        %v3031 = vpop.f32.mrf.mxu0
        %v3032 = vadd.f32 0.0, %v3031
        %v3033 = vpop.f32.mrf.mxu0
        %v3034 = vadd.f32 0.0, %v3033
        %3035 = vdwg.mxu0
        %v3036 = vmul.f32 %v2958, 0.088388346
        %v3037 = vmul.f32 %v2960, 0.088388346
        %v3038 = vmul.f32 %v2962, 0.088388346
        %v3039 = vmul.f32 %v2964, 0.088388346
        %v3040 = vmul.f32 %v2968, 0.088388346
        %v3041 = vmul.f32 %v2970, 0.088388346
        %v3042 = vmul.f32 %v2972, 0.088388346
        %v3043 = vmul.f32 %v2974, 0.088388346
        %v3044 = vmul.f32 %v2978, 0.088388346
        %v3045 = vmul.f32 %v2980, 0.088388346
        %v3046 = vmul.f32 %v2982, 0.088388346
        %v3047 = vmul.f32 %v2984, 0.088388346
        %v3048 = vmul.f32 %v2988, 0.088388346
        %v3049 = vmul.f32 %v2990, 0.088388346
        %v3050 = vmul.f32 %v2992, 0.088388346
        %v3051 = vmul.f32 %v2994, 0.088388346
        %v3052 = vmul.f32 %v2998, 0.088388346
        %v3053 = vmul.f32 %v3000, 0.088388346
        %v3054 = vmul.f32 %v3002, 0.088388346
        %v3055 = vmul.f32 %v3004, 0.088388346
        %v3056 = vmul.f32 %v3008, 0.088388346
        %v3057 = vmul.f32 %v3010, 0.088388346
        %v3058 = vmul.f32 %v3012, 0.088388346
        %v3059 = vmul.f32 %v3014, 0.088388346
        %v3060 = vmul.f32 %v3018, 0.088388346
        %v3061 = vmul.f32 %v3020, 0.088388346
        %v3062 = vmul.f32 %v3022, 0.088388346
        %v3063 = vmul.f32 %v3024, 0.088388346
        %v3064 = vmul.f32 %v3028, 0.088388346
        %v3065 = vmul.f32 %v3030, 0.088388346
        %v3066 = vmul.f32 %v3032, 0.088388346
        %v3067 = vmul.f32 %v3034, 0.088388346
        %v3068 = vmax.f32 %v3036, %v3037
        %3069 = vmax.xlane.f32.xlu0 %v3068
        %v3070 = vpop.xlane.xlu0 %3069
        %v3071 = vmax.f32 %v3038, %v3039
        %3072 = vmax.xlane.f32.xlu0 %v3071
        %v3073 = vpop.xlane.xlu0 %3072
        %v3074 = vmax.f32 %v3040, %v3041
        %3075 = vmax.xlane.f32.xlu0 %v3074
        %v3076 = vpop.xlane.xlu0 %3075
        %v3077 = vmax.f32 %v3042, %v3043
        %3078 = vmax.xlane.f32.xlu0 %v3077
        %v3079 = vpop.xlane.xlu0 %3078
        %v3080 = vmax.f32 %v3044, %v3045
        %3081 = vmax.xlane.f32.xlu0 %v3080
        %v3082 = vpop.xlane.xlu0 %3081
        %v3083 = vmax.f32 %v3046, %v3047
        %3084 = vmax.xlane.f32.xlu0 %v3083
        %v3085 = vpop.xlane.xlu0 %3084
        %v3086 = vmax.f32 %v3048, %v3049
        %3087 = vmax.xlane.f32.xlu0 %v3086
        %v3088 = vpop.xlane.xlu0 %3087
        %v3089 = vmax.f32 %v3050, %v3051
        %3090 = vmax.xlane.f32.xlu0 %v3089
        %v3091 = vpop.xlane.xlu0 %3090
        %v3092 = vmax.f32 %v3052, %v3053
        %3093 = vmax.xlane.f32.xlu0 %v3092
        %v3094 = vpop.xlane.xlu0 %3093
        %v3095 = vmax.f32 %v3054, %v3055
        %3096 = vmax.xlane.f32.xlu0 %v3095
        %v3097 = vpop.xlane.xlu0 %3096
        %v3098 = vmax.f32 %v3056, %v3057
        %3099 = vmax.xlane.f32.xlu0 %v3098
        %v3100 = vpop.xlane.xlu0 %3099
        %v3101 = vmax.f32 %v3058, %v3059
        %3102 = vmax.xlane.f32.xlu0 %v3101
        %v3103 = vpop.xlane.xlu0 %3102
        %v3104 = vmax.f32 %v3060, %v3061
        %3105 = vmax.xlane.f32.xlu0 %v3104
        %v3106 = vpop.xlane.xlu0 %3105
        %v3107 = vmax.f32 %v3062, %v3063
        %3108 = vmax.xlane.f32.xlu0 %v3107
        %v3109 = vpop.xlane.xlu0 %3108
        %v3110 = vmax.f32 %v3064, %v3065
        %3111 = vmax.xlane.f32.xlu0 %v3110
        %v3112 = vpop.xlane.xlu0 %3111
        %v3113 = vmax.f32 %v3066, %v3067
        %3114 = vmax.xlane.f32.xlu0 %v3113
        %v3115 = vpop.xlane.xlu0 %3114
        %v3116 = vsub.f32 %v3036, %v3070
        %v3117 = vsub.f32 %v3037, %v3070
        %v3118 = vsub.f32 %v3038, %v3073
        %v3119 = vsub.f32 %v3039, %v3073
        %v3120 = vsub.f32 %v3040, %v3076
        %v3121 = vsub.f32 %v3041, %v3076
        %v3122 = vsub.f32 %v3042, %v3079
        %v3123 = vsub.f32 %v3043, %v3079
        %v3124 = vsub.f32 %v3044, %v3082
        %v3125 = vsub.f32 %v3045, %v3082
        %v3126 = vsub.f32 %v3046, %v3085
        %v3127 = vsub.f32 %v3047, %v3085
        %v3128 = vsub.f32 %v3048, %v3088
        %v3129 = vsub.f32 %v3049, %v3088
        %v3130 = vsub.f32 %v3050, %v3091
        %v3131 = vsub.f32 %v3051, %v3091
        %v3132 = vsub.f32 %v3052, %v3094
        %v3133 = vsub.f32 %v3053, %v3094
        %v3134 = vsub.f32 %v3054, %v3097
        %v3135 = vsub.f32 %v3055, %v3097
        %v3136 = vsub.f32 %v3056, %v3100
        %v3137 = vsub.f32 %v3057, %v3100
        %v3138 = vsub.f32 %v3058, %v3103
        %v3139 = vsub.f32 %v3059, %v3103
        %v3140 = vsub.f32 %v3060, %v3106
        %v3141 = vsub.f32 %v3061, %v3106
        %v3142 = vsub.f32 %v3062, %v3109
        %v3143 = vsub.f32 %v3063, %v3109
        %v3144 = vsub.f32 %v3064, %v3112
        %v3145 = vsub.f32 %v3065, %v3112
        %v3146 = vsub.f32 %v3066, %v3115
        %v3147 = vsub.f32 %v3067, %v3115
        %v3148 = vmul.f32 %v3116, 1.442695
        %v3149 = vpow.pop %v3148
        %v3150 = vmul.f32 %v3117, 1.442695
        %v3151 = vpow.pop %v3150
        %v3152 = vmul.f32 %v3118, 1.442695
        %v3153 = vpow.pop %v3152
        %v3154 = vmul.f32 %v3119, 1.442695
        %v3155 = vpow.pop %v3154
        %v3156 = vmul.f32 %v3120, 1.442695
        %v3157 = vpow.pop %v3156
        %v3158 = vmul.f32 %v3121, 1.442695
        %v3159 = vpow.pop %v3158
        %v3160 = vmul.f32 %v3122, 1.442695
        %v3161 = vpow.pop %v3160
        %v3162 = vmul.f32 %v3123, 1.442695
        %v3163 = vpow.pop %v3162
        %v3164 = vmul.f32 %v3124, 1.442695
        %v3165 = vpow.pop %v3164
        %v3166 = vmul.f32 %v3125, 1.442695
        %v3167 = vpow.pop %v3166
        %v3168 = vmul.f32 %v3126, 1.442695
        %v3169 = vpow.pop %v3168
        %v3170 = vmul.f32 %v3127, 1.442695
        %v3171 = vpow.pop %v3170
        %v3172 = vmul.f32 %v3128, 1.442695
        %v3173 = vpow.pop %v3172
        %v3174 = vmul.f32 %v3129, 1.442695
        %v3175 = vpow.pop %v3174
        %v3176 = vmul.f32 %v3130, 1.442695
        %v3177 = vpow.pop %v3176
        %v3178 = vmul.f32 %v3131, 1.442695
        %v3179 = vpow.pop %v3178
        %v3180 = vmul.f32 %v3132, 1.442695
        %v3181 = vpow.pop %v3180
        %v3182 = vmul.f32 %v3133, 1.442695
        %v3183 = vpow.pop %v3182
        %v3184 = vmul.f32 %v3134, 1.442695
        %v3185 = vpow.pop %v3184
        %v3186 = vmul.f32 %v3135, 1.442695
        %v3187 = vpow.pop %v3186
        %v3188 = vmul.f32 %v3136, 1.442695
        %v3189 = vpow.pop %v3188
        %v3190 = vmul.f32 %v3137, 1.442695
        %v3191 = vpow.pop %v3190
        %v3192 = vmul.f32 %v3138, 1.442695
        %v3193 = vpow.pop %v3192
        %v3194 = vmul.f32 %v3139, 1.442695
        %v3195 = vpow.pop %v3194
        %v3196 = vmul.f32 %v3140, 1.442695
        %v3197 = vpow.pop %v3196
        %v3198 = vmul.f32 %v3141, 1.442695
        %v3199 = vpow.pop %v3198
        %v3200 = vmul.f32 %v3142, 1.442695
        %v3201 = vpow.pop %v3200
        %v3202 = vmul.f32 %v3143, 1.442695
        %v3203 = vpow.pop %v3202
        %v3204 = vmul.f32 %v3144, 1.442695
        %v3205 = vpow.pop %v3204
        %v3206 = vmul.f32 %v3145, 1.442695
        %v3207 = vpow.pop %v3206
        %v3208 = vmul.f32 %v3146, 1.442695
        %v3209 = vpow.pop %v3208
        %v3210 = vmul.f32 %v3147, 1.442695
        %v3211 = vpow.pop %v3210
        %v3212 = vadd.f32 %v3149, %v3151
        %3213 = vadd.xlane.f32.xlu0 %v3212
        %v3214 = vpop.xlane.xlu0 %3213
        %v3215 = vadd.f32 %v3153, %v3155
        %3216 = vadd.xlane.f32.xlu0 %v3215
        %v3217 = vpop.xlane.xlu0 %3216
        %v3218 = vadd.f32 %v3157, %v3159
        %3219 = vadd.xlane.f32.xlu0 %v3218
        %v3220 = vpop.xlane.xlu0 %3219
        %v3221 = vadd.f32 %v3161, %v3163
        %3222 = vadd.xlane.f32.xlu0 %v3221
        %v3223 = vpop.xlane.xlu0 %3222
        %v3224 = vadd.f32 %v3165, %v3167
        %3225 = vadd.xlane.f32.xlu0 %v3224
        %v3226 = vpop.xlane.xlu0 %3225
        %v3227 = vadd.f32 %v3169, %v3171
        %3228 = vadd.xlane.f32.xlu0 %v3227
        %v3229 = vpop.xlane.xlu0 %3228
        %v3230 = vadd.f32 %v3173, %v3175
        %3231 = vadd.xlane.f32.xlu0 %v3230
        %v3232 = vpop.xlane.xlu0 %3231
        %v3233 = vadd.f32 %v3177, %v3179
        %3234 = vadd.xlane.f32.xlu0 %v3233
        %v3235 = vpop.xlane.xlu0 %3234
        %v3236 = vadd.f32 %v3181, %v3183
        %3237 = vadd.xlane.f32.xlu0 %v3236
        %v3238 = vpop.xlane.xlu0 %3237
        %v3239 = vadd.f32 %v3185, %v3187
        %3240 = vadd.xlane.f32.xlu0 %v3239
        %v3241 = vpop.xlane.xlu0 %3240
        %v3242 = vadd.f32 %v3189, %v3191
        %3243 = vadd.xlane.f32.xlu0 %v3242
        %v3244 = vpop.xlane.xlu0 %3243
        %v3245 = vadd.f32 %v3193, %v3195
        %3246 = vadd.xlane.f32.xlu0 %v3245
        %v3247 = vpop.xlane.xlu0 %3246
        %v3248 = vadd.f32 %v3197, %v3199
        %3249 = vadd.xlane.f32.xlu0 %v3248
        %v3250 = vpop.xlane.xlu0 %3249
        %v3251 = vadd.f32 %v3201, %v3203
        %3252 = vadd.xlane.f32.xlu0 %v3251
        %v3253 = vpop.xlane.xlu0 %3252
        %v3254 = vadd.f32 %v3205, %v3207
        %3255 = vadd.xlane.f32.xlu0 %v3254
        %v3256 = vpop.xlane.xlu0 %3255
        %v3257 = vadd.f32 %v3209, %v3211
        %3258 = vadd.xlane.f32.xlu0 %v3257
        %v3259 = vpop.xlane.xlu0 %3258
        %v3260 = vrcp.pop %v3214
        %v3261 = vmul.f32 %v3149, %v3260
        %v3262 = vmul.f32 %v3151, %v3260
        %v3263 = vrcp.pop %v3217
        %v3264 = vmul.f32 %v3153, %v3263
        %v3265 = vmul.f32 %v3155, %v3263
        %v3266 = vrcp.pop %v3220
        %v3267 = vmul.f32 %v3157, %v3266
        %v3268 = vmul.f32 %v3159, %v3266
        %v3269 = vrcp.pop %v3223
        %v3270 = vmul.f32 %v3161, %v3269
        %v3271 = vmul.f32 %v3163, %v3269
        %v3272 = vrcp.pop %v3226
        %v3273 = vmul.f32 %v3165, %v3272
        %v3274 = vmul.f32 %v3167, %v3272
        %v3275 = vrcp.pop %v3229
        %v3276 = vmul.f32 %v3169, %v3275
        %v3277 = vmul.f32 %v3171, %v3275
        %v3278 = vrcp.pop %v3232
        %v3279 = vmul.f32 %v3173, %v3278
        %v3280 = vmul.f32 %v3175, %v3278
        %v3281 = vrcp.pop %v3235
        %v3282 = vmul.f32 %v3177, %v3281
        %v3283 = vmul.f32 %v3179, %v3281
        %v3284 = vrcp.pop %v3238
        %v3285 = vmul.f32 %v3181, %v3284
        %v3286 = vmul.f32 %v3183, %v3284
        %v3287 = vrcp.pop %v3241
        %v3288 = vmul.f32 %v3185, %v3287
        %v3289 = vmul.f32 %v3187, %v3287
        %v3290 = vrcp.pop %v3244
        %v3291 = vmul.f32 %v3189, %v3290
        %v3292 = vmul.f32 %v3191, %v3290
        %v3293 = vrcp.pop %v3247
        %v3294 = vmul.f32 %v3193, %v3293
        %v3295 = vmul.f32 %v3195, %v3293
        %v3296 = vrcp.pop %v3250
        %v3297 = vmul.f32 %v3197, %v3296
        %v3298 = vmul.f32 %v3199, %v3296
        %v3299 = vrcp.pop %v3253
        %v3300 = vmul.f32 %v3201, %v3299
        %v3301 = vmul.f32 %v3203, %v3299
        %v3302 = vrcp.pop %v3256
        %v3303 = vmul.f32 %v3205, %v3302
        %v3304 = vmul.f32 %v3207, %v3302
        %v3305 = vrcp.pop %v3259
        %v3306 = vmul.f32 %v3209, %v3305
        %v3307 = vmul.f32 %v3211, %v3305
        %v3308 = vpack.c.bf16 %v3264, %v3261
        %v3309 = vpack.c.bf16 %v3265, %v3262
        %v3310 = vpack.c.bf16 %v3270, %v3267
        %v3311 = vpack.c.bf16 %v3271, %v3268
        %v3312 = vpack.c.bf16 %v3276, %v3273
        %v3313 = vpack.c.bf16 %v3277, %v3274
        %v3314 = vpack.c.bf16 %v3282, %v3279
        %v3315 = vpack.c.bf16 %v3283, %v3280
        %v3316 = vpack.c.bf16 %v3288, %v3285
        %v3317 = vpack.c.bf16 %v3289, %v3286
        %v3318 = vpack.c.bf16 %v3294, %v3291
        %v3319 = vpack.c.bf16 %v3295, %v3292
        %v3320 = vpack.c.bf16 %v3300, %v3297
        %v3321 = vpack.c.bf16 %v3301, %v3298
        %v3322 = vpack.c.bf16 %v3306, %v3303
        %v3323 = vpack.c.bf16 %v3307, %v3304
        %3324 = vmatprep.subr.bf16.mxu0 0
        %3325 = vmatpush1.bf16.msra.mxu0 %v2914
        %3326 = vmatprep.subr.bf16.mxu0 0
        %3327 = vmatpush1.bf16.msra.mxu0 %v2913
        %3328 = vmatprep.subr.bf16.mxu0 0
        %3329 = vmatpush1.bf16.msra.mxu0 %v2912
        %3330 = vmatprep.subr.bf16.mxu0 0
        %3331 = vmatpush1.bf16.msra.mxu0 %v2911
        %3332 = vmatprep.subr.bf16.mxu0 0
        %3333 = vmatpush1.bf16.msra.mxu0 %v2910
        %3334 = vmatprep.subr.bf16.mxu0 0
        %3335 = vmatpush1.bf16.msra.mxu0 %v2909
        %3336 = vmatprep.subr.bf16.mxu0 0
        %3337 = vmatpush1.bf16.msra.mxu0 %v2908
        %3338 = vmatprep.subr.bf16.mxu0 0
        %3339 = vmatpush1.bf16.msra.mxu0 %v2907
        %3340 = vmatprep.subr.bf16.mxu0 0
        %3341 = vmatpush2.bf16.msra.mxu0 %v2922
        %3342 = vmatprep.subr.bf16.mxu0 0
        %3343 = vmatpush2.bf16.msra.mxu0 %v2921
        %3344 = vmatprep.subr.bf16.mxu0 0
        %3345 = vmatpush2.bf16.msra.mxu0 %v2920
        %3346 = vmatprep.subr.bf16.mxu0 0
        %3347 = vmatpush2.bf16.msra.mxu0 %v2919
        %3348 = vmatprep.subr.bf16.mxu0 0
        %3349 = vmatpush2.bf16.msra.mxu0 %v2918
        %3350 = vmatprep.subr.bf16.mxu0 0
        %3351 = vmatpush2.bf16.msra.mxu0 %v2917
        %3352 = vmatprep.subr.bf16.mxu0 0
        %3353 = vmatpush2.bf16.msra.mxu0 %v2916
        %3354 = vmatprep.subr.bf16.mxu0 0
        %3355 = vmatpush2.bf16.msra.mxu0 %v2915
        %3356 = vmatprep.mubr.bf16.mxu0 %v3309
        %3357 = vmatmul.mubr.bf16.gmra.mxu0 %v3308
        %v3358 = vpop.f32.mrf.mxu0
        %v3359 = vadd.f32 0.0, %v3358
        %v3360 = vpop.f32.mrf.mxu0
        %v3361 = vpop.f32.mrf.mxu0
        %v3362 = vadd.f32 0.0, %v3361
        %v3363 = vpop.f32.mrf.mxu0
        %3364 = vmatprep.mubr.bf16.mxu0 %v3311
        %3365 = vmatmul.mubr.bf16.gmra.mxu0 %v3310
        %v3366 = vpop.f32.mrf.mxu0
        %v3367 = vadd.f32 0.0, %v3366
        %v3368 = vpop.f32.mrf.mxu0
        %v3369 = vpop.f32.mrf.mxu0
        %v3370 = vadd.f32 0.0, %v3369
        %v3371 = vpop.f32.mrf.mxu0
        %3372 = vmatprep.mubr.bf16.mxu0 %v3313
        %3373 = vmatmul.mubr.bf16.gmra.mxu0 %v3312
        %v3374 = vpop.f32.mrf.mxu0
        %v3375 = vadd.f32 0.0, %v3374
        %v3376 = vpop.f32.mrf.mxu0
        %v3377 = vpop.f32.mrf.mxu0
        %v3378 = vadd.f32 0.0, %v3377
        %v3379 = vpop.f32.mrf.mxu0
        %3380 = vmatprep.mubr.bf16.mxu0 %v3315
        %3381 = vmatmul.mubr.bf16.gmra.mxu0 %v3314
        %v3382 = vpop.f32.mrf.mxu0
        %v3383 = vadd.f32 0.0, %v3382
        %v3384 = vpop.f32.mrf.mxu0
        %v3385 = vpop.f32.mrf.mxu0
        %v3386 = vadd.f32 0.0, %v3385
        %v3387 = vpop.f32.mrf.mxu0
        %3388 = vmatprep.mubr.bf16.mxu0 %v3317
        %3389 = vmatmul.mubr.bf16.gmra.mxu0 %v3316
        %v3390 = vpop.f32.mrf.mxu0
        %v3391 = vadd.f32 0.0, %v3390
        %v3392 = vpop.f32.mrf.mxu0
        %v3393 = vpop.f32.mrf.mxu0
        %v3394 = vadd.f32 0.0, %v3393
        %v3395 = vpop.f32.mrf.mxu0
        %3396 = vmatprep.mubr.bf16.mxu0 %v3319
        %3397 = vmatmul.mubr.bf16.gmra.mxu0 %v3318
        %v3398 = vpop.f32.mrf.mxu0
        %v3399 = vadd.f32 0.0, %v3398
        %v3400 = vpop.f32.mrf.mxu0
        %v3401 = vpop.f32.mrf.mxu0
        %v3402 = vadd.f32 0.0, %v3401
        %v3403 = vpop.f32.mrf.mxu0
        %3404 = vmatprep.mubr.bf16.mxu0 %v3321
        %3405 = vmatmul.mubr.bf16.gmra.mxu0 %v3320
        %v3406 = vpop.f32.mrf.mxu0
        %v3407 = vadd.f32 0.0, %v3406
        %v3408 = vpop.f32.mrf.mxu0
        %v3409 = vpop.f32.mrf.mxu0
        %v3410 = vadd.f32 0.0, %v3409
        %v3411 = vpop.f32.mrf.mxu0
        %3412 = vmatprep.mubr.bf16.mxu0 %v3323
        %3413 = vmatmul.mubr.bf16.gmra.mxu0 %v3322
        %v3414 = vpop.f32.mrf.mxu0
        %v3415 = vadd.f32 0.0, %v3414
        %v3416 = vpop.f32.mrf.mxu0
        %v3417 = vpop.f32.mrf.mxu0
        %v3418 = vadd.f32 0.0, %v3417
        %v3419 = vpop.f32.mrf.mxu0
        %3420 = vdwg.mxu0
        %v3421 = vpack.c.bf16 %v1987, %v1983
        %v3422 = vpack.c.bf16 %v1997, %v1993
        %v3423 = vpack.c.bf16 %v2007, %v2003
        %v3424 = vpack.c.bf16 %v2017, %v2013
        %v3425 = vpack.c.bf16 %v2027, %v2023
        %v3426 = vpack.c.bf16 %v2037, %v2033
        %v3427 = vpack.c.bf16 %v2047, %v2043
        %v3428 = vpack.c.bf16 %v2057, %v2053
        %v3429 = vpack.c.bf16 %v2538, %v2534
        %v3430 = vpack.c.bf16 %v2548, %v2544
        %v3431 = vpack.c.bf16 %v2558, %v2554
        %v3432 = vpack.c.bf16 %v2568, %v2564
        %v3433 = vpack.c.bf16 %v2578, %v2574
        %v3434 = vpack.c.bf16 %v2588, %v2584
        %v3435 = vpack.c.bf16 %v2598, %v2594
        %v3436 = vpack.c.bf16 %v2608, %v2604
        %v3437 = vpack.c.bf16 %v2618, %v2614
        %v3438 = vpack.c.bf16 %v2628, %v2624
        %v3439 = vpack.c.bf16 %v2638, %v2634
        %v3440 = vpack.c.bf16 %v2648, %v2644
        %v3441 = vpack.c.bf16 %v2658, %v2654
        %v3442 = vpack.c.bf16 %v2668, %v2664
        %v3443 = vpack.c.bf16 %v2678, %v2674
        %v3444 = vpack.c.bf16 %v2688, %v2684
        %v3445 = vpack.c.bf16 %v2731, %v2727
        %v3446 = vpack.c.bf16 %v2741, %v2737
        %v3447 = vpack.c.bf16 %v2751, %v2747
        %v3448 = vpack.c.bf16 %v2761, %v2757
        %v3449 = vpack.c.bf16 %v2771, %v2767
        %v3450 = vpack.c.bf16 %v2781, %v2777
        %v3451 = vpack.c.bf16 %v2791, %v2787
        %v3452 = vpack.c.bf16 %v2801, %v2797
        %v3453 = vpack.c.bf16 %v2811, %v2807
        %v3454 = vpack.c.bf16 %v2821, %v2817
        %v3455 = vpack.c.bf16 %v2831, %v2827
        %v3456 = vpack.c.bf16 %v2841, %v2837
        %v3457 = vpack.c.bf16 %v2851, %v2847
        %v3458 = vpack.c.bf16 %v2861, %v2857
        %v3459 = vpack.c.bf16 %v2871, %v2867
        %v3460 = vpack.c.bf16 %v2881, %v2877
        %3461 = vmatprep.subr.bf16.mxu0 0
        %3462 = vmatpush1.bf16.xpose.msra.mxu0 %v3436
        %3463 = vmatprep.subr.bf16.mxu0 0
        %3464 = vmatpush1.bf16.xpose.msra.mxu0 %v3435
        %3465 = vmatprep.subr.bf16.mxu0 0
        %3466 = vmatpush1.bf16.xpose.msra.mxu0 %v3434
        %3467 = vmatprep.subr.bf16.mxu0 0
        %3468 = vmatpush1.bf16.xpose.msra.mxu0 %v3433
        %3469 = vmatprep.subr.bf16.mxu0 0
        %3470 = vmatpush1.bf16.xpose.msra.mxu0 %v3432
        %3471 = vmatprep.subr.bf16.mxu0 0
        %3472 = vmatpush1.bf16.xpose.msra.mxu0 %v3431
        %3473 = vmatprep.subr.bf16.mxu0 0
        %3474 = vmatpush1.bf16.xpose.msra.mxu0 %v3430
        %3475 = vmatprep.subr.bf16.mxu0 0
        %3476 = vmatpush1.bf16.xpose.msra.mxu0 %v3429
        %3477 = vmatprep.subr.bf16.mxu0 0
        %3478 = vmatpush2.bf16.xpose.msra.mxu0 %v3444
        %3479 = vmatprep.subr.bf16.mxu0 0
        %3480 = vmatpush2.bf16.xpose.msra.mxu0 %v3443
        %3481 = vmatprep.subr.bf16.mxu0 0
        %3482 = vmatpush2.bf16.xpose.msra.mxu0 %v3442
        %3483 = vmatprep.subr.bf16.mxu0 0
        %3484 = vmatpush2.bf16.xpose.msra.mxu0 %v3441
        %3485 = vmatprep.subr.bf16.mxu0 0
        %3486 = vmatpush2.bf16.xpose.msra.mxu0 %v3440
        %3487 = vmatprep.subr.bf16.mxu0 0
        %3488 = vmatpush2.bf16.xpose.msra.mxu0 %v3439
        %3489 = vmatprep.subr.bf16.mxu0 0
        %3490 = vmatpush2.bf16.xpose.msra.mxu0 %v3438
        %3491 = vmatprep.subr.bf16.mxu0 0
        %3492 = vmatpush2.bf16.xpose.msra.mxu0 %v3437
        %3493 = vmatprep.mubr.bf16.mxu0 0
        %3494 = vmatmul.mubr.bf16.gmra.mxu0 %v3421
        %v3495 = vpop.f32.mrf.mxu0
        %v3496 = vadd.f32 0.0, %v3495
        %v3497 = vpop.f32.mrf.mxu0
        %v3498 = vadd.f32 0.0, %v3497
        %v3499 = vpop.f32.mrf.mxu0
        %v3500 = vadd.f32 0.0, %v3499
        %v3501 = vpop.f32.mrf.mxu0
        %v3502 = vadd.f32 0.0, %v3501
        %3503 = vmatprep.mubr.bf16.mxu0 0
        %3504 = vmatmul.mubr.bf16.gmra.mxu0 %v3422
        %v3505 = vpop.f32.mrf.mxu0
        %v3506 = vadd.f32 0.0, %v3505
        %v3507 = vpop.f32.mrf.mxu0
        %v3508 = vadd.f32 0.0, %v3507
        %v3509 = vpop.f32.mrf.mxu0
        %v3510 = vadd.f32 0.0, %v3509
        %v3511 = vpop.f32.mrf.mxu0
        %v3512 = vadd.f32 0.0, %v3511
        %3513 = vmatprep.mubr.bf16.mxu0 0
        %3514 = vmatmul.mubr.bf16.gmra.mxu0 %v3423
        %v3515 = vpop.f32.mrf.mxu0
        %v3516 = vadd.f32 0.0, %v3515
        %v3517 = vpop.f32.mrf.mxu0
        %v3518 = vadd.f32 0.0, %v3517
        %v3519 = vpop.f32.mrf.mxu0
        %v3520 = vadd.f32 0.0, %v3519
        %v3521 = vpop.f32.mrf.mxu0
        %v3522 = vadd.f32 0.0, %v3521
        %3523 = vmatprep.mubr.bf16.mxu0 0
        %3524 = vmatmul.mubr.bf16.gmra.mxu0 %v3424
        %v3525 = vpop.f32.mrf.mxu0
        %v3526 = vadd.f32 0.0, %v3525
        %v3527 = vpop.f32.mrf.mxu0
        %v3528 = vadd.f32 0.0, %v3527
        %v3529 = vpop.f32.mrf.mxu0
        %v3530 = vadd.f32 0.0, %v3529
        %v3531 = vpop.f32.mrf.mxu0
        %v3532 = vadd.f32 0.0, %v3531
        %3533 = vmatprep.mubr.bf16.mxu0 0
        %3534 = vmatmul.mubr.bf16.gmra.mxu0 %v3425
        %v3535 = vpop.f32.mrf.mxu0
        %v3536 = vadd.f32 0.0, %v3535
        %v3537 = vpop.f32.mrf.mxu0
        %v3538 = vadd.f32 0.0, %v3537
        %v3539 = vpop.f32.mrf.mxu0
        %v3540 = vadd.f32 0.0, %v3539
        %v3541 = vpop.f32.mrf.mxu0
        %v3542 = vadd.f32 0.0, %v3541
        %3543 = vmatprep.mubr.bf16.mxu0 0
        %3544 = vmatmul.mubr.bf16.gmra.mxu0 %v3426
        %v3545 = vpop.f32.mrf.mxu0
        %v3546 = vadd.f32 0.0, %v3545
        %v3547 = vpop.f32.mrf.mxu0
        %v3548 = vadd.f32 0.0, %v3547
        %v3549 = vpop.f32.mrf.mxu0
        %v3550 = vadd.f32 0.0, %v3549
        %v3551 = vpop.f32.mrf.mxu0
        %v3552 = vadd.f32 0.0, %v3551
        %3553 = vmatprep.mubr.bf16.mxu0 0
        %3554 = vmatmul.mubr.bf16.gmra.mxu0 %v3427
        %v3555 = vpop.f32.mrf.mxu0
        %v3556 = vadd.f32 0.0, %v3555
        %v3557 = vpop.f32.mrf.mxu0
        %v3558 = vadd.f32 0.0, %v3557
        %v3559 = vpop.f32.mrf.mxu0
        %v3560 = vadd.f32 0.0, %v3559
        %v3561 = vpop.f32.mrf.mxu0
        %v3562 = vadd.f32 0.0, %v3561
        %3563 = vmatprep.mubr.bf16.mxu0 0
        %3564 = vmatmul.mubr.bf16.gmra.mxu0 %v3428
        %v3565 = vpop.f32.mrf.mxu0
        %v3566 = vadd.f32 0.0, %v3565
        %v3567 = vpop.f32.mrf.mxu0
        %v3568 = vadd.f32 0.0, %v3567
        %v3569 = vpop.f32.mrf.mxu0
        %v3570 = vadd.f32 0.0, %v3569
        %v3571 = vpop.f32.mrf.mxu0
        %v3572 = vadd.f32 0.0, %v3571
        %3573 = vdwg.mxu0
        %v3574 = vmul.f32 %v3496, 0.088388346
        %v3575 = vmul.f32 %v3498, 0.088388346
        %v3576 = vmul.f32 %v3500, 0.088388346
        %v3577 = vmul.f32 %v3502, 0.088388346
        %v3578 = vmul.f32 %v3506, 0.088388346
        %v3579 = vmul.f32 %v3508, 0.088388346
        %v3580 = vmul.f32 %v3510, 0.088388346
        %v3581 = vmul.f32 %v3512, 0.088388346
        %v3582 = vmul.f32 %v3516, 0.088388346
        %v3583 = vmul.f32 %v3518, 0.088388346
        %v3584 = vmul.f32 %v3520, 0.088388346
        %v3585 = vmul.f32 %v3522, 0.088388346
        %v3586 = vmul.f32 %v3526, 0.088388346
        %v3587 = vmul.f32 %v3528, 0.088388346
        %v3588 = vmul.f32 %v3530, 0.088388346
        %v3589 = vmul.f32 %v3532, 0.088388346
        %v3590 = vmul.f32 %v3536, 0.088388346
        %v3591 = vmul.f32 %v3538, 0.088388346
        %v3592 = vmul.f32 %v3540, 0.088388346
        %v3593 = vmul.f32 %v3542, 0.088388346
        %v3594 = vmul.f32 %v3546, 0.088388346
        %v3595 = vmul.f32 %v3548, 0.088388346
        %v3596 = vmul.f32 %v3550, 0.088388346
        %v3597 = vmul.f32 %v3552, 0.088388346
        %v3598 = vmul.f32 %v3556, 0.088388346
        %v3599 = vmul.f32 %v3558, 0.088388346
        %v3600 = vmul.f32 %v3560, 0.088388346
        %v3601 = vmul.f32 %v3562, 0.088388346
        %v3602 = vmul.f32 %v3566, 0.088388346
        %v3603 = vmul.f32 %v3568, 0.088388346
        %v3604 = vmul.f32 %v3570, 0.088388346
        %v3605 = vmul.f32 %v3572, 0.088388346
        %v3606 = vmax.f32 %v3574, %v3575
        %3607 = vmax.xlane.f32.xlu0 %v3606
        %v3608 = vpop.xlane.xlu0 %3607
        %v3609 = vmax.f32 %v3576, %v3577
        %3610 = vmax.xlane.f32.xlu0 %v3609
        %v3611 = vpop.xlane.xlu0 %3610
        %v3612 = vmax.f32 %v3578, %v3579
        %3613 = vmax.xlane.f32.xlu0 %v3612
        %v3614 = vpop.xlane.xlu0 %3613
        %v3615 = vmax.f32 %v3580, %v3581
        %3616 = vmax.xlane.f32.xlu0 %v3615
        %v3617 = vpop.xlane.xlu0 %3616
        %v3618 = vmax.f32 %v3582, %v3583
        %3619 = vmax.xlane.f32.xlu0 %v3618
        %v3620 = vpop.xlane.xlu0 %3619
        %v3621 = vmax.f32 %v3584, %v3585
        %3622 = vmax.xlane.f32.xlu0 %v3621
        %v3623 = vpop.xlane.xlu0 %3622
        %v3624 = vmax.f32 %v3586, %v3587
        %3625 = vmax.xlane.f32.xlu0 %v3624
        %v3626 = vpop.xlane.xlu0 %3625
        %v3627 = vmax.f32 %v3588, %v3589
        %3628 = vmax.xlane.f32.xlu0 %v3627
        %v3629 = vpop.xlane.xlu0 %3628
        %v3630 = vmax.f32 %v3590, %v3591
        %3631 = vmax.xlane.f32.xlu0 %v3630
        %v3632 = vpop.xlane.xlu0 %3631
        %v3633 = vmax.f32 %v3592, %v3593
        %3634 = vmax.xlane.f32.xlu0 %v3633
        %v3635 = vpop.xlane.xlu0 %3634
        %v3636 = vmax.f32 %v3594, %v3595
        %3637 = vmax.xlane.f32.xlu0 %v3636
        %v3638 = vpop.xlane.xlu0 %3637
        %v3639 = vmax.f32 %v3596, %v3597
        %3640 = vmax.xlane.f32.xlu0 %v3639
        %v3641 = vpop.xlane.xlu0 %3640
        %v3642 = vmax.f32 %v3598, %v3599
        %3643 = vmax.xlane.f32.xlu0 %v3642
        %v3644 = vpop.xlane.xlu0 %3643
        %v3645 = vmax.f32 %v3600, %v3601
        %3646 = vmax.xlane.f32.xlu0 %v3645
        %v3647 = vpop.xlane.xlu0 %3646
        %v3648 = vmax.f32 %v3602, %v3603
        %3649 = vmax.xlane.f32.xlu0 %v3648
        %v3650 = vpop.xlane.xlu0 %3649
        %v3651 = vmax.f32 %v3604, %v3605
        %3652 = vmax.xlane.f32.xlu0 %v3651
        %v3653 = vpop.xlane.xlu0 %3652
        %v3654 = vsub.f32 %v3574, %v3608
        %v3655 = vsub.f32 %v3575, %v3608
        %v3656 = vsub.f32 %v3576, %v3611
        %v3657 = vsub.f32 %v3577, %v3611
        %v3658 = vsub.f32 %v3578, %v3614
        %v3659 = vsub.f32 %v3579, %v3614
        %v3660 = vsub.f32 %v3580, %v3617
        %v3661 = vsub.f32 %v3581, %v3617
        %v3662 = vsub.f32 %v3582, %v3620
        %v3663 = vsub.f32 %v3583, %v3620
        %v3664 = vsub.f32 %v3584, %v3623
        %v3665 = vsub.f32 %v3585, %v3623
        %v3666 = vsub.f32 %v3586, %v3626
        %v3667 = vsub.f32 %v3587, %v3626
        %v3668 = vsub.f32 %v3588, %v3629
        %v3669 = vsub.f32 %v3589, %v3629
        %v3670 = vsub.f32 %v3590, %v3632
        %v3671 = vsub.f32 %v3591, %v3632
        %v3672 = vsub.f32 %v3592, %v3635
        %v3673 = vsub.f32 %v3593, %v3635
        %v3674 = vsub.f32 %v3594, %v3638
        %v3675 = vsub.f32 %v3595, %v3638
        %v3676 = vsub.f32 %v3596, %v3641
        %v3677 = vsub.f32 %v3597, %v3641
        %v3678 = vsub.f32 %v3598, %v3644
        %v3679 = vsub.f32 %v3599, %v3644
        %v3680 = vsub.f32 %v3600, %v3647
        %v3681 = vsub.f32 %v3601, %v3647
        %v3682 = vsub.f32 %v3602, %v3650
        %v3683 = vsub.f32 %v3603, %v3650
        %v3684 = vsub.f32 %v3604, %v3653
        %v3685 = vsub.f32 %v3605, %v3653
        %v3686 = vmul.f32 %v3654, 1.442695
        %v3687 = vpow.pop %v3686
        %v3688 = vmul.f32 %v3655, 1.442695
        %v3689 = vpow.pop %v3688
        %v3690 = vmul.f32 %v3656, 1.442695
        %v3691 = vpow.pop %v3690
        %v3692 = vmul.f32 %v3657, 1.442695
        %v3693 = vpow.pop %v3692
        %v3694 = vmul.f32 %v3658, 1.442695
        %v3695 = vpow.pop %v3694
        %v3696 = vmul.f32 %v3659, 1.442695
        %v3697 = vpow.pop %v3696
        %v3698 = vmul.f32 %v3660, 1.442695
        %v3699 = vpow.pop %v3698
        %v3700 = vmul.f32 %v3661, 1.442695
        %v3701 = vpow.pop %v3700
        %v3702 = vmul.f32 %v3662, 1.442695
        %v3703 = vpow.pop %v3702
        %v3704 = vmul.f32 %v3663, 1.442695
        %v3705 = vpow.pop %v3704
        %v3706 = vmul.f32 %v3664, 1.442695
        %v3707 = vpow.pop %v3706
        %v3708 = vmul.f32 %v3665, 1.442695
        %v3709 = vpow.pop %v3708
        %v3710 = vmul.f32 %v3666, 1.442695
        %v3711 = vpow.pop %v3710
        %v3712 = vmul.f32 %v3667, 1.442695
        %v3713 = vpow.pop %v3712
        %v3714 = vmul.f32 %v3668, 1.442695
        %v3715 = vpow.pop %v3714
        %v3716 = vmul.f32 %v3669, 1.442695
        %v3717 = vpow.pop %v3716
        %v3718 = vmul.f32 %v3670, 1.442695
        %v3719 = vpow.pop %v3718
        %v3720 = vmul.f32 %v3671, 1.442695
        %v3721 = vpow.pop %v3720
        %v3722 = vmul.f32 %v3672, 1.442695
        %v3723 = vpow.pop %v3722
        %v3724 = vmul.f32 %v3673, 1.442695
        %v3725 = vpow.pop %v3724
        %v3726 = vmul.f32 %v3674, 1.442695
        %v3727 = vpow.pop %v3726
        %v3728 = vmul.f32 %v3675, 1.442695
        %v3729 = vpow.pop %v3728
        %v3730 = vmul.f32 %v3676, 1.442695
        %v3731 = vpow.pop %v3730
        %v3732 = vmul.f32 %v3677, 1.442695
        %v3733 = vpow.pop %v3732
        %v3734 = vmul.f32 %v3678, 1.442695
        %v3735 = vpow.pop %v3734
        %v3736 = vmul.f32 %v3679, 1.442695
        %v3737 = vpow.pop %v3736
        %v3738 = vmul.f32 %v3680, 1.442695
        %v3739 = vpow.pop %v3738
        %v3740 = vmul.f32 %v3681, 1.442695
        %v3741 = vpow.pop %v3740
        %v3742 = vmul.f32 %v3682, 1.442695
        %v3743 = vpow.pop %v3742
        %v3744 = vmul.f32 %v3683, 1.442695
        %v3745 = vpow.pop %v3744
        %v3746 = vmul.f32 %v3684, 1.442695
        %v3747 = vpow.pop %v3746
        %v3748 = vmul.f32 %v3685, 1.442695
        %v3749 = vpow.pop %v3748
        %v3750 = vadd.f32 %v3687, %v3689
        %3751 = vadd.xlane.f32.xlu0 %v3750
        %v3752 = vpop.xlane.xlu0 %3751
        %v3753 = vadd.f32 %v3691, %v3693
        %3754 = vadd.xlane.f32.xlu0 %v3753
        %v3755 = vpop.xlane.xlu0 %3754
        %v3756 = vadd.f32 %v3695, %v3697
        %3757 = vadd.xlane.f32.xlu0 %v3756
        %v3758 = vpop.xlane.xlu0 %3757
        %v3759 = vadd.f32 %v3699, %v3701
        %3760 = vadd.xlane.f32.xlu0 %v3759
        %v3761 = vpop.xlane.xlu0 %3760
        %v3762 = vadd.f32 %v3703, %v3705
        %3763 = vadd.xlane.f32.xlu0 %v3762
        %v3764 = vpop.xlane.xlu0 %3763
        %v3765 = vadd.f32 %v3707, %v3709
        %3766 = vadd.xlane.f32.xlu0 %v3765
        %v3767 = vpop.xlane.xlu0 %3766
        %v3768 = vadd.f32 %v3711, %v3713
        %3769 = vadd.xlane.f32.xlu0 %v3768
        %v3770 = vpop.xlane.xlu0 %3769
        %v3771 = vadd.f32 %v3715, %v3717
        %3772 = vadd.xlane.f32.xlu0 %v3771
        %v3773 = vpop.xlane.xlu0 %3772
        %v3774 = vadd.f32 %v3719, %v3721
        %3775 = vadd.xlane.f32.xlu0 %v3774
        %v3776 = vpop.xlane.xlu0 %3775
        %v3777 = vadd.f32 %v3723, %v3725
        %3778 = vadd.xlane.f32.xlu0 %v3777
        %v3779 = vpop.xlane.xlu0 %3778
        %v3780 = vadd.f32 %v3727, %v3729
        %3781 = vadd.xlane.f32.xlu0 %v3780
        %v3782 = vpop.xlane.xlu0 %3781
        %v3783 = vadd.f32 %v3731, %v3733
        %3784 = vadd.xlane.f32.xlu0 %v3783
        %v3785 = vpop.xlane.xlu0 %3784
        %v3786 = vadd.f32 %v3735, %v3737
        %3787 = vadd.xlane.f32.xlu0 %v3786
        %v3788 = vpop.xlane.xlu0 %3787
        %v3789 = vadd.f32 %v3739, %v3741
        %3790 = vadd.xlane.f32.xlu0 %v3789
        %v3791 = vpop.xlane.xlu0 %3790
        %v3792 = vadd.f32 %v3743, %v3745
        %3793 = vadd.xlane.f32.xlu0 %v3792
        %v3794 = vpop.xlane.xlu0 %3793
        %v3795 = vadd.f32 %v3747, %v3749
        %3796 = vadd.xlane.f32.xlu0 %v3795
        %v3797 = vpop.xlane.xlu0 %3796
        %v3798 = vrcp.pop %v3752
        %v3799 = vmul.f32 %v3687, %v3798
        %v3800 = vmul.f32 %v3689, %v3798
        %v3801 = vrcp.pop %v3755
        %v3802 = vmul.f32 %v3691, %v3801
        %v3803 = vmul.f32 %v3693, %v3801
        %v3804 = vrcp.pop %v3758
        %v3805 = vmul.f32 %v3695, %v3804
        %v3806 = vmul.f32 %v3697, %v3804
        %v3807 = vrcp.pop %v3761
        %v3808 = vmul.f32 %v3699, %v3807
        %v3809 = vmul.f32 %v3701, %v3807
        %v3810 = vrcp.pop %v3764
        %v3811 = vmul.f32 %v3703, %v3810
        %v3812 = vmul.f32 %v3705, %v3810
        %v3813 = vrcp.pop %v3767
        %v3814 = vmul.f32 %v3707, %v3813
        %v3815 = vmul.f32 %v3709, %v3813
        %v3816 = vrcp.pop %v3770
        %v3817 = vmul.f32 %v3711, %v3816
        %v3818 = vmul.f32 %v3713, %v3816
        %v3819 = vrcp.pop %v3773
        %v3820 = vmul.f32 %v3715, %v3819
        %v3821 = vmul.f32 %v3717, %v3819
        %v3822 = vrcp.pop %v3776
        %v3823 = vmul.f32 %v3719, %v3822
        %v3824 = vmul.f32 %v3721, %v3822
        %v3825 = vrcp.pop %v3779
        %v3826 = vmul.f32 %v3723, %v3825
        %v3827 = vmul.f32 %v3725, %v3825
        %v3828 = vrcp.pop %v3782
        %v3829 = vmul.f32 %v3727, %v3828
        %v3830 = vmul.f32 %v3729, %v3828
        %v3831 = vrcp.pop %v3785
        %v3832 = vmul.f32 %v3731, %v3831
        %v3833 = vmul.f32 %v3733, %v3831
        %v3834 = vrcp.pop %v3788
        %v3835 = vmul.f32 %v3735, %v3834
        %v3836 = vmul.f32 %v3737, %v3834
        %v3837 = vrcp.pop %v3791
        %v3838 = vmul.f32 %v3739, %v3837
        %v3839 = vmul.f32 %v3741, %v3837
        %v3840 = vrcp.pop %v3794
        %v3841 = vmul.f32 %v3743, %v3840
        %v3842 = vmul.f32 %v3745, %v3840
        %v3843 = vrcp.pop %v3797
        %v3844 = vmul.f32 %v3747, %v3843
        %v3845 = vmul.f32 %v3749, %v3843
        %v3846 = vpack.c.bf16 %v3802, %v3799
        %v3847 = vpack.c.bf16 %v3803, %v3800
        %v3848 = vpack.c.bf16 %v3808, %v3805
        %v3849 = vpack.c.bf16 %v3809, %v3806
        %v3850 = vpack.c.bf16 %v3814, %v3811
        %v3851 = vpack.c.bf16 %v3815, %v3812
        %v3852 = vpack.c.bf16 %v3820, %v3817
        %v3853 = vpack.c.bf16 %v3821, %v3818
        %v3854 = vpack.c.bf16 %v3826, %v3823
        %v3855 = vpack.c.bf16 %v3827, %v3824
        %v3856 = vpack.c.bf16 %v3832, %v3829
        %v3857 = vpack.c.bf16 %v3833, %v3830
        %v3858 = vpack.c.bf16 %v3838, %v3835
        %v3859 = vpack.c.bf16 %v3839, %v3836
        %v3860 = vpack.c.bf16 %v3844, %v3841
        %v3861 = vpack.c.bf16 %v3845, %v3842
        %3862 = vmatprep.subr.bf16.mxu0 0
        %3863 = vmatpush1.bf16.msra.mxu0 %v3452
        %3864 = vmatprep.subr.bf16.mxu0 0
        %3865 = vmatpush1.bf16.msra.mxu0 %v3451
        %3866 = vmatprep.subr.bf16.mxu0 0
        %3867 = vmatpush1.bf16.msra.mxu0 %v3450
        %3868 = vmatprep.subr.bf16.mxu0 0
        %3869 = vmatpush1.bf16.msra.mxu0 %v3449
        %3870 = vmatprep.subr.bf16.mxu0 0
        %3871 = vmatpush1.bf16.msra.mxu0 %v3448
        %3872 = vmatprep.subr.bf16.mxu0 0
        %3873 = vmatpush1.bf16.msra.mxu0 %v3447
        %3874 = vmatprep.subr.bf16.mxu0 0
        %3875 = vmatpush1.bf16.msra.mxu0 %v3446
        %3876 = vmatprep.subr.bf16.mxu0 0
        %3877 = vmatpush1.bf16.msra.mxu0 %v3445
        %3878 = vmatprep.subr.bf16.mxu0 0
        %3879 = vmatpush2.bf16.msra.mxu0 %v3460
        %3880 = vmatprep.subr.bf16.mxu0 0
        %3881 = vmatpush2.bf16.msra.mxu0 %v3459
        %3882 = vmatprep.subr.bf16.mxu0 0
        %3883 = vmatpush2.bf16.msra.mxu0 %v3458
        %3884 = vmatprep.subr.bf16.mxu0 0
        %3885 = vmatpush2.bf16.msra.mxu0 %v3457
        %3886 = vmatprep.subr.bf16.mxu0 0
        %3887 = vmatpush2.bf16.msra.mxu0 %v3456
        %3888 = vmatprep.subr.bf16.mxu0 0
        %3889 = vmatpush2.bf16.msra.mxu0 %v3455
        %3890 = vmatprep.subr.bf16.mxu0 0
        %3891 = vmatpush2.bf16.msra.mxu0 %v3454
        %3892 = vmatprep.subr.bf16.mxu0 0
        %3893 = vmatpush2.bf16.msra.mxu0 %v3453
        %3894 = vmatprep.mubr.bf16.mxu0 %v3847
        %3895 = vmatmul.mubr.bf16.gmra.mxu0 %v3846
        %v3896 = vpop.f32.mrf.mxu0
        %v3897 = vadd.f32 0.0, %v3896
        %v3898 = vpop.f32.mrf.mxu0
        %v3899 = vpop.f32.mrf.mxu0
        %v3900 = vadd.f32 0.0, %v3899
        %v3901 = vpop.f32.mrf.mxu0
        %3902 = vmatprep.mubr.bf16.mxu0 %v3849
        %3903 = vmatmul.mubr.bf16.gmra.mxu0 %v3848
        %v3904 = vpop.f32.mrf.mxu0
        %v3905 = vadd.f32 0.0, %v3904
        %v3906 = vpop.f32.mrf.mxu0
        %v3907 = vpop.f32.mrf.mxu0
        %v3908 = vadd.f32 0.0, %v3907
        %v3909 = vpop.f32.mrf.mxu0
        %3910 = vmatprep.mubr.bf16.mxu0 %v3851
        %3911 = vmatmul.mubr.bf16.gmra.mxu0 %v3850
        %v3912 = vpop.f32.mrf.mxu0
        %v3913 = vadd.f32 0.0, %v3912
        %v3914 = vpop.f32.mrf.mxu0
        %v3915 = vpop.f32.mrf.mxu0
        %v3916 = vadd.f32 0.0, %v3915
        %v3917 = vpop.f32.mrf.mxu0
        %3918 = vmatprep.mubr.bf16.mxu0 %v3853
        %3919 = vmatmul.mubr.bf16.gmra.mxu0 %v3852
        %v3920 = vpop.f32.mrf.mxu0
        %v3921 = vadd.f32 0.0, %v3920
        %v3922 = vpop.f32.mrf.mxu0
        %v3923 = vpop.f32.mrf.mxu0
        %v3924 = vadd.f32 0.0, %v3923
        %v3925 = vpop.f32.mrf.mxu0
        %3926 = vmatprep.mubr.bf16.mxu0 %v3855
        %3927 = vmatmul.mubr.bf16.gmra.mxu0 %v3854
        %v3928 = vpop.f32.mrf.mxu0
        %v3929 = vadd.f32 0.0, %v3928
        %v3930 = vpop.f32.mrf.mxu0
        %v3931 = vpop.f32.mrf.mxu0
        %v3932 = vadd.f32 0.0, %v3931
        %v3933 = vpop.f32.mrf.mxu0
        %3934 = vmatprep.mubr.bf16.mxu0 %v3857
        %3935 = vmatmul.mubr.bf16.gmra.mxu0 %v3856
        %v3936 = vpop.f32.mrf.mxu0
        %v3937 = vadd.f32 0.0, %v3936
        %v3938 = vpop.f32.mrf.mxu0
        %v3939 = vpop.f32.mrf.mxu0
        %v3940 = vadd.f32 0.0, %v3939
        %v3941 = vpop.f32.mrf.mxu0
        %3942 = vmatprep.mubr.bf16.mxu0 %v3859
        %3943 = vmatmul.mubr.bf16.gmra.mxu0 %v3858
        %v3944 = vpop.f32.mrf.mxu0
        %v3945 = vadd.f32 0.0, %v3944
        %v3946 = vpop.f32.mrf.mxu0
        %v3947 = vpop.f32.mrf.mxu0
        %v3948 = vadd.f32 0.0, %v3947
        %v3949 = vpop.f32.mrf.mxu0
        %3950 = vmatprep.mubr.bf16.mxu0 %v3861
        %3951 = vmatmul.mubr.bf16.gmra.mxu0 %v3860
        %v3952 = vpop.f32.mrf.mxu0
        %v3953 = vadd.f32 0.0, %v3952
        %v3954 = vpop.f32.mrf.mxu0
        %v3955 = vpop.f32.mrf.mxu0
        %v3956 = vadd.f32 0.0, %v3955
        %v3957 = vpop.f32.mrf.mxu0
        %3958 = vdwg.mxu0
        %v3959 = vpack.c.bf16 %v3362, %v3359
        %v3960 = vpack.c.bf16 %v3900, %v3897
        %v3961 = vpack.c.bf16 %v3370, %v3367
        %v3962 = vpack.c.bf16 %v3908, %v3905
        %v3963 = vpack.c.bf16 %v3378, %v3375
        %v3964 = vpack.c.bf16 %v3916, %v3913
        %v3965 = vpack.c.bf16 %v3386, %v3383
        %v3966 = vpack.c.bf16 %v3924, %v3921
        %v3967 = vpack.c.bf16 %v3394, %v3391
        %v3968 = vpack.c.bf16 %v3932, %v3929
        %v3969 = vpack.c.bf16 %v3402, %v3399
        %v3970 = vpack.c.bf16 %v3940, %v3937
        %v3971 = vpack.c.bf16 %v3410, %v3407
        %v3972 = vpack.c.bf16 %v3948, %v3945
        %v3973 = vpack.c.bf16 %v3418, %v3415
        %v3974 = vpack.c.bf16 %v3956, %v3953
        %v3975 = vld [vmem:[#allocation13] sm:$0xff]
        %v3976 = vld [vmem:[#allocation13 + $0x8] sm:$0xff]
        %v3977 = vld [vmem:[#allocation13 + $0x10] sm:$0xff]
        %v3978 = vld [vmem:[#allocation13 + $0x18] sm:$0xff]
        %v3979 = vld [vmem:[#allocation13 + $0x20] sm:$0xff]
        %v3980 = vld [vmem:[#allocation13 + $0x28] sm:$0xff]
        %v3981 = vld [vmem:[#allocation13 + $0x30] sm:$0xff]
        %v3982 = vld [vmem:[#allocation13 + $0x38] sm:$0xff]
        %v3983 = vld [vmem:[#allocation13 + $0x40] sm:$0xff]
        %v3984 = vld [vmem:[#allocation13 + $0x48] sm:$0xff]
        %v3985 = vld [vmem:[#allocation13 + $0x50] sm:$0xff]
        %v3986 = vld [vmem:[#allocation13 + $0x58] sm:$0xff]
        %v3987 = vld [vmem:[#allocation13 + $0x60] sm:$0xff]
        %v3988 = vld [vmem:[#allocation13 + $0x68] sm:$0xff]
        %v3989 = vld [vmem:[#allocation13 + $0x70] sm:$0xff]
        %v3990 = vld [vmem:[#allocation13 + $0x78] sm:$0xff]
        %v3991 = vld [vmem:[#allocation13 + $0x80] sm:$0xff]
        %v3992 = vld [vmem:[#allocation13 + $0x88] sm:$0xff]
        %v3993 = vld [vmem:[#allocation13 + $0x90] sm:$0xff]
        %v3994 = vld [vmem:[#allocation13 + $0x98] sm:$0xff]
        %v3995 = vld [vmem:[#allocation13 + $0xa0] sm:$0xff]
        %v3996 = vld [vmem:[#allocation13 + $0xa8] sm:$0xff]
        %v3997 = vld [vmem:[#allocation13 + $0xb0] sm:$0xff]
        %v3998 = vld [vmem:[#allocation13 + $0xb8] sm:$0xff]
        %v3999 = vld [vmem:[#allocation13 + $0xc0] sm:$0xff]
        %v4000 = vld [vmem:[#allocation13 + $0xc8] sm:$0xff]
        %v4001 = vld [vmem:[#allocation13 + $0xd0] sm:$0xff]
        %v4002 = vld [vmem:[#allocation13 + $0xd8] sm:$0xff]
        %v4003 = vld [vmem:[#allocation13 + $0xe0] sm:$0xff]
        %v4004 = vld [vmem:[#allocation13 + $0xe8] sm:$0xff]
        %v4005 = vld [vmem:[#allocation13 + $0xf0] sm:$0xff]
        %v4006 = vld [vmem:[#allocation13 + $0xf8] sm:$0xff]
        %v4007 = vld [vmem:[%s8] sm:$0x3]
        %v4009 = vlaneseq
        %v4010 = vshrl.u32 %v4009, 7
        %v4011 = vsub.s32 0, %v4010
        %v4012 = vrot.slane %v4007, %v4011
        %v4013 = vlaneseq
        %v4014 = vshrl.u32 %v4013, 7
        %v4015 = vsub.s32 1, %v4014
        %v4016 = vrot.slane %v4007, %v4015
        %v4051 = vunpack.c.l.b16 %v3975
        %v4052 = vunpack.c.h.b16 %v3975
        %v4053 = vunpack.c.l.b16 %v3976
        %v4054 = vunpack.c.h.b16 %v3976
        %v4055 = vunpack.c.l.b16 %v3977
        %v4056 = vunpack.c.h.b16 %v3977
        %v4057 = vunpack.c.l.b16 %v3978
        %v4058 = vunpack.c.h.b16 %v3978
        %v4059 = vunpack.c.l.b16 %v3979
        %v4060 = vunpack.c.h.b16 %v3979
        %v4061 = vunpack.c.l.b16 %v3980
        %v4062 = vunpack.c.h.b16 %v3980
        %v4063 = vunpack.c.l.b16 %v3981
        %v4064 = vunpack.c.h.b16 %v3981
        %v4065 = vunpack.c.l.b16 %v3982
        %v4066 = vunpack.c.h.b16 %v3982
        %v4067 = vunpack.c.l.b16 %v3983
        %v4068 = vunpack.c.h.b16 %v3983
        %v4069 = vunpack.c.l.b16 %v3984
        %v4070 = vunpack.c.h.b16 %v3984
        %v4071 = vunpack.c.l.b16 %v3985
        %v4072 = vunpack.c.h.b16 %v3985
        %v4073 = vunpack.c.l.b16 %v3986
        %v4074 = vunpack.c.h.b16 %v3986
        %v4075 = vunpack.c.l.b16 %v3987
        %v4076 = vunpack.c.h.b16 %v3987
        %v4077 = vunpack.c.l.b16 %v3988
        %v4078 = vunpack.c.h.b16 %v3988
        %v4079 = vunpack.c.l.b16 %v3989
        %v4080 = vunpack.c.h.b16 %v3989
        %v4081 = vunpack.c.l.b16 %v3990
        %v4082 = vunpack.c.h.b16 %v3990
        %v4083 = vunpack.c.l.b16 %v3991
        %v4084 = vunpack.c.h.b16 %v3991
        %v4085 = vunpack.c.l.b16 %v3992
        %v4086 = vunpack.c.h.b16 %v3992
        %v4087 = vunpack.c.l.b16 %v3993
        %v4088 = vunpack.c.h.b16 %v3993
        %v4089 = vunpack.c.l.b16 %v3994
        %v4090 = vunpack.c.h.b16 %v3994
        %v4091 = vunpack.c.l.b16 %v3995
        %v4092 = vunpack.c.h.b16 %v3995
        %v4093 = vunpack.c.l.b16 %v3996
        %v4094 = vunpack.c.h.b16 %v3996
        %v4095 = vunpack.c.l.b16 %v3997
        %v4096 = vunpack.c.h.b16 %v3997
        %v4097 = vunpack.c.l.b16 %v3998
        %v4098 = vunpack.c.h.b16 %v3998
        %v4099 = vunpack.c.l.b16 %v3999
        %v4100 = vunpack.c.h.b16 %v3999
        %v4101 = vunpack.c.l.b16 %v4000
        %v4102 = vunpack.c.h.b16 %v4000
        %v4103 = vunpack.c.l.b16 %v4001
        %v4104 = vunpack.c.h.b16 %v4001
        %v4105 = vunpack.c.l.b16 %v4002
        %v4106 = vunpack.c.h.b16 %v4002
        %v4107 = vunpack.c.l.b16 %v4003
        %v4108 = vunpack.c.h.b16 %v4003
        %v4109 = vunpack.c.l.b16 %v4004
        %v4110 = vunpack.c.h.b16 %v4004
        %v4111 = vunpack.c.l.b16 %v4005
        %v4112 = vunpack.c.h.b16 %v4005
        %v4113 = vunpack.c.l.b16 %v4006
        %v4114 = vunpack.c.h.b16 %v4006
        %v4115 = vpack.c.b16 %v4053, %v4051
        %v4116 = vpack.c.b16 %v4054, %v4052
        %v4117 = vpack.c.b16 %v4057, %v4055
        %v4118 = vpack.c.b16 %v4058, %v4056
        %v4119 = vpack.c.b16 %v4061, %v4059
        %v4120 = vpack.c.b16 %v4062, %v4060
        %v4121 = vpack.c.b16 %v4065, %v4063
        %v4122 = vpack.c.b16 %v4066, %v4064
        %v4123 = vpack.c.b16 %v4069, %v4067
        %v4124 = vpack.c.b16 %v4070, %v4068
        %v4125 = vpack.c.b16 %v4073, %v4071
        %v4126 = vpack.c.b16 %v4074, %v4072
        %v4127 = vpack.c.b16 %v4077, %v4075
        %v4128 = vpack.c.b16 %v4078, %v4076
        %v4129 = vpack.c.b16 %v4081, %v4079
        %v4130 = vpack.c.b16 %v4082, %v4080
        %v4131 = vpack.c.b16 %v4085, %v4083
        %v4132 = vpack.c.b16 %v4086, %v4084
        %v4133 = vpack.c.b16 %v4089, %v4087
        %v4134 = vpack.c.b16 %v4090, %v4088
        %v4135 = vpack.c.b16 %v4093, %v4091
        %v4136 = vpack.c.b16 %v4094, %v4092
        %v4137 = vpack.c.b16 %v4097, %v4095
        %v4138 = vpack.c.b16 %v4098, %v4096
        %v4139 = vpack.c.b16 %v4101, %v4099
        %v4140 = vpack.c.b16 %v4102, %v4100
        %v4141 = vpack.c.b16 %v4105, %v4103
        %v4142 = vpack.c.b16 %v4106, %v4104
        %v4143 = vpack.c.b16 %v4109, %v4107
        %v4144 = vpack.c.b16 %v4110, %v4108
        %v4145 = vpack.c.b16 %v4113, %v4111
        %v4146 = vpack.c.b16 %v4114, %v4112
        %4179 = vmatprep.subr.bf16.mxu0 %v4130
        %4180 = vmatpush1.bf16.msra.mxu0 %v4129
        %4181 = vmatprep.subr.bf16.mxu0 %v4128
        %4182 = vmatpush1.bf16.msra.mxu0 %v4127
        %4183 = vmatprep.subr.bf16.mxu0 %v4126
        %4184 = vmatpush1.bf16.msra.mxu0 %v4125
        %4185 = vmatprep.subr.bf16.mxu0 %v4124
        %4186 = vmatpush1.bf16.msra.mxu0 %v4123
        %4187 = vmatprep.subr.bf16.mxu0 %v4122
        %4188 = vmatpush1.bf16.msra.mxu0 %v4121
        %4189 = vmatprep.subr.bf16.mxu0 %v4120
        %4190 = vmatpush1.bf16.msra.mxu0 %v4119
        %4191 = vmatprep.subr.bf16.mxu0 %v4118
        %4192 = vmatpush1.bf16.msra.mxu0 %v4117
        %4193 = vmatprep.subr.bf16.mxu0 %v4116
        %4194 = vmatpush1.bf16.msra.mxu0 %v4115
        %4195 = vmatprep.subr.bf16.mxu0 %v4146
        %4196 = vmatpush2.bf16.msra.mxu0 %v4145
        %4197 = vmatprep.subr.bf16.mxu0 %v4144
        %4198 = vmatpush2.bf16.msra.mxu0 %v4143
        %4199 = vmatprep.subr.bf16.mxu0 %v4142
        %4200 = vmatpush2.bf16.msra.mxu0 %v4141
        %4201 = vmatprep.subr.bf16.mxu0 %v4140
        %4202 = vmatpush2.bf16.msra.mxu0 %v4139
        %4203 = vmatprep.subr.bf16.mxu0 %v4138
        %4204 = vmatpush2.bf16.msra.mxu0 %v4137
        %4205 = vmatprep.subr.bf16.mxu0 %v4136
        %4206 = vmatpush2.bf16.msra.mxu0 %v4135
        %4207 = vmatprep.subr.bf16.mxu0 %v4134
        %4208 = vmatpush2.bf16.msra.mxu0 %v4133
        %4209 = vmatprep.subr.bf16.mxu0 %v4132
        %4210 = vmatpush2.bf16.msra.mxu0 %v4131
        %4211 = vmatprep.mubr.bf16.mxu0 %v3960
        %4212 = vmatmul.mubr.bf16.gmra.mxu0 %v3959
        %v4213 = vpop.f32.mrf.mxu0
        %v4214 = vadd.f32 %v4012, %v4213
        %v4215 = vpop.f32.mrf.mxu0
        %v4216 = vadd.f32 %v4016, %v4215
        %v4217 = vpop.f32.mrf.mxu0
        %v4218 = vadd.f32 %v4012, %v4217
        %v4219 = vpop.f32.mrf.mxu0
        %v4220 = vadd.f32 %v4016, %v4219
        %4221 = vmatprep.mubr.bf16.mxu0 %v3962
        %4222 = vmatmul.mubr.bf16.gmra.mxu0 %v3961
        %v4223 = vpop.f32.mrf.mxu0
        %v4224 = vadd.f32 %v4012, %v4223
        %v4225 = vpop.f32.mrf.mxu0
        %v4226 = vadd.f32 %v4016, %v4225
        %v4227 = vpop.f32.mrf.mxu0
        %v4228 = vadd.f32 %v4012, %v4227
        %v4229 = vpop.f32.mrf.mxu0
        %v4230 = vadd.f32 %v4016, %v4229
        %4231 = vmatprep.mubr.bf16.mxu0 %v3964
        %4232 = vmatmul.mubr.bf16.gmra.mxu0 %v3963
        %v4233 = vpop.f32.mrf.mxu0
        %v4234 = vadd.f32 %v4012, %v4233
        %v4235 = vpop.f32.mrf.mxu0
        %v4236 = vadd.f32 %v4016, %v4235
        %v4237 = vpop.f32.mrf.mxu0
        %v4238 = vadd.f32 %v4012, %v4237
        %v4239 = vpop.f32.mrf.mxu0
        %v4240 = vadd.f32 %v4016, %v4239
        %4241 = vmatprep.mubr.bf16.mxu0 %v3966
        %4242 = vmatmul.mubr.bf16.gmra.mxu0 %v3965
        %v4243 = vpop.f32.mrf.mxu0
        %v4244 = vadd.f32 %v4012, %v4243
        %v4245 = vpop.f32.mrf.mxu0
        %v4246 = vadd.f32 %v4016, %v4245
        %v4247 = vpop.f32.mrf.mxu0
        %v4248 = vadd.f32 %v4012, %v4247
        %v4249 = vpop.f32.mrf.mxu0
        %v4250 = vadd.f32 %v4016, %v4249
        %4251 = vmatprep.mubr.bf16.mxu0 %v3968
        %4252 = vmatmul.mubr.bf16.gmra.mxu0 %v3967
        %v4253 = vpop.f32.mrf.mxu0
        %v4254 = vadd.f32 %v4012, %v4253
        %v4255 = vpop.f32.mrf.mxu0
        %v4256 = vadd.f32 %v4016, %v4255
        %v4257 = vpop.f32.mrf.mxu0
        %v4258 = vadd.f32 %v4012, %v4257
        %v4259 = vpop.f32.mrf.mxu0
        %v4260 = vadd.f32 %v4016, %v4259
        %4261 = vmatprep.mubr.bf16.mxu0 %v3970
        %4262 = vmatmul.mubr.bf16.gmra.mxu0 %v3969
        %v4263 = vpop.f32.mrf.mxu0
        %v4264 = vadd.f32 %v4012, %v4263
        %v4265 = vpop.f32.mrf.mxu0
        %v4266 = vadd.f32 %v4016, %v4265
        %v4267 = vpop.f32.mrf.mxu0
        %v4268 = vadd.f32 %v4012, %v4267
        %v4269 = vpop.f32.mrf.mxu0
        %v4270 = vadd.f32 %v4016, %v4269
        %4271 = vmatprep.mubr.bf16.mxu0 %v3972
        %4272 = vmatmul.mubr.bf16.gmra.mxu0 %v3971
        %v4273 = vpop.f32.mrf.mxu0
        %v4274 = vadd.f32 %v4012, %v4273
        %v4275 = vpop.f32.mrf.mxu0
        %v4276 = vadd.f32 %v4016, %v4275
        %v4277 = vpop.f32.mrf.mxu0
        %v4278 = vadd.f32 %v4012, %v4277
        %v4279 = vpop.f32.mrf.mxu0
        %v4280 = vadd.f32 %v4016, %v4279
        %4281 = vmatprep.mubr.bf16.mxu0 %v3974
        %4282 = vmatmul.mubr.bf16.gmra.mxu0 %v3973
        %v4283 = vpop.f32.mrf.mxu0
        %v4284 = vadd.f32 %v4012, %v4283
        %v4285 = vpop.f32.mrf.mxu0
        %v4286 = vadd.f32 %v4016, %v4285
        %v4287 = vpop.f32.mrf.mxu0
        %v4288 = vadd.f32 %v4012, %v4287
        %v4289 = vpop.f32.mrf.mxu0
        %v4290 = vadd.f32 %v4016, %v4289
        %4291 = vdwg.mxu0
        %v4292 = vadd.f32 %v709, %v4214
        %v4293 = vadd.f32 %v710, %v4216
        %v4294 = vadd.f32 %v711, %v4218
        %v4295 = vadd.f32 %v712, %v4220
        %v4296 = vadd.f32 %v713, %v4224
        %v4297 = vadd.f32 %v714, %v4226
        %v4298 = vadd.f32 %v715, %v4228
        %v4299 = vadd.f32 %v716, %v4230
        %v4300 = vadd.f32 %v717, %v4234
        %v4301 = vadd.f32 %v718, %v4236
        %v4302 = vadd.f32 %v719, %v4238
        %v4303 = vadd.f32 %v720, %v4240
        %v4304 = vadd.f32 %v721, %v4244
        %v4305 = vadd.f32 %v722, %v4246
        %v4306 = vadd.f32 %v723, %v4248
        %v4307 = vadd.f32 %v724, %v4250
        %v4308 = vadd.f32 %v725, %v4254
        %v4309 = vadd.f32 %v726, %v4256
        %v4310 = vadd.f32 %v727, %v4258
        %v4311 = vadd.f32 %v728, %v4260
        %v4312 = vadd.f32 %v729, %v4264
        %v4313 = vadd.f32 %v730, %v4266
        %v4314 = vadd.f32 %v731, %v4268
        %v4315 = vadd.f32 %v732, %v4270
        %v4316 = vadd.f32 %v733, %v4274
        %v4317 = vadd.f32 %v734, %v4276
        %v4318 = vadd.f32 %v735, %v4278
        %v4319 = vadd.f32 %v736, %v4280
        %v4320 = vadd.f32 %v737, %v4284
        %v4321 = vadd.f32 %v738, %v4286
        %v4322 = vadd.f32 %v739, %v4288
        %v4323 = vadd.f32 %v740, %v4290
        %v4324 = vld [vmem:[%s9] sm:$0x3]
        %v4325 = vld [vmem:[%s10] sm:$0x3]
        %v4326 = vadd.f32 %v4292, %v4293
        %4327 = vadd.xlane.f32.xlu0 %v4326
        %v4328 = vpop.xlane.xlu0 %4327
        %v4329 = vadd.f32 %v4294, %v4295
        %4330 = vadd.xlane.f32.xlu0 %v4329
        %v4331 = vpop.xlane.xlu0 %4330
        %v4332 = vadd.f32 %v4296, %v4297
        %4333 = vadd.xlane.f32.xlu0 %v4332
        %v4334 = vpop.xlane.xlu0 %4333
        %v4335 = vadd.f32 %v4298, %v4299
        %4336 = vadd.xlane.f32.xlu0 %v4335
        %v4337 = vpop.xlane.xlu0 %4336
        %v4338 = vadd.f32 %v4300, %v4301
        %4339 = vadd.xlane.f32.xlu0 %v4338
        %v4340 = vpop.xlane.xlu0 %4339
        %v4341 = vadd.f32 %v4302, %v4303
        %4342 = vadd.xlane.f32.xlu0 %v4341
        %v4343 = vpop.xlane.xlu0 %4342
        %v4344 = vadd.f32 %v4304, %v4305
        %4345 = vadd.xlane.f32.xlu0 %v4344
        %v4346 = vpop.xlane.xlu0 %4345
        %v4347 = vadd.f32 %v4306, %v4307
        %4348 = vadd.xlane.f32.xlu0 %v4347
        %v4349 = vpop.xlane.xlu0 %4348
        %v4350 = vadd.f32 %v4308, %v4309
        %4351 = vadd.xlane.f32.xlu0 %v4350
        %v4352 = vpop.xlane.xlu0 %4351
        %v4353 = vadd.f32 %v4310, %v4311
        %4354 = vadd.xlane.f32.xlu0 %v4353
        %v4355 = vpop.xlane.xlu0 %4354
        %v4356 = vadd.f32 %v4312, %v4313
        %4357 = vadd.xlane.f32.xlu0 %v4356
        %v4358 = vpop.xlane.xlu0 %4357
        %v4359 = vadd.f32 %v4314, %v4315
        %4360 = vadd.xlane.f32.xlu0 %v4359
        %v4361 = vpop.xlane.xlu0 %4360
        %v4362 = vadd.f32 %v4316, %v4317
        %4363 = vadd.xlane.f32.xlu0 %v4362
        %v4364 = vpop.xlane.xlu0 %4363
        %v4365 = vadd.f32 %v4318, %v4319
        %4366 = vadd.xlane.f32.xlu0 %v4365
        %v4367 = vpop.xlane.xlu0 %4366
        %v4368 = vadd.f32 %v4320, %v4321
        %4369 = vadd.xlane.f32.xlu0 %v4368
        %v4370 = vpop.xlane.xlu0 %4369
        %v4371 = vadd.f32 %v4322, %v4323
        %4372 = vadd.xlane.f32.xlu0 %v4371
        %v4373 = vpop.xlane.xlu0 %4372
        %v4374 = vmul.f32 %v4328, %v839
        %v4375 = vmul.f32 %v4331, %v839
        %v4376 = vmul.f32 %v4334, %v839
        %v4377 = vmul.f32 %v4337, %v839
        %v4378 = vmul.f32 %v4340, %v839
        %v4379 = vmul.f32 %v4343, %v839
        %v4380 = vmul.f32 %v4346, %v839
        %v4381 = vmul.f32 %v4349, %v839
        %v4382 = vmul.f32 %v4352, %v839
        %v4383 = vmul.f32 %v4355, %v839
        %v4384 = vmul.f32 %v4358, %v839
        %v4385 = vmul.f32 %v4361, %v839
        %v4386 = vmul.f32 %v4364, %v839
        %v4387 = vmul.f32 %v4367, %v839
        %v4388 = vmul.f32 %v4370, %v839
        %v4389 = vmul.f32 %v4373, %v839
        %v4390 = vsub.f32 %v4292, %v4374
        %v4391 = vsub.f32 %v4293, %v4374
        %v4392 = vsub.f32 %v4294, %v4375
        %v4393 = vsub.f32 %v4295, %v4375
        %v4394 = vsub.f32 %v4296, %v4376
        %v4395 = vsub.f32 %v4297, %v4376
        %v4396 = vsub.f32 %v4298, %v4377
        %v4397 = vsub.f32 %v4299, %v4377
        %v4398 = vsub.f32 %v4300, %v4378
        %v4399 = vsub.f32 %v4301, %v4378
        %v4400 = vsub.f32 %v4302, %v4379
        %v4401 = vsub.f32 %v4303, %v4379
        %v4402 = vsub.f32 %v4304, %v4380
        %v4403 = vsub.f32 %v4305, %v4380
        %v4404 = vsub.f32 %v4306, %v4381
        %v4405 = vsub.f32 %v4307, %v4381
        %v4406 = vsub.f32 %v4308, %v4382
        %v4407 = vsub.f32 %v4309, %v4382
        %v4408 = vsub.f32 %v4310, %v4383
        %v4409 = vsub.f32 %v4311, %v4383
        %v4410 = vsub.f32 %v4312, %v4384
        %v4411 = vsub.f32 %v4313, %v4384
        %v4412 = vsub.f32 %v4314, %v4385
        %v4413 = vsub.f32 %v4315, %v4385
        %v4414 = vsub.f32 %v4316, %v4386
        %v4415 = vsub.f32 %v4317, %v4386
        %v4416 = vsub.f32 %v4318, %v4387
        %v4417 = vsub.f32 %v4319, %v4387
        %v4418 = vsub.f32 %v4320, %v4388
        %v4419 = vsub.f32 %v4321, %v4388
        %v4420 = vsub.f32 %v4322, %v4389
        %v4421 = vsub.f32 %v4323, %v4389
        %v4422 = vmul.f32 %v4390, %v4390
        %v4423 = vmul.f32 %v4391, %v4391
        %v4424 = vmul.f32 %v4392, %v4392
        %v4425 = vmul.f32 %v4393, %v4393
        %v4426 = vmul.f32 %v4394, %v4394
        %v4427 = vmul.f32 %v4395, %v4395
        %v4428 = vmul.f32 %v4396, %v4396
        %v4429 = vmul.f32 %v4397, %v4397
        %v4430 = vmul.f32 %v4398, %v4398
        %v4431 = vmul.f32 %v4399, %v4399
        %v4432 = vmul.f32 %v4400, %v4400
        %v4433 = vmul.f32 %v4401, %v4401
        %v4434 = vmul.f32 %v4402, %v4402
        %v4435 = vmul.f32 %v4403, %v4403
        %v4436 = vmul.f32 %v4404, %v4404
        %v4437 = vmul.f32 %v4405, %v4405
        %v4438 = vmul.f32 %v4406, %v4406
        %v4439 = vmul.f32 %v4407, %v4407
        %v4440 = vmul.f32 %v4408, %v4408
        %v4441 = vmul.f32 %v4409, %v4409
        %v4442 = vmul.f32 %v4410, %v4410
        %v4443 = vmul.f32 %v4411, %v4411
        %v4444 = vmul.f32 %v4412, %v4412
        %v4445 = vmul.f32 %v4413, %v4413
        %v4446 = vmul.f32 %v4414, %v4414
        %v4447 = vmul.f32 %v4415, %v4415
        %v4448 = vmul.f32 %v4416, %v4416
        %v4449 = vmul.f32 %v4417, %v4417
        %v4450 = vmul.f32 %v4418, %v4418
        %v4451 = vmul.f32 %v4419, %v4419
        %v4452 = vmul.f32 %v4420, %v4420
        %v4453 = vmul.f32 %v4421, %v4421
        %v4454 = vadd.f32 %v4422, %v4423
        %4455 = vadd.xlane.f32.xlu0 %v4454
        %v4456 = vpop.xlane.xlu0 %4455
        %v4457 = vadd.f32 %v4424, %v4425
        %4458 = vadd.xlane.f32.xlu0 %v4457
        %v4459 = vpop.xlane.xlu0 %4458
        %v4460 = vadd.f32 %v4426, %v4427
        %4461 = vadd.xlane.f32.xlu0 %v4460
        %v4462 = vpop.xlane.xlu0 %4461
        %v4463 = vadd.f32 %v4428, %v4429
        %4464 = vadd.xlane.f32.xlu0 %v4463
        %v4465 = vpop.xlane.xlu0 %4464
        %v4466 = vadd.f32 %v4430, %v4431
        %4467 = vadd.xlane.f32.xlu0 %v4466
        %v4468 = vpop.xlane.xlu0 %4467
        %v4469 = vadd.f32 %v4432, %v4433
        %4470 = vadd.xlane.f32.xlu0 %v4469
        %v4471 = vpop.xlane.xlu0 %4470
        %v4472 = vadd.f32 %v4434, %v4435
        %4473 = vadd.xlane.f32.xlu0 %v4472
        %v4474 = vpop.xlane.xlu0 %4473
        %v4475 = vadd.f32 %v4436, %v4437
        %4476 = vadd.xlane.f32.xlu0 %v4475
        %v4477 = vpop.xlane.xlu0 %4476
        %v4478 = vadd.f32 %v4438, %v4439
        %4479 = vadd.xlane.f32.xlu0 %v4478
        %v4480 = vpop.xlane.xlu0 %4479
        %v4481 = vadd.f32 %v4440, %v4441
        %4482 = vadd.xlane.f32.xlu0 %v4481
        %v4483 = vpop.xlane.xlu0 %4482
        %v4484 = vadd.f32 %v4442, %v4443
        %4485 = vadd.xlane.f32.xlu0 %v4484
        %v4486 = vpop.xlane.xlu0 %4485
        %v4487 = vadd.f32 %v4444, %v4445
        %4488 = vadd.xlane.f32.xlu0 %v4487
        %v4489 = vpop.xlane.xlu0 %4488
        %v4490 = vadd.f32 %v4446, %v4447
        %4491 = vadd.xlane.f32.xlu0 %v4490
        %v4492 = vpop.xlane.xlu0 %4491
        %v4493 = vadd.f32 %v4448, %v4449
        %4494 = vadd.xlane.f32.xlu0 %v4493
        %v4495 = vpop.xlane.xlu0 %4494
        %v4496 = vadd.f32 %v4450, %v4451
        %4497 = vadd.xlane.f32.xlu0 %v4496
        %v4498 = vpop.xlane.xlu0 %4497
        %v4499 = vadd.f32 %v4452, %v4453
        %4500 = vadd.xlane.f32.xlu0 %v4499
        %v4501 = vpop.xlane.xlu0 %4500
        %v4502 = vmul.f32 %v4456, %v839
        %v4503 = vmul.f32 %v4459, %v839
        %v4504 = vmul.f32 %v4462, %v839
        %v4505 = vmul.f32 %v4465, %v839
        %v4506 = vmul.f32 %v4468, %v839
        %v4507 = vmul.f32 %v4471, %v839
        %v4508 = vmul.f32 %v4474, %v839
        %v4509 = vmul.f32 %v4477, %v839
        %v4510 = vmul.f32 %v4480, %v839
        %v4511 = vmul.f32 %v4483, %v839
        %v4512 = vmul.f32 %v4486, %v839
        %v4513 = vmul.f32 %v4489, %v839
        %v4514 = vmul.f32 %v4492, %v839
        %v4515 = vmul.f32 %v4495, %v839
        %v4516 = vmul.f32 %v4498, %v839
        %v4517 = vmul.f32 %v4501, %v839
        %v4518 = vadd.f32 %v4502, 1e-12
        %v4519 = vadd.f32 %v4503, 1e-12
        %v4520 = vadd.f32 %v4504, 1e-12
        %v4521 = vadd.f32 %v4505, 1e-12
        %v4522 = vadd.f32 %v4506, 1e-12
        %v4523 = vadd.f32 %v4507, 1e-12
        %v4524 = vadd.f32 %v4508, 1e-12
        %v4525 = vadd.f32 %v4509, 1e-12
        %v4526 = vadd.f32 %v4510, 1e-12
        %v4527 = vadd.f32 %v4511, 1e-12
        %v4528 = vadd.f32 %v4512, 1e-12
        %v4529 = vadd.f32 %v4513, 1e-12
        %v4530 = vadd.f32 %v4514, 1e-12
        %v4531 = vadd.f32 %v4515, 1e-12
        %v4532 = vadd.f32 %v4516, 1e-12
        %v4533 = vadd.f32 %v4517, 1e-12
        %v4534 = vrsqrt.pop %v4518
        %v4535 = vrsqrt.pop %v4519
        %v4536 = vrsqrt.pop %v4520
        %v4537 = vrsqrt.pop %v4521
        %v4538 = vrsqrt.pop %v4522
        %v4539 = vrsqrt.pop %v4523
        %v4540 = vrsqrt.pop %v4524
        %v4541 = vrsqrt.pop %v4525
        %v4542 = vrsqrt.pop %v4526
        %v4543 = vrsqrt.pop %v4527
        %v4544 = vrsqrt.pop %v4528
        %v4545 = vrsqrt.pop %v4529
        %v4546 = vrsqrt.pop %v4530
        %v4547 = vrsqrt.pop %v4531
        %v4548 = vrsqrt.pop %v4532
        %v4549 = vrsqrt.pop %v4533
        %v4550 = vmul.f32 %v4390, %v4534
        %v4551 = vmul.f32 %v4391, %v4534
        %v4552 = vmul.f32 %v4392, %v4535
        %v4553 = vmul.f32 %v4393, %v4535
        %v4554 = vmul.f32 %v4394, %v4536
        %v4555 = vmul.f32 %v4395, %v4536
        %v4556 = vmul.f32 %v4396, %v4537
        %v4557 = vmul.f32 %v4397, %v4537
        %v4558 = vmul.f32 %v4398, %v4538
        %v4559 = vmul.f32 %v4399, %v4538
        %v4560 = vmul.f32 %v4400, %v4539
        %v4561 = vmul.f32 %v4401, %v4539
        %v4562 = vmul.f32 %v4402, %v4540
        %v4563 = vmul.f32 %v4403, %v4540
        %v4564 = vmul.f32 %v4404, %v4541
        %v4565 = vmul.f32 %v4405, %v4541
        %v4566 = vmul.f32 %v4406, %v4542
        %v4567 = vmul.f32 %v4407, %v4542
        %v4568 = vmul.f32 %v4408, %v4543
        %v4569 = vmul.f32 %v4409, %v4543
        %v4570 = vmul.f32 %v4410, %v4544
        %v4571 = vmul.f32 %v4411, %v4544
        %v4572 = vmul.f32 %v4412, %v4545
        %v4573 = vmul.f32 %v4413, %v4545
        %v4574 = vmul.f32 %v4414, %v4546
        %v4575 = vmul.f32 %v4415, %v4546
        %v4576 = vmul.f32 %v4416, %v4547
        %v4577 = vmul.f32 %v4417, %v4547
        %v4578 = vmul.f32 %v4418, %v4548
        %v4579 = vmul.f32 %v4419, %v4548
        %v4580 = vmul.f32 %v4420, %v4549
        %v4581 = vmul.f32 %v4421, %v4549
        %v4583 = vlaneseq
        %v4584 = vshrl.u32 %v4583, 7
        %v4585 = vsub.s32 0, %v4584
        %v4586 = vrot.slane %v4324, %v4585
        %v4587 = vlaneseq
        %v4588 = vshrl.u32 %v4587, 7
        %v4589 = vsub.s32 1, %v4588
        %v4590 = vrot.slane %v4324, %v4589
        %v4593 = vmul.f32 %v4550, %v4586
        %v4594 = vmul.f32 %v4551, %v4590
        %v4595 = vmul.f32 %v4552, %v4586
        %v4596 = vmul.f32 %v4553, %v4590
        %v4597 = vmul.f32 %v4554, %v4586
        %v4598 = vmul.f32 %v4555, %v4590
        %v4599 = vmul.f32 %v4556, %v4586
        %v4600 = vmul.f32 %v4557, %v4590
        %v4601 = vmul.f32 %v4558, %v4586
        %v4602 = vmul.f32 %v4559, %v4590
        %v4603 = vmul.f32 %v4560, %v4586
        %v4604 = vmul.f32 %v4561, %v4590
        %v4605 = vmul.f32 %v4562, %v4586
        %v4606 = vmul.f32 %v4563, %v4590
        %v4607 = vmul.f32 %v4564, %v4586
        %v4608 = vmul.f32 %v4565, %v4590
        %v4609 = vmul.f32 %v4566, %v4586
        %v4610 = vmul.f32 %v4567, %v4590
        %v4611 = vmul.f32 %v4568, %v4586
        %v4612 = vmul.f32 %v4569, %v4590
        %v4613 = vmul.f32 %v4570, %v4586
        %v4614 = vmul.f32 %v4571, %v4590
        %v4615 = vmul.f32 %v4572, %v4586
        %v4616 = vmul.f32 %v4573, %v4590
        %v4617 = vmul.f32 %v4574, %v4586
        %v4618 = vmul.f32 %v4575, %v4590
        %v4619 = vmul.f32 %v4576, %v4586
        %v4620 = vmul.f32 %v4577, %v4590
        %v4621 = vmul.f32 %v4578, %v4586
        %v4622 = vmul.f32 %v4579, %v4590
        %v4623 = vmul.f32 %v4580, %v4586
        %v4624 = vmul.f32 %v4581, %v4590
        %v4626 = vlaneseq
        %v4627 = vshrl.u32 %v4626, 7
        %v4628 = vsub.s32 0, %v4627
        %v4629 = vrot.slane %v4325, %v4628
        %v4630 = vlaneseq
        %v4631 = vshrl.u32 %v4630, 7
        %v4632 = vsub.s32 1, %v4631
        %v4633 = vrot.slane %v4325, %v4632
        %v4636 = vadd.f32 %v4593, %v4629
        %v4637 = vadd.f32 %v4594, %v4633
        %v4638 = vadd.f32 %v4595, %v4629
        %v4639 = vadd.f32 %v4596, %v4633
        %v4640 = vadd.f32 %v4597, %v4629
        %v4641 = vadd.f32 %v4598, %v4633
        %v4642 = vadd.f32 %v4599, %v4629
        %v4643 = vadd.f32 %v4600, %v4633
        %v4644 = vadd.f32 %v4601, %v4629
        %v4645 = vadd.f32 %v4602, %v4633
        %v4646 = vadd.f32 %v4603, %v4629
        %v4647 = vadd.f32 %v4604, %v4633
        %v4648 = vadd.f32 %v4605, %v4629
        %v4649 = vadd.f32 %v4606, %v4633
        %v4650 = vadd.f32 %v4607, %v4629
        %v4651 = vadd.f32 %v4608, %v4633
        %v4652 = vadd.f32 %v4609, %v4629
        %v4653 = vadd.f32 %v4610, %v4633
        %v4654 = vadd.f32 %v4611, %v4629
        %v4655 = vadd.f32 %v4612, %v4633
        %v4656 = vadd.f32 %v4613, %v4629
        %v4657 = vadd.f32 %v4614, %v4633
        %v4658 = vadd.f32 %v4615, %v4629
        %v4659 = vadd.f32 %v4616, %v4633
        %v4660 = vadd.f32 %v4617, %v4629
        %v4661 = vadd.f32 %v4618, %v4633
        %v4662 = vadd.f32 %v4619, %v4629
        %v4663 = vadd.f32 %v4620, %v4633
        %v4664 = vadd.f32 %v4621, %v4629
        %v4665 = vadd.f32 %v4622, %v4633
        %v4666 = vadd.f32 %v4623, %v4629
        %v4667 = vadd.f32 %v4624, %v4633
        %v4668 = vpack.c.bf16 %v4638, %v4636
        %v4669 = vpack.c.bf16 %v4639, %v4637
        %v4670 = vpack.c.bf16 %v4642, %v4640
        %v4671 = vpack.c.bf16 %v4643, %v4641
        %v4672 = vpack.c.bf16 %v4646, %v4644
        %v4673 = vpack.c.bf16 %v4647, %v4645
        %v4674 = vpack.c.bf16 %v4650, %v4648
        %v4675 = vpack.c.bf16 %v4651, %v4649
        %v4676 = vpack.c.bf16 %v4654, %v4652
        %v4677 = vpack.c.bf16 %v4655, %v4653
        %v4678 = vpack.c.bf16 %v4658, %v4656
        %v4679 = vpack.c.bf16 %v4659, %v4657
        %v4680 = vpack.c.bf16 %v4662, %v4660
        %v4681 = vpack.c.bf16 %v4663, %v4661
        %v4682 = vpack.c.bf16 %v4666, %v4664
        %v4683 = vpack.c.bf16 %v4667, %v4665
        %v4684 = vld [vmem:[#allocation14] sm:$0xff]
        %v4685 = vld [vmem:[#allocation14 + $0x8] sm:$0xff]
        %v4686 = vld [vmem:[#allocation14 + $0x10] sm:$0xff]
        %v4687 = vld [vmem:[#allocation14 + $0x18] sm:$0xff]
        %v4688 = vld [vmem:[#allocation14 + $0x20] sm:$0xff]
        %v4689 = vld [vmem:[#allocation14 + $0x28] sm:$0xff]
        %v4690 = vld [vmem:[#allocation14 + $0x30] sm:$0xff]
        %v4691 = vld [vmem:[#allocation14 + $0x38] sm:$0xff]
        %v4692 = vld [vmem:[#allocation14 + $0x40] sm:$0xff]
        %v4693 = vld [vmem:[#allocation14 + $0x48] sm:$0xff]
        %v4694 = vld [vmem:[#allocation14 + $0x50] sm:$0xff]
        %v4695 = vld [vmem:[#allocation14 + $0x58] sm:$0xff]
        %v4696 = vld [vmem:[#allocation14 + $0x60] sm:$0xff]
        %v4697 = vld [vmem:[#allocation14 + $0x68] sm:$0xff]
        %v4698 = vld [vmem:[#allocation14 + $0x70] sm:$0xff]
        %v4699 = vld [vmem:[#allocation14 + $0x78] sm:$0xff]
        %v4700 = vld [vmem:[#allocation14 + $0x80] sm:$0xff]
        %v4701 = vld [vmem:[#allocation14 + $0x88] sm:$0xff]
        %v4702 = vld [vmem:[#allocation14 + $0x90] sm:$0xff]
        %v4703 = vld [vmem:[#allocation14 + $0x98] sm:$0xff]
        %v4704 = vld [vmem:[#allocation14 + $0xa0] sm:$0xff]
        %v4705 = vld [vmem:[#allocation14 + $0xa8] sm:$0xff]
        %v4706 = vld [vmem:[#allocation14 + $0xb0] sm:$0xff]
        %v4707 = vld [vmem:[#allocation14 + $0xb8] sm:$0xff]
        %v4708 = vld [vmem:[#allocation14 + $0xc0] sm:$0xff]
        %v4709 = vld [vmem:[#allocation14 + $0xc8] sm:$0xff]
        %v4710 = vld [vmem:[#allocation14 + $0xd0] sm:$0xff]
        %v4711 = vld [vmem:[#allocation14 + $0xd8] sm:$0xff]
        %v4712 = vld [vmem:[#allocation14 + $0xe0] sm:$0xff]
        %v4713 = vld [vmem:[#allocation14 + $0xe8] sm:$0xff]
        %v4714 = vld [vmem:[#allocation14 + $0xf0] sm:$0xff]
        %v4715 = vld [vmem:[#allocation14 + $0xf8] sm:$0xff]
        %v4716 = vld [vmem:[#allocation14 + $0x100] sm:$0xff]
        %v4717 = vld [vmem:[#allocation14 + $0x108] sm:$0xff]
        %v4718 = vld [vmem:[#allocation14 + $0x110] sm:$0xff]
        %v4719 = vld [vmem:[#allocation14 + $0x118] sm:$0xff]
        %v4720 = vld [vmem:[#allocation14 + $0x120] sm:$0xff]
        %v4721 = vld [vmem:[#allocation14 + $0x128] sm:$0xff]
        %v4722 = vld [vmem:[#allocation14 + $0x130] sm:$0xff]
        %v4723 = vld [vmem:[#allocation14 + $0x138] sm:$0xff]
        %v4724 = vld [vmem:[#allocation14 + $0x140] sm:$0xff]
        %v4725 = vld [vmem:[#allocation14 + $0x148] sm:$0xff]
        %v4726 = vld [vmem:[#allocation14 + $0x150] sm:$0xff]
        %v4727 = vld [vmem:[#allocation14 + $0x158] sm:$0xff]
        %v4728 = vld [vmem:[#allocation14 + $0x160] sm:$0xff]
        %v4729 = vld [vmem:[#allocation14 + $0x168] sm:$0xff]
        %v4730 = vld [vmem:[#allocation14 + $0x170] sm:$0xff]
        %v4731 = vld [vmem:[#allocation14 + $0x178] sm:$0xff]
        %v4732 = vld [vmem:[#allocation14 + $0x180] sm:$0xff]
        %v4733 = vld [vmem:[#allocation14 + $0x188] sm:$0xff]
        %v4734 = vld [vmem:[#allocation14 + $0x190] sm:$0xff]
        %v4735 = vld [vmem:[#allocation14 + $0x198] sm:$0xff]
        %v4736 = vld [vmem:[#allocation14 + $0x1a0] sm:$0xff]
        %v4737 = vld [vmem:[#allocation14 + $0x1a8] sm:$0xff]
        %v4738 = vld [vmem:[#allocation14 + $0x1b0] sm:$0xff]
        %v4739 = vld [vmem:[#allocation14 + $0x1b8] sm:$0xff]
        %v4740 = vld [vmem:[#allocation14 + $0x1c0] sm:$0xff]
        %v4741 = vld [vmem:[#allocation14 + $0x1c8] sm:$0xff]
        %v4742 = vld [vmem:[#allocation14 + $0x1d0] sm:$0xff]
        %v4743 = vld [vmem:[#allocation14 + $0x1d8] sm:$0xff]
        %v4744 = vld [vmem:[#allocation14 + $0x1e0] sm:$0xff]
        %v4745 = vld [vmem:[#allocation14 + $0x1e8] sm:$0xff]
        %v4746 = vld [vmem:[#allocation14 + $0x1f0] sm:$0xff]
        %v4747 = vld [vmem:[#allocation14 + $0x1f8] sm:$0xff]
        %v4748 = vld [vmem:[%s12] sm:$0xf]
        %v4750 = vlaneseq
        %v4751 = vshrl.u32 %v4750, 7
        %v4752 = vsub.s32 0, %v4751
        %v4753 = vrot.slane %v4748, %v4752
        %v4754 = vlaneseq
        %v4755 = vshrl.u32 %v4754, 7
        %v4756 = vsub.s32 1, %v4755
        %v4757 = vrot.slane %v4748, %v4756
        %v4758 = vlaneseq
        %v4759 = vshrl.u32 %v4758, 7
        %v4760 = vsub.s32 2, %v4759
        %v4761 = vrot.slane %v4748, %v4760
        %v4762 = vlaneseq
        %v4763 = vshrl.u32 %v4762, 7
        %v4764 = vsub.s32 3, %v4763
        %v4765 = vrot.slane %v4748, %v4764
        %v4834 = vunpack.c.l.b16 %v4684
        %v4835 = vunpack.c.h.b16 %v4684
        %v4836 = vunpack.c.l.b16 %v4685
        %v4837 = vunpack.c.h.b16 %v4685
        %v4838 = vunpack.c.l.b16 %v4686
        %v4839 = vunpack.c.h.b16 %v4686
        %v4840 = vunpack.c.l.b16 %v4687
        %v4841 = vunpack.c.h.b16 %v4687
        %v4842 = vunpack.c.l.b16 %v4688
        %v4843 = vunpack.c.h.b16 %v4688
        %v4844 = vunpack.c.l.b16 %v4689
        %v4845 = vunpack.c.h.b16 %v4689
        %v4846 = vunpack.c.l.b16 %v4690
        %v4847 = vunpack.c.h.b16 %v4690
        %v4848 = vunpack.c.l.b16 %v4691
        %v4849 = vunpack.c.h.b16 %v4691
        %v4850 = vunpack.c.l.b16 %v4692
        %v4851 = vunpack.c.h.b16 %v4692
        %v4852 = vunpack.c.l.b16 %v4693
        %v4853 = vunpack.c.h.b16 %v4693
        %v4854 = vunpack.c.l.b16 %v4694
        %v4855 = vunpack.c.h.b16 %v4694
        %v4856 = vunpack.c.l.b16 %v4695
        %v4857 = vunpack.c.h.b16 %v4695
        %v4858 = vunpack.c.l.b16 %v4696
        %v4859 = vunpack.c.h.b16 %v4696
        %v4860 = vunpack.c.l.b16 %v4697
        %v4861 = vunpack.c.h.b16 %v4697
        %v4862 = vunpack.c.l.b16 %v4698
        %v4863 = vunpack.c.h.b16 %v4698
        %v4864 = vunpack.c.l.b16 %v4699
        %v4865 = vunpack.c.h.b16 %v4699
        %v4866 = vunpack.c.l.b16 %v4700
        %v4867 = vunpack.c.h.b16 %v4700
        %v4868 = vunpack.c.l.b16 %v4701
        %v4869 = vunpack.c.h.b16 %v4701
        %v4870 = vunpack.c.l.b16 %v4702
        %v4871 = vunpack.c.h.b16 %v4702
        %v4872 = vunpack.c.l.b16 %v4703
        %v4873 = vunpack.c.h.b16 %v4703
        %v4874 = vunpack.c.l.b16 %v4704
        %v4875 = vunpack.c.h.b16 %v4704
        %v4876 = vunpack.c.l.b16 %v4705
        %v4877 = vunpack.c.h.b16 %v4705
        %v4878 = vunpack.c.l.b16 %v4706
        %v4879 = vunpack.c.h.b16 %v4706
        %v4880 = vunpack.c.l.b16 %v4707
        %v4881 = vunpack.c.h.b16 %v4707
        %v4882 = vunpack.c.l.b16 %v4708
        %v4883 = vunpack.c.h.b16 %v4708
        %v4884 = vunpack.c.l.b16 %v4709
        %v4885 = vunpack.c.h.b16 %v4709
        %v4886 = vunpack.c.l.b16 %v4710
        %v4887 = vunpack.c.h.b16 %v4710
        %v4888 = vunpack.c.l.b16 %v4711
        %v4889 = vunpack.c.h.b16 %v4711
        %v4890 = vunpack.c.l.b16 %v4712
        %v4891 = vunpack.c.h.b16 %v4712
        %v4892 = vunpack.c.l.b16 %v4713
        %v4893 = vunpack.c.h.b16 %v4713
        %v4894 = vunpack.c.l.b16 %v4714
        %v4895 = vunpack.c.h.b16 %v4714
        %v4896 = vunpack.c.l.b16 %v4715
        %v4897 = vunpack.c.h.b16 %v4715
        %v4898 = vunpack.c.l.b16 %v4716
        %v4899 = vunpack.c.h.b16 %v4716
        %v4900 = vunpack.c.l.b16 %v4717
        %v4901 = vunpack.c.h.b16 %v4717
        %v4902 = vunpack.c.l.b16 %v4718
        %v4903 = vunpack.c.h.b16 %v4718
        %v4904 = vunpack.c.l.b16 %v4719
        %v4905 = vunpack.c.h.b16 %v4719
        %v4906 = vunpack.c.l.b16 %v4720
        %v4907 = vunpack.c.h.b16 %v4720
        %v4908 = vunpack.c.l.b16 %v4721
        %v4909 = vunpack.c.h.b16 %v4721
        %v4910 = vunpack.c.l.b16 %v4722
        %v4911 = vunpack.c.h.b16 %v4722
        %v4912 = vunpack.c.l.b16 %v4723
        %v4913 = vunpack.c.h.b16 %v4723
        %v4914 = vunpack.c.l.b16 %v4724
        %v4915 = vunpack.c.h.b16 %v4724
        %v4916 = vunpack.c.l.b16 %v4725
        %v4917 = vunpack.c.h.b16 %v4725
        %v4918 = vunpack.c.l.b16 %v4726
        %v4919 = vunpack.c.h.b16 %v4726
        %v4920 = vunpack.c.l.b16 %v4727
        %v4921 = vunpack.c.h.b16 %v4727
        %v4922 = vunpack.c.l.b16 %v4728
        %v4923 = vunpack.c.h.b16 %v4728
        %v4924 = vunpack.c.l.b16 %v4729
        %v4925 = vunpack.c.h.b16 %v4729
        %v4926 = vunpack.c.l.b16 %v4730
        %v4927 = vunpack.c.h.b16 %v4730
        %v4928 = vunpack.c.l.b16 %v4731
        %v4929 = vunpack.c.h.b16 %v4731
        %v4930 = vunpack.c.l.b16 %v4732
        %v4931 = vunpack.c.h.b16 %v4732
        %v4932 = vunpack.c.l.b16 %v4733
        %v4933 = vunpack.c.h.b16 %v4733
        %v4934 = vunpack.c.l.b16 %v4734
        %v4935 = vunpack.c.h.b16 %v4734
        %v4936 = vunpack.c.l.b16 %v4735
        %v4937 = vunpack.c.h.b16 %v4735
        %v4938 = vunpack.c.l.b16 %v4736
        %v4939 = vunpack.c.h.b16 %v4736
        %v4940 = vunpack.c.l.b16 %v4737
        %v4941 = vunpack.c.h.b16 %v4737
        %v4942 = vunpack.c.l.b16 %v4738
        %v4943 = vunpack.c.h.b16 %v4738
        %v4944 = vunpack.c.l.b16 %v4739
        %v4945 = vunpack.c.h.b16 %v4739
        %v4946 = vunpack.c.l.b16 %v4740
        %v4947 = vunpack.c.h.b16 %v4740
        %v4948 = vunpack.c.l.b16 %v4741
        %v4949 = vunpack.c.h.b16 %v4741
        %v4950 = vunpack.c.l.b16 %v4742
        %v4951 = vunpack.c.h.b16 %v4742
        %v4952 = vunpack.c.l.b16 %v4743
        %v4953 = vunpack.c.h.b16 %v4743
        %v4954 = vunpack.c.l.b16 %v4744
        %v4955 = vunpack.c.h.b16 %v4744
        %v4956 = vunpack.c.l.b16 %v4745
        %v4957 = vunpack.c.h.b16 %v4745
        %v4958 = vunpack.c.l.b16 %v4746
        %v4959 = vunpack.c.h.b16 %v4746
        %v4960 = vunpack.c.l.b16 %v4747
        %v4961 = vunpack.c.h.b16 %v4747
        %v4962 = vpack.c.b16 %v4838, %v4834
        %v4963 = vpack.c.b16 %v4839, %v4835
        %v4964 = vpack.c.b16 %v4840, %v4836
        %v4965 = vpack.c.b16 %v4841, %v4837
        %v4966 = vpack.c.b16 %v4846, %v4842
        %v4967 = vpack.c.b16 %v4847, %v4843
        %v4968 = vpack.c.b16 %v4848, %v4844
        %v4969 = vpack.c.b16 %v4849, %v4845
        %v4970 = vpack.c.b16 %v4854, %v4850
        %v4971 = vpack.c.b16 %v4855, %v4851
        %v4972 = vpack.c.b16 %v4856, %v4852
        %v4973 = vpack.c.b16 %v4857, %v4853
        %v4974 = vpack.c.b16 %v4862, %v4858
        %v4975 = vpack.c.b16 %v4863, %v4859
        %v4976 = vpack.c.b16 %v4864, %v4860
        %v4977 = vpack.c.b16 %v4865, %v4861
        %v4978 = vpack.c.b16 %v4870, %v4866
        %v4979 = vpack.c.b16 %v4871, %v4867
        %v4980 = vpack.c.b16 %v4872, %v4868
        %v4981 = vpack.c.b16 %v4873, %v4869
        %v4982 = vpack.c.b16 %v4878, %v4874
        %v4983 = vpack.c.b16 %v4879, %v4875
        %v4984 = vpack.c.b16 %v4880, %v4876
        %v4985 = vpack.c.b16 %v4881, %v4877
        %v4986 = vpack.c.b16 %v4886, %v4882
        %v4987 = vpack.c.b16 %v4887, %v4883
        %v4988 = vpack.c.b16 %v4888, %v4884
        %v4989 = vpack.c.b16 %v4889, %v4885
        %v4990 = vpack.c.b16 %v4894, %v4890
        %v4991 = vpack.c.b16 %v4895, %v4891
        %v4992 = vpack.c.b16 %v4896, %v4892
        %v4993 = vpack.c.b16 %v4897, %v4893
        %v4994 = vpack.c.b16 %v4902, %v4898
        %v4995 = vpack.c.b16 %v4903, %v4899
        %v4996 = vpack.c.b16 %v4904, %v4900
        %v4997 = vpack.c.b16 %v4905, %v4901
        %v4998 = vpack.c.b16 %v4910, %v4906
        %v4999 = vpack.c.b16 %v4911, %v4907
        %v5000 = vpack.c.b16 %v4912, %v4908
        %v5001 = vpack.c.b16 %v4913, %v4909
        %v5002 = vpack.c.b16 %v4918, %v4914
        %v5003 = vpack.c.b16 %v4919, %v4915
        %v5004 = vpack.c.b16 %v4920, %v4916
        %v5005 = vpack.c.b16 %v4921, %v4917
        %v5006 = vpack.c.b16 %v4926, %v4922
        %v5007 = vpack.c.b16 %v4927, %v4923
        %v5008 = vpack.c.b16 %v4928, %v4924
        %v5009 = vpack.c.b16 %v4929, %v4925
        %v5010 = vpack.c.b16 %v4934, %v4930
        %v5011 = vpack.c.b16 %v4935, %v4931
        %v5012 = vpack.c.b16 %v4936, %v4932
        %v5013 = vpack.c.b16 %v4937, %v4933
        %v5014 = vpack.c.b16 %v4942, %v4938
        %v5015 = vpack.c.b16 %v4943, %v4939
        %v5016 = vpack.c.b16 %v4944, %v4940
        %v5017 = vpack.c.b16 %v4945, %v4941
        %v5018 = vpack.c.b16 %v4950, %v4946
        %v5019 = vpack.c.b16 %v4951, %v4947
        %v5020 = vpack.c.b16 %v4952, %v4948
        %v5021 = vpack.c.b16 %v4953, %v4949
        %v5022 = vpack.c.b16 %v4958, %v4954
        %v5023 = vpack.c.b16 %v4959, %v4955
        %v5024 = vpack.c.b16 %v4960, %v4956
        %v5025 = vpack.c.b16 %v4961, %v4957
        %5090 = vmatprep.subr.bf16.mxu0 %v4991
        %5091 = vmatpush1.bf16.msra.mxu0 %v4990
        %5092 = vmatprep.subr.bf16.mxu0 %v4987
        %5093 = vmatpush1.bf16.msra.mxu0 %v4986
        %5094 = vmatprep.subr.bf16.mxu0 %v4983
        %5095 = vmatpush1.bf16.msra.mxu0 %v4982
        %5096 = vmatprep.subr.bf16.mxu0 %v4979
        %5097 = vmatpush1.bf16.msra.mxu0 %v4978
        %5098 = vmatprep.subr.bf16.mxu0 %v4975
        %5099 = vmatpush1.bf16.msra.mxu0 %v4974
        %5100 = vmatprep.subr.bf16.mxu0 %v4971
        %5101 = vmatpush1.bf16.msra.mxu0 %v4970
        %5102 = vmatprep.subr.bf16.mxu0 %v4967
        %5103 = vmatpush1.bf16.msra.mxu0 %v4966
        %5104 = vmatprep.subr.bf16.mxu0 %v4963
        %5105 = vmatpush1.bf16.msra.mxu0 %v4962
        %5106 = vmatprep.subr.bf16.mxu0 %v5023
        %5107 = vmatpush2.bf16.msra.mxu0 %v5022
        %5108 = vmatprep.subr.bf16.mxu0 %v5019
        %5109 = vmatpush2.bf16.msra.mxu0 %v5018
        %5110 = vmatprep.subr.bf16.mxu0 %v5015
        %5111 = vmatpush2.bf16.msra.mxu0 %v5014
        %5112 = vmatprep.subr.bf16.mxu0 %v5011
        %5113 = vmatpush2.bf16.msra.mxu0 %v5010
        %5114 = vmatprep.subr.bf16.mxu0 %v5007
        %5115 = vmatpush2.bf16.msra.mxu0 %v5006
        %5116 = vmatprep.subr.bf16.mxu0 %v5003
        %5117 = vmatpush2.bf16.msra.mxu0 %v5002
        %5118 = vmatprep.subr.bf16.mxu0 %v4999
        %5119 = vmatpush2.bf16.msra.mxu0 %v4998
        %5120 = vmatprep.subr.bf16.mxu0 %v4995
        %5121 = vmatpush2.bf16.msra.mxu0 %v4994
        %5122 = vmatprep.mubr.bf16.mxu0 %v4669
        %5123 = vmatmul.mubr.bf16.gmra.mxu0 %v4668
        %v5124 = vpop.f32.mrf.mxu0
        %v5125 = vadd.f32 %v4753, %v5124
        %v5126 = vpop.f32.mrf.mxu0
        %v5127 = vadd.f32 %v4757, %v5126
        %v5128 = vpop.f32.mrf.mxu0
        %v5129 = vadd.f32 %v4753, %v5128
        %v5130 = vpop.f32.mrf.mxu0
        %v5131 = vadd.f32 %v4757, %v5130
        %5132 = vmatprep.mubr.bf16.mxu0 %v4671
        %5133 = vmatmul.mubr.bf16.gmra.mxu0 %v4670
        %v5134 = vpop.f32.mrf.mxu0
        %v5135 = vadd.f32 %v4753, %v5134
        %v5136 = vpop.f32.mrf.mxu0
        %v5137 = vadd.f32 %v4757, %v5136
        %v5138 = vpop.f32.mrf.mxu0
        %v5139 = vadd.f32 %v4753, %v5138
        %v5140 = vpop.f32.mrf.mxu0
        %v5141 = vadd.f32 %v4757, %v5140
        %5142 = vmatprep.mubr.bf16.mxu0 %v4673
        %5143 = vmatmul.mubr.bf16.gmra.mxu0 %v4672
        %v5144 = vpop.f32.mrf.mxu0
        %v5145 = vadd.f32 %v4753, %v5144
        %v5146 = vpop.f32.mrf.mxu0
        %v5147 = vadd.f32 %v4757, %v5146
        %v5148 = vpop.f32.mrf.mxu0
        %v5149 = vadd.f32 %v4753, %v5148
        %v5150 = vpop.f32.mrf.mxu0
        %v5151 = vadd.f32 %v4757, %v5150
        %5152 = vmatprep.mubr.bf16.mxu0 %v4675
        %5153 = vmatmul.mubr.bf16.gmra.mxu0 %v4674
        %v5154 = vpop.f32.mrf.mxu0
        %v5155 = vadd.f32 %v4753, %v5154
        %v5156 = vpop.f32.mrf.mxu0
        %v5157 = vadd.f32 %v4757, %v5156
        %v5158 = vpop.f32.mrf.mxu0
        %v5159 = vadd.f32 %v4753, %v5158
        %v5160 = vpop.f32.mrf.mxu0
        %v5161 = vadd.f32 %v4757, %v5160
        %5162 = vmatprep.mubr.bf16.mxu0 %v4677
        %5163 = vmatmul.mubr.bf16.gmra.mxu0 %v4676
        %v5164 = vpop.f32.mrf.mxu0
        %v5165 = vadd.f32 %v4753, %v5164
        %v5166 = vpop.f32.mrf.mxu0
        %v5167 = vadd.f32 %v4757, %v5166
        %v5168 = vpop.f32.mrf.mxu0
        %v5169 = vadd.f32 %v4753, %v5168
        %v5170 = vpop.f32.mrf.mxu0
        %v5171 = vadd.f32 %v4757, %v5170
        %5172 = vmatprep.mubr.bf16.mxu0 %v4679
        %5173 = vmatmul.mubr.bf16.gmra.mxu0 %v4678
        %v5174 = vpop.f32.mrf.mxu0
        %v5175 = vadd.f32 %v4753, %v5174
        %v5176 = vpop.f32.mrf.mxu0
        %v5177 = vadd.f32 %v4757, %v5176
        %v5178 = vpop.f32.mrf.mxu0
        %v5179 = vadd.f32 %v4753, %v5178
        %v5180 = vpop.f32.mrf.mxu0
        %v5181 = vadd.f32 %v4757, %v5180
        %5182 = vmatprep.mubr.bf16.mxu0 %v4681
        %5183 = vmatmul.mubr.bf16.gmra.mxu0 %v4680
        %v5184 = vpop.f32.mrf.mxu0
        %v5185 = vadd.f32 %v4753, %v5184
        %v5186 = vpop.f32.mrf.mxu0
        %v5187 = vadd.f32 %v4757, %v5186
        %v5188 = vpop.f32.mrf.mxu0
        %v5189 = vadd.f32 %v4753, %v5188
        %v5190 = vpop.f32.mrf.mxu0
        %v5191 = vadd.f32 %v4757, %v5190
        %5192 = vmatprep.mubr.bf16.mxu0 %v4683
        %5193 = vmatmul.mubr.bf16.gmra.mxu0 %v4682
        %v5194 = vpop.f32.mrf.mxu0
        %v5195 = vadd.f32 %v4753, %v5194
        %v5196 = vpop.f32.mrf.mxu0
        %v5197 = vadd.f32 %v4757, %v5196
        %v5198 = vpop.f32.mrf.mxu0
        %v5199 = vadd.f32 %v4753, %v5198
        %v5200 = vpop.f32.mrf.mxu0
        %v5201 = vadd.f32 %v4757, %v5200
        %5202 = vdwg.mxu0
        %5203 = vmatprep.subr.bf16.mxu0 %v4993
        %5204 = vmatpush1.bf16.msra.mxu0 %v4992
        %5205 = vmatprep.subr.bf16.mxu0 %v4989
        %5206 = vmatpush1.bf16.msra.mxu0 %v4988
        %5207 = vmatprep.subr.bf16.mxu0 %v4985
        %5208 = vmatpush1.bf16.msra.mxu0 %v4984
        %5209 = vmatprep.subr.bf16.mxu0 %v4981
        %5210 = vmatpush1.bf16.msra.mxu0 %v4980
        %5211 = vmatprep.subr.bf16.mxu0 %v4977
        %5212 = vmatpush1.bf16.msra.mxu0 %v4976
        %5213 = vmatprep.subr.bf16.mxu0 %v4973
        %5214 = vmatpush1.bf16.msra.mxu0 %v4972
        %5215 = vmatprep.subr.bf16.mxu0 %v4969
        %5216 = vmatpush1.bf16.msra.mxu0 %v4968
        %5217 = vmatprep.subr.bf16.mxu0 %v4965
        %5218 = vmatpush1.bf16.msra.mxu0 %v4964
        %5219 = vmatprep.subr.bf16.mxu0 %v5025
        %5220 = vmatpush2.bf16.msra.mxu0 %v5024
        %5221 = vmatprep.subr.bf16.mxu0 %v5021
        %5222 = vmatpush2.bf16.msra.mxu0 %v5020
        %5223 = vmatprep.subr.bf16.mxu0 %v5017
        %5224 = vmatpush2.bf16.msra.mxu0 %v5016
        %5225 = vmatprep.subr.bf16.mxu0 %v5013
        %5226 = vmatpush2.bf16.msra.mxu0 %v5012
        %5227 = vmatprep.subr.bf16.mxu0 %v5009
        %5228 = vmatpush2.bf16.msra.mxu0 %v5008
        %5229 = vmatprep.subr.bf16.mxu0 %v5005
        %5230 = vmatpush2.bf16.msra.mxu0 %v5004
        %5231 = vmatprep.subr.bf16.mxu0 %v5001
        %5232 = vmatpush2.bf16.msra.mxu0 %v5000
        %5233 = vmatprep.subr.bf16.mxu0 %v4997
        %5234 = vmatpush2.bf16.msra.mxu0 %v4996
        %5235 = vmatprep.mubr.bf16.mxu0 %v4669
        %5236 = vmatmul.mubr.bf16.gmra.mxu0 %v4668
        %v5237 = vpop.f32.mrf.mxu0
        %v5238 = vadd.f32 %v4761, %v5237
        %v5239 = vpop.f32.mrf.mxu0
        %v5240 = vadd.f32 %v4765, %v5239
        %v5241 = vpop.f32.mrf.mxu0
        %v5242 = vadd.f32 %v4761, %v5241
        %v5243 = vpop.f32.mrf.mxu0
        %v5244 = vadd.f32 %v4765, %v5243
        %5245 = vmatprep.mubr.bf16.mxu0 %v4671
        %5246 = vmatmul.mubr.bf16.gmra.mxu0 %v4670
        %v5247 = vpop.f32.mrf.mxu0
        %v5248 = vadd.f32 %v4761, %v5247
        %v5249 = vpop.f32.mrf.mxu0
        %v5250 = vadd.f32 %v4765, %v5249
        %v5251 = vpop.f32.mrf.mxu0
        %v5252 = vadd.f32 %v4761, %v5251
        %v5253 = vpop.f32.mrf.mxu0
        %v5254 = vadd.f32 %v4765, %v5253
        %5255 = vmatprep.mubr.bf16.mxu0 %v4673
        %5256 = vmatmul.mubr.bf16.gmra.mxu0 %v4672
        %v5257 = vpop.f32.mrf.mxu0
        %v5258 = vadd.f32 %v4761, %v5257
        %v5259 = vpop.f32.mrf.mxu0
        %v5260 = vadd.f32 %v4765, %v5259
        %v5261 = vpop.f32.mrf.mxu0
        %v5262 = vadd.f32 %v4761, %v5261
        %v5263 = vpop.f32.mrf.mxu0
        %v5264 = vadd.f32 %v4765, %v5263
        %5265 = vmatprep.mubr.bf16.mxu0 %v4675
        %5266 = vmatmul.mubr.bf16.gmra.mxu0 %v4674
        %v5267 = vpop.f32.mrf.mxu0
        %v5268 = vadd.f32 %v4761, %v5267
        %v5269 = vpop.f32.mrf.mxu0
        %v5270 = vadd.f32 %v4765, %v5269
        %v5271 = vpop.f32.mrf.mxu0
        %v5272 = vadd.f32 %v4761, %v5271
        %v5273 = vpop.f32.mrf.mxu0
        %v5274 = vadd.f32 %v4765, %v5273
        %5275 = vmatprep.mubr.bf16.mxu0 %v4677
        %5276 = vmatmul.mubr.bf16.gmra.mxu0 %v4676
        %v5277 = vpop.f32.mrf.mxu0
        %v5278 = vadd.f32 %v4761, %v5277
        %v5279 = vpop.f32.mrf.mxu0
        %v5280 = vadd.f32 %v4765, %v5279
        %v5281 = vpop.f32.mrf.mxu0
        %v5282 = vadd.f32 %v4761, %v5281
        %v5283 = vpop.f32.mrf.mxu0
        %v5284 = vadd.f32 %v4765, %v5283
        %5285 = vmatprep.mubr.bf16.mxu0 %v4679
        %5286 = vmatmul.mubr.bf16.gmra.mxu0 %v4678
        %v5287 = vpop.f32.mrf.mxu0
        %v5288 = vadd.f32 %v4761, %v5287
        %v5289 = vpop.f32.mrf.mxu0
        %v5290 = vadd.f32 %v4765, %v5289
        %v5291 = vpop.f32.mrf.mxu0
        %v5292 = vadd.f32 %v4761, %v5291
        %v5293 = vpop.f32.mrf.mxu0
        %v5294 = vadd.f32 %v4765, %v5293
        %5295 = vmatprep.mubr.bf16.mxu0 %v4681
        %5296 = vmatmul.mubr.bf16.gmra.mxu0 %v4680
        %v5297 = vpop.f32.mrf.mxu0
        %v5298 = vadd.f32 %v4761, %v5297
        %v5299 = vpop.f32.mrf.mxu0
        %v5300 = vadd.f32 %v4765, %v5299
        %v5301 = vpop.f32.mrf.mxu0
        %v5302 = vadd.f32 %v4761, %v5301
        %v5303 = vpop.f32.mrf.mxu0
        %v5304 = vadd.f32 %v4765, %v5303
        %5305 = vmatprep.mubr.bf16.mxu0 %v4683
        %5306 = vmatmul.mubr.bf16.gmra.mxu0 %v4682
        %v5307 = vpop.f32.mrf.mxu0
        %v5308 = vadd.f32 %v4761, %v5307
        %v5309 = vpop.f32.mrf.mxu0
        %v5310 = vadd.f32 %v4765, %v5309
        %v5311 = vpop.f32.mrf.mxu0
        %v5312 = vadd.f32 %v4761, %v5311
        %v5313 = vpop.f32.mrf.mxu0
        %v5314 = vadd.f32 %v4765, %v5313
        %5315 = vdwg.mxu0
        %v5316 = vmul.f32 %v5125, 0.5
        %v5317 = vmul.f32 %v5127, 0.5
        %v5318 = vmul.f32 %v5238, 0.5
        %v5319 = vmul.f32 %v5240, 0.5
        %v5320 = vmul.f32 %v5129, 0.5
        %v5321 = vmul.f32 %v5131, 0.5
        %v5322 = vmul.f32 %v5242, 0.5
        %v5323 = vmul.f32 %v5244, 0.5
        %v5324 = vmul.f32 %v5135, 0.5
        %v5325 = vmul.f32 %v5137, 0.5
        %v5326 = vmul.f32 %v5248, 0.5
        %v5327 = vmul.f32 %v5250, 0.5
        %v5328 = vmul.f32 %v5139, 0.5
        %v5329 = vmul.f32 %v5141, 0.5
        %v5330 = vmul.f32 %v5252, 0.5
        %v5331 = vmul.f32 %v5254, 0.5
        %v5332 = vmul.f32 %v5145, 0.5
        %v5333 = vmul.f32 %v5147, 0.5
        %v5334 = vmul.f32 %v5258, 0.5
        %v5335 = vmul.f32 %v5260, 0.5
        %v5336 = vmul.f32 %v5149, 0.5
        %v5337 = vmul.f32 %v5151, 0.5
        %v5338 = vmul.f32 %v5262, 0.5
        %v5339 = vmul.f32 %v5264, 0.5
        %v5340 = vmul.f32 %v5155, 0.5
        %v5341 = vmul.f32 %v5157, 0.5
        %v5342 = vmul.f32 %v5268, 0.5
        %v5343 = vmul.f32 %v5270, 0.5
        %v5344 = vmul.f32 %v5159, 0.5
        %v5345 = vmul.f32 %v5161, 0.5
        %v5346 = vmul.f32 %v5272, 0.5
        %v5347 = vmul.f32 %v5274, 0.5
        %v5348 = vmul.f32 %v5165, 0.5
        %v5349 = vmul.f32 %v5167, 0.5
        %v5350 = vmul.f32 %v5278, 0.5
        %v5351 = vmul.f32 %v5280, 0.5
        %v5352 = vmul.f32 %v5169, 0.5
        %v5353 = vmul.f32 %v5171, 0.5
        %v5354 = vmul.f32 %v5282, 0.5
        %v5355 = vmul.f32 %v5284, 0.5
        %v5356 = vmul.f32 %v5175, 0.5
        %v5357 = vmul.f32 %v5177, 0.5
        %v5358 = vmul.f32 %v5288, 0.5
        %v5359 = vmul.f32 %v5290, 0.5
        %v5360 = vmul.f32 %v5179, 0.5
        %v5361 = vmul.f32 %v5181, 0.5
        %v5362 = vmul.f32 %v5292, 0.5
        %v5363 = vmul.f32 %v5294, 0.5
        %v5364 = vmul.f32 %v5185, 0.5
        %v5365 = vmul.f32 %v5187, 0.5
        %v5366 = vmul.f32 %v5298, 0.5
        %v5367 = vmul.f32 %v5300, 0.5
        %v5368 = vmul.f32 %v5189, 0.5
        %v5369 = vmul.f32 %v5191, 0.5
        %v5370 = vmul.f32 %v5302, 0.5
        %v5371 = vmul.f32 %v5304, 0.5
        %v5372 = vmul.f32 %v5195, 0.5
        %v5373 = vmul.f32 %v5197, 0.5
        %v5374 = vmul.f32 %v5308, 0.5
        %v5375 = vmul.f32 %v5310, 0.5
        %v5376 = vmul.f32 %v5199, 0.5
        %v5377 = vmul.f32 %v5201, 0.5
        %v5378 = vmul.f32 %v5312, 0.5
        %v5379 = vmul.f32 %v5314, 0.5
        %v5380 = vmul.f32 %v5125, 0.70710677
        %v5381 = vmul.f32 %v5127, 0.70710677
        %v5382 = vmul.f32 %v5238, 0.70710677
        %v5383 = vmul.f32 %v5240, 0.70710677
        %v5384 = vmul.f32 %v5129, 0.70710677
        %v5385 = vmul.f32 %v5131, 0.70710677
        %v5386 = vmul.f32 %v5242, 0.70710677
        %v5387 = vmul.f32 %v5244, 0.70710677
        %v5388 = vmul.f32 %v5135, 0.70710677
        %v5389 = vmul.f32 %v5137, 0.70710677
        %v5390 = vmul.f32 %v5248, 0.70710677
        %v5391 = vmul.f32 %v5250, 0.70710677
        %v5392 = vmul.f32 %v5139, 0.70710677
        %v5393 = vmul.f32 %v5141, 0.70710677
        %v5394 = vmul.f32 %v5252, 0.70710677
        %v5395 = vmul.f32 %v5254, 0.70710677
        %v5396 = vmul.f32 %v5145, 0.70710677
        %v5397 = vmul.f32 %v5147, 0.70710677
        %v5398 = vmul.f32 %v5258, 0.70710677
        %v5399 = vmul.f32 %v5260, 0.70710677
        %v5400 = vmul.f32 %v5149, 0.70710677
        %v5401 = vmul.f32 %v5151, 0.70710677
        %v5402 = vmul.f32 %v5262, 0.70710677
        %v5403 = vmul.f32 %v5264, 0.70710677
        %v5404 = vmul.f32 %v5155, 0.70710677
        %v5405 = vmul.f32 %v5157, 0.70710677
        %v5406 = vmul.f32 %v5268, 0.70710677
        %v5407 = vmul.f32 %v5270, 0.70710677
        %v5408 = vmul.f32 %v5159, 0.70710677
        %v5409 = vmul.f32 %v5161, 0.70710677
        %v5410 = vmul.f32 %v5272, 0.70710677
        %v5411 = vmul.f32 %v5274, 0.70710677
        %v5412 = vmul.f32 %v5165, 0.70710677
        %v5413 = vmul.f32 %v5167, 0.70710677
        %v5414 = vmul.f32 %v5278, 0.70710677
        %v5415 = vmul.f32 %v5280, 0.70710677
        %v5416 = vmul.f32 %v5169, 0.70710677
        %v5417 = vmul.f32 %v5171, 0.70710677
        %v5418 = vmul.f32 %v5282, 0.70710677
        %v5419 = vmul.f32 %v5284, 0.70710677
        %v5420 = vmul.f32 %v5175, 0.70710677
        %v5421 = vmul.f32 %v5177, 0.70710677
        %v5422 = vmul.f32 %v5288, 0.70710677
        %v5423 = vmul.f32 %v5290, 0.70710677
        %v5424 = vmul.f32 %v5179, 0.70710677
        %v5425 = vmul.f32 %v5181, 0.70710677
        %v5426 = vmul.f32 %v5292, 0.70710677
        %v5427 = vmul.f32 %v5294, 0.70710677
        %v5428 = vmul.f32 %v5185, 0.70710677
        %v5429 = vmul.f32 %v5187, 0.70710677
        %v5430 = vmul.f32 %v5298, 0.70710677
        %v5431 = vmul.f32 %v5300, 0.70710677
        %v5432 = vmul.f32 %v5189, 0.70710677
        %v5433 = vmul.f32 %v5191, 0.70710677
        %v5434 = vmul.f32 %v5302, 0.70710677
        %v5435 = vmul.f32 %v5304, 0.70710677
        %v5436 = vmul.f32 %v5195, 0.70710677
        %v5437 = vmul.f32 %v5197, 0.70710677
        %v5438 = vmul.f32 %v5308, 0.70710677
        %v5439 = vmul.f32 %v5310, 0.70710677
        %v5440 = vmul.f32 %v5199, 0.70710677
        %v5441 = vmul.f32 %v5201, 0.70710677
        %v5442 = vmul.f32 %v5312, 0.70710677
        %v5443 = vmul.f32 %v5314, 0.70710677
        %v5444 = vand.u32 2147483647, %v5380
        %v5445 = vand.u32 2147483647, %v5381
        %v5446 = vand.u32 2147483647, %v5382
        %v5447 = vand.u32 2147483647, %v5383
        %v5448 = vand.u32 2147483647, %v5384
        %v5449 = vand.u32 2147483647, %v5385
        %v5450 = vand.u32 2147483647, %v5386
        %v5451 = vand.u32 2147483647, %v5387
        %v5452 = vand.u32 2147483647, %v5388
        %v5453 = vand.u32 2147483647, %v5389
        %v5454 = vand.u32 2147483647, %v5390
        %v5455 = vand.u32 2147483647, %v5391
        %v5456 = vand.u32 2147483647, %v5392
        %v5457 = vand.u32 2147483647, %v5393
        %v5458 = vand.u32 2147483647, %v5394
        %v5459 = vand.u32 2147483647, %v5395
        %v5460 = vand.u32 2147483647, %v5396
        %v5461 = vand.u32 2147483647, %v5397
        %v5462 = vand.u32 2147483647, %v5398
        %v5463 = vand.u32 2147483647, %v5399
        %v5464 = vand.u32 2147483647, %v5400
        %v5465 = vand.u32 2147483647, %v5401
        %v5466 = vand.u32 2147483647, %v5402
        %v5467 = vand.u32 2147483647, %v5403
        %v5468 = vand.u32 2147483647, %v5404
        %v5469 = vand.u32 2147483647, %v5405
        %v5470 = vand.u32 2147483647, %v5406
        %v5471 = vand.u32 2147483647, %v5407
        %v5472 = vand.u32 2147483647, %v5408
        %v5473 = vand.u32 2147483647, %v5409
        %v5474 = vand.u32 2147483647, %v5410
        %v5475 = vand.u32 2147483647, %v5411
        %v5476 = vand.u32 2147483647, %v5412
        %v5477 = vand.u32 2147483647, %v5413
        %v5478 = vand.u32 2147483647, %v5414
        %v5479 = vand.u32 2147483647, %v5415
        %v5480 = vand.u32 2147483647, %v5416
        %v5481 = vand.u32 2147483647, %v5417
        %v5482 = vand.u32 2147483647, %v5418
        %v5483 = vand.u32 2147483647, %v5419
        %v5484 = vand.u32 2147483647, %v5420
        %v5485 = vand.u32 2147483647, %v5421
        %v5486 = vand.u32 2147483647, %v5422
        %v5487 = vand.u32 2147483647, %v5423
        %v5488 = vand.u32 2147483647, %v5424
        %v5489 = vand.u32 2147483647, %v5425
        %v5490 = vand.u32 2147483647, %v5426
        %v5491 = vand.u32 2147483647, %v5427
        %v5492 = vand.u32 2147483647, %v5428
        %v5493 = vand.u32 2147483647, %v5429
        %v5494 = vand.u32 2147483647, %v5430
        %v5495 = vand.u32 2147483647, %v5431
        %v5496 = vand.u32 2147483647, %v5432
        %v5497 = vand.u32 2147483647, %v5433
        %v5498 = vand.u32 2147483647, %v5434
        %v5499 = vand.u32 2147483647, %v5435
        %v5500 = vand.u32 2147483647, %v5436
        %v5501 = vand.u32 2147483647, %v5437
        %v5502 = vand.u32 2147483647, %v5438
        %v5503 = vand.u32 2147483647, %v5439
        %v5504 = vand.u32 2147483647, %v5440
        %v5505 = vand.u32 2147483647, %v5441
        %v5506 = vand.u32 2147483647, %v5442
        %v5507 = vand.u32 2147483647, %v5443
        %v5508 = vmul.f32 %v5444, 0.3275911
        %v5509 = vmul.f32 %v5445, 0.3275911
        %v5510 = vmul.f32 %v5446, 0.3275911
        %v5511 = vmul.f32 %v5447, 0.3275911
        %v5512 = vmul.f32 %v5448, 0.3275911
        %v5513 = vmul.f32 %v5449, 0.3275911
        %v5514 = vmul.f32 %v5450, 0.3275911
        %v5515 = vmul.f32 %v5451, 0.3275911
        %v5516 = vmul.f32 %v5452, 0.3275911
        %v5517 = vmul.f32 %v5453, 0.3275911
        %v5518 = vmul.f32 %v5454, 0.3275911
        %v5519 = vmul.f32 %v5455, 0.3275911
        %v5520 = vmul.f32 %v5456, 0.3275911
        %v5521 = vmul.f32 %v5457, 0.3275911
        %v5522 = vmul.f32 %v5458, 0.3275911
        %v5523 = vmul.f32 %v5459, 0.3275911
        %v5524 = vmul.f32 %v5460, 0.3275911
        %v5525 = vmul.f32 %v5461, 0.3275911
        %v5526 = vmul.f32 %v5462, 0.3275911
        %v5527 = vmul.f32 %v5463, 0.3275911
        %v5528 = vmul.f32 %v5464, 0.3275911
        %v5529 = vmul.f32 %v5465, 0.3275911
        %v5530 = vmul.f32 %v5466, 0.3275911
        %v5531 = vmul.f32 %v5467, 0.3275911
        %v5532 = vmul.f32 %v5468, 0.3275911
        %v5533 = vmul.f32 %v5469, 0.3275911
        %v5534 = vmul.f32 %v5470, 0.3275911
        %v5535 = vmul.f32 %v5471, 0.3275911
        %v5536 = vmul.f32 %v5472, 0.3275911
        %v5537 = vmul.f32 %v5473, 0.3275911
        %v5538 = vmul.f32 %v5474, 0.3275911
        %v5539 = vmul.f32 %v5475, 0.3275911
        %v5540 = vmul.f32 %v5476, 0.3275911
        %v5541 = vmul.f32 %v5477, 0.3275911
        %v5542 = vmul.f32 %v5478, 0.3275911
        %v5543 = vmul.f32 %v5479, 0.3275911
        %v5544 = vmul.f32 %v5480, 0.3275911
        %v5545 = vmul.f32 %v5481, 0.3275911
        %v5546 = vmul.f32 %v5482, 0.3275911
        %v5547 = vmul.f32 %v5483, 0.3275911
        %v5548 = vmul.f32 %v5484, 0.3275911
        %v5549 = vmul.f32 %v5485, 0.3275911
        %v5550 = vmul.f32 %v5486, 0.3275911
        %v5551 = vmul.f32 %v5487, 0.3275911
        %v5552 = vmul.f32 %v5488, 0.3275911
        %v5553 = vmul.f32 %v5489, 0.3275911
        %v5554 = vmul.f32 %v5490, 0.3275911
        %v5555 = vmul.f32 %v5491, 0.3275911
        %v5556 = vmul.f32 %v5492, 0.3275911
        %v5557 = vmul.f32 %v5493, 0.3275911
        %v5558 = vmul.f32 %v5494, 0.3275911
        %v5559 = vmul.f32 %v5495, 0.3275911
        %v5560 = vmul.f32 %v5496, 0.3275911
        %v5561 = vmul.f32 %v5497, 0.3275911
        %v5562 = vmul.f32 %v5498, 0.3275911
        %v5563 = vmul.f32 %v5499, 0.3275911
        %v5564 = vmul.f32 %v5500, 0.3275911
        %v5565 = vmul.f32 %v5501, 0.3275911
        %v5566 = vmul.f32 %v5502, 0.3275911
        %v5567 = vmul.f32 %v5503, 0.3275911
        %v5568 = vmul.f32 %v5504, 0.3275911
        %v5569 = vmul.f32 %v5505, 0.3275911
        %v5570 = vmul.f32 %v5506, 0.3275911
        %v5571 = vmul.f32 %v5507, 0.3275911
        %v5572 = vadd.f32 %v5508, 1.0
        %v5573 = vadd.f32 %v5509, 1.0
        %v5574 = vadd.f32 %v5510, 1.0
        %v5575 = vadd.f32 %v5511, 1.0
        %v5576 = vadd.f32 %v5512, 1.0
        %v5577 = vadd.f32 %v5513, 1.0
        %v5578 = vadd.f32 %v5514, 1.0
        %v5579 = vadd.f32 %v5515, 1.0
        %v5580 = vadd.f32 %v5516, 1.0
        %v5581 = vadd.f32 %v5517, 1.0
        %v5582 = vadd.f32 %v5518, 1.0
        %v5583 = vadd.f32 %v5519, 1.0
        %v5584 = vadd.f32 %v5520, 1.0
        %v5585 = vadd.f32 %v5521, 1.0
        %v5586 = vadd.f32 %v5522, 1.0
        %v5587 = vadd.f32 %v5523, 1.0
        %v5588 = vadd.f32 %v5524, 1.0
        %v5589 = vadd.f32 %v5525, 1.0
        %v5590 = vadd.f32 %v5526, 1.0
        %v5591 = vadd.f32 %v5527, 1.0
        %v5592 = vadd.f32 %v5528, 1.0
        %v5593 = vadd.f32 %v5529, 1.0
        %v5594 = vadd.f32 %v5530, 1.0
        %v5595 = vadd.f32 %v5531, 1.0
        %v5596 = vadd.f32 %v5532, 1.0
        %v5597 = vadd.f32 %v5533, 1.0
        %v5598 = vadd.f32 %v5534, 1.0
        %v5599 = vadd.f32 %v5535, 1.0
        %v5600 = vadd.f32 %v5536, 1.0
        %v5601 = vadd.f32 %v5537, 1.0
        %v5602 = vadd.f32 %v5538, 1.0
        %v5603 = vadd.f32 %v5539, 1.0
        %v5604 = vadd.f32 %v5540, 1.0
        %v5605 = vadd.f32 %v5541, 1.0
        %v5606 = vadd.f32 %v5542, 1.0
        %v5607 = vadd.f32 %v5543, 1.0
        %v5608 = vadd.f32 %v5544, 1.0
        %v5609 = vadd.f32 %v5545, 1.0
        %v5610 = vadd.f32 %v5546, 1.0
        %v5611 = vadd.f32 %v5547, 1.0
        %v5612 = vadd.f32 %v5548, 1.0
        %v5613 = vadd.f32 %v5549, 1.0
        %v5614 = vadd.f32 %v5550, 1.0
        %v5615 = vadd.f32 %v5551, 1.0
        %v5616 = vadd.f32 %v5552, 1.0
        %v5617 = vadd.f32 %v5553, 1.0
        %v5618 = vadd.f32 %v5554, 1.0
        %v5619 = vadd.f32 %v5555, 1.0
        %v5620 = vadd.f32 %v5556, 1.0
        %v5621 = vadd.f32 %v5557, 1.0
        %v5622 = vadd.f32 %v5558, 1.0
        %v5623 = vadd.f32 %v5559, 1.0
        %v5624 = vadd.f32 %v5560, 1.0
        %v5625 = vadd.f32 %v5561, 1.0
        %v5626 = vadd.f32 %v5562, 1.0
        %v5627 = vadd.f32 %v5563, 1.0
        %v5628 = vadd.f32 %v5564, 1.0
        %v5629 = vadd.f32 %v5565, 1.0
        %v5630 = vadd.f32 %v5566, 1.0
        %v5631 = vadd.f32 %v5567, 1.0
        %v5632 = vadd.f32 %v5568, 1.0
        %v5633 = vadd.f32 %v5569, 1.0
        %v5634 = vadd.f32 %v5570, 1.0
        %v5635 = vadd.f32 %v5571, 1.0
        %v5636 = vrcp.pop %v5572
        %v5637 = vmul.f32 1.0, %v5636
        %v5638 = vrcp.pop %v5573
        %v5639 = vmul.f32 1.0, %v5638
        %v5640 = vrcp.pop %v5574
        %v5641 = vmul.f32 1.0, %v5640
        %v5642 = vrcp.pop %v5575
        %v5643 = vmul.f32 1.0, %v5642
        %v5644 = vrcp.pop %v5576
        %v5645 = vmul.f32 1.0, %v5644
        %v5646 = vrcp.pop %v5577
        %v5647 = vmul.f32 1.0, %v5646
        %v5648 = vrcp.pop %v5578
        %v5649 = vmul.f32 1.0, %v5648
        %v5650 = vrcp.pop %v5579
        %v5651 = vmul.f32 1.0, %v5650
        %v5652 = vrcp.pop %v5580
        %v5653 = vmul.f32 1.0, %v5652
        %v5654 = vrcp.pop %v5581
        %v5655 = vmul.f32 1.0, %v5654
        %v5656 = vrcp.pop %v5582
        %v5657 = vmul.f32 1.0, %v5656
        %v5658 = vrcp.pop %v5583
        %v5659 = vmul.f32 1.0, %v5658
        %v5660 = vrcp.pop %v5584
        %v5661 = vmul.f32 1.0, %v5660
        %v5662 = vrcp.pop %v5585
        %v5663 = vmul.f32 1.0, %v5662
        %v5664 = vrcp.pop %v5586
        %v5665 = vmul.f32 1.0, %v5664
        %v5666 = vrcp.pop %v5587
        %v5667 = vmul.f32 1.0, %v5666
        %v5668 = vrcp.pop %v5588
        %v5669 = vmul.f32 1.0, %v5668
        %v5670 = vrcp.pop %v5589
        %v5671 = vmul.f32 1.0, %v5670
        %v5672 = vrcp.pop %v5590
        %v5673 = vmul.f32 1.0, %v5672
        %v5674 = vrcp.pop %v5591
        %v5675 = vmul.f32 1.0, %v5674
        %v5676 = vrcp.pop %v5592
        %v5677 = vmul.f32 1.0, %v5676
        %v5678 = vrcp.pop %v5593
        %v5679 = vmul.f32 1.0, %v5678
        %v5680 = vrcp.pop %v5594
        %v5681 = vmul.f32 1.0, %v5680
        %v5682 = vrcp.pop %v5595
        %v5683 = vmul.f32 1.0, %v5682
        %v5684 = vrcp.pop %v5596
        %v5685 = vmul.f32 1.0, %v5684
        %v5686 = vrcp.pop %v5597
        %v5687 = vmul.f32 1.0, %v5686
        %v5688 = vrcp.pop %v5598
        %v5689 = vmul.f32 1.0, %v5688
        %v5690 = vrcp.pop %v5599
        %v5691 = vmul.f32 1.0, %v5690
        %v5692 = vrcp.pop %v5600
        %v5693 = vmul.f32 1.0, %v5692
        %v5694 = vrcp.pop %v5601
        %v5695 = vmul.f32 1.0, %v5694
        %v5696 = vrcp.pop %v5602
        %v5697 = vmul.f32 1.0, %v5696
        %v5698 = vrcp.pop %v5603
        %v5699 = vmul.f32 1.0, %v5698
        %v5700 = vrcp.pop %v5604
        %v5701 = vmul.f32 1.0, %v5700
        %v5702 = vrcp.pop %v5605
        %v5703 = vmul.f32 1.0, %v5702
        %v5704 = vrcp.pop %v5606
        %v5705 = vmul.f32 1.0, %v5704
        %v5706 = vrcp.pop %v5607
        %v5707 = vmul.f32 1.0, %v5706
        %v5708 = vrcp.pop %v5608
        %v5709 = vmul.f32 1.0, %v5708
        %v5710 = vrcp.pop %v5609
        %v5711 = vmul.f32 1.0, %v5710
        %v5712 = vrcp.pop %v5610
        %v5713 = vmul.f32 1.0, %v5712
        %v5714 = vrcp.pop %v5611
        %v5715 = vmul.f32 1.0, %v5714
        %v5716 = vrcp.pop %v5612
        %v5717 = vmul.f32 1.0, %v5716
        %v5718 = vrcp.pop %v5613
        %v5719 = vmul.f32 1.0, %v5718
        %v5720 = vrcp.pop %v5614
        %v5721 = vmul.f32 1.0, %v5720
        %v5722 = vrcp.pop %v5615
        %v5723 = vmul.f32 1.0, %v5722
        %v5724 = vrcp.pop %v5616
        %v5725 = vmul.f32 1.0, %v5724
        %v5726 = vrcp.pop %v5617
        %v5727 = vmul.f32 1.0, %v5726
        %v5728 = vrcp.pop %v5618
        %v5729 = vmul.f32 1.0, %v5728
        %v5730 = vrcp.pop %v5619
        %v5731 = vmul.f32 1.0, %v5730
        %v5732 = vrcp.pop %v5620
        %v5733 = vmul.f32 1.0, %v5732
        %v5734 = vrcp.pop %v5621
        %v5735 = vmul.f32 1.0, %v5734
        %v5736 = vrcp.pop %v5622
        %v5737 = vmul.f32 1.0, %v5736
        %v5738 = vrcp.pop %v5623
        %v5739 = vmul.f32 1.0, %v5738
        %v5740 = vrcp.pop %v5624
        %v5741 = vmul.f32 1.0, %v5740
        %v5742 = vrcp.pop %v5625
        %v5743 = vmul.f32 1.0, %v5742
        %v5744 = vrcp.pop %v5626
        %v5745 = vmul.f32 1.0, %v5744
        %v5746 = vrcp.pop %v5627
        %v5747 = vmul.f32 1.0, %v5746
        %v5748 = vrcp.pop %v5628
        %v5749 = vmul.f32 1.0, %v5748
        %v5750 = vrcp.pop %v5629
        %v5751 = vmul.f32 1.0, %v5750
        %v5752 = vrcp.pop %v5630
        %v5753 = vmul.f32 1.0, %v5752
        %v5754 = vrcp.pop %v5631
        %v5755 = vmul.f32 1.0, %v5754
        %v5756 = vrcp.pop %v5632
        %v5757 = vmul.f32 1.0, %v5756
        %v5758 = vrcp.pop %v5633
        %v5759 = vmul.f32 1.0, %v5758
        %v5760 = vrcp.pop %v5634
        %v5761 = vmul.f32 1.0, %v5760
        %v5762 = vrcp.pop %v5635
        %v5763 = vmul.f32 1.0, %v5762
        %v5764 = vmul.f32 %v5637, 1.0614054
        %v5765 = vmul.f32 %v5639, 1.0614054
        %v5766 = vmul.f32 %v5641, 1.0614054
        %v5767 = vmul.f32 %v5643, 1.0614054
        %v5768 = vmul.f32 %v5645, 1.0614054
        %v5769 = vmul.f32 %v5647, 1.0614054
        %v5770 = vmul.f32 %v5649, 1.0614054
        %v5771 = vmul.f32 %v5651, 1.0614054
        %v5772 = vmul.f32 %v5653, 1.0614054
        %v5773 = vmul.f32 %v5655, 1.0614054
        %v5774 = vmul.f32 %v5657, 1.0614054
        %v5775 = vmul.f32 %v5659, 1.0614054
        %v5776 = vmul.f32 %v5661, 1.0614054
        %v5777 = vmul.f32 %v5663, 1.0614054
        %v5778 = vmul.f32 %v5665, 1.0614054
        %v5779 = vmul.f32 %v5667, 1.0614054
        %v5780 = vmul.f32 %v5669, 1.0614054
        %v5781 = vmul.f32 %v5671, 1.0614054
        %v5782 = vmul.f32 %v5673, 1.0614054
        %v5783 = vmul.f32 %v5675, 1.0614054
        %v5784 = vmul.f32 %v5677, 1.0614054
        %v5785 = vmul.f32 %v5679, 1.0614054
        %v5786 = vmul.f32 %v5681, 1.0614054
        %v5787 = vmul.f32 %v5683, 1.0614054
        %v5788 = vmul.f32 %v5685, 1.0614054
        %v5789 = vmul.f32 %v5687, 1.0614054
        %v5790 = vmul.f32 %v5689, 1.0614054
        %v5791 = vmul.f32 %v5691, 1.0614054
        %v5792 = vmul.f32 %v5693, 1.0614054
        %v5793 = vmul.f32 %v5695, 1.0614054
        %v5794 = vmul.f32 %v5697, 1.0614054
        %v5795 = vmul.f32 %v5699, 1.0614054
        %v5796 = vmul.f32 %v5701, 1.0614054
        %v5797 = vmul.f32 %v5703, 1.0614054
        %v5798 = vmul.f32 %v5705, 1.0614054
        %v5799 = vmul.f32 %v5707, 1.0614054
        %v5800 = vmul.f32 %v5709, 1.0614054
        %v5801 = vmul.f32 %v5711, 1.0614054
        %v5802 = vmul.f32 %v5713, 1.0614054
        %v5803 = vmul.f32 %v5715, 1.0614054
        %v5804 = vmul.f32 %v5717, 1.0614054
        %v5805 = vmul.f32 %v5719, 1.0614054
        %v5806 = vmul.f32 %v5721, 1.0614054
        %v5807 = vmul.f32 %v5723, 1.0614054
        %v5808 = vmul.f32 %v5725, 1.0614054
        %v5809 = vmul.f32 %v5727, 1.0614054
        %v5810 = vmul.f32 %v5729, 1.0614054
        %v5811 = vmul.f32 %v5731, 1.0614054
        %v5812 = vmul.f32 %v5733, 1.0614054
        %v5813 = vmul.f32 %v5735, 1.0614054
        %v5814 = vmul.f32 %v5737, 1.0614054
        %v5815 = vmul.f32 %v5739, 1.0614054
        %v5816 = vmul.f32 %v5741, 1.0614054
        %v5817 = vmul.f32 %v5743, 1.0614054
        %v5818 = vmul.f32 %v5745, 1.0614054
        %v5819 = vmul.f32 %v5747, 1.0614054
        %v5820 = vmul.f32 %v5749, 1.0614054
        %v5821 = vmul.f32 %v5751, 1.0614054
        %v5822 = vmul.f32 %v5753, 1.0614054
        %v5823 = vmul.f32 %v5755, 1.0614054
        %v5824 = vmul.f32 %v5757, 1.0614054
        %v5825 = vmul.f32 %v5759, 1.0614054
        %v5826 = vmul.f32 %v5761, 1.0614054
        %v5827 = vmul.f32 %v5763, 1.0614054
        %v5828 = vadd.f32 %v5764, -1.4531521
        %v5829 = vadd.f32 %v5765, -1.4531521
        %v5830 = vadd.f32 %v5766, -1.4531521
        %v5831 = vadd.f32 %v5767, -1.4531521
        %v5832 = vadd.f32 %v5768, -1.4531521
        %v5833 = vadd.f32 %v5769, -1.4531521
        %v5834 = vadd.f32 %v5770, -1.4531521
        %v5835 = vadd.f32 %v5771, -1.4531521
        %v5836 = vadd.f32 %v5772, -1.4531521
        %v5837 = vadd.f32 %v5773, -1.4531521
        %v5838 = vadd.f32 %v5774, -1.4531521
        %v5839 = vadd.f32 %v5775, -1.4531521
        %v5840 = vadd.f32 %v5776, -1.4531521
        %v5841 = vadd.f32 %v5777, -1.4531521
        %v5842 = vadd.f32 %v5778, -1.4531521
        %v5843 = vadd.f32 %v5779, -1.4531521
        %v5844 = vadd.f32 %v5780, -1.4531521
        %v5845 = vadd.f32 %v5781, -1.4531521
        %v5846 = vadd.f32 %v5782, -1.4531521
        %v5847 = vadd.f32 %v5783, -1.4531521
        %v5848 = vadd.f32 %v5784, -1.4531521
        %v5849 = vadd.f32 %v5785, -1.4531521
        %v5850 = vadd.f32 %v5786, -1.4531521
        %v5851 = vadd.f32 %v5787, -1.4531521
        %v5852 = vadd.f32 %v5788, -1.4531521
        %v5853 = vadd.f32 %v5789, -1.4531521
        %v5854 = vadd.f32 %v5790, -1.4531521
        %v5855 = vadd.f32 %v5791, -1.4531521
        %v5856 = vadd.f32 %v5792, -1.4531521
        %v5857 = vadd.f32 %v5793, -1.4531521
        %v5858 = vadd.f32 %v5794, -1.4531521
        %v5859 = vadd.f32 %v5795, -1.4531521
        %v5860 = vadd.f32 %v5796, -1.4531521
        %v5861 = vadd.f32 %v5797, -1.4531521
        %v5862 = vadd.f32 %v5798, -1.4531521
        %v5863 = vadd.f32 %v5799, -1.4531521
        %v5864 = vadd.f32 %v5800, -1.4531521
        %v5865 = vadd.f32 %v5801, -1.4531521
        %v5866 = vadd.f32 %v5802, -1.4531521
        %v5867 = vadd.f32 %v5803, -1.4531521
        %v5868 = vadd.f32 %v5804, -1.4531521
        %v5869 = vadd.f32 %v5805, -1.4531521
        %v5870 = vadd.f32 %v5806, -1.4531521
        %v5871 = vadd.f32 %v5807, -1.4531521
        %v5872 = vadd.f32 %v5808, -1.4531521
        %v5873 = vadd.f32 %v5809, -1.4531521
        %v5874 = vadd.f32 %v5810, -1.4531521
        %v5875 = vadd.f32 %v5811, -1.4531521
        %v5876 = vadd.f32 %v5812, -1.4531521
        %v5877 = vadd.f32 %v5813, -1.4531521
        %v5878 = vadd.f32 %v5814, -1.4531521
        %v5879 = vadd.f32 %v5815, -1.4531521
        %v5880 = vadd.f32 %v5816, -1.4531521
        %v5881 = vadd.f32 %v5817, -1.4531521
        %v5882 = vadd.f32 %v5818, -1.4531521
        %v5883 = vadd.f32 %v5819, -1.4531521
        %v5884 = vadd.f32 %v5820, -1.4531521
        %v5885 = vadd.f32 %v5821, -1.4531521
        %v5886 = vadd.f32 %v5822, -1.4531521
        %v5887 = vadd.f32 %v5823, -1.4531521
        %v5888 = vadd.f32 %v5824, -1.4531521
        %v5889 = vadd.f32 %v5825, -1.4531521
        %v5890 = vadd.f32 %v5826, -1.4531521
        %v5891 = vadd.f32 %v5827, -1.4531521
        %v5892 = vmul.f32 %v5828, %v5637
        %v5893 = vmul.f32 %v5829, %v5639
        %v5894 = vmul.f32 %v5830, %v5641
        %v5895 = vmul.f32 %v5831, %v5643
        %v5896 = vmul.f32 %v5832, %v5645
        %v5897 = vmul.f32 %v5833, %v5647
        %v5898 = vmul.f32 %v5834, %v5649
        %v5899 = vmul.f32 %v5835, %v5651
        %v5900 = vmul.f32 %v5836, %v5653
        %v5901 = vmul.f32 %v5837, %v5655
        %v5902 = vmul.f32 %v5838, %v5657
        %v5903 = vmul.f32 %v5839, %v5659
        %v5904 = vmul.f32 %v5840, %v5661
        %v5905 = vmul.f32 %v5841, %v5663
        %v5906 = vmul.f32 %v5842, %v5665
        %v5907 = vmul.f32 %v5843, %v5667
        %v5908 = vmul.f32 %v5844, %v5669
        %v5909 = vmul.f32 %v5845, %v5671
        %v5910 = vmul.f32 %v5846, %v5673
        %v5911 = vmul.f32 %v5847, %v5675
        %v5912 = vmul.f32 %v5848, %v5677
        %v5913 = vmul.f32 %v5849, %v5679
        %v5914 = vmul.f32 %v5850, %v5681
        %v5915 = vmul.f32 %v5851, %v5683
        %v5916 = vmul.f32 %v5852, %v5685
        %v5917 = vmul.f32 %v5853, %v5687
        %v5918 = vmul.f32 %v5854, %v5689
        %v5919 = vmul.f32 %v5855, %v5691
        %v5920 = vmul.f32 %v5856, %v5693
        %v5921 = vmul.f32 %v5857, %v5695
        %v5922 = vmul.f32 %v5858, %v5697
        %v5923 = vmul.f32 %v5859, %v5699
        %v5924 = vmul.f32 %v5860, %v5701
        %v5925 = vmul.f32 %v5861, %v5703
        %v5926 = vmul.f32 %v5862, %v5705
        %v5927 = vmul.f32 %v5863, %v5707
        %v5928 = vmul.f32 %v5864, %v5709
        %v5929 = vmul.f32 %v5865, %v5711
        %v5930 = vmul.f32 %v5866, %v5713
        %v5931 = vmul.f32 %v5867, %v5715
        %v5932 = vmul.f32 %v5868, %v5717
        %v5933 = vmul.f32 %v5869, %v5719
        %v5934 = vmul.f32 %v5870, %v5721
        %v5935 = vmul.f32 %v5871, %v5723
        %v5936 = vmul.f32 %v5872, %v5725
        %v5937 = vmul.f32 %v5873, %v5727
        %v5938 = vmul.f32 %v5874, %v5729
        %v5939 = vmul.f32 %v5875, %v5731
        %v5940 = vmul.f32 %v5876, %v5733
        %v5941 = vmul.f32 %v5877, %v5735
        %v5942 = vmul.f32 %v5878, %v5737
        %v5943 = vmul.f32 %v5879, %v5739
        %v5944 = vmul.f32 %v5880, %v5741
        %v5945 = vmul.f32 %v5881, %v5743
        %v5946 = vmul.f32 %v5882, %v5745
        %v5947 = vmul.f32 %v5883, %v5747
        %v5948 = vmul.f32 %v5884, %v5749
        %v5949 = vmul.f32 %v5885, %v5751
        %v5950 = vmul.f32 %v5886, %v5753
        %v5951 = vmul.f32 %v5887, %v5755
        %v5952 = vmul.f32 %v5888, %v5757
        %v5953 = vmul.f32 %v5889, %v5759
        %v5954 = vmul.f32 %v5890, %v5761
        %v5955 = vmul.f32 %v5891, %v5763
        %v5956 = vadd.f32 %v5892, 1.4214138
        %v5957 = vadd.f32 %v5893, 1.4214138
        %v5958 = vadd.f32 %v5894, 1.4214138
        %v5959 = vadd.f32 %v5895, 1.4214138
        %v5960 = vadd.f32 %v5896, 1.4214138
        %v5961 = vadd.f32 %v5897, 1.4214138
        %v5962 = vadd.f32 %v5898, 1.4214138
        %v5963 = vadd.f32 %v5899, 1.4214138
        %v5964 = vadd.f32 %v5900, 1.4214138
        %v5965 = vadd.f32 %v5901, 1.4214138
        %v5966 = vadd.f32 %v5902, 1.4214138
        %v5967 = vadd.f32 %v5903, 1.4214138
        %v5968 = vadd.f32 %v5904, 1.4214138
        %v5969 = vadd.f32 %v5905, 1.4214138
        %v5970 = vadd.f32 %v5906, 1.4214138
        %v5971 = vadd.f32 %v5907, 1.4214138
        %v5972 = vadd.f32 %v5908, 1.4214138
        %v5973 = vadd.f32 %v5909, 1.4214138
        %v5974 = vadd.f32 %v5910, 1.4214138
        %v5975 = vadd.f32 %v5911, 1.4214138
        %v5976 = vadd.f32 %v5912, 1.4214138
        %v5977 = vadd.f32 %v5913, 1.4214138
        %v5978 = vadd.f32 %v5914, 1.4214138
        %v5979 = vadd.f32 %v5915, 1.4214138
        %v5980 = vadd.f32 %v5916, 1.4214138
        %v5981 = vadd.f32 %v5917, 1.4214138
        %v5982 = vadd.f32 %v5918, 1.4214138
        %v5983 = vadd.f32 %v5919, 1.4214138
        %v5984 = vadd.f32 %v5920, 1.4214138
        %v5985 = vadd.f32 %v5921, 1.4214138
        %v5986 = vadd.f32 %v5922, 1.4214138
        %v5987 = vadd.f32 %v5923, 1.4214138
        %v5988 = vadd.f32 %v5924, 1.4214138
        %v5989 = vadd.f32 %v5925, 1.4214138
        %v5990 = vadd.f32 %v5926, 1.4214138
        %v5991 = vadd.f32 %v5927, 1.4214138
        %v5992 = vadd.f32 %v5928, 1.4214138
        %v5993 = vadd.f32 %v5929, 1.4214138
        %v5994 = vadd.f32 %v5930, 1.4214138
        %v5995 = vadd.f32 %v5931, 1.4214138
        %v5996 = vadd.f32 %v5932, 1.4214138
        %v5997 = vadd.f32 %v5933, 1.4214138
        %v5998 = vadd.f32 %v5934, 1.4214138
        %v5999 = vadd.f32 %v5935, 1.4214138
        %v6000 = vadd.f32 %v5936, 1.4214138
        %v6001 = vadd.f32 %v5937, 1.4214138
        %v6002 = vadd.f32 %v5938, 1.4214138
        %v6003 = vadd.f32 %v5939, 1.4214138
        %v6004 = vadd.f32 %v5940, 1.4214138
        %v6005 = vadd.f32 %v5941, 1.4214138
        %v6006 = vadd.f32 %v5942, 1.4214138
        %v6007 = vadd.f32 %v5943, 1.4214138
        %v6008 = vadd.f32 %v5944, 1.4214138
        %v6009 = vadd.f32 %v5945, 1.4214138
        %v6010 = vadd.f32 %v5946, 1.4214138
        %v6011 = vadd.f32 %v5947, 1.4214138
        %v6012 = vadd.f32 %v5948, 1.4214138
        %v6013 = vadd.f32 %v5949, 1.4214138
        %v6014 = vadd.f32 %v5950, 1.4214138
        %v6015 = vadd.f32 %v5951, 1.4214138
        %v6016 = vadd.f32 %v5952, 1.4214138
        %v6017 = vadd.f32 %v5953, 1.4214138
        %v6018 = vadd.f32 %v5954, 1.4214138
        %v6019 = vadd.f32 %v5955, 1.4214138
        %v6020 = vmul.f32 %v5956, %v5637
        %v6021 = vmul.f32 %v5957, %v5639
        %v6022 = vmul.f32 %v5958, %v5641
        %v6023 = vmul.f32 %v5959, %v5643
        %v6024 = vmul.f32 %v5960, %v5645
        %v6025 = vmul.f32 %v5961, %v5647
        %v6026 = vmul.f32 %v5962, %v5649
        %v6027 = vmul.f32 %v5963, %v5651
        %v6028 = vmul.f32 %v5964, %v5653
        %v6029 = vmul.f32 %v5965, %v5655
        %v6030 = vmul.f32 %v5966, %v5657
        %v6031 = vmul.f32 %v5967, %v5659
        %v6032 = vmul.f32 %v5968, %v5661
        %v6033 = vmul.f32 %v5969, %v5663
        %v6034 = vmul.f32 %v5970, %v5665
        %v6035 = vmul.f32 %v5971, %v5667
        %v6036 = vmul.f32 %v5972, %v5669
        %v6037 = vmul.f32 %v5973, %v5671
        %v6038 = vmul.f32 %v5974, %v5673
        %v6039 = vmul.f32 %v5975, %v5675
        %v6040 = vmul.f32 %v5976, %v5677
        %v6041 = vmul.f32 %v5977, %v5679
        %v6042 = vmul.f32 %v5978, %v5681
        %v6043 = vmul.f32 %v5979, %v5683
        %v6044 = vmul.f32 %v5980, %v5685
        %v6045 = vmul.f32 %v5981, %v5687
        %v6046 = vmul.f32 %v5982, %v5689
        %v6047 = vmul.f32 %v5983, %v5691
        %v6048 = vmul.f32 %v5984, %v5693
        %v6049 = vmul.f32 %v5985, %v5695
        %v6050 = vmul.f32 %v5986, %v5697
        %v6051 = vmul.f32 %v5987, %v5699
        %v6052 = vmul.f32 %v5988, %v5701
        %v6053 = vmul.f32 %v5989, %v5703
        %v6054 = vmul.f32 %v5990, %v5705
        %v6055 = vmul.f32 %v5991, %v5707
        %v6056 = vmul.f32 %v5992, %v5709
        %v6057 = vmul.f32 %v5993, %v5711
        %v6058 = vmul.f32 %v5994, %v5713
        %v6059 = vmul.f32 %v5995, %v5715
        %v6060 = vmul.f32 %v5996, %v5717
        %v6061 = vmul.f32 %v5997, %v5719
        %v6062 = vmul.f32 %v5998, %v5721
        %v6063 = vmul.f32 %v5999, %v5723
        %v6064 = vmul.f32 %v6000, %v5725
        %v6065 = vmul.f32 %v6001, %v5727
        %v6066 = vmul.f32 %v6002, %v5729
        %v6067 = vmul.f32 %v6003, %v5731
        %v6068 = vmul.f32 %v6004, %v5733
        %v6069 = vmul.f32 %v6005, %v5735
        %v6070 = vmul.f32 %v6006, %v5737
        %v6071 = vmul.f32 %v6007, %v5739
        %v6072 = vmul.f32 %v6008, %v5741
        %v6073 = vmul.f32 %v6009, %v5743
        %v6074 = vmul.f32 %v6010, %v5745
        %v6075 = vmul.f32 %v6011, %v5747
        %v6076 = vmul.f32 %v6012, %v5749
        %v6077 = vmul.f32 %v6013, %v5751
        %v6078 = vmul.f32 %v6014, %v5753
        %v6079 = vmul.f32 %v6015, %v5755
        %v6080 = vmul.f32 %v6016, %v5757
        %v6081 = vmul.f32 %v6017, %v5759
        %v6082 = vmul.f32 %v6018, %v5761
        %v6083 = vmul.f32 %v6019, %v5763
        %v6084 = vadd.f32 %v6020, -0.28449672
        %v6085 = vadd.f32 %v6021, -0.28449672
        %v6086 = vadd.f32 %v6022, -0.28449672
        %v6087 = vadd.f32 %v6023, -0.28449672
        %v6088 = vadd.f32 %v6024, -0.28449672
        %v6089 = vadd.f32 %v6025, -0.28449672
        %v6090 = vadd.f32 %v6026, -0.28449672
        %v6091 = vadd.f32 %v6027, -0.28449672
        %v6092 = vadd.f32 %v6028, -0.28449672
        %v6093 = vadd.f32 %v6029, -0.28449672
        %v6094 = vadd.f32 %v6030, -0.28449672
        %v6095 = vadd.f32 %v6031, -0.28449672
        %v6096 = vadd.f32 %v6032, -0.28449672
        %v6097 = vadd.f32 %v6033, -0.28449672
        %v6098 = vadd.f32 %v6034, -0.28449672
        %v6099 = vadd.f32 %v6035, -0.28449672
        %v6100 = vadd.f32 %v6036, -0.28449672
        %v6101 = vadd.f32 %v6037, -0.28449672
        %v6102 = vadd.f32 %v6038, -0.28449672
        %v6103 = vadd.f32 %v6039, -0.28449672
        %v6104 = vadd.f32 %v6040, -0.28449672
        %v6105 = vadd.f32 %v6041, -0.28449672
        %v6106 = vadd.f32 %v6042, -0.28449672
        %v6107 = vadd.f32 %v6043, -0.28449672
        %v6108 = vadd.f32 %v6044, -0.28449672
        %v6109 = vadd.f32 %v6045, -0.28449672
        %v6110 = vadd.f32 %v6046, -0.28449672
        %v6111 = vadd.f32 %v6047, -0.28449672
        %v6112 = vadd.f32 %v6048, -0.28449672
        %v6113 = vadd.f32 %v6049, -0.28449672
        %v6114 = vadd.f32 %v6050, -0.28449672
        %v6115 = vadd.f32 %v6051, -0.28449672
        %v6116 = vadd.f32 %v6052, -0.28449672
        %v6117 = vadd.f32 %v6053, -0.28449672
        %v6118 = vadd.f32 %v6054, -0.28449672
        %v6119 = vadd.f32 %v6055, -0.28449672
        %v6120 = vadd.f32 %v6056, -0.28449672
        %v6121 = vadd.f32 %v6057, -0.28449672
        %v6122 = vadd.f32 %v6058, -0.28449672
        %v6123 = vadd.f32 %v6059, -0.28449672
        %v6124 = vadd.f32 %v6060, -0.28449672
        %v6125 = vadd.f32 %v6061, -0.28449672
        %v6126 = vadd.f32 %v6062, -0.28449672
        %v6127 = vadd.f32 %v6063, -0.28449672
        %v6128 = vadd.f32 %v6064, -0.28449672
        %v6129 = vadd.f32 %v6065, -0.28449672
        %v6130 = vadd.f32 %v6066, -0.28449672
        %v6131 = vadd.f32 %v6067, -0.28449672
        %v6132 = vadd.f32 %v6068, -0.28449672
        %v6133 = vadd.f32 %v6069, -0.28449672
        %v6134 = vadd.f32 %v6070, -0.28449672
        %v6135 = vadd.f32 %v6071, -0.28449672
        %v6136 = vadd.f32 %v6072, -0.28449672
        %v6137 = vadd.f32 %v6073, -0.28449672
        %v6138 = vadd.f32 %v6074, -0.28449672
        %v6139 = vadd.f32 %v6075, -0.28449672
        %v6140 = vadd.f32 %v6076, -0.28449672
        %v6141 = vadd.f32 %v6077, -0.28449672
        %v6142 = vadd.f32 %v6078, -0.28449672
        %v6143 = vadd.f32 %v6079, -0.28449672
        %v6144 = vadd.f32 %v6080, -0.28449672
        %v6145 = vadd.f32 %v6081, -0.28449672
        %v6146 = vadd.f32 %v6082, -0.28449672
        %v6147 = vadd.f32 %v6083, -0.28449672
        %v6148 = vmul.f32 %v6084, %v5637
        %v6149 = vmul.f32 %v6085, %v5639
        %v6150 = vmul.f32 %v6086, %v5641
        %v6151 = vmul.f32 %v6087, %v5643
        %v6152 = vmul.f32 %v6088, %v5645
        %v6153 = vmul.f32 %v6089, %v5647
        %v6154 = vmul.f32 %v6090, %v5649
        %v6155 = vmul.f32 %v6091, %v5651
        %v6156 = vmul.f32 %v6092, %v5653
        %v6157 = vmul.f32 %v6093, %v5655
        %v6158 = vmul.f32 %v6094, %v5657
        %v6159 = vmul.f32 %v6095, %v5659
        %v6160 = vmul.f32 %v6096, %v5661
        %v6161 = vmul.f32 %v6097, %v5663
        %v6162 = vmul.f32 %v6098, %v5665
        %v6163 = vmul.f32 %v6099, %v5667
        %v6164 = vmul.f32 %v6100, %v5669
        %v6165 = vmul.f32 %v6101, %v5671
        %v6166 = vmul.f32 %v6102, %v5673
        %v6167 = vmul.f32 %v6103, %v5675
        %v6168 = vmul.f32 %v6104, %v5677
        %v6169 = vmul.f32 %v6105, %v5679
        %v6170 = vmul.f32 %v6106, %v5681
        %v6171 = vmul.f32 %v6107, %v5683
        %v6172 = vmul.f32 %v6108, %v5685
        %v6173 = vmul.f32 %v6109, %v5687
        %v6174 = vmul.f32 %v6110, %v5689
        %v6175 = vmul.f32 %v6111, %v5691
        %v6176 = vmul.f32 %v6112, %v5693
        %v6177 = vmul.f32 %v6113, %v5695
        %v6178 = vmul.f32 %v6114, %v5697
        %v6179 = vmul.f32 %v6115, %v5699
        %v6180 = vmul.f32 %v6116, %v5701
        %v6181 = vmul.f32 %v6117, %v5703
        %v6182 = vmul.f32 %v6118, %v5705
        %v6183 = vmul.f32 %v6119, %v5707
        %v6184 = vmul.f32 %v6120, %v5709
        %v6185 = vmul.f32 %v6121, %v5711
        %v6186 = vmul.f32 %v6122, %v5713
        %v6187 = vmul.f32 %v6123, %v5715
        %v6188 = vmul.f32 %v6124, %v5717
        %v6189 = vmul.f32 %v6125, %v5719
        %v6190 = vmul.f32 %v6126, %v5721
        %v6191 = vmul.f32 %v6127, %v5723
        %v6192 = vmul.f32 %v6128, %v5725
        %v6193 = vmul.f32 %v6129, %v5727
        %v6194 = vmul.f32 %v6130, %v5729
        %v6195 = vmul.f32 %v6131, %v5731
        %v6196 = vmul.f32 %v6132, %v5733
        %v6197 = vmul.f32 %v6133, %v5735
        %v6198 = vmul.f32 %v6134, %v5737
        %v6199 = vmul.f32 %v6135, %v5739
        %v6200 = vmul.f32 %v6136, %v5741
        %v6201 = vmul.f32 %v6137, %v5743
        %v6202 = vmul.f32 %v6138, %v5745
        %v6203 = vmul.f32 %v6139, %v5747
        %v6204 = vmul.f32 %v6140, %v5749
        %v6205 = vmul.f32 %v6141, %v5751
        %v6206 = vmul.f32 %v6142, %v5753
        %v6207 = vmul.f32 %v6143, %v5755
        %v6208 = vmul.f32 %v6144, %v5757
        %v6209 = vmul.f32 %v6145, %v5759
        %v6210 = vmul.f32 %v6146, %v5761
        %v6211 = vmul.f32 %v6147, %v5763
        %v6212 = vadd.f32 %v6148, 0.2548296
        %v6213 = vadd.f32 %v6149, 0.2548296
        %v6214 = vadd.f32 %v6150, 0.2548296
        %v6215 = vadd.f32 %v6151, 0.2548296
        %v6216 = vadd.f32 %v6152, 0.2548296
        %v6217 = vadd.f32 %v6153, 0.2548296
        %v6218 = vadd.f32 %v6154, 0.2548296
        %v6219 = vadd.f32 %v6155, 0.2548296
        %v6220 = vadd.f32 %v6156, 0.2548296
        %v6221 = vadd.f32 %v6157, 0.2548296
        %v6222 = vadd.f32 %v6158, 0.2548296
        %v6223 = vadd.f32 %v6159, 0.2548296
        %v6224 = vadd.f32 %v6160, 0.2548296
        %v6225 = vadd.f32 %v6161, 0.2548296
        %v6226 = vadd.f32 %v6162, 0.2548296
        %v6227 = vadd.f32 %v6163, 0.2548296
        %v6228 = vadd.f32 %v6164, 0.2548296
        %v6229 = vadd.f32 %v6165, 0.2548296
        %v6230 = vadd.f32 %v6166, 0.2548296
        %v6231 = vadd.f32 %v6167, 0.2548296
        %v6232 = vadd.f32 %v6168, 0.2548296
        %v6233 = vadd.f32 %v6169, 0.2548296
        %v6234 = vadd.f32 %v6170, 0.2548296
        %v6235 = vadd.f32 %v6171, 0.2548296
        %v6236 = vadd.f32 %v6172, 0.2548296
        %v6237 = vadd.f32 %v6173, 0.2548296
        %v6238 = vadd.f32 %v6174, 0.2548296
        %v6239 = vadd.f32 %v6175, 0.2548296
        %v6240 = vadd.f32 %v6176, 0.2548296
        %v6241 = vadd.f32 %v6177, 0.2548296
        %v6242 = vadd.f32 %v6178, 0.2548296
        %v6243 = vadd.f32 %v6179, 0.2548296
        %v6244 = vadd.f32 %v6180, 0.2548296
        %v6245 = vadd.f32 %v6181, 0.2548296
        %v6246 = vadd.f32 %v6182, 0.2548296
        %v6247 = vadd.f32 %v6183, 0.2548296
        %v6248 = vadd.f32 %v6184, 0.2548296
        %v6249 = vadd.f32 %v6185, 0.2548296
        %v6250 = vadd.f32 %v6186, 0.2548296
        %v6251 = vadd.f32 %v6187, 0.2548296
        %v6252 = vadd.f32 %v6188, 0.2548296
        %v6253 = vadd.f32 %v6189, 0.2548296
        %v6254 = vadd.f32 %v6190, 0.2548296
        %v6255 = vadd.f32 %v6191, 0.2548296
        %v6256 = vadd.f32 %v6192, 0.2548296
        %v6257 = vadd.f32 %v6193, 0.2548296
        %v6258 = vadd.f32 %v6194, 0.2548296
        %v6259 = vadd.f32 %v6195, 0.2548296
        %v6260 = vadd.f32 %v6196, 0.2548296
        %v6261 = vadd.f32 %v6197, 0.2548296
        %v6262 = vadd.f32 %v6198, 0.2548296
        %v6263 = vadd.f32 %v6199, 0.2548296
        %v6264 = vadd.f32 %v6200, 0.2548296
        %v6265 = vadd.f32 %v6201, 0.2548296
        %v6266 = vadd.f32 %v6202, 0.2548296
        %v6267 = vadd.f32 %v6203, 0.2548296
        %v6268 = vadd.f32 %v6204, 0.2548296
        %v6269 = vadd.f32 %v6205, 0.2548296
        %v6270 = vadd.f32 %v6206, 0.2548296
        %v6271 = vadd.f32 %v6207, 0.2548296
        %v6272 = vadd.f32 %v6208, 0.2548296
        %v6273 = vadd.f32 %v6209, 0.2548296
        %v6274 = vadd.f32 %v6210, 0.2548296
        %v6275 = vadd.f32 %v6211, 0.2548296
        %v6276 = vmul.f32 %v6212, %v5637
        %v6277 = vmul.f32 %v6213, %v5639
        %v6278 = vmul.f32 %v6214, %v5641
        %v6279 = vmul.f32 %v6215, %v5643
        %v6280 = vmul.f32 %v6216, %v5645
        %v6281 = vmul.f32 %v6217, %v5647
        %v6282 = vmul.f32 %v6218, %v5649
        %v6283 = vmul.f32 %v6219, %v5651
        %v6284 = vmul.f32 %v6220, %v5653
        %v6285 = vmul.f32 %v6221, %v5655
        %v6286 = vmul.f32 %v6222, %v5657
        %v6287 = vmul.f32 %v6223, %v5659
        %v6288 = vmul.f32 %v6224, %v5661
        %v6289 = vmul.f32 %v6225, %v5663
        %v6290 = vmul.f32 %v6226, %v5665
        %v6291 = vmul.f32 %v6227, %v5667
        %v6292 = vmul.f32 %v6228, %v5669
        %v6293 = vmul.f32 %v6229, %v5671
        %v6294 = vmul.f32 %v6230, %v5673
        %v6295 = vmul.f32 %v6231, %v5675
        %v6296 = vmul.f32 %v6232, %v5677
        %v6297 = vmul.f32 %v6233, %v5679
        %v6298 = vmul.f32 %v6234, %v5681
        %v6299 = vmul.f32 %v6235, %v5683
        %v6300 = vmul.f32 %v6236, %v5685
        %v6301 = vmul.f32 %v6237, %v5687
        %v6302 = vmul.f32 %v6238, %v5689
        %v6303 = vmul.f32 %v6239, %v5691
        %v6304 = vmul.f32 %v6240, %v5693
        %v6305 = vmul.f32 %v6241, %v5695
        %v6306 = vmul.f32 %v6242, %v5697
        %v6307 = vmul.f32 %v6243, %v5699
        %v6308 = vmul.f32 %v6244, %v5701
        %v6309 = vmul.f32 %v6245, %v5703
        %v6310 = vmul.f32 %v6246, %v5705
        %v6311 = vmul.f32 %v6247, %v5707
        %v6312 = vmul.f32 %v6248, %v5709
        %v6313 = vmul.f32 %v6249, %v5711
        %v6314 = vmul.f32 %v6250, %v5713
        %v6315 = vmul.f32 %v6251, %v5715
        %v6316 = vmul.f32 %v6252, %v5717
        %v6317 = vmul.f32 %v6253, %v5719
        %v6318 = vmul.f32 %v6254, %v5721
        %v6319 = vmul.f32 %v6255, %v5723
        %v6320 = vmul.f32 %v6256, %v5725
        %v6321 = vmul.f32 %v6257, %v5727
        %v6322 = vmul.f32 %v6258, %v5729
        %v6323 = vmul.f32 %v6259, %v5731
        %v6324 = vmul.f32 %v6260, %v5733
        %v6325 = vmul.f32 %v6261, %v5735
        %v6326 = vmul.f32 %v6262, %v5737
        %v6327 = vmul.f32 %v6263, %v5739
        %v6328 = vmul.f32 %v6264, %v5741
        %v6329 = vmul.f32 %v6265, %v5743
        %v6330 = vmul.f32 %v6266, %v5745
        %v6331 = vmul.f32 %v6267, %v5747
        %v6332 = vmul.f32 %v6268, %v5749
        %v6333 = vmul.f32 %v6269, %v5751
        %v6334 = vmul.f32 %v6270, %v5753
        %v6335 = vmul.f32 %v6271, %v5755
        %v6336 = vmul.f32 %v6272, %v5757
        %v6337 = vmul.f32 %v6273, %v5759
        %v6338 = vmul.f32 %v6274, %v5761
        %v6339 = vmul.f32 %v6275, %v5763
        %v6340 = vsub.f32 0.0, %v5444
        %v6341 = vsub.f32 0.0, %v5445
        %v6342 = vsub.f32 0.0, %v5446
        %v6343 = vsub.f32 0.0, %v5447
        %v6344 = vsub.f32 0.0, %v5448
        %v6345 = vsub.f32 0.0, %v5449
        %v6346 = vsub.f32 0.0, %v5450
        %v6347 = vsub.f32 0.0, %v5451
        %v6348 = vsub.f32 0.0, %v5452
        %v6349 = vsub.f32 0.0, %v5453
        %v6350 = vsub.f32 0.0, %v5454
        %v6351 = vsub.f32 0.0, %v5455
        %v6352 = vsub.f32 0.0, %v5456
        %v6353 = vsub.f32 0.0, %v5457
        %v6354 = vsub.f32 0.0, %v5458
        %v6355 = vsub.f32 0.0, %v5459
        %v6356 = vsub.f32 0.0, %v5460
        %v6357 = vsub.f32 0.0, %v5461
        %v6358 = vsub.f32 0.0, %v5462
        %v6359 = vsub.f32 0.0, %v5463
        %v6360 = vsub.f32 0.0, %v5464
        %v6361 = vsub.f32 0.0, %v5465
        %v6362 = vsub.f32 0.0, %v5466
        %v6363 = vsub.f32 0.0, %v5467
        %v6364 = vsub.f32 0.0, %v5468
        %v6365 = vsub.f32 0.0, %v5469
        %v6366 = vsub.f32 0.0, %v5470
        %v6367 = vsub.f32 0.0, %v5471
        %v6368 = vsub.f32 0.0, %v5472
        %v6369 = vsub.f32 0.0, %v5473
        %v6370 = vsub.f32 0.0, %v5474
        %v6371 = vsub.f32 0.0, %v5475
        %v6372 = vsub.f32 0.0, %v5476
        %v6373 = vsub.f32 0.0, %v5477
        %v6374 = vsub.f32 0.0, %v5478
        %v6375 = vsub.f32 0.0, %v5479
        %v6376 = vsub.f32 0.0, %v5480
        %v6377 = vsub.f32 0.0, %v5481
        %v6378 = vsub.f32 0.0, %v5482
        %v6379 = vsub.f32 0.0, %v5483
        %v6380 = vsub.f32 0.0, %v5484
        %v6381 = vsub.f32 0.0, %v5485
        %v6382 = vsub.f32 0.0, %v5486
        %v6383 = vsub.f32 0.0, %v5487
        %v6384 = vsub.f32 0.0, %v5488
        %v6385 = vsub.f32 0.0, %v5489
        %v6386 = vsub.f32 0.0, %v5490
        %v6387 = vsub.f32 0.0, %v5491
        %v6388 = vsub.f32 0.0, %v5492
        %v6389 = vsub.f32 0.0, %v5493
        %v6390 = vsub.f32 0.0, %v5494
        %v6391 = vsub.f32 0.0, %v5495
        %v6392 = vsub.f32 0.0, %v5496
        %v6393 = vsub.f32 0.0, %v5497
        %v6394 = vsub.f32 0.0, %v5498
        %v6395 = vsub.f32 0.0, %v5499
        %v6396 = vsub.f32 0.0, %v5500
        %v6397 = vsub.f32 0.0, %v5501
        %v6398 = vsub.f32 0.0, %v5502
        %v6399 = vsub.f32 0.0, %v5503
        %v6400 = vsub.f32 0.0, %v5504
        %v6401 = vsub.f32 0.0, %v5505
        %v6402 = vsub.f32 0.0, %v5506
        %v6403 = vsub.f32 0.0, %v5507
        %v6404 = vmul.f32 %v6340, %v5444
        %v6405 = vmul.f32 %v6341, %v5445
        %v6406 = vmul.f32 %v6342, %v5446
        %v6407 = vmul.f32 %v6343, %v5447
        %v6408 = vmul.f32 %v6344, %v5448
        %v6409 = vmul.f32 %v6345, %v5449
        %v6410 = vmul.f32 %v6346, %v5450
        %v6411 = vmul.f32 %v6347, %v5451
        %v6412 = vmul.f32 %v6348, %v5452
        %v6413 = vmul.f32 %v6349, %v5453
        %v6414 = vmul.f32 %v6350, %v5454
        %v6415 = vmul.f32 %v6351, %v5455
        %v6416 = vmul.f32 %v6352, %v5456
        %v6417 = vmul.f32 %v6353, %v5457
        %v6418 = vmul.f32 %v6354, %v5458
        %v6419 = vmul.f32 %v6355, %v5459
        %v6420 = vmul.f32 %v6356, %v5460
        %v6421 = vmul.f32 %v6357, %v5461
        %v6422 = vmul.f32 %v6358, %v5462
        %v6423 = vmul.f32 %v6359, %v5463
        %v6424 = vmul.f32 %v6360, %v5464
        %v6425 = vmul.f32 %v6361, %v5465
        %v6426 = vmul.f32 %v6362, %v5466
        %v6427 = vmul.f32 %v6363, %v5467
        %v6428 = vmul.f32 %v6364, %v5468
        %v6429 = vmul.f32 %v6365, %v5469
        %v6430 = vmul.f32 %v6366, %v5470
        %v6431 = vmul.f32 %v6367, %v5471
        %v6432 = vmul.f32 %v6368, %v5472
        %v6433 = vmul.f32 %v6369, %v5473
        %v6434 = vmul.f32 %v6370, %v5474
        %v6435 = vmul.f32 %v6371, %v5475
        %v6436 = vmul.f32 %v6372, %v5476
        %v6437 = vmul.f32 %v6373, %v5477
        %v6438 = vmul.f32 %v6374, %v5478
        %v6439 = vmul.f32 %v6375, %v5479
        %v6440 = vmul.f32 %v6376, %v5480
        %v6441 = vmul.f32 %v6377, %v5481
        %v6442 = vmul.f32 %v6378, %v5482
        %v6443 = vmul.f32 %v6379, %v5483
        %v6444 = vmul.f32 %v6380, %v5484
        %v6445 = vmul.f32 %v6381, %v5485
        %v6446 = vmul.f32 %v6382, %v5486
        %v6447 = vmul.f32 %v6383, %v5487
        %v6448 = vmul.f32 %v6384, %v5488
        %v6449 = vmul.f32 %v6385, %v5489
        %v6450 = vmul.f32 %v6386, %v5490
        %v6451 = vmul.f32 %v6387, %v5491
        %v6452 = vmul.f32 %v6388, %v5492
        %v6453 = vmul.f32 %v6389, %v5493
        %v6454 = vmul.f32 %v6390, %v5494
        %v6455 = vmul.f32 %v6391, %v5495
        %v6456 = vmul.f32 %v6392, %v5496
        %v6457 = vmul.f32 %v6393, %v5497
        %v6458 = vmul.f32 %v6394, %v5498
        %v6459 = vmul.f32 %v6395, %v5499
        %v6460 = vmul.f32 %v6396, %v5500
        %v6461 = vmul.f32 %v6397, %v5501
        %v6462 = vmul.f32 %v6398, %v5502
        %v6463 = vmul.f32 %v6399, %v5503
        %v6464 = vmul.f32 %v6400, %v5504
        %v6465 = vmul.f32 %v6401, %v5505
        %v6466 = vmul.f32 %v6402, %v5506
        %v6467 = vmul.f32 %v6403, %v5507
        %v6468 = vmul.f32 %v6404, 1.442695
        %v6469 = vpow.pop %v6468
        %v6470 = vmul.f32 %v6405, 1.442695
        %v6471 = vpow.pop %v6470
        %v6472 = vmul.f32 %v6406, 1.442695
        %v6473 = vpow.pop %v6472
        %v6474 = vmul.f32 %v6407, 1.442695
        %v6475 = vpow.pop %v6474
        %v6476 = vmul.f32 %v6408, 1.442695
        %v6477 = vpow.pop %v6476
        %v6478 = vmul.f32 %v6409, 1.442695
        %v6479 = vpow.pop %v6478
        %v6480 = vmul.f32 %v6410, 1.442695
        %v6481 = vpow.pop %v6480
        %v6482 = vmul.f32 %v6411, 1.442695
        %v6483 = vpow.pop %v6482
        %v6484 = vmul.f32 %v6412, 1.442695
        %v6485 = vpow.pop %v6484
        %v6486 = vmul.f32 %v6413, 1.442695
        %v6487 = vpow.pop %v6486
        %v6488 = vmul.f32 %v6414, 1.442695
        %v6489 = vpow.pop %v6488
        %v6490 = vmul.f32 %v6415, 1.442695
        %v6491 = vpow.pop %v6490
        %v6492 = vmul.f32 %v6416, 1.442695
        %v6493 = vpow.pop %v6492
        %v6494 = vmul.f32 %v6417, 1.442695
        %v6495 = vpow.pop %v6494
        %v6496 = vmul.f32 %v6418, 1.442695
        %v6497 = vpow.pop %v6496
        %v6498 = vmul.f32 %v6419, 1.442695
        %v6499 = vpow.pop %v6498
        %v6500 = vmul.f32 %v6420, 1.442695
        %v6501 = vpow.pop %v6500
        %v6502 = vmul.f32 %v6421, 1.442695
        %v6503 = vpow.pop %v6502
        %v6504 = vmul.f32 %v6422, 1.442695
        %v6505 = vpow.pop %v6504
        %v6506 = vmul.f32 %v6423, 1.442695
        %v6507 = vpow.pop %v6506
        %v6508 = vmul.f32 %v6424, 1.442695
        %v6509 = vpow.pop %v6508
        %v6510 = vmul.f32 %v6425, 1.442695
        %v6511 = vpow.pop %v6510
        %v6512 = vmul.f32 %v6426, 1.442695
        %v6513 = vpow.pop %v6512
        %v6514 = vmul.f32 %v6427, 1.442695
        %v6515 = vpow.pop %v6514
        %v6516 = vmul.f32 %v6428, 1.442695
        %v6517 = vpow.pop %v6516
        %v6518 = vmul.f32 %v6429, 1.442695
        %v6519 = vpow.pop %v6518
        %v6520 = vmul.f32 %v6430, 1.442695
        %v6521 = vpow.pop %v6520
        %v6522 = vmul.f32 %v6431, 1.442695
        %v6523 = vpow.pop %v6522
        %v6524 = vmul.f32 %v6432, 1.442695
        %v6525 = vpow.pop %v6524
        %v6526 = vmul.f32 %v6433, 1.442695
        %v6527 = vpow.pop %v6526
        %v6528 = vmul.f32 %v6434, 1.442695
        %v6529 = vpow.pop %v6528
        %v6530 = vmul.f32 %v6435, 1.442695
        %v6531 = vpow.pop %v6530
        %v6532 = vmul.f32 %v6436, 1.442695
        %v6533 = vpow.pop %v6532
        %v6534 = vmul.f32 %v6437, 1.442695
        %v6535 = vpow.pop %v6534
        %v6536 = vmul.f32 %v6438, 1.442695
        %v6537 = vpow.pop %v6536
        %v6538 = vmul.f32 %v6439, 1.442695
        %v6539 = vpow.pop %v6538
        %v6540 = vmul.f32 %v6440, 1.442695
        %v6541 = vpow.pop %v6540
        %v6542 = vmul.f32 %v6441, 1.442695
        %v6543 = vpow.pop %v6542
        %v6544 = vmul.f32 %v6442, 1.442695
        %v6545 = vpow.pop %v6544
        %v6546 = vmul.f32 %v6443, 1.442695
        %v6547 = vpow.pop %v6546
        %v6548 = vmul.f32 %v6444, 1.442695
        %v6549 = vpow.pop %v6548
        %v6550 = vmul.f32 %v6445, 1.442695
        %v6551 = vpow.pop %v6550
        %v6552 = vmul.f32 %v6446, 1.442695
        %v6553 = vpow.pop %v6552
        %v6554 = vmul.f32 %v6447, 1.442695
        %v6555 = vpow.pop %v6554
        %v6556 = vmul.f32 %v6448, 1.442695
        %v6557 = vpow.pop %v6556
        %v6558 = vmul.f32 %v6449, 1.442695
        %v6559 = vpow.pop %v6558
        %v6560 = vmul.f32 %v6450, 1.442695
        %v6561 = vpow.pop %v6560
        %v6562 = vmul.f32 %v6451, 1.442695
        %v6563 = vpow.pop %v6562
        %v6564 = vmul.f32 %v6452, 1.442695
        %v6565 = vpow.pop %v6564
        %v6566 = vmul.f32 %v6453, 1.442695
        %v6567 = vpow.pop %v6566
        %v6568 = vmul.f32 %v6454, 1.442695
        %v6569 = vpow.pop %v6568
        %v6570 = vmul.f32 %v6455, 1.442695
        %v6571 = vpow.pop %v6570
        %v6572 = vmul.f32 %v6456, 1.442695
        %v6573 = vpow.pop %v6572
        %v6574 = vmul.f32 %v6457, 1.442695
        %v6575 = vpow.pop %v6574
        %v6576 = vmul.f32 %v6458, 1.442695
        %v6577 = vpow.pop %v6576
        %v6578 = vmul.f32 %v6459, 1.442695
        %v6579 = vpow.pop %v6578
        %v6580 = vmul.f32 %v6460, 1.442695
        %v6581 = vpow.pop %v6580
        %v6582 = vmul.f32 %v6461, 1.442695
        %v6583 = vpow.pop %v6582
        %v6584 = vmul.f32 %v6462, 1.442695
        %v6585 = vpow.pop %v6584
        %v6586 = vmul.f32 %v6463, 1.442695
        %v6587 = vpow.pop %v6586
        %v6588 = vmul.f32 %v6464, 1.442695
        %v6589 = vpow.pop %v6588
        %v6590 = vmul.f32 %v6465, 1.442695
        %v6591 = vpow.pop %v6590
        %v6592 = vmul.f32 %v6466, 1.442695
        %v6593 = vpow.pop %v6592
        %v6594 = vmul.f32 %v6467, 1.442695
        %v6595 = vpow.pop %v6594
        %v6596 = vmul.f32 %v6276, %v6469
        %v6597 = vmul.f32 %v6277, %v6471
        %v6598 = vmul.f32 %v6278, %v6473
        %v6599 = vmul.f32 %v6279, %v6475
        %v6600 = vmul.f32 %v6280, %v6477
        %v6601 = vmul.f32 %v6281, %v6479
        %v6602 = vmul.f32 %v6282, %v6481
        %v6603 = vmul.f32 %v6283, %v6483
        %v6604 = vmul.f32 %v6284, %v6485
        %v6605 = vmul.f32 %v6285, %v6487
        %v6606 = vmul.f32 %v6286, %v6489
        %v6607 = vmul.f32 %v6287, %v6491
        %v6608 = vmul.f32 %v6288, %v6493
        %v6609 = vmul.f32 %v6289, %v6495
        %v6610 = vmul.f32 %v6290, %v6497
        %v6611 = vmul.f32 %v6291, %v6499
        %v6612 = vmul.f32 %v6292, %v6501
        %v6613 = vmul.f32 %v6293, %v6503
        %v6614 = vmul.f32 %v6294, %v6505
        %v6615 = vmul.f32 %v6295, %v6507
        %v6616 = vmul.f32 %v6296, %v6509
        %v6617 = vmul.f32 %v6297, %v6511
        %v6618 = vmul.f32 %v6298, %v6513
        %v6619 = vmul.f32 %v6299, %v6515
        %v6620 = vmul.f32 %v6300, %v6517
        %v6621 = vmul.f32 %v6301, %v6519
        %v6622 = vmul.f32 %v6302, %v6521
        %v6623 = vmul.f32 %v6303, %v6523
        %v6624 = vmul.f32 %v6304, %v6525
        %v6625 = vmul.f32 %v6305, %v6527
        %v6626 = vmul.f32 %v6306, %v6529
        %v6627 = vmul.f32 %v6307, %v6531
        %v6628 = vmul.f32 %v6308, %v6533
        %v6629 = vmul.f32 %v6309, %v6535
        %v6630 = vmul.f32 %v6310, %v6537
        %v6631 = vmul.f32 %v6311, %v6539
        %v6632 = vmul.f32 %v6312, %v6541
        %v6633 = vmul.f32 %v6313, %v6543
        %v6634 = vmul.f32 %v6314, %v6545
        %v6635 = vmul.f32 %v6315, %v6547
        %v6636 = vmul.f32 %v6316, %v6549
        %v6637 = vmul.f32 %v6317, %v6551
        %v6638 = vmul.f32 %v6318, %v6553
        %v6639 = vmul.f32 %v6319, %v6555
        %v6640 = vmul.f32 %v6320, %v6557
        %v6641 = vmul.f32 %v6321, %v6559
        %v6642 = vmul.f32 %v6322, %v6561
        %v6643 = vmul.f32 %v6323, %v6563
        %v6644 = vmul.f32 %v6324, %v6565
        %v6645 = vmul.f32 %v6325, %v6567
        %v6646 = vmul.f32 %v6326, %v6569
        %v6647 = vmul.f32 %v6327, %v6571
        %v6648 = vmul.f32 %v6328, %v6573
        %v6649 = vmul.f32 %v6329, %v6575
        %v6650 = vmul.f32 %v6330, %v6577
        %v6651 = vmul.f32 %v6331, %v6579
        %v6652 = vmul.f32 %v6332, %v6581
        %v6653 = vmul.f32 %v6333, %v6583
        %v6654 = vmul.f32 %v6334, %v6585
        %v6655 = vmul.f32 %v6335, %v6587
        %v6656 = vmul.f32 %v6336, %v6589
        %v6657 = vmul.f32 %v6337, %v6591
        %v6658 = vmul.f32 %v6338, %v6593
        %v6659 = vmul.f32 %v6339, %v6595
        %v6660 = vsub.f32 1.0, %v6596
        %v6661 = vsub.f32 1.0, %v6597
        %v6662 = vsub.f32 1.0, %v6598
        %v6663 = vsub.f32 1.0, %v6599
        %v6664 = vsub.f32 1.0, %v6600
        %v6665 = vsub.f32 1.0, %v6601
        %v6666 = vsub.f32 1.0, %v6602
        %v6667 = vsub.f32 1.0, %v6603
        %v6668 = vsub.f32 1.0, %v6604
        %v6669 = vsub.f32 1.0, %v6605
        %v6670 = vsub.f32 1.0, %v6606
        %v6671 = vsub.f32 1.0, %v6607
        %v6672 = vsub.f32 1.0, %v6608
        %v6673 = vsub.f32 1.0, %v6609
        %v6674 = vsub.f32 1.0, %v6610
        %v6675 = vsub.f32 1.0, %v6611
        %v6676 = vsub.f32 1.0, %v6612
        %v6677 = vsub.f32 1.0, %v6613
        %v6678 = vsub.f32 1.0, %v6614
        %v6679 = vsub.f32 1.0, %v6615
        %v6680 = vsub.f32 1.0, %v6616
        %v6681 = vsub.f32 1.0, %v6617
        %v6682 = vsub.f32 1.0, %v6618
        %v6683 = vsub.f32 1.0, %v6619
        %v6684 = vsub.f32 1.0, %v6620
        %v6685 = vsub.f32 1.0, %v6621
        %v6686 = vsub.f32 1.0, %v6622
        %v6687 = vsub.f32 1.0, %v6623
        %v6688 = vsub.f32 1.0, %v6624
        %v6689 = vsub.f32 1.0, %v6625
        %v6690 = vsub.f32 1.0, %v6626
        %v6691 = vsub.f32 1.0, %v6627
        %v6692 = vsub.f32 1.0, %v6628
        %v6693 = vsub.f32 1.0, %v6629
        %v6694 = vsub.f32 1.0, %v6630
        %v6695 = vsub.f32 1.0, %v6631
        %v6696 = vsub.f32 1.0, %v6632
        %v6697 = vsub.f32 1.0, %v6633
        %v6698 = vsub.f32 1.0, %v6634
        %v6699 = vsub.f32 1.0, %v6635
        %v6700 = vsub.f32 1.0, %v6636
        %v6701 = vsub.f32 1.0, %v6637
        %v6702 = vsub.f32 1.0, %v6638
        %v6703 = vsub.f32 1.0, %v6639
        %v6704 = vsub.f32 1.0, %v6640
        %v6705 = vsub.f32 1.0, %v6641
        %v6706 = vsub.f32 1.0, %v6642
        %v6707 = vsub.f32 1.0, %v6643
        %v6708 = vsub.f32 1.0, %v6644
        %v6709 = vsub.f32 1.0, %v6645
        %v6710 = vsub.f32 1.0, %v6646
        %v6711 = vsub.f32 1.0, %v6647
        %v6712 = vsub.f32 1.0, %v6648
        %v6713 = vsub.f32 1.0, %v6649
        %v6714 = vsub.f32 1.0, %v6650
        %v6715 = vsub.f32 1.0, %v6651
        %v6716 = vsub.f32 1.0, %v6652
        %v6717 = vsub.f32 1.0, %v6653
        %v6718 = vsub.f32 1.0, %v6654
        %v6719 = vsub.f32 1.0, %v6655
        %v6720 = vsub.f32 1.0, %v6656
        %v6721 = vsub.f32 1.0, %v6657
        %v6722 = vsub.f32 1.0, %v6658
        %v6723 = vsub.f32 1.0, %v6659
        %vm6724 = vcmp.ge.f32.partialorder %v5380, 0.0
        %vm6725 = vcmp.ge.f32.partialorder %v5381, 0.0
        %vm6726 = vcmp.ge.f32.partialorder %v5382, 0.0
        %vm6727 = vcmp.ge.f32.partialorder %v5383, 0.0
        %vm6728 = vcmp.ge.f32.partialorder %v5384, 0.0
        %vm6729 = vcmp.ge.f32.partialorder %v5385, 0.0
        %vm6730 = vcmp.ge.f32.partialorder %v5386, 0.0
        %vm6731 = vcmp.ge.f32.partialorder %v5387, 0.0
        %vm6732 = vcmp.ge.f32.partialorder %v5388, 0.0
        %vm6733 = vcmp.ge.f32.partialorder %v5389, 0.0
        %vm6734 = vcmp.ge.f32.partialorder %v5390, 0.0
        %vm6735 = vcmp.ge.f32.partialorder %v5391, 0.0
        %vm6736 = vcmp.ge.f32.partialorder %v5392, 0.0
        %vm6737 = vcmp.ge.f32.partialorder %v5393, 0.0
        %vm6738 = vcmp.ge.f32.partialorder %v5394, 0.0
        %vm6739 = vcmp.ge.f32.partialorder %v5395, 0.0
        %vm6740 = vcmp.ge.f32.partialorder %v5396, 0.0
        %vm6741 = vcmp.ge.f32.partialorder %v5397, 0.0
        %vm6742 = vcmp.ge.f32.partialorder %v5398, 0.0
        %vm6743 = vcmp.ge.f32.partialorder %v5399, 0.0
        %vm6744 = vcmp.ge.f32.partialorder %v5400, 0.0
        %vm6745 = vcmp.ge.f32.partialorder %v5401, 0.0
        %vm6746 = vcmp.ge.f32.partialorder %v5402, 0.0
        %vm6747 = vcmp.ge.f32.partialorder %v5403, 0.0
        %vm6748 = vcmp.ge.f32.partialorder %v5404, 0.0
        %vm6749 = vcmp.ge.f32.partialorder %v5405, 0.0
        %vm6750 = vcmp.ge.f32.partialorder %v5406, 0.0
        %vm6751 = vcmp.ge.f32.partialorder %v5407, 0.0
        %vm6752 = vcmp.ge.f32.partialorder %v5408, 0.0
        %vm6753 = vcmp.ge.f32.partialorder %v5409, 0.0
        %vm6754 = vcmp.ge.f32.partialorder %v5410, 0.0
        %vm6755 = vcmp.ge.f32.partialorder %v5411, 0.0
        %vm6756 = vcmp.ge.f32.partialorder %v5412, 0.0
        %vm6757 = vcmp.ge.f32.partialorder %v5413, 0.0
        %vm6758 = vcmp.ge.f32.partialorder %v5414, 0.0
        %vm6759 = vcmp.ge.f32.partialorder %v5415, 0.0
        %vm6760 = vcmp.ge.f32.partialorder %v5416, 0.0
        %vm6761 = vcmp.ge.f32.partialorder %v5417, 0.0
        %vm6762 = vcmp.ge.f32.partialorder %v5418, 0.0
        %vm6763 = vcmp.ge.f32.partialorder %v5419, 0.0
        %vm6764 = vcmp.ge.f32.partialorder %v5420, 0.0
        %vm6765 = vcmp.ge.f32.partialorder %v5421, 0.0
        %vm6766 = vcmp.ge.f32.partialorder %v5422, 0.0
        %vm6767 = vcmp.ge.f32.partialorder %v5423, 0.0
        %vm6768 = vcmp.ge.f32.partialorder %v5424, 0.0
        %vm6769 = vcmp.ge.f32.partialorder %v5425, 0.0
        %vm6770 = vcmp.ge.f32.partialorder %v5426, 0.0
        %vm6771 = vcmp.ge.f32.partialorder %v5427, 0.0
        %vm6772 = vcmp.ge.f32.partialorder %v5428, 0.0
        %vm6773 = vcmp.ge.f32.partialorder %v5429, 0.0
        %vm6774 = vcmp.ge.f32.partialorder %v5430, 0.0
        %vm6775 = vcmp.ge.f32.partialorder %v5431, 0.0
        %vm6776 = vcmp.ge.f32.partialorder %v5432, 0.0
        %vm6777 = vcmp.ge.f32.partialorder %v5433, 0.0
        %vm6778 = vcmp.ge.f32.partialorder %v5434, 0.0
        %vm6779 = vcmp.ge.f32.partialorder %v5435, 0.0
        %vm6780 = vcmp.ge.f32.partialorder %v5436, 0.0
        %vm6781 = vcmp.ge.f32.partialorder %v5437, 0.0
        %vm6782 = vcmp.ge.f32.partialorder %v5438, 0.0
        %vm6783 = vcmp.ge.f32.partialorder %v5439, 0.0
        %vm6784 = vcmp.ge.f32.partialorder %v5440, 0.0
        %vm6785 = vcmp.ge.f32.partialorder %v5441, 0.0
        %vm6786 = vcmp.ge.f32.partialorder %v5442, 0.0
        %vm6787 = vcmp.ge.f32.partialorder %v5443, 0.0
        %v6788 = vsub.f32 0.0, %v6660
        %v6789 = vsub.f32 0.0, %v6661
        %v6790 = vsub.f32 0.0, %v6662
        %v6791 = vsub.f32 0.0, %v6663
        %v6792 = vsub.f32 0.0, %v6664
        %v6793 = vsub.f32 0.0, %v6665
        %v6794 = vsub.f32 0.0, %v6666
        %v6795 = vsub.f32 0.0, %v6667
        %v6796 = vsub.f32 0.0, %v6668
        %v6797 = vsub.f32 0.0, %v6669
        %v6798 = vsub.f32 0.0, %v6670
        %v6799 = vsub.f32 0.0, %v6671
        %v6800 = vsub.f32 0.0, %v6672
        %v6801 = vsub.f32 0.0, %v6673
        %v6802 = vsub.f32 0.0, %v6674
        %v6803 = vsub.f32 0.0, %v6675
        %v6804 = vsub.f32 0.0, %v6676
        %v6805 = vsub.f32 0.0, %v6677
        %v6806 = vsub.f32 0.0, %v6678
        %v6807 = vsub.f32 0.0, %v6679
        %v6808 = vsub.f32 0.0, %v6680
        %v6809 = vsub.f32 0.0, %v6681
        %v6810 = vsub.f32 0.0, %v6682
        %v6811 = vsub.f32 0.0, %v6683
        %v6812 = vsub.f32 0.0, %v6684
        %v6813 = vsub.f32 0.0, %v6685
        %v6814 = vsub.f32 0.0, %v6686
        %v6815 = vsub.f32 0.0, %v6687
        %v6816 = vsub.f32 0.0, %v6688
        %v6817 = vsub.f32 0.0, %v6689
        %v6818 = vsub.f32 0.0, %v6690
        %v6819 = vsub.f32 0.0, %v6691
        %v6820 = vsub.f32 0.0, %v6692
        %v6821 = vsub.f32 0.0, %v6693
        %v6822 = vsub.f32 0.0, %v6694
        %v6823 = vsub.f32 0.0, %v6695
        %v6824 = vsub.f32 0.0, %v6696
        %v6825 = vsub.f32 0.0, %v6697
        %v6826 = vsub.f32 0.0, %v6698
        %v6827 = vsub.f32 0.0, %v6699
        %v6828 = vsub.f32 0.0, %v6700
        %v6829 = vsub.f32 0.0, %v6701
        %v6830 = vsub.f32 0.0, %v6702
        %v6831 = vsub.f32 0.0, %v6703
        %v6832 = vsub.f32 0.0, %v6704
        %v6833 = vsub.f32 0.0, %v6705
        %v6834 = vsub.f32 0.0, %v6706
        %v6835 = vsub.f32 0.0, %v6707
        %v6836 = vsub.f32 0.0, %v6708
        %v6837 = vsub.f32 0.0, %v6709
        %v6838 = vsub.f32 0.0, %v6710
        %v6839 = vsub.f32 0.0, %v6711
        %v6840 = vsub.f32 0.0, %v6712
        %v6841 = vsub.f32 0.0, %v6713
        %v6842 = vsub.f32 0.0, %v6714
        %v6843 = vsub.f32 0.0, %v6715
        %v6844 = vsub.f32 0.0, %v6716
        %v6845 = vsub.f32 0.0, %v6717
        %v6846 = vsub.f32 0.0, %v6718
        %v6847 = vsub.f32 0.0, %v6719
        %v6848 = vsub.f32 0.0, %v6720
        %v6849 = vsub.f32 0.0, %v6721
        %v6850 = vsub.f32 0.0, %v6722
        %v6851 = vsub.f32 0.0, %v6723
        %v6852 = vsel %vm6724, %v6660, %v6788
        %v6853 = vsel %vm6725, %v6661, %v6789
        %v6854 = vsel %vm6726, %v6662, %v6790
        %v6855 = vsel %vm6727, %v6663, %v6791
        %v6856 = vsel %vm6728, %v6664, %v6792
        %v6857 = vsel %vm6729, %v6665, %v6793
        %v6858 = vsel %vm6730, %v6666, %v6794
        %v6859 = vsel %vm6731, %v6667, %v6795
        %v6860 = vsel %vm6732, %v6668, %v6796
        %v6861 = vsel %vm6733, %v6669, %v6797
        %v6862 = vsel %vm6734, %v6670, %v6798
        %v6863 = vsel %vm6735, %v6671, %v6799
        %v6864 = vsel %vm6736, %v6672, %v6800
        %v6865 = vsel %vm6737, %v6673, %v6801
        %v6866 = vsel %vm6738, %v6674, %v6802
        %v6867 = vsel %vm6739, %v6675, %v6803
        %v6868 = vsel %vm6740, %v6676, %v6804
        %v6869 = vsel %vm6741, %v6677, %v6805
        %v6870 = vsel %vm6742, %v6678, %v6806
        %v6871 = vsel %vm6743, %v6679, %v6807
        %v6872 = vsel %vm6744, %v6680, %v6808
        %v6873 = vsel %vm6745, %v6681, %v6809
        %v6874 = vsel %vm6746, %v6682, %v6810
        %v6875 = vsel %vm6747, %v6683, %v6811
        %v6876 = vsel %vm6748, %v6684, %v6812
        %v6877 = vsel %vm6749, %v6685, %v6813
        %v6878 = vsel %vm6750, %v6686, %v6814
        %v6879 = vsel %vm6751, %v6687, %v6815
        %v6880 = vsel %vm6752, %v6688, %v6816
        %v6881 = vsel %vm6753, %v6689, %v6817
        %v6882 = vsel %vm6754, %v6690, %v6818
        %v6883 = vsel %vm6755, %v6691, %v6819
        %v6884 = vsel %vm6756, %v6692, %v6820
        %v6885 = vsel %vm6757, %v6693, %v6821
        %v6886 = vsel %vm6758, %v6694, %v6822
        %v6887 = vsel %vm6759, %v6695, %v6823
        %v6888 = vsel %vm6760, %v6696, %v6824
        %v6889 = vsel %vm6761, %v6697, %v6825
        %v6890 = vsel %vm6762, %v6698, %v6826
        %v6891 = vsel %vm6763, %v6699, %v6827
        %v6892 = vsel %vm6764, %v6700, %v6828
        %v6893 = vsel %vm6765, %v6701, %v6829
        %v6894 = vsel %vm6766, %v6702, %v6830
        %v6895 = vsel %vm6767, %v6703, %v6831
        %v6896 = vsel %vm6768, %v6704, %v6832
        %v6897 = vsel %vm6769, %v6705, %v6833
        %v6898 = vsel %vm6770, %v6706, %v6834
        %v6899 = vsel %vm6771, %v6707, %v6835
        %v6900 = vsel %vm6772, %v6708, %v6836
        %v6901 = vsel %vm6773, %v6709, %v6837
        %v6902 = vsel %vm6774, %v6710, %v6838
        %v6903 = vsel %vm6775, %v6711, %v6839
        %v6904 = vsel %vm6776, %v6712, %v6840
        %v6905 = vsel %vm6777, %v6713, %v6841
        %v6906 = vsel %vm6778, %v6714, %v6842
        %v6907 = vsel %vm6779, %v6715, %v6843
        %v6908 = vsel %vm6780, %v6716, %v6844
        %v6909 = vsel %vm6781, %v6717, %v6845
        %v6910 = vsel %vm6782, %v6718, %v6846
        %v6911 = vsel %vm6783, %v6719, %v6847
        %v6912 = vsel %vm6784, %v6720, %v6848
        %v6913 = vsel %vm6785, %v6721, %v6849
        %v6914 = vsel %vm6786, %v6722, %v6850
        %v6915 = vsel %vm6787, %v6723, %v6851
        %v6916 = vadd.f32 %v6852, 1.0
        %v6917 = vadd.f32 %v6853, 1.0
        %v6918 = vadd.f32 %v6854, 1.0
        %v6919 = vadd.f32 %v6855, 1.0
        %v6920 = vadd.f32 %v6856, 1.0
        %v6921 = vadd.f32 %v6857, 1.0
        %v6922 = vadd.f32 %v6858, 1.0
        %v6923 = vadd.f32 %v6859, 1.0
        %v6924 = vadd.f32 %v6860, 1.0
        %v6925 = vadd.f32 %v6861, 1.0
        %v6926 = vadd.f32 %v6862, 1.0
        %v6927 = vadd.f32 %v6863, 1.0
        %v6928 = vadd.f32 %v6864, 1.0
        %v6929 = vadd.f32 %v6865, 1.0
        %v6930 = vadd.f32 %v6866, 1.0
        %v6931 = vadd.f32 %v6867, 1.0
        %v6932 = vadd.f32 %v6868, 1.0
        %v6933 = vadd.f32 %v6869, 1.0
        %v6934 = vadd.f32 %v6870, 1.0
        %v6935 = vadd.f32 %v6871, 1.0
        %v6936 = vadd.f32 %v6872, 1.0
        %v6937 = vadd.f32 %v6873, 1.0
        %v6938 = vadd.f32 %v6874, 1.0
        %v6939 = vadd.f32 %v6875, 1.0
        %v6940 = vadd.f32 %v6876, 1.0
        %v6941 = vadd.f32 %v6877, 1.0
        %v6942 = vadd.f32 %v6878, 1.0
        %v6943 = vadd.f32 %v6879, 1.0
        %v6944 = vadd.f32 %v6880, 1.0
        %v6945 = vadd.f32 %v6881, 1.0
        %v6946 = vadd.f32 %v6882, 1.0
        %v6947 = vadd.f32 %v6883, 1.0
        %v6948 = vadd.f32 %v6884, 1.0
        %v6949 = vadd.f32 %v6885, 1.0
        %v6950 = vadd.f32 %v6886, 1.0
        %v6951 = vadd.f32 %v6887, 1.0
        %v6952 = vadd.f32 %v6888, 1.0
        %v6953 = vadd.f32 %v6889, 1.0
        %v6954 = vadd.f32 %v6890, 1.0
        %v6955 = vadd.f32 %v6891, 1.0
        %v6956 = vadd.f32 %v6892, 1.0
        %v6957 = vadd.f32 %v6893, 1.0
        %v6958 = vadd.f32 %v6894, 1.0
        %v6959 = vadd.f32 %v6895, 1.0
        %v6960 = vadd.f32 %v6896, 1.0
        %v6961 = vadd.f32 %v6897, 1.0
        %v6962 = vadd.f32 %v6898, 1.0
        %v6963 = vadd.f32 %v6899, 1.0
        %v6964 = vadd.f32 %v6900, 1.0
        %v6965 = vadd.f32 %v6901, 1.0
        %v6966 = vadd.f32 %v6902, 1.0
        %v6967 = vadd.f32 %v6903, 1.0
        %v6968 = vadd.f32 %v6904, 1.0
        %v6969 = vadd.f32 %v6905, 1.0
        %v6970 = vadd.f32 %v6906, 1.0
        %v6971 = vadd.f32 %v6907, 1.0
        %v6972 = vadd.f32 %v6908, 1.0
        %v6973 = vadd.f32 %v6909, 1.0
        %v6974 = vadd.f32 %v6910, 1.0
        %v6975 = vadd.f32 %v6911, 1.0
        %v6976 = vadd.f32 %v6912, 1.0
        %v6977 = vadd.f32 %v6913, 1.0
        %v6978 = vadd.f32 %v6914, 1.0
        %v6979 = vadd.f32 %v6915, 1.0
        %v6980 = vmul.f32 %v5316, %v6916
        %v6981 = vmul.f32 %v5317, %v6917
        %v6982 = vmul.f32 %v5318, %v6918
        %v6983 = vmul.f32 %v5319, %v6919
        %v6984 = vmul.f32 %v5320, %v6920
        %v6985 = vmul.f32 %v5321, %v6921
        %v6986 = vmul.f32 %v5322, %v6922
        %v6987 = vmul.f32 %v5323, %v6923
        %v6988 = vmul.f32 %v5324, %v6924
        %v6989 = vmul.f32 %v5325, %v6925
        %v6990 = vmul.f32 %v5326, %v6926
        %v6991 = vmul.f32 %v5327, %v6927
        %v6992 = vmul.f32 %v5328, %v6928
        %v6993 = vmul.f32 %v5329, %v6929
        %v6994 = vmul.f32 %v5330, %v6930
        %v6995 = vmul.f32 %v5331, %v6931
        %v6996 = vmul.f32 %v5332, %v6932
        %v6997 = vmul.f32 %v5333, %v6933
        %v6998 = vmul.f32 %v5334, %v6934
        %v6999 = vmul.f32 %v5335, %v6935
        %v7000 = vmul.f32 %v5336, %v6936
        %v7001 = vmul.f32 %v5337, %v6937
        %v7002 = vmul.f32 %v5338, %v6938
        %v7003 = vmul.f32 %v5339, %v6939
        %v7004 = vmul.f32 %v5340, %v6940
        %v7005 = vmul.f32 %v5341, %v6941
        %v7006 = vmul.f32 %v5342, %v6942
        %v7007 = vmul.f32 %v5343, %v6943
        %v7008 = vmul.f32 %v5344, %v6944
        %v7009 = vmul.f32 %v5345, %v6945
        %v7010 = vmul.f32 %v5346, %v6946
        %v7011 = vmul.f32 %v5347, %v6947
        %v7012 = vmul.f32 %v5348, %v6948
        %v7013 = vmul.f32 %v5349, %v6949
        %v7014 = vmul.f32 %v5350, %v6950
        %v7015 = vmul.f32 %v5351, %v6951
        %v7016 = vmul.f32 %v5352, %v6952
        %v7017 = vmul.f32 %v5353, %v6953
        %v7018 = vmul.f32 %v5354, %v6954
        %v7019 = vmul.f32 %v5355, %v6955
        %v7020 = vmul.f32 %v5356, %v6956
        %v7021 = vmul.f32 %v5357, %v6957
        %v7022 = vmul.f32 %v5358, %v6958
        %v7023 = vmul.f32 %v5359, %v6959
        %v7024 = vmul.f32 %v5360, %v6960
        %v7025 = vmul.f32 %v5361, %v6961
        %v7026 = vmul.f32 %v5362, %v6962
        %v7027 = vmul.f32 %v5363, %v6963
        %v7028 = vmul.f32 %v5364, %v6964
        %v7029 = vmul.f32 %v5365, %v6965
        %v7030 = vmul.f32 %v5366, %v6966
        %v7031 = vmul.f32 %v5367, %v6967
        %v7032 = vmul.f32 %v5368, %v6968
        %v7033 = vmul.f32 %v5369, %v6969
        %v7034 = vmul.f32 %v5370, %v6970
        %v7035 = vmul.f32 %v5371, %v6971
        %v7036 = vmul.f32 %v5372, %v6972
        %v7037 = vmul.f32 %v5373, %v6973
        %v7038 = vmul.f32 %v5374, %v6974
        %v7039 = vmul.f32 %v5375, %v6975
        %v7040 = vmul.f32 %v5376, %v6976
        %v7041 = vmul.f32 %v5377, %v6977
        %v7042 = vmul.f32 %v5378, %v6978
        %v7043 = vmul.f32 %v5379, %v6979
        %v7044 = vpack.c.bf16 %v6984, %v6980
        %v7045 = vpack.c.bf16 %v6985, %v6981
        %v7046 = vpack.c.bf16 %v6986, %v6982
        %v7047 = vpack.c.bf16 %v6987, %v6983
        %v7048 = vpack.c.bf16 %v6992, %v6988
        %v7049 = vpack.c.bf16 %v6993, %v6989
        %v7050 = vpack.c.bf16 %v6994, %v6990
        %v7051 = vpack.c.bf16 %v6995, %v6991
        %v7052 = vpack.c.bf16 %v7000, %v6996
        %v7053 = vpack.c.bf16 %v7001, %v6997
        %v7054 = vpack.c.bf16 %v7002, %v6998
        %v7055 = vpack.c.bf16 %v7003, %v6999
        %v7056 = vpack.c.bf16 %v7008, %v7004
        %v7057 = vpack.c.bf16 %v7009, %v7005
        %v7058 = vpack.c.bf16 %v7010, %v7006
        %v7059 = vpack.c.bf16 %v7011, %v7007
        %v7060 = vpack.c.bf16 %v7016, %v7012
        %v7061 = vpack.c.bf16 %v7017, %v7013
        %v7062 = vpack.c.bf16 %v7018, %v7014
        %v7063 = vpack.c.bf16 %v7019, %v7015
        %v7064 = vpack.c.bf16 %v7024, %v7020
        %v7065 = vpack.c.bf16 %v7025, %v7021
        %v7066 = vpack.c.bf16 %v7026, %v7022
        %v7067 = vpack.c.bf16 %v7027, %v7023
        %v7068 = vpack.c.bf16 %v7032, %v7028
        %v7069 = vpack.c.bf16 %v7033, %v7029
        %v7070 = vpack.c.bf16 %v7034, %v7030
        %v7071 = vpack.c.bf16 %v7035, %v7031
        %v7072 = vpack.c.bf16 %v7040, %v7036
        %v7073 = vpack.c.bf16 %v7041, %v7037
        %v7074 = vpack.c.bf16 %v7042, %v7038
        %v7075 = vpack.c.bf16 %v7043, %v7039
        %v7076 = vld [vmem:[#allocation16] sm:$0xff]
        %v7077 = vld [vmem:[#allocation16 + $0x8] sm:$0xff]
        %v7078 = vld [vmem:[#allocation16 + $0x10] sm:$0xff]
        %v7079 = vld [vmem:[#allocation16 + $0x18] sm:$0xff]
        %v7080 = vld [vmem:[#allocation16 + $0x20] sm:$0xff]
        %v7081 = vld [vmem:[#allocation16 + $0x28] sm:$0xff]
        %v7082 = vld [vmem:[#allocation16 + $0x30] sm:$0xff]
        %v7083 = vld [vmem:[#allocation16 + $0x38] sm:$0xff]
        %v7084 = vld [vmem:[#allocation16 + $0x40] sm:$0xff]
        %v7085 = vld [vmem:[#allocation16 + $0x48] sm:$0xff]
        %v7086 = vld [vmem:[#allocation16 + $0x50] sm:$0xff]
        %v7087 = vld [vmem:[#allocation16 + $0x58] sm:$0xff]
        %v7088 = vld [vmem:[#allocation16 + $0x60] sm:$0xff]
        %v7089 = vld [vmem:[#allocation16 + $0x68] sm:$0xff]
        %v7090 = vld [vmem:[#allocation16 + $0x70] sm:$0xff]
        %v7091 = vld [vmem:[#allocation16 + $0x78] sm:$0xff]
        %v7092 = vld [vmem:[#allocation16 + $0x80] sm:$0xff]
        %v7093 = vld [vmem:[#allocation16 + $0x88] sm:$0xff]
        %v7094 = vld [vmem:[#allocation16 + $0x90] sm:$0xff]
        %v7095 = vld [vmem:[#allocation16 + $0x98] sm:$0xff]
        %v7096 = vld [vmem:[#allocation16 + $0xa0] sm:$0xff]
        %v7097 = vld [vmem:[#allocation16 + $0xa8] sm:$0xff]
        %v7098 = vld [vmem:[#allocation16 + $0xb0] sm:$0xff]
        %v7099 = vld [vmem:[#allocation16 + $0xb8] sm:$0xff]
        %v7100 = vld [vmem:[#allocation16 + $0xc0] sm:$0xff]
        %v7101 = vld [vmem:[#allocation16 + $0xc8] sm:$0xff]
        %v7102 = vld [vmem:[#allocation16 + $0xd0] sm:$0xff]
        %v7103 = vld [vmem:[#allocation16 + $0xd8] sm:$0xff]
        %v7104 = vld [vmem:[#allocation16 + $0xe0] sm:$0xff]
        %v7105 = vld [vmem:[#allocation16 + $0xe8] sm:$0xff]
        %v7106 = vld [vmem:[#allocation16 + $0xf0] sm:$0xff]
        %v7107 = vld [vmem:[#allocation16 + $0xf8] sm:$0xff]
        %v7108 = vld [vmem:[#allocation16 + $0x100] sm:$0xff]
        %v7109 = vld [vmem:[#allocation16 + $0x108] sm:$0xff]
        %v7110 = vld [vmem:[#allocation16 + $0x110] sm:$0xff]
        %v7111 = vld [vmem:[#allocation16 + $0x118] sm:$0xff]
        %v7112 = vld [vmem:[#allocation16 + $0x120] sm:$0xff]
        %v7113 = vld [vmem:[#allocation16 + $0x128] sm:$0xff]
        %v7114 = vld [vmem:[#allocation16 + $0x130] sm:$0xff]
        %v7115 = vld [vmem:[#allocation16 + $0x138] sm:$0xff]
        %v7116 = vld [vmem:[#allocation16 + $0x140] sm:$0xff]
        %v7117 = vld [vmem:[#allocation16 + $0x148] sm:$0xff]
        %v7118 = vld [vmem:[#allocation16 + $0x150] sm:$0xff]
        %v7119 = vld [vmem:[#allocation16 + $0x158] sm:$0xff]
        %v7120 = vld [vmem:[#allocation16 + $0x160] sm:$0xff]
        %v7121 = vld [vmem:[#allocation16 + $0x168] sm:$0xff]
        %v7122 = vld [vmem:[#allocation16 + $0x170] sm:$0xff]
        %v7123 = vld [vmem:[#allocation16 + $0x178] sm:$0xff]
        %v7124 = vld [vmem:[#allocation16 + $0x180] sm:$0xff]
        %v7125 = vld [vmem:[#allocation16 + $0x188] sm:$0xff]
        %v7126 = vld [vmem:[#allocation16 + $0x190] sm:$0xff]
        %v7127 = vld [vmem:[#allocation16 + $0x198] sm:$0xff]
        %v7128 = vld [vmem:[#allocation16 + $0x1a0] sm:$0xff]
        %v7129 = vld [vmem:[#allocation16 + $0x1a8] sm:$0xff]
        %v7130 = vld [vmem:[#allocation16 + $0x1b0] sm:$0xff]
        %v7131 = vld [vmem:[#allocation16 + $0x1b8] sm:$0xff]
        %v7132 = vld [vmem:[#allocation16 + $0x1c0] sm:$0xff]
        %v7133 = vld [vmem:[#allocation16 + $0x1c8] sm:$0xff]
        %v7134 = vld [vmem:[#allocation16 + $0x1d0] sm:$0xff]
        %v7135 = vld [vmem:[#allocation16 + $0x1d8] sm:$0xff]
        %v7136 = vld [vmem:[#allocation16 + $0x1e0] sm:$0xff]
        %v7137 = vld [vmem:[#allocation16 + $0x1e8] sm:$0xff]
        %v7138 = vld [vmem:[#allocation16 + $0x1f0] sm:$0xff]
        %v7139 = vld [vmem:[#allocation16 + $0x1f8] sm:$0xff]
        %v7140 = vld [vmem:[%s14] sm:$0x3]
        %v7142 = vlaneseq
        %v7143 = vshrl.u32 %v7142, 7
        %v7144 = vsub.s32 0, %v7143
        %v7145 = vrot.slane %v7140, %v7144
        %v7146 = vlaneseq
        %v7147 = vshrl.u32 %v7146, 7
        %v7148 = vsub.s32 1, %v7147
        %v7149 = vrot.slane %v7140, %v7148
        %v7216 = vunpack.c.l.b16 %v7076
        %v7217 = vunpack.c.h.b16 %v7076
        %v7218 = vunpack.c.l.b16 %v7077
        %v7219 = vunpack.c.h.b16 %v7077
        %v7220 = vunpack.c.l.b16 %v7078
        %v7221 = vunpack.c.h.b16 %v7078
        %v7222 = vunpack.c.l.b16 %v7079
        %v7223 = vunpack.c.h.b16 %v7079
        %v7224 = vunpack.c.l.b16 %v7080
        %v7225 = vunpack.c.h.b16 %v7080
        %v7226 = vunpack.c.l.b16 %v7081
        %v7227 = vunpack.c.h.b16 %v7081
        %v7228 = vunpack.c.l.b16 %v7082
        %v7229 = vunpack.c.h.b16 %v7082
        %v7230 = vunpack.c.l.b16 %v7083
        %v7231 = vunpack.c.h.b16 %v7083
        %v7232 = vunpack.c.l.b16 %v7084
        %v7233 = vunpack.c.h.b16 %v7084
        %v7234 = vunpack.c.l.b16 %v7085
        %v7235 = vunpack.c.h.b16 %v7085
        %v7236 = vunpack.c.l.b16 %v7086
        %v7237 = vunpack.c.h.b16 %v7086
        %v7238 = vunpack.c.l.b16 %v7087
        %v7239 = vunpack.c.h.b16 %v7087
        %v7240 = vunpack.c.l.b16 %v7088
        %v7241 = vunpack.c.h.b16 %v7088
        %v7242 = vunpack.c.l.b16 %v7089
        %v7243 = vunpack.c.h.b16 %v7089
        %v7244 = vunpack.c.l.b16 %v7090
        %v7245 = vunpack.c.h.b16 %v7090
        %v7246 = vunpack.c.l.b16 %v7091
        %v7247 = vunpack.c.h.b16 %v7091
        %v7248 = vunpack.c.l.b16 %v7092
        %v7249 = vunpack.c.h.b16 %v7092
        %v7250 = vunpack.c.l.b16 %v7093
        %v7251 = vunpack.c.h.b16 %v7093
        %v7252 = vunpack.c.l.b16 %v7094
        %v7253 = vunpack.c.h.b16 %v7094
        %v7254 = vunpack.c.l.b16 %v7095
        %v7255 = vunpack.c.h.b16 %v7095
        %v7256 = vunpack.c.l.b16 %v7096
        %v7257 = vunpack.c.h.b16 %v7096
        %v7258 = vunpack.c.l.b16 %v7097
        %v7259 = vunpack.c.h.b16 %v7097
        %v7260 = vunpack.c.l.b16 %v7098
        %v7261 = vunpack.c.h.b16 %v7098
        %v7262 = vunpack.c.l.b16 %v7099
        %v7263 = vunpack.c.h.b16 %v7099
        %v7264 = vunpack.c.l.b16 %v7100
        %v7265 = vunpack.c.h.b16 %v7100
        %v7266 = vunpack.c.l.b16 %v7101
        %v7267 = vunpack.c.h.b16 %v7101
        %v7268 = vunpack.c.l.b16 %v7102
        %v7269 = vunpack.c.h.b16 %v7102
        %v7270 = vunpack.c.l.b16 %v7103
        %v7271 = vunpack.c.h.b16 %v7103
        %v7272 = vunpack.c.l.b16 %v7104
        %v7273 = vunpack.c.h.b16 %v7104
        %v7274 = vunpack.c.l.b16 %v7105
        %v7275 = vunpack.c.h.b16 %v7105
        %v7276 = vunpack.c.l.b16 %v7106
        %v7277 = vunpack.c.h.b16 %v7106
        %v7278 = vunpack.c.l.b16 %v7107
        %v7279 = vunpack.c.h.b16 %v7107
        %v7280 = vunpack.c.l.b16 %v7108
        %v7281 = vunpack.c.h.b16 %v7108
        %v7282 = vunpack.c.l.b16 %v7109
        %v7283 = vunpack.c.h.b16 %v7109
        %v7284 = vunpack.c.l.b16 %v7110
        %v7285 = vunpack.c.h.b16 %v7110
        %v7286 = vunpack.c.l.b16 %v7111
        %v7287 = vunpack.c.h.b16 %v7111
        %v7288 = vunpack.c.l.b16 %v7112
        %v7289 = vunpack.c.h.b16 %v7112
        %v7290 = vunpack.c.l.b16 %v7113
        %v7291 = vunpack.c.h.b16 %v7113
        %v7292 = vunpack.c.l.b16 %v7114
        %v7293 = vunpack.c.h.b16 %v7114
        %v7294 = vunpack.c.l.b16 %v7115
        %v7295 = vunpack.c.h.b16 %v7115
        %v7296 = vunpack.c.l.b16 %v7116
        %v7297 = vunpack.c.h.b16 %v7116
        %v7298 = vunpack.c.l.b16 %v7117
        %v7299 = vunpack.c.h.b16 %v7117
        %v7300 = vunpack.c.l.b16 %v7118
        %v7301 = vunpack.c.h.b16 %v7118
        %v7302 = vunpack.c.l.b16 %v7119
        %v7303 = vunpack.c.h.b16 %v7119
        %v7304 = vunpack.c.l.b16 %v7120
        %v7305 = vunpack.c.h.b16 %v7120
        %v7306 = vunpack.c.l.b16 %v7121
        %v7307 = vunpack.c.h.b16 %v7121
        %v7308 = vunpack.c.l.b16 %v7122
        %v7309 = vunpack.c.h.b16 %v7122
        %v7310 = vunpack.c.l.b16 %v7123
        %v7311 = vunpack.c.h.b16 %v7123
        %v7312 = vunpack.c.l.b16 %v7124
        %v7313 = vunpack.c.h.b16 %v7124
        %v7314 = vunpack.c.l.b16 %v7125
        %v7315 = vunpack.c.h.b16 %v7125
        %v7316 = vunpack.c.l.b16 %v7126
        %v7317 = vunpack.c.h.b16 %v7126
        %v7318 = vunpack.c.l.b16 %v7127
        %v7319 = vunpack.c.h.b16 %v7127
        %v7320 = vunpack.c.l.b16 %v7128
        %v7321 = vunpack.c.h.b16 %v7128
        %v7322 = vunpack.c.l.b16 %v7129
        %v7323 = vunpack.c.h.b16 %v7129
        %v7324 = vunpack.c.l.b16 %v7130
        %v7325 = vunpack.c.h.b16 %v7130
        %v7326 = vunpack.c.l.b16 %v7131
        %v7327 = vunpack.c.h.b16 %v7131
        %v7328 = vunpack.c.l.b16 %v7132
        %v7329 = vunpack.c.h.b16 %v7132
        %v7330 = vunpack.c.l.b16 %v7133
        %v7331 = vunpack.c.h.b16 %v7133
        %v7332 = vunpack.c.l.b16 %v7134
        %v7333 = vunpack.c.h.b16 %v7134
        %v7334 = vunpack.c.l.b16 %v7135
        %v7335 = vunpack.c.h.b16 %v7135
        %v7336 = vunpack.c.l.b16 %v7136
        %v7337 = vunpack.c.h.b16 %v7136
        %v7338 = vunpack.c.l.b16 %v7137
        %v7339 = vunpack.c.h.b16 %v7137
        %v7340 = vunpack.c.l.b16 %v7138
        %v7341 = vunpack.c.h.b16 %v7138
        %v7342 = vunpack.c.l.b16 %v7139
        %v7343 = vunpack.c.h.b16 %v7139
        %v7344 = vpack.c.b16 %v7218, %v7216
        %v7345 = vpack.c.b16 %v7219, %v7217
        %v7346 = vpack.c.b16 %v7222, %v7220
        %v7347 = vpack.c.b16 %v7223, %v7221
        %v7348 = vpack.c.b16 %v7226, %v7224
        %v7349 = vpack.c.b16 %v7227, %v7225
        %v7350 = vpack.c.b16 %v7230, %v7228
        %v7351 = vpack.c.b16 %v7231, %v7229
        %v7352 = vpack.c.b16 %v7234, %v7232
        %v7353 = vpack.c.b16 %v7235, %v7233
        %v7354 = vpack.c.b16 %v7238, %v7236
        %v7355 = vpack.c.b16 %v7239, %v7237
        %v7356 = vpack.c.b16 %v7242, %v7240
        %v7357 = vpack.c.b16 %v7243, %v7241
        %v7358 = vpack.c.b16 %v7246, %v7244
        %v7359 = vpack.c.b16 %v7247, %v7245
        %v7360 = vpack.c.b16 %v7250, %v7248
        %v7361 = vpack.c.b16 %v7251, %v7249
        %v7362 = vpack.c.b16 %v7254, %v7252
        %v7363 = vpack.c.b16 %v7255, %v7253
        %v7364 = vpack.c.b16 %v7258, %v7256
        %v7365 = vpack.c.b16 %v7259, %v7257
        %v7366 = vpack.c.b16 %v7262, %v7260
        %v7367 = vpack.c.b16 %v7263, %v7261
        %v7368 = vpack.c.b16 %v7266, %v7264
        %v7369 = vpack.c.b16 %v7267, %v7265
        %v7370 = vpack.c.b16 %v7270, %v7268
        %v7371 = vpack.c.b16 %v7271, %v7269
        %v7372 = vpack.c.b16 %v7274, %v7272
        %v7373 = vpack.c.b16 %v7275, %v7273
        %v7374 = vpack.c.b16 %v7278, %v7276
        %v7375 = vpack.c.b16 %v7279, %v7277
        %v7376 = vpack.c.b16 %v7282, %v7280
        %v7377 = vpack.c.b16 %v7283, %v7281
        %v7378 = vpack.c.b16 %v7286, %v7284
        %v7379 = vpack.c.b16 %v7287, %v7285
        %v7380 = vpack.c.b16 %v7290, %v7288
        %v7381 = vpack.c.b16 %v7291, %v7289
        %v7382 = vpack.c.b16 %v7294, %v7292
        %v7383 = vpack.c.b16 %v7295, %v7293
        %v7384 = vpack.c.b16 %v7298, %v7296
        %v7385 = vpack.c.b16 %v7299, %v7297
        %v7386 = vpack.c.b16 %v7302, %v7300
        %v7387 = vpack.c.b16 %v7303, %v7301
        %v7388 = vpack.c.b16 %v7306, %v7304
        %v7389 = vpack.c.b16 %v7307, %v7305
        %v7390 = vpack.c.b16 %v7310, %v7308
        %v7391 = vpack.c.b16 %v7311, %v7309
        %v7392 = vpack.c.b16 %v7314, %v7312
        %v7393 = vpack.c.b16 %v7315, %v7313
        %v7394 = vpack.c.b16 %v7318, %v7316
        %v7395 = vpack.c.b16 %v7319, %v7317
        %v7396 = vpack.c.b16 %v7322, %v7320
        %v7397 = vpack.c.b16 %v7323, %v7321
        %v7398 = vpack.c.b16 %v7326, %v7324
        %v7399 = vpack.c.b16 %v7327, %v7325
        %v7400 = vpack.c.b16 %v7330, %v7328
        %v7401 = vpack.c.b16 %v7331, %v7329
        %v7402 = vpack.c.b16 %v7334, %v7332
        %v7403 = vpack.c.b16 %v7335, %v7333
        %v7404 = vpack.c.b16 %v7338, %v7336
        %v7405 = vpack.c.b16 %v7339, %v7337
        %v7406 = vpack.c.b16 %v7342, %v7340
        %v7407 = vpack.c.b16 %v7343, %v7341
        %7472 = vmatprep.subr.bf16.mxu0 %v7359
        %7473 = vmatpush1.bf16.msra.mxu0 %v7358
        %7474 = vmatprep.subr.bf16.mxu0 %v7357
        %7475 = vmatpush1.bf16.msra.mxu0 %v7356
        %7476 = vmatprep.subr.bf16.mxu0 %v7355
        %7477 = vmatpush1.bf16.msra.mxu0 %v7354
        %7478 = vmatprep.subr.bf16.mxu0 %v7353
        %7479 = vmatpush1.bf16.msra.mxu0 %v7352
        %7480 = vmatprep.subr.bf16.mxu0 %v7351
        %7481 = vmatpush1.bf16.msra.mxu0 %v7350
        %7482 = vmatprep.subr.bf16.mxu0 %v7349
        %7483 = vmatpush1.bf16.msra.mxu0 %v7348
        %7484 = vmatprep.subr.bf16.mxu0 %v7347
        %7485 = vmatpush1.bf16.msra.mxu0 %v7346
        %7486 = vmatprep.subr.bf16.mxu0 %v7345
        %7487 = vmatpush1.bf16.msra.mxu0 %v7344
        %7488 = vmatprep.subr.bf16.mxu0 %v7375
        %7489 = vmatpush2.bf16.msra.mxu0 %v7374
        %7490 = vmatprep.subr.bf16.mxu0 %v7373
        %7491 = vmatpush2.bf16.msra.mxu0 %v7372
        %7492 = vmatprep.subr.bf16.mxu0 %v7371
        %7493 = vmatpush2.bf16.msra.mxu0 %v7370
        %7494 = vmatprep.subr.bf16.mxu0 %v7369
        %7495 = vmatpush2.bf16.msra.mxu0 %v7368
        %7496 = vmatprep.subr.bf16.mxu0 %v7367
        %7497 = vmatpush2.bf16.msra.mxu0 %v7366
        %7498 = vmatprep.subr.bf16.mxu0 %v7365
        %7499 = vmatpush2.bf16.msra.mxu0 %v7364
        %7500 = vmatprep.subr.bf16.mxu0 %v7363
        %7501 = vmatpush2.bf16.msra.mxu0 %v7362
        %7502 = vmatprep.subr.bf16.mxu0 %v7361
        %7503 = vmatpush2.bf16.msra.mxu0 %v7360
        %7504 = vmatprep.mubr.bf16.mxu0 %v7045
        %7505 = vmatmul.mubr.bf16.gmra.mxu0 %v7044
        %v7506 = vpop.f32.mrf.mxu0
        %v7507 = vadd.f32 %v7145, %v7506
        %v7508 = vpop.f32.mrf.mxu0
        %v7509 = vadd.f32 %v7149, %v7508
        %v7510 = vpop.f32.mrf.mxu0
        %v7511 = vadd.f32 %v7145, %v7510
        %v7512 = vpop.f32.mrf.mxu0
        %v7513 = vadd.f32 %v7149, %v7512
        %7514 = vmatprep.mubr.bf16.mxu0 %v7049
        %7515 = vmatmul.mubr.bf16.gmra.mxu0 %v7048
        %v7516 = vpop.f32.mrf.mxu0
        %v7517 = vadd.f32 %v7145, %v7516
        %v7518 = vpop.f32.mrf.mxu0
        %v7519 = vadd.f32 %v7149, %v7518
        %v7520 = vpop.f32.mrf.mxu0
        %v7521 = vadd.f32 %v7145, %v7520
        %v7522 = vpop.f32.mrf.mxu0
        %v7523 = vadd.f32 %v7149, %v7522
        %7524 = vmatprep.mubr.bf16.mxu0 %v7053
        %7525 = vmatmul.mubr.bf16.gmra.mxu0 %v7052
        %v7526 = vpop.f32.mrf.mxu0
        %v7527 = vadd.f32 %v7145, %v7526
        %v7528 = vpop.f32.mrf.mxu0
        %v7529 = vadd.f32 %v7149, %v7528
        %v7530 = vpop.f32.mrf.mxu0
        %v7531 = vadd.f32 %v7145, %v7530
        %v7532 = vpop.f32.mrf.mxu0
        %v7533 = vadd.f32 %v7149, %v7532
        %7534 = vmatprep.mubr.bf16.mxu0 %v7057
        %7535 = vmatmul.mubr.bf16.gmra.mxu0 %v7056
        %v7536 = vpop.f32.mrf.mxu0
        %v7537 = vadd.f32 %v7145, %v7536
        %v7538 = vpop.f32.mrf.mxu0
        %v7539 = vadd.f32 %v7149, %v7538
        %v7540 = vpop.f32.mrf.mxu0
        %v7541 = vadd.f32 %v7145, %v7540
        %v7542 = vpop.f32.mrf.mxu0
        %v7543 = vadd.f32 %v7149, %v7542
        %7544 = vmatprep.mubr.bf16.mxu0 %v7061
        %7545 = vmatmul.mubr.bf16.gmra.mxu0 %v7060
        %v7546 = vpop.f32.mrf.mxu0
        %v7547 = vadd.f32 %v7145, %v7546
        %v7548 = vpop.f32.mrf.mxu0
        %v7549 = vadd.f32 %v7149, %v7548
        %v7550 = vpop.f32.mrf.mxu0
        %v7551 = vadd.f32 %v7145, %v7550
        %v7552 = vpop.f32.mrf.mxu0
        %v7553 = vadd.f32 %v7149, %v7552
        %7554 = vmatprep.mubr.bf16.mxu0 %v7065
        %7555 = vmatmul.mubr.bf16.gmra.mxu0 %v7064
        %v7556 = vpop.f32.mrf.mxu0
        %v7557 = vadd.f32 %v7145, %v7556
        %v7558 = vpop.f32.mrf.mxu0
        %v7559 = vadd.f32 %v7149, %v7558
        %v7560 = vpop.f32.mrf.mxu0
        %v7561 = vadd.f32 %v7145, %v7560
        %v7562 = vpop.f32.mrf.mxu0
        %v7563 = vadd.f32 %v7149, %v7562
        %7564 = vmatprep.mubr.bf16.mxu0 %v7069
        %7565 = vmatmul.mubr.bf16.gmra.mxu0 %v7068
        %v7566 = vpop.f32.mrf.mxu0
        %v7567 = vadd.f32 %v7145, %v7566
        %v7568 = vpop.f32.mrf.mxu0
        %v7569 = vadd.f32 %v7149, %v7568
        %v7570 = vpop.f32.mrf.mxu0
        %v7571 = vadd.f32 %v7145, %v7570
        %v7572 = vpop.f32.mrf.mxu0
        %v7573 = vadd.f32 %v7149, %v7572
        %7574 = vmatprep.mubr.bf16.mxu0 %v7073
        %7575 = vmatmul.mubr.bf16.gmra.mxu0 %v7072
        %v7576 = vpop.f32.mrf.mxu0
        %v7577 = vadd.f32 %v7145, %v7576
        %v7578 = vpop.f32.mrf.mxu0
        %v7579 = vadd.f32 %v7149, %v7578
        %v7580 = vpop.f32.mrf.mxu0
        %v7581 = vadd.f32 %v7145, %v7580
        %v7582 = vpop.f32.mrf.mxu0
        %v7583 = vadd.f32 %v7149, %v7582
        %7584 = vdwg.mxu0
        %7585 = vmatprep.subr.bf16.mxu0 %v7391
        %7586 = vmatpush1.bf16.msra.mxu0 %v7390
        %7587 = vmatprep.subr.bf16.mxu0 %v7389
        %7588 = vmatpush1.bf16.msra.mxu0 %v7388
        %7589 = vmatprep.subr.bf16.mxu0 %v7387
        %7590 = vmatpush1.bf16.msra.mxu0 %v7386
        %7591 = vmatprep.subr.bf16.mxu0 %v7385
        %7592 = vmatpush1.bf16.msra.mxu0 %v7384
        %7593 = vmatprep.subr.bf16.mxu0 %v7383
        %7594 = vmatpush1.bf16.msra.mxu0 %v7382
        %7595 = vmatprep.subr.bf16.mxu0 %v7381
        %7596 = vmatpush1.bf16.msra.mxu0 %v7380
        %7597 = vmatprep.subr.bf16.mxu0 %v7379
        %7598 = vmatpush1.bf16.msra.mxu0 %v7378
        %7599 = vmatprep.subr.bf16.mxu0 %v7377
        %7600 = vmatpush1.bf16.msra.mxu0 %v7376
        %7601 = vmatprep.subr.bf16.mxu0 %v7407
        %7602 = vmatpush2.bf16.msra.mxu0 %v7406
        %7603 = vmatprep.subr.bf16.mxu0 %v7405
        %7604 = vmatpush2.bf16.msra.mxu0 %v7404
        %7605 = vmatprep.subr.bf16.mxu0 %v7403
        %7606 = vmatpush2.bf16.msra.mxu0 %v7402
        %7607 = vmatprep.subr.bf16.mxu0 %v7401
        %7608 = vmatpush2.bf16.msra.mxu0 %v7400
        %7609 = vmatprep.subr.bf16.mxu0 %v7399
        %7610 = vmatpush2.bf16.msra.mxu0 %v7398
        %7611 = vmatprep.subr.bf16.mxu0 %v7397
        %7612 = vmatpush2.bf16.msra.mxu0 %v7396
        %7613 = vmatprep.subr.bf16.mxu0 %v7395
        %7614 = vmatpush2.bf16.msra.mxu0 %v7394
        %7615 = vmatprep.subr.bf16.mxu0 %v7393
        %7616 = vmatpush2.bf16.msra.mxu0 %v7392
        %7617 = vmatprep.mubr.bf16.mxu0 %v7047
        %7618 = vmatmul.mubr.bf16.gmra.mxu0 %v7046
        %v7619 = vpop.f32.mrf.mxu0
        %v7620 = vadd.f32 %v7507, %v7619
        %v7621 = vpop.f32.mrf.mxu0
        %v7622 = vadd.f32 %v7509, %v7621
        %v7623 = vpop.f32.mrf.mxu0
        %v7624 = vadd.f32 %v7511, %v7623
        %v7625 = vpop.f32.mrf.mxu0
        %v7626 = vadd.f32 %v7513, %v7625
        %7627 = vmatprep.mubr.bf16.mxu0 %v7051
        %7628 = vmatmul.mubr.bf16.gmra.mxu0 %v7050
        %v7629 = vpop.f32.mrf.mxu0
        %v7630 = vadd.f32 %v7517, %v7629
        %v7631 = vpop.f32.mrf.mxu0
        %v7632 = vadd.f32 %v7519, %v7631
        %v7633 = vpop.f32.mrf.mxu0
        %v7634 = vadd.f32 %v7521, %v7633
        %v7635 = vpop.f32.mrf.mxu0
        %v7636 = vadd.f32 %v7523, %v7635
        %7637 = vmatprep.mubr.bf16.mxu0 %v7055
        %7638 = vmatmul.mubr.bf16.gmra.mxu0 %v7054
        %v7639 = vpop.f32.mrf.mxu0
        %v7640 = vadd.f32 %v7527, %v7639
        %v7641 = vpop.f32.mrf.mxu0
        %v7642 = vadd.f32 %v7529, %v7641
        %v7643 = vpop.f32.mrf.mxu0
        %v7644 = vadd.f32 %v7531, %v7643
        %v7645 = vpop.f32.mrf.mxu0
        %v7646 = vadd.f32 %v7533, %v7645
        %7647 = vmatprep.mubr.bf16.mxu0 %v7059
        %7648 = vmatmul.mubr.bf16.gmra.mxu0 %v7058
        %v7649 = vpop.f32.mrf.mxu0
        %v7650 = vadd.f32 %v7537, %v7649
        %v7651 = vpop.f32.mrf.mxu0
        %v7652 = vadd.f32 %v7539, %v7651
        %v7653 = vpop.f32.mrf.mxu0
        %v7654 = vadd.f32 %v7541, %v7653
        %v7655 = vpop.f32.mrf.mxu0
        %v7656 = vadd.f32 %v7543, %v7655
        %7657 = vmatprep.mubr.bf16.mxu0 %v7063
        %7658 = vmatmul.mubr.bf16.gmra.mxu0 %v7062
        %v7659 = vpop.f32.mrf.mxu0
        %v7660 = vadd.f32 %v7547, %v7659
        %v7661 = vpop.f32.mrf.mxu0
        %v7662 = vadd.f32 %v7549, %v7661
        %v7663 = vpop.f32.mrf.mxu0
        %v7664 = vadd.f32 %v7551, %v7663
        %v7665 = vpop.f32.mrf.mxu0
        %v7666 = vadd.f32 %v7553, %v7665
        %7667 = vmatprep.mubr.bf16.mxu0 %v7067
        %7668 = vmatmul.mubr.bf16.gmra.mxu0 %v7066
        %v7669 = vpop.f32.mrf.mxu0
        %v7670 = vadd.f32 %v7557, %v7669
        %v7671 = vpop.f32.mrf.mxu0
        %v7672 = vadd.f32 %v7559, %v7671
        %v7673 = vpop.f32.mrf.mxu0
        %v7674 = vadd.f32 %v7561, %v7673
        %v7675 = vpop.f32.mrf.mxu0
        %v7676 = vadd.f32 %v7563, %v7675
        %7677 = vmatprep.mubr.bf16.mxu0 %v7071
        %7678 = vmatmul.mubr.bf16.gmra.mxu0 %v7070
        %v7679 = vpop.f32.mrf.mxu0
        %v7680 = vadd.f32 %v7567, %v7679
        %v7681 = vpop.f32.mrf.mxu0
        %v7682 = vadd.f32 %v7569, %v7681
        %v7683 = vpop.f32.mrf.mxu0
        %v7684 = vadd.f32 %v7571, %v7683
        %v7685 = vpop.f32.mrf.mxu0
        %v7686 = vadd.f32 %v7573, %v7685
        %7687 = vmatprep.mubr.bf16.mxu0 %v7075
        %7688 = vmatmul.mubr.bf16.gmra.mxu0 %v7074
        %v7689 = vpop.f32.mrf.mxu0
        %v7690 = vadd.f32 %v7577, %v7689
        %v7691 = vpop.f32.mrf.mxu0
        %v7692 = vadd.f32 %v7579, %v7691
        %v7693 = vpop.f32.mrf.mxu0
        %v7694 = vadd.f32 %v7581, %v7693
        %v7695 = vpop.f32.mrf.mxu0
        %v7696 = vadd.f32 %v7583, %v7695
        %7697 = vdwg.mxu0
        %v7698 = vadd.f32 %v4292, %v7620
        %v7699 = vadd.f32 %v4293, %v7622
        %v7700 = vadd.f32 %v4294, %v7624
        %v7701 = vadd.f32 %v4295, %v7626
        %v7702 = vadd.f32 %v4296, %v7630
        %v7703 = vadd.f32 %v4297, %v7632
        %v7704 = vadd.f32 %v4298, %v7634
        %v7705 = vadd.f32 %v4299, %v7636
        %v7706 = vadd.f32 %v4300, %v7640
        %v7707 = vadd.f32 %v4301, %v7642
        %v7708 = vadd.f32 %v4302, %v7644
        %v7709 = vadd.f32 %v4303, %v7646
        %v7710 = vadd.f32 %v4304, %v7650
        %v7711 = vadd.f32 %v4305, %v7652
        %v7712 = vadd.f32 %v4306, %v7654
        %v7713 = vadd.f32 %v4307, %v7656
        %v7714 = vadd.f32 %v4308, %v7660
        %v7715 = vadd.f32 %v4309, %v7662
        %v7716 = vadd.f32 %v4310, %v7664
        %v7717 = vadd.f32 %v4311, %v7666
        %v7718 = vadd.f32 %v4312, %v7670
        %v7719 = vadd.f32 %v4313, %v7672
        %v7720 = vadd.f32 %v4314, %v7674
        %v7721 = vadd.f32 %v4315, %v7676
        %v7722 = vadd.f32 %v4316, %v7680
        %v7723 = vadd.f32 %v4317, %v7682
        %v7724 = vadd.f32 %v4318, %v7684
        %v7725 = vadd.f32 %v4319, %v7686
        %v7726 = vadd.f32 %v4320, %v7690
        %v7727 = vadd.f32 %v4321, %v7692
        %v7728 = vadd.f32 %v4322, %v7694
        %v7729 = vadd.f32 %v4323, %v7696
        %7730 = vst [vmem:[%s636] sm:$0xff] %v7698
        %7731 = vst [vmem:[%s636 + $0x8] sm:$0xff] %v7699
        %7732 = vst [vmem:[%s636 + $0x10] sm:$0xff] %v7700
        %7733 = vst [vmem:[%s636 + $0x18] sm:$0xff] %v7701
        %7734 = vst [vmem:[%s636 + $0x20] sm:$0xff] %v7702
        %7735 = vst [vmem:[%s636 + $0x28] sm:$0xff] %v7703
        %7736 = vst [vmem:[%s636 + $0x30] sm:$0xff] %v7704
        %7737 = vst [vmem:[%s636 + $0x38] sm:$0xff] %v7705
        %7738 = vst [vmem:[%s636 + $0x40] sm:$0xff] %v7706
        %7739 = vst [vmem:[%s636 + $0x48] sm:$0xff] %v7707
        %7740 = vst [vmem:[%s636 + $0x50] sm:$0xff] %v7708
        %7741 = vst [vmem:[%s636 + $0x58] sm:$0xff] %v7709
        %7742 = vst [vmem:[%s636 + $0x60] sm:$0xff] %v7710
        %7743 = vst [vmem:[%s636 + $0x68] sm:$0xff] %v7711
        %7744 = vst [vmem:[%s636 + $0x70] sm:$0xff] %v7712
        %7745 = vst [vmem:[%s636 + $0x78] sm:$0xff] %v7713
        %7746 = vst [vmem:[%s636 + $0x80] sm:$0xff] %v7714
        %7747 = vst [vmem:[%s636 + $0x88] sm:$0xff] %v7715
        %7748 = vst [vmem:[%s636 + $0x90] sm:$0xff] %v7716
        %7749 = vst [vmem:[%s636 + $0x98] sm:$0xff] %v7717
        %7750 = vst [vmem:[%s636 + $0xa0] sm:$0xff] %v7718
        %7751 = vst [vmem:[%s636 + $0xa8] sm:$0xff] %v7719
        %7752 = vst [vmem:[%s636 + $0xb0] sm:$0xff] %v7720
        %7753 = vst [vmem:[%s636 + $0xb8] sm:$0xff] %v7721
        %7754 = vst [vmem:[%s636 + $0xc0] sm:$0xff] %v7722
        %7755 = vst [vmem:[%s636 + $0xc8] sm:$0xff] %v7723
        %7756 = vst [vmem:[%s636 + $0xd0] sm:$0xff] %v7724
        %7757 = vst [vmem:[%s636 + $0xd8] sm:$0xff] %v7725
        %7758 = vst [vmem:[%s636 + $0xe0] sm:$0xff] %v7726
        %7759 = vst [vmem:[%s636 + $0xe8] sm:$0xff] %v7727
        %7760 = vst [vmem:[%s636 + $0xf0] sm:$0xff] %v7728
        %7761 = vst [vmem:[%s636 + $0xf8] sm:$0xff] %v7729
        %s7762 = sand.u32 %s378, 1
        %s7763 = scalar_lea.sflag [#allocation4], %s7762
        %s7764 = sand.u32 %s378, 1
        %s7765 = smul.addr %s7764, 256
        %s7766 = scalar_lea.vmem [#allocation17], %s7765
        // Predicated region
        $region117: #{tpu_custom_call.1} parent=79 // pred_check
          %p7767 = pneg %p388
        $region118: #{tpu_custom_call.1} parent=79 // pred_check_branch
          %7769 = sbr.rel (%p7767) target = $region120
        $region119: #{tpu_custom_call.1} parent=79 // pred_region
          %s7770 = smul.u32 16, %s41
          %s7772 = ssub.s32 4096, 4096
          %7773 = vsyncadd %s7763, %s7772
          %s7774 = smul.addr %s7770, 2
          %s7775 = smul.addr %s40, 64
          %s7776 = sadd.s32 %s7774, %s7775
          %s7777 = smul.addr %s7776, 128
          %s7778 = scalar_lea.hbm %s15, %s7777
          %s7779 = sshll.u32 %s7766, 4
          %s7780 = int_to_ptr.vmem [resolvable:$true] %s7779
          %7785 = dma.vmem_to_hbm [thread:$0]  %s7780, 4096, %s7778, %s7763, 256, 256, 16
        $region120: #{tpu_custom_call.1} parent=79 // pred_fallthru
          _
      $region80: #{tpu_custom_call.1} parent=5 // pred_fallthru
        _
      %p7786 = scmp.le.s32.totalorder 2, %s31
      // Predicated region
      $region121: #{tpu_custom_call.1} parent=5 // pred_check
        %p7787 = pneg %p7786
      $region122: #{tpu_custom_call.1} parent=5 // pred_check_branch
        %7789 = sbr.rel (%p7787) target = $region124
      $region123: #{tpu_custom_call.1} parent=5 // pred_region
        %s7790 = ssub.s32 %s31, 2
        // Predicated region
        $region125: #{tpu_custom_call.1} parent=123 // pred_check
          %p7791 = pneg %p394
        $region126: #{tpu_custom_call.1} parent=123 // pred_check_branch
          %7793 = sbr.rel (%p7791) target = $region128
        $region127: #{tpu_custom_call.1} parent=123 // pred_region
          %s7794 = sand.u32 %s379, 1
          %s7795 = scalar_lea.sflag [#allocation4], %s7794
          %s7796 = sand.u32 %s379, 1
          %s7797 = smul.addr %s7796, 256
          %s7798 = scalar_lea.vmem [#allocation17], %s7797
          %7799 = dma.done %s7795, 4096
        $region128: #{tpu_custom_call.1} parent=123 // pred_fallthru
          _
      $region124: #{tpu_custom_call.1} parent=5 // pred_fallthru
        _
    $region6: #{tpu_custom_call.1} parent=1 // loop_footer
      %s35 = sadd.s32 1, %s31
    $region7: #{tpu_custom_call.1} parent=1 // loop_footer_branch
      %30 = sbr.rel target = $region3
    $region8: #{tpu_custom_call.1} parent=1 // loop_exit
      _
    %7800 = vsyncpa [#allocation3], 1
    %s7801 = scalar_lea.sflag [#allocation3], 1
    %7802 = vsyncpa %s7801, 1
    %7803 = vsyncpa [#allocation6], 1
    %7804 = vsyncpa [#allocation9], 1
    %7805 = vsyncpa [#allocation12], 1
    %7806 = vsyncpa [#allocation15], 1
    %7807 = vsyncpa [#allocation4], 1
    %s7808 = scalar_lea.sflag [#allocation4], 1
    %7809 = vsyncpa %s7808, 1

</llo_original>
